<compile_context>
chip_gen: v6e
topology: v6e:2x2x1
jax: 0.10.0
libtpu: 0.0.40
codegen_flags: <defaults>
</compile_context>

<pallas_src>
import functools

import jax
import jax.numpy as jnp
from jax.experimental import pallas as pl
from jax.experimental.pallas import tpu as pltpu

# ---------------- module hyper-parameters (GlobalBranch.__init__ / timm defaults) ----
INPUT_CHANNELS = 6
EMBED_DIM = 256          # output_dim
NUM_HEADS = 8
DEPTH = 12               # timm VisionTransformer default depth
PATCH = 16
MLP_RATIO = 4
LN_EPS = 1e-6            # timm uses LayerNorm(eps=1e-6)
HEAD_DIM = EMBED_DIM // NUM_HEADS
ATTN_SCALE = HEAD_DIM ** -0.5


def _round_up(x, m):
    return (x + m - 1) // m * m


# ---------------- in-kernel helpers ----------------
def _ln(x, g, b):
    mean = jnp.mean(x, axis=-1, keepdims=True)
    var = jnp.mean(jnp.square(x - mean), axis=-1, keepdims=True)
    return (x - mean) * jax.lax.rsqrt(var + LN_EPS) * g + b


# ---------------- fused encoder kernel (patch embed + 12 blocks + final LN) ---------
def _encoder_kernel(patches_ref, patchw_ref, base_ref,
                    ln1g_ref, ln1b_ref, qkvw_ref, qkvb_ref,
                    projw_ref, projb_ref, ln2g_ref, ln2b_ref,
                    fc1w_ref, fc1b_ref, fc2w_ref, fc2b_ref,
                    fng_ref, fnb_ref, o_ref,
                    *, n_valid, npad, num_heads, head_dim):
    layer = pl.program_id(1)

    # ---- layer 0: patch-embed matmul + cls/pos base (CLS/pad rows of the patch slab
    #      are zero, so they pick up only the base slab).  Result stays VMEM-resident.
    @pl.when(layer == 0)
    def _init():
        o_ref[...] = (
            jnp.dot(patches_ref[...], patchw_ref[...],
                    preferred_element_type=jnp.float32)
            + base_ref[...]
        )

    x = o_ref[...]                       # (M, D) f32, M = (B/groups) * Npad
    m_rows, d = x.shape
    nb = m_rows // npad                  # batch elements in this block (static)

    # ---------- attention sub-block --------------------------------------------------
    h = _ln(x, ln1g_ref[0], ln1b_ref[0])
    # one large QKV matmul over the whole slab (weights already bf16, Q pre-scaled)
    qkv = jnp.dot(h.astype(jnp.bfloat16), qkvw_ref[0],
                  preferred_element_type=jnp.float32) + qkvb_ref[0]      # (M, 3D)

    key_valid = jax.lax.broadcasted_iota(jnp.int32, (1, npad), 1) < n_valid
    projw = projw_ref[0]                 # (D, D) bf16

    # residual + proj bias as accumulator base; each head's PV is routed through its
    # own sublane-aligned row-slice of proj_w (no lane concatenate of head outputs).
    acc = x + projb_ref[0]
    for hh in range(num_heads):
        lo = hh * head_dim
        q_h = qkv[:, lo:lo + head_dim].astype(jnp.bfloat16)
        k_h = qkv[:, d + lo:d + lo + head_dim].astype(jnp.bfloat16)
        v_h = qkv[:, 2 * d + lo:2 * d + lo + head_dim].astype(jnp.bfloat16)
        pv_rows = []
        for b in range(nb):              # per-batch (8-row, sublane-aligned) attention
            r0 = b * npad
            s = jax.lax.dot_general(q_h[r0:r0 + npad], k_h[r0:r0 + npad],
                                    (((1,), (1,)), ((), ())),
                                    preferred_element_type=jnp.float32)   # (npad, npad)
            s = jnp.where(key_valid, s, -1e30)                            # mask pad keys
            s = s - jnp.max(s, axis=-1, keepdims=True)
            p = jnp.exp(s)
            p = p / jnp.sum(p, axis=-1, keepdims=True)                    # exact recip
            pv_rows.append(jnp.dot(p.astype(jnp.bfloat16), v_h[r0:r0 + npad],
                                   preferred_element_type=jnp.float32))   # (npad, hd)
        pv = pv_rows[0] if nb == 1 else jnp.concatenate(pv_rows, axis=0)  # (M, hd)
        acc = acc + jnp.dot(pv.astype(jnp.bfloat16),
                            projw[lo:lo + head_dim, :],
                            preferred_element_type=jnp.float32)
    x = acc

    # ---------- MLP sub-block --------------------------------------------------------
    h2 = _ln(x, ln2g_ref[0], ln2b_ref[0])
    hid = jnp.dot(h2.astype(jnp.bfloat16), fc1w_ref[0],
                  preferred_element_type=jnp.float32) + fc1b_ref[0]       # (M, 4D)
    # TODO(synk): timm uses exact erf-GELU; tanh approximation differs by ~1e-3.
    hid = jax.nn.gelu(hid, approximate=True)
    x = x + jnp.dot(hid.astype(jnp.bfloat16), fc2w_ref[0],
                    preferred_element_type=jnp.float32) + fc2b_ref[0]

    o_ref[...] = x

    # fused final LayerNorm on the last layer (wrapper only reads the CLS rows)
    @pl.when(layer == pl.num_programs(1) - 1)
    def _fin():
        o_ref[...] = _ln(x, fng_ref[...], fnb_ref[...])


def vit_encoder(patches_pad, base_slab, prep, *, n_valid, npad, batch_groups=1):
    """patches_pad: (B*Npad, PD) bf16 (CLS/pad rows zero); base_slab: (B*Npad, D) f32."""
    M, PD = patches_pad.shape
    D = EMBED_DIM
    H3 = 3 * D
    HID = MLP_RATIO * D
    assert M % batch_groups == 0
    Mg = M // batch_groups
    assert Mg % npad == 0

    kern = functools.partial(_encoder_kernel, n_valid=n_valid, npad=npad,
                             num_heads=NUM_HEADS, head_dim=HEAD_DIM)

    xmap = lambda g, l: (g, 0)           # per-group activation blocks
    wmap = lambda g, l: (l, 0, 0)        # per-layer weight blocks
    cmap = lambda g, l: (0, 0)           # constants (fetched once)

    return pl.pallas_call(
        kern,
        out_shape=jax.ShapeDtypeStruct((M, D), jnp.float32),
        grid=(batch_groups, DEPTH),
        in_specs=[
            pl.BlockSpec((Mg, PD), xmap),      # padded patch slab (bf16)
            pl.BlockSpec((PD, D), cmap),       # patch-embed weight (bf16)
            pl.BlockSpec((Mg, D), xmap),       # cls/pos/patch-bias base slab (f32)
            pl.BlockSpec((1, 1, D), wmap),     # ln1 gamma
            pl.BlockSpec((1, 1, D), wmap),     # ln1 beta
            pl.BlockSpec((1, D, H3), wmap),    # qkv weight (bf16, Q pre-scaled)
            pl.BlockSpec((1, 1, H3), wmap),    # qkv bias   (f32, Q pre-scaled)
            pl.BlockSpec((1, D, D), wmap),     # proj weight (bf16)
            pl.BlockSpec((1, 1, D), wmap),     # proj bias
            pl.BlockSpec((1, 1, D), wmap),     # ln2 gamma
            pl.BlockSpec((1, 1, D), wmap),     # ln2 beta
            pl.BlockSpec((1, D, HID), wmap),   # fc1 weight (bf16)
            pl.BlockSpec((1, 1, HID), wmap),   # fc1 bias
            pl.BlockSpec((1, HID, D), wmap),   # fc2 weight (bf16)
            pl.BlockSpec((1, 1, D), wmap),     # fc2 bias
            pl.BlockSpec((1, D), cmap),        # final norm gamma
            pl.BlockSpec((1, D), cmap),        # final norm beta
        ],
        out_specs=pl.BlockSpec((Mg, D), xmap),
        compiler_params=pltpu.CompilerParams(
            dimension_semantics=("parallel", "arbitrary")),
    )(patches_pad, prep["patch_w"], base_slab,
      prep["ln1_g"], prep["ln1_b"], prep["qkv_w"], prep["qkv_b"],
      prep["proj_w"], prep["proj_b"], prep["ln2_g"], prep["ln2_b"],
      prep["fc1_w"], prep["fc1_b"], prep["fc2_w"], prep["fc2_b"],
      prep["norm_g"], prep["norm_b"])


# ---------------- parameters (deterministic synthetic init) ----------------
def init_params(key, num_patches):
    hidden = EMBED_DIM * MLP_RATIO
    patch_dim = INPUT_CHANNELS * PATCH * PATCH
    ks = jax.random.split(key, 8)

    def nrm(k, shape, std=0.02):
        return (std * jax.random.normal(k, shape)).astype(jnp.float32)

    return dict(
        patch_w=nrm(ks[0], (patch_dim, EMBED_DIM)),
        patch_b=jnp.zeros((EMBED_DIM,), jnp.float32),
        cls_token=nrm(ks[1], (1, 1, EMBED_DIM)),
        pos_embed=nrm(ks[2], (1, num_patches + 1, EMBED_DIM)),
        norm_g=jnp.ones((EMBED_DIM,), jnp.float32),
        norm_b=jnp.zeros((EMBED_DIM,), jnp.float32),
        blocks=dict(  # stacked over DEPTH
            ln1_g=jnp.ones((DEPTH, EMBED_DIM), jnp.float32),
            ln1_b=jnp.zeros((DEPTH, EMBED_DIM), jnp.float32),
            qkv_w=nrm(ks[3], (DEPTH, EMBED_DIM, 3 * EMBED_DIM)),
            qkv_b=jnp.zeros((DEPTH, 3 * EMBED_DIM), jnp.float32),
            proj_w=nrm(ks[4], (DEPTH, EMBED_DIM, EMBED_DIM)),
            proj_b=jnp.zeros((DEPTH, EMBED_DIM), jnp.float32),
            ln2_g=jnp.ones((DEPTH, EMBED_DIM), jnp.float32),
            ln2_b=jnp.zeros((DEPTH, EMBED_DIM), jnp.float32),
            fc1_w=nrm(ks[5], (DEPTH, EMBED_DIM, hidden), ),
            fc1_b=jnp.zeros((DEPTH, hidden), jnp.float32),
            fc2_w=nrm(ks[6], (DEPTH, hidden, EMBED_DIM)),
            fc2_b=jnp.zeros((DEPTH, EMBED_DIM), jnp.float32),
        ),
    )


def prepare_params(params, num_patches):
    """One-time parameter preparation (bf16 casts, Q-scale fold, cls/pos base slab).

    Done OUTSIDE the jitted forward so no conversion traffic is paid per call.
    """
    D = EMBED_DIM
    H3 = 3 * D
    HID = MLP_RATIO * D
    N = num_patches + 1
    Npad = _round_up(N, 8)
    blk = params["blocks"]

    # fold the attention scale into the Q third of QKV (in f32, then cast to bf16)
    qscale = jnp.concatenate([jnp.full((D,), ATTN_SCALE, jnp.float32),
                              jnp.ones((2 * D,), jnp.float32)])

    # base slab: row 0 = cls_token + pos[0]; rows 1..P = patch_bias + pos[1..P]; pad = 0
    pos = params["pos_embed"][0]                                   # (N, D)
    base = jnp.zeros((Npad, D), jnp.float32)
    base = base.at[0].set(params["cls_token"][0, 0] + pos[0])
    base = base.at[1:N].set(params["patch_b"][None, :] + pos[1:N])

    return dict(
        patch_w=params["patch_w"].astype(jnp.bfloat16),
        base=base,
        ln1_g=blk["ln1_g"].reshape(DEPTH, 1, D),
        ln1_b=blk["ln1_b"].reshape(DEPTH, 1, D),
        qkv_w=(blk["qkv_w"] * qscale).astype(jnp.bfloat16),
        qkv_b=(blk["qkv_b"] * qscale).reshape(DEPTH, 1, H3),
        proj_w=blk["proj_w"].astype(jnp.bfloat16),
        proj_b=blk["proj_b"].reshape(DEPTH, 1, D),
        ln2_g=blk["ln2_g"].reshape(DEPTH, 1, D),
        ln2_b=blk["ln2_b"].reshape(DEPTH, 1, D),
        fc1_w=blk["fc1_w"].astype(jnp.bfloat16),
        fc1_b=blk["fc1_b"].reshape(DEPTH, 1, HID),
        fc2_w=blk["fc2_w"].astype(jnp.bfloat16),
        fc2_b=blk["fc2_b"].reshape(DEPTH, 1, D),
        norm_g=params["norm_g"].reshape(1, D),
        norm_b=params["norm_b"].reshape(1, D),
    )


# ---------------- forward (== GlobalBranch.forward) ----------------
@jax.jit
def global_branch_forward(x, prep):
    B, C, Hh, Ww = x.shape
    gh, gw = Hh // PATCH, Ww // PATCH
    P = gh * gw
    N = P + 1
    Npad = prep["base"].shape[0]
    assert Npad == _round_up(N, 8), "prepared params were built for a different image size"
    PD = C * PATCH * PATCH

    # Conv2d(k=16, s=16) patch embed == patchify + matmul (flatten order: C, ph, pw)
    patches = (
        x.reshape(B, C, gh, PATCH, gw, PATCH)
        .transpose(0, 2, 4, 1, 3, 5)
        .reshape(B, P, PD)
    )
    # pad each sequence: row 0 reserved for CLS (zeros), rows 1..P = patches, rest pad.
    patches_pad = jnp.pad(patches, ((0, 0), (1, Npad - 1 - P), (0, 0)))
    patches_pad = patches_pad.reshape(B * Npad, PD).astype(jnp.bfloat16)
    base_slab = jnp.tile(prep["base"], (B, 1))                     # (B*Npad, D)

    # TODO(synk): on v7x set batch_groups=2 (B even) so both TensorCores are used.
    out_slab = vit_encoder(patches_pad, base_slab, prep,
                           n_valid=N, npad=Npad, batch_groups=1)

    # num_classes=0 -> head is Identity; global_pool='token' -> CLS token features.
    # Final LayerNorm was fused into the last grid step of the encoder kernel.
    return out_slab.reshape(B, Npad, EMBED_DIM)[:, 0, :]


if __name__ == "__main__":
    key = jax.random.PRNGKey(0)
    kx, kp = jax.random.split(key)

    B, C, Hh, Ww = 2, INPUT_CHANNELS, 32, 32      # small, multiple of patch size 16
    num_patches = (Hh // PATCH) * (Ww // PATCH)

    x = jax.random.normal(kx, (B, C, Hh, Ww), dtype=jnp.float32)
    params = init_params(kp, num_patches=num_patches)
    prep = prepare_params(params, num_patches=num_patches)         # one-time prep
    prep = jax.tree_util.tree_map(jax.block_until_ready, prep)

    out = global_branch_forward(x, prep)
    out = jax.block_until_ready(out)
    assert out.shape == (B, EMBED_DIM), out.shape
    assert out.dtype == jnp.float32
    assert bool(jnp.all(jnp.isfinite(out)))
    print("KERNEL_OK")
</pallas_src>

<mosaic_0001>
module attributes {stable_mosaic.version = 11 : i64} {
  func.func @_encoder_kernel(%arg0: i32, %arg1: i32, %arg2: memref<16x1536xbf16, #tpu.memory_space<vmem>>, %arg3: memref<1536x256xbf16, #tpu.memory_space<vmem>>, %arg4: memref<16x256xf32, #tpu.memory_space<vmem>>, %arg5: memref<1x1x256xf32, #tpu.memory_space<vmem>>, %arg6: memref<1x1x256xf32, #tpu.memory_space<vmem>>, %arg7: memref<1x256x768xbf16, #tpu.memory_space<vmem>>, %arg8: memref<1x1x768xf32, #tpu.memory_space<vmem>>, %arg9: memref<1x256x256xbf16, #tpu.memory_space<vmem>>, %arg10: memref<1x1x256xf32, #tpu.memory_space<vmem>>, %arg11: memref<1x1x256xf32, #tpu.memory_space<vmem>>, %arg12: memref<1x1x256xf32, #tpu.memory_space<vmem>>, %arg13: memref<1x256x1024xbf16, #tpu.memory_space<vmem>>, %arg14: memref<1x1x1024xf32, #tpu.memory_space<vmem>>, %arg15: memref<1x1024x256xbf16, #tpu.memory_space<vmem>>, %arg16: memref<1x1x256xf32, #tpu.memory_space<vmem>>, %arg17: memref<1x256xf32, #tpu.memory_space<vmem>>, %arg18: memref<1x256xf32, #tpu.memory_space<vmem>>, %arg19: memref<16x256xf32, #tpu.memory_space<vmem>>) attributes {dimension_semantics = [#tpu.dimension_semantics<parallel>, #tpu.dimension_semantics<arbitrary>], iteration_bounds = array<i64: 1, 12>, scalar_prefetch = 0 : i64, scratch_operands = 0 : i64, tpu.core_type = #tpu.core_type<tc>, window_params = [{transform_indices = @transform_0, window_bounds = array<i64: 16, 1536>}, {pipeline_mode = #tpu.pipeline_mode<synchronous>, transform_indices = @transform_1, window_bounds = array<i64: 1536, 256>}, {transform_indices = @transform_2, window_bounds = array<i64: 16, 256>}, {transform_indices = @transform_3, window_bounds = array<i64: 1, 1, 256>}, {transform_indices = @transform_4, window_bounds = array<i64: 1, 1, 256>}, {transform_indices = @transform_5, window_bounds = array<i64: 1, 256, 768>}, {transform_indices = @transform_6, window_bounds = array<i64: 1, 1, 768>}, {transform_indices = @transform_7, window_bounds = array<i64: 1, 256, 256>}, {transform_indices = @transform_8, window_bounds = array<i64: 1, 1, 256>}, {transform_indices = @transform_9, window_bounds = array<i64: 1, 1, 256>}, {transform_indices = @transform_10, window_bounds = array<i64: 1, 1, 256>}, {transform_indices = @transform_11, window_bounds = array<i64: 1, 256, 1024>}, {transform_indices = @transform_12, window_bounds = array<i64: 1, 1, 1024>}, {transform_indices = @transform_13, window_bounds = array<i64: 1, 1024, 256>}, {transform_indices = @transform_14, window_bounds = array<i64: 1, 1, 256>}, {pipeline_mode = #tpu.pipeline_mode<synchronous>, transform_indices = @transform_15, window_bounds = array<i64: 1, 256>}, {pipeline_mode = #tpu.pipeline_mode<synchronous>, transform_indices = @transform_16, window_bounds = array<i64: 1, 256>}, {transform_indices = @transform_17, window_bounds = array<i64: 16, 256>}]} {
    %c0_i32 = arith.constant 0 : i32
    %0 = arith.cmpi eq, %arg1, %c0_i32 : i32
    %1 = arith.extui %0 : i1 to i32
    %c0_i32_0 = arith.constant 0 : i32
    %2 = arith.cmpi ne, %1, %c0_i32_0 : i32
    scf.if %2 {
      %c0_145 = arith.constant 0 : index
      %c0_146 = arith.constant 0 : index
      %499 = vector.load %arg2[%c0_145, %c0_146] : memref<16x1536xbf16, #tpu.memory_space<vmem>>, vector<16x1536xbf16>
      %c0_147 = arith.constant 0 : index
      %c0_148 = arith.constant 0 : index
      %500 = vector.load %arg3[%c0_147, %c0_148] : memref<1536x256xbf16, #tpu.memory_space<vmem>>, vector<1536x256xbf16>
      %cst_149 = arith.constant dense<0.000000e+00> : vector<16x256xf32>
      %501 = tpu.matmul %499, %500, %cst_149 {dimension_numbers = #tpu.dot_dimension_numbers<[1], [0], [0], [1], [0, 0, 1, 1], [], []>} : vector<16x1536xbf16>, vector<1536x256xbf16>, vector<16x256xf32> -> vector<16x256xf32>
      %c0_150 = arith.constant 0 : index
      %c0_151 = arith.constant 0 : index
      %502 = vector.load %arg4[%c0_150, %c0_151] : memref<16x256xf32, #tpu.memory_space<vmem>>, vector<16x256xf32>
      %503 = arith.addf %501, %502 : vector<16x256xf32>
      %c0_152 = arith.constant 0 : index
      %c0_153 = arith.constant 0 : index
      %504 = vector.load %arg19[%c0_152, %c0_153] : memref<16x256xf32, #tpu.memory_space<vmem>>, vector<16x256xf32>
      tpu.vector_store %arg19[%c0_152, %c0_153], %503 {strides = array<i32>} : memref<16x256xf32, #tpu.memory_space<vmem>>, vector<16x256xf32>,
    } else {
    }
    %c0 = arith.constant 0 : index
    %c0_1 = arith.constant 0 : index
    %3 = vector.load %arg19[%c0, %c0_1] : memref<16x256xf32, #tpu.memory_space<vmem>>, vector<16x256xf32>
    %c0_2 = arith.constant 0 : index
    %c0_3 = arith.constant 0 : index
    %c0_4 = arith.constant 0 : index
    %4 = vector.load %arg5[%c0_2, %c0_3, %c0_4] : memref<1x1x256xf32, #tpu.memory_space<vmem>>, vector<1x1x256xf32>
    %5 = vector.shape_cast %4 : vector<1x1x256xf32> to vector<1x256xf32>
    %c0_5 = arith.constant 0 : index
    %c0_6 = arith.constant 0 : index
    %c0_7 = arith.constant 0 : index
    %6 = vector.load %arg6[%c0_5, %c0_6, %c0_7] : memref<1x1x256xf32, #tpu.memory_space<vmem>>, vector<1x1x256xf32>
    %7 = vector.shape_cast %6 : vector<1x1x256xf32> to vector<1x256xf32>
    %cst = arith.constant dense<0.000000e+00> : vector<16xf32>
    %8 = vector.multi_reduction <add>, %3, %cst [1] : vector<16x256xf32> to vector<16xf32>
    %9 = vector.shape_cast %8 : vector<16xf32> to vector<16x1xf32>
    %cst_8 = arith.constant 2.560000e+02 : f32
    %10 = vector.broadcast %cst_8 : f32 to vector<16x1xf32>
    %11 = arith.divf %9, %10 : vector<16x1xf32>
    %12 = vector.broadcast %11 : vector<16x1xf32> to vector<16x256xf32>
    %13 = arith.subf %3, %12 : vector<16x256xf32>
    %14 = arith.mulf %13, %13 : vector<16x256xf32>
    %cst_9 = arith.constant dense<0.000000e+00> : vector<16xf32>
    %15 = vector.multi_reduction <add>, %14, %cst_9 [1] : vector<16x256xf32> to vector<16xf32>
    %16 = vector.shape_cast %15 : vector<16xf32> to vector<16x1xf32>
    %cst_10 = arith.constant 2.560000e+02 : f32
    %17 = vector.broadcast %cst_10 : f32 to vector<16x1xf32>
    %18 = arith.divf %16, %17 : vector<16x1xf32>
    %19 = vector.broadcast %11 : vector<16x1xf32> to vector<16x256xf32>
    %20 = arith.subf %3, %19 : vector<16x256xf32>
    %cst_11 = arith.constant 9.99999997E-7 : f32
    %21 = vector.broadcast %cst_11 : f32 to vector<16x1xf32>
    %22 = arith.addf %18, %21 : vector<16x1xf32>
    %23 = math.rsqrt %22 : vector<16x1xf32>
    %24 = vector.broadcast %23 : vector<16x1xf32> to vector<16x256xf32>
    %25 = arith.mulf %20, %24 : vector<16x256xf32>
    %26 = vector.broadcast %5 : vector<1x256xf32> to vector<16x256xf32>
    %27 = arith.mulf %25, %26 : vector<16x256xf32>
    %28 = vector.broadcast %7 : vector<1x256xf32> to vector<16x256xf32>
    %29 = arith.addf %27, %28 : vector<16x256xf32>
    %30 = arith.truncf %29 : vector<16x256xf32> to vector<16x256xbf16>
    %c0_12 = arith.constant 0 : index
    %c0_13 = arith.constant 0 : index
    %c0_14 = arith.constant 0 : index
    %31 = vector.load %arg7[%c0_12, %c0_13, %c0_14] : memref<1x256x768xbf16, #tpu.memory_space<vmem>>, vector<1x256x768xbf16>
    %32 = vector.shape_cast %31 : vector<1x256x768xbf16> to vector<256x768xbf16>
    %cst_15 = arith.constant dense<0.000000e+00> : vector<16x768xf32>
    %33 = tpu.matmul %30, %32, %cst_15 {dimension_numbers = #tpu.dot_dimension_numbers<[1], [0], [0], [1], [0, 0, 1, 1], [], []>} : vector<16x256xbf16>, vector<256x768xbf16>, vector<16x768xf32> -> vector<16x768xf32>
    %c0_16 = arith.constant 0 : index
    %c0_17 = arith.constant 0 : index
    %c0_18 = arith.constant 0 : index
    %34 = vector.load %arg8[%c0_16, %c0_17, %c0_18] : memref<1x1x768xf32, #tpu.memory_space<vmem>>, vector<1x1x768xf32>
    %35 = vector.shape_cast %34 : vector<1x1x768xf32> to vector<1x768xf32>
    %36 = vector.broadcast %35 : vector<1x768xf32> to vector<16x768xf32>
    %37 = arith.addf %33, %36 : vector<16x768xf32>
    %38 = tpu.iota {dimensions = array<i32: 1>} : vector<1x8xi32>
    %c5_i32 = arith.constant 5 : i32
    %39 = vector.broadcast %c5_i32 : i32 to vector<1x8xi32>
    %40 = arith.cmpi slt, %38, %39 : vector<1x8xi32>
    %c0_19 = arith.constant 0 : index
    %c0_20 = arith.constant 0 : index
    %c0_21 = arith.constant 0 : index
    %41 = vector.load %arg9[%c0_19, %c0_20, %c0_21] : memref<1x256x256xbf16, #tpu.memory_space<vmem>>, vector<1x256x256xbf16>
    %42 = vector.shape_cast %41 : vector<1x256x256xbf16> to vector<256x256xbf16>
    %c0_22 = arith.constant 0 : index
    %c0_23 = arith.constant 0 : index
    %c0_24 = arith.constant 0 : index
    %43 = vector.load %arg10[%c0_22, %c0_23, %c0_24] : memref<1x1x256xf32, #tpu.memory_space<vmem>>, vector<1x1x256xf32>
    %44 = vector.shape_cast %43 : vector<1x1x256xf32> to vector<1x256xf32>
    %45 = vector.broadcast %44 : vector<1x256xf32> to vector<16x256xf32>
    %46 = arith.addf %3, %45 : vector<16x256xf32>
    %47 = vector.extract_strided_slice %37 {offsets = [0, 0], sizes = [16, 32], strides = [1, 1]} : vector<16x768xf32> to vector<16x32xf32>
    %48 = arith.truncf %47 : vector<16x32xf32> to vector<16x32xbf16>
    %49 = vector.extract_strided_slice %37 {offsets = [0, 256], sizes = [16, 32], strides = [1, 1]} : vector<16x768xf32> to vector<16x32xf32>
    %50 = arith.truncf %49 : vector<16x32xf32> to vector<16x32xbf16>
    %51 = vector.extract_strided_slice %37 {offsets = [0, 512], sizes = [16, 32], strides = [1, 1]} : vector<16x768xf32> to vector<16x32xf32>
    %52 = arith.truncf %51 : vector<16x32xf32> to vector<16x32xbf16>
    %53 = vector.extract_strided_slice %48 {offsets = [0, 0], sizes = [8, 32], strides = [1, 1]} : vector<16x32xbf16> to vector<8x32xbf16>
    %54 = vector.extract_strided_slice %50 {offsets = [0, 0], sizes = [8, 32], strides = [1, 1]} : vector<16x32xbf16> to vector<8x32xbf16>
    %cst_25 = arith.constant dense<0.000000e+00> : vector<8x8xf32>
    %55 = tpu.matmul %53, %54, %cst_25 {dimension_numbers = #tpu.dot_dimension_numbers<[1], [1], [0], [0], [0, 0, 1, 0], [], []>} : vector<8x32xbf16>, vector<8x32xbf16>, vector<8x8xf32> -> vector<8x8xf32>
    %cst_26 = arith.constant -1.000000e+30 : f32
    %56 = vector.shape_cast %40 : vector<1x8xi1> to vector<1x8xi1>
    %57 = vector.broadcast %56 : vector<1x8xi1> to vector<8x8xi1>
    %58 = vector.broadcast %cst_26 : f32 to vector<8x8xf32>
    %59 = arith.select %57, %55, %58 : vector<8x8xi1>, vector<8x8xf32>
    %cst_27 = arith.constant dense<0xFF800000> : vector<8xf32>
    %60 = vector.multi_reduction <maximumf>, %59, %cst_27 [1] : vector<8x8xf32> to vector<8xf32>
    %61 = vector.shape_cast %60 : vector<8xf32> to vector<8x1xf32>
    %62 = vector.broadcast %61 : vector<8x1xf32> to vector<8x8xf32>
    %63 = arith.subf %59, %62 : vector<8x8xf32>
    %64 = math.exp %63 : vector<8x8xf32>
    %cst_28 = arith.constant dense<0.000000e+00> : vector<8xf32>
    %65 = vector.multi_reduction <add>, %64, %cst_28 [1] : vector<8x8xf32> to vector<8xf32>
    %66 = vector.shape_cast %65 : vector<8xf32> to vector<8x1xf32>
    %67 = vector.broadcast %66 : vector<8x1xf32> to vector<8x8xf32>
    %68 = arith.divf %64, %67 : vector<8x8xf32>
    %69 = arith.truncf %68 : vector<8x8xf32> to vector<8x8xbf16>
    %70 = vector.extract_strided_slice %52 {offsets = [0, 0], sizes = [8, 32], strides = [1, 1]} : vector<16x32xbf16> to vector<8x32xbf16>
    %cst_29 = arith.constant dense<0.000000e+00> : vector<8x32xf32>
    %71 = tpu.matmul %69, %70, %cst_29 {dimension_numbers = #tpu.dot_dimension_numbers<[1], [0], [0], [1], [0, 0, 1, 1], [], []>} : vector<8x8xbf16>, vector<8x32xbf16>, vector<8x32xf32> -> vector<8x32xf32>
    %72 = vector.extract_strided_slice %48 {offsets = [8, 0], sizes = [8, 32], strides = [1, 1]} : vector<16x32xbf16> to vector<8x32xbf16>
    %73 = vector.extract_strided_slice %50 {offsets = [8, 0], sizes = [8, 32], strides = [1, 1]} : vector<16x32xbf16> to vector<8x32xbf16>
    %cst_30 = arith.constant dense<0.000000e+00> : vector<8x8xf32>
    %74 = tpu.matmul %72, %73, %cst_30 {dimension_numbers = #tpu.dot_dimension_numbers<[1], [1], [0], [0], [0, 0, 1, 0], [], []>} : vector<8x32xbf16>, vector<8x32xbf16>, vector<8x8xf32> -> vector<8x8xf32>
    %cst_31 = arith.constant -1.000000e+30 : f32
    %75 = vector.shape_cast %40 : vector<1x8xi1> to vector<1x8xi1>
    %76 = vector.broadcast %75 : vector<1x8xi1> to vector<8x8xi1>
    %77 = vector.broadcast %cst_31 : f32 to vector<8x8xf32>
    %78 = arith.select %76, %74, %77 : vector<8x8xi1>, vector<8x8xf32>
    %cst_32 = arith.constant dense<0xFF800000> : vector<8xf32>
    %79 = vector.multi_reduction <maximumf>, %78, %cst_32 [1] : vector<8x8xf32> to vector<8xf32>
    %80 = vector.shape_cast %79 : vector<8xf32> to vector<8x1xf32>
    %81 = vector.broadcast %80 : vector<8x1xf32> to vector<8x8xf32>
    %82 = arith.subf %78, %81 : vector<8x8xf32>
    %83 = math.exp %82 : vector<8x8xf32>
    %cst_33 = arith.constant dense<0.000000e+00> : vector<8xf32>
    %84 = vector.multi_reduction <add>, %83, %cst_33 [1] : vector<8x8xf32> to vector<8xf32>
    %85 = vector.shape_cast %84 : vector<8xf32> to vector<8x1xf32>
    %86 = vector.broadcast %85 : vector<8x1xf32> to vector<8x8xf32>
    %87 = arith.divf %83, %86 : vector<8x8xf32>
    %88 = arith.truncf %87 : vector<8x8xf32> to vector<8x8xbf16>
    %89 = vector.extract_strided_slice %52 {offsets = [8, 0], sizes = [8, 32], strides = [1, 1]} : vector<16x32xbf16> to vector<8x32xbf16>
    %cst_34 = arith.constant dense<0.000000e+00> : vector<8x32xf32>
    %90 = tpu.matmul %88, %89, %cst_34 {dimension_numbers = #tpu.dot_dimension_numbers<[1], [0], [0], [1], [0, 0, 1, 1], [], []>} : vector<8x8xbf16>, vector<8x32xbf16>, vector<8x32xf32> -> vector<8x32xf32>
    %91 = tpu.concatenate %71, %90 in 0 : vector<8x32xf32>, vector<8x32xf32> -> vector<16x32xf32>
    %92 = arith.truncf %91 : vector<16x32xf32> to vector<16x32xbf16>
    %93 = vector.extract_strided_slice %42 {offsets = [0, 0], sizes = [32, 256], strides = [1, 1]} : vector<256x256xbf16> to vector<32x256xbf16>
    %cst_35 = arith.constant dense<0.000000e+00> : vector<16x256xf32>
    %94 = tpu.matmul %92, %93, %cst_35 {dimension_numbers = #tpu.dot_dimension_numbers<[1], [0], [0], [1], [0, 0, 1, 1], [], []>} : vector<16x32xbf16>, vector<32x256xbf16>, vector<16x256xf32> -> vector<16x256xf32>
    %95 = arith.addf %46, %94 : vector<16x256xf32>
    %96 = vector.extract_strided_slice %37 {offsets = [0, 32], sizes = [16, 32], strides = [1, 1]} : vector<16x768xf32> to vector<16x32xf32>
    %97 = arith.truncf %96 : vector<16x32xf32> to vector<16x32xbf16>
    %98 = vector.extract_strided_slice %37 {offsets = [0, 288], sizes = [16, 32], strides = [1, 1]} : vector<16x768xf32> to vector<16x32xf32>
    %99 = arith.truncf %98 : vector<16x32xf32> to vector<16x32xbf16>
    %100 = vector.extract_strided_slice %37 {offsets = [0, 544], sizes = [16, 32], strides = [1, 1]} : vector<16x768xf32> to vector<16x32xf32>
    %101 = arith.truncf %100 : vector<16x32xf32> to vector<16x32xbf16>
    %102 = vector.extract_strided_slice %97 {offsets = [0, 0], sizes = [8, 32], strides = [1, 1]} : vector<16x32xbf16> to vector<8x32xbf16>
    %103 = vector.extract_strided_slice %99 {offsets = [0, 0], sizes = [8, 32], strides = [1, 1]} : vector<16x32xbf16> to vector<8x32xbf16>
    %cst_36 = arith.constant dense<0.000000e+00> : vector<8x8xf32>
    %104 = tpu.matmul %102, %103, %cst_36 {dimension_numbers = #tpu.dot_dimension_numbers<[1], [1], [0], [0], [0, 0, 1, 0], [], []>} : vector<8x32xbf16>, vector<8x32xbf16>, vector<8x8xf32> -> vector<8x8xf32>
    %cst_37 = arith.constant -1.000000e+30 : f32
    %105 = vector.shape_cast %40 : vector<1x8xi1> to vector<1x8xi1>
    %106 = vector.broadcast %105 : vector<1x8xi1> to vector<8x8xi1>
    %107 = vector.broadcast %cst_37 : f32 to vector<8x8xf32>
    %108 = arith.select %106, %104, %107 : vector<8x8xi1>, vector<8x8xf32>
    %cst_38 = arith.constant dense<0xFF800000> : vector<8xf32>
    %109 = vector.multi_reduction <maximumf>, %108, %cst_38 [1] : vector<8x8xf32> to vector<8xf32>
    %110 = vector.shape_cast %109 : vector<8xf32> to vector<8x1xf32>
    %111 = vector.broadcast %110 : vector<8x1xf32> to vector<8x8xf32>
    %112 = arith.subf %108, %111 : vector<8x8xf32>
    %113 = math.exp %112 : vector<8x8xf32>
    %cst_39 = arith.constant dense<0.000000e+00> : vector<8xf32>
    %114 = vector.multi_reduction <add>, %113, %cst_39 [1] : vector<8x8xf32> to vector<8xf32>
    %115 = vector.shape_cast %114 : vector<8xf32> to vector<8x1xf32>
    %116 = vector.broadcast %115 : vector<8x1xf32> to vector<8x8xf32>
    %117 = arith.divf %113, %116 : vector<8x8xf32>
    %118 = arith.truncf %117 : vector<8x8xf32> to vector<8x8xbf16>
    %119 = vector.extract_strided_slice %101 {offsets = [0, 0], sizes = [8, 32], strides = [1, 1]} : vector<16x32xbf16> to vector<8x32xbf16>
    %cst_40 = arith.constant dense<0.000000e+00> : vector<8x32xf32>
    %120 = tpu.matmul %118, %119, %cst_40 {dimension_numbers = #tpu.dot_dimension_numbers<[1], [0], [0], [1], [0, 0, 1, 1], [], []>} : vector<8x8xbf16>, vector<8x32xbf16>, vector<8x32xf32> -> vector<8x32xf32>
    %121 = vector.extract_strided_slice %97 {offsets = [8, 0], sizes = [8, 32], strides = [1, 1]} : vector<16x32xbf16> to vector<8x32xbf16>
    %122 = vector.extract_strided_slice %99 {offsets = [8, 0], sizes = [8, 32], strides = [1, 1]} : vector<16x32xbf16> to vector<8x32xbf16>
    %cst_41 = arith.constant dense<0.000000e+00> : vector<8x8xf32>
    %123 = tpu.matmul %121, %122, %cst_41 {dimension_numbers = #tpu.dot_dimension_numbers<[1], [1], [0], [0], [0, 0, 1, 0], [], []>} : vector<8x32xbf16>, vector<8x32xbf16>, vector<8x8xf32> -> vector<8x8xf32>
    %cst_42 = arith.constant -1.000000e+30 : f32
    %124 = vector.shape_cast %40 : vector<1x8xi1> to vector<1x8xi1>
    %125 = vector.broadcast %124 : vector<1x8xi1> to vector<8x8xi1>
    %126 = vector.broadcast %cst_42 : f32 to vector<8x8xf32>
    %127 = arith.select %125, %123, %126 : vector<8x8xi1>, vector<8x8xf32>
    %cst_43 = arith.constant dense<0xFF800000> : vector<8xf32>
    %128 = vector.multi_reduction <maximumf>, %127, %cst_43 [1] : vector<8x8xf32> to vector<8xf32>
    %129 = vector.shape_cast %128 : vector<8xf32> to vector<8x1xf32>
    %130 = vector.broadcast %129 : vector<8x1xf32> to vector<8x8xf32>
    %131 = arith.subf %127, %130 : vector<8x8xf32>
    %132 = math.exp %131 : vector<8x8xf32>
    %cst_44 = arith.constant dense<0.000000e+00> : vector<8xf32>
    %133 = vector.multi_reduction <add>, %132, %cst_44 [1] : vector<8x8xf32> to vector<8xf32>
    %134 = vector.shape_cast %133 : vector<8xf32> to vector<8x1xf32>
    %135 = vector.broadcast %134 : vector<8x1xf32> to vector<8x8xf32>
    %136 = arith.divf %132, %135 : vector<8x8xf32>
    %137 = arith.truncf %136 : vector<8x8xf32> to vector<8x8xbf16>
    %138 = vector.extract_strided_slice %101 {offsets = [8, 0], sizes = [8, 32], strides = [1, 1]} : vector<16x32xbf16> to vector<8x32xbf16>
    %cst_45 = arith.constant dense<0.000000e+00> : vector<8x32xf32>
    %139 = tpu.matmul %137, %138, %cst_45 {dimension_numbers = #tpu.dot_dimension_numbers<[1], [0], [0], [1], [0, 0, 1, 1], [], []>} : vector<8x8xbf16>, vector<8x32xbf16>, vector<8x32xf32> -> vector<8x32xf32>
    %140 = tpu.concatenate %120, %139 in 0 : vector<8x32xf32>, vector<8x32xf32> -> vector<16x32xf32>
    %141 = arith.truncf %140 : vector<16x32xf32> to vector<16x32xbf16>
    %142 = vector.extract_strided_slice %42 {offsets = [32, 0], sizes = [32, 256], strides = [1, 1]} : vector<256x256xbf16> to vector<32x256xbf16>
    %cst_46 = arith.constant dense<0.000000e+00> : vector<16x256xf32>
    %143 = tpu.matmul %141, %142, %cst_46 {dimension_numbers = #tpu.dot_dimension_numbers<[1], [0], [0], [1], [0, 0, 1, 1], [], []>} : vector<16x32xbf16>, vector<32x256xbf16>, vector<16x256xf32> -> vector<16x256xf32>
    %144 = arith.addf %95, %143 : vector<16x256xf32>
    %145 = vector.extract_strided_slice %37 {offsets = [0, 64], sizes = [16, 32], strides = [1, 1]} : vector<16x768xf32> to vector<16x32xf32>
    %146 = arith.truncf %145 : vector<16x32xf32> to vector<16x32xbf16>
    %147 = vector.extract_strided_slice %37 {offsets = [0, 320], sizes = [16, 32], strides = [1, 1]} : vector<16x768xf32> to vector<16x32xf32>
    %148 = arith.truncf %147 : vector<16x32xf32> to vector<16x32xbf16>
    %149 = vector.extract_strided_slice %37 {offsets = [0, 576], sizes = [16, 32], strides = [1, 1]} : vector<16x768xf32> to vector<16x32xf32>
    %150 = arith.truncf %149 : vector<16x32xf32> to vector<16x32xbf16>
    %151 = vector.extract_strided_slice %146 {offsets = [0, 0], sizes = [8, 32], strides = [1, 1]} : vector<16x32xbf16> to vector<8x32xbf16>
    %152 = vector.extract_strided_slice %148 {offsets = [0, 0], sizes = [8, 32], strides = [1, 1]} : vector<16x32xbf16> to vector<8x32xbf16>
    %cst_47 = arith.constant dense<0.000000e+00> : vector<8x8xf32>
    %153 = tpu.matmul %151, %152, %cst_47 {dimension_numbers = #tpu.dot_dimension_numbers<[1], [1], [0], [0], [0, 0, 1, 0], [], []>} : vector<8x32xbf16>, vector<8x32xbf16>, vector<8x8xf32> -> vector<8x8xf32>
    %cst_48 = arith.constant -1.000000e+30 : f32
    %154 = vector.shape_cast %40 : vector<1x8xi1> to vector<1x8xi1>
    %155 = vector.broadcast %154 : vector<1x8xi1> to vector<8x8xi1>
    %156 = vector.broadcast %cst_48 : f32 to vector<8x8xf32>
    %157 = arith.select %155, %153, %156 : vector<8x8xi1>, vector<8x8xf32>
    %cst_49 = arith.constant dense<0xFF800000> : vector<8xf32>
    %158 = vector.multi_reduction <maximumf>, %157, %cst_49 [1] : vector<8x8xf32> to vector<8xf32>
    %159 = vector.shape_cast %158 : vector<8xf32> to vector<8x1xf32>
    %160 = vector.broadcast %159 : vector<8x1xf32> to vector<8x8xf32>
    %161 = arith.subf %157, %160 : vector<8x8xf32>
    %162 = math.exp %161 : vector<8x8xf32>
    %cst_50 = arith.constant dense<0.000000e+00> : vector<8xf32>
    %163 = vector.multi_reduction <add>, %162, %cst_50 [1] : vector<8x8xf32> to vector<8xf32>
    %164 = vector.shape_cast %163 : vector<8xf32> to vector<8x1xf32>
    %165 = vector.broadcast %164 : vector<8x1xf32> to vector<8x8xf32>
    %166 = arith.divf %162, %165 : vector<8x8xf32>
    %167 = arith.truncf %166 : vector<8x8xf32> to vector<8x8xbf16>
    %168 = vector.extract_strided_slice %150 {offsets = [0, 0], sizes = [8, 32], strides = [1, 1]} : vector<16x32xbf16> to vector<8x32xbf16>
    %cst_51 = arith.constant dense<0.000000e+00> : vector<8x32xf32>
    %169 = tpu.matmul %167, %168, %cst_51 {dimension_numbers = #tpu.dot_dimension_numbers<[1], [0], [0], [1], [0, 0, 1, 1], [], []>} : vector<8x8xbf16>, vector<8x32xbf16>, vector<8x32xf32> -> vector<8x32xf32>
    %170 = vector.extract_strided_slice %146 {offsets = [8, 0], sizes = [8, 32], strides = [1, 1]} : vector<16x32xbf16> to vector<8x32xbf16>
    %171 = vector.extract_strided_slice %148 {offsets = [8, 0], sizes = [8, 32], strides = [1, 1]} : vector<16x32xbf16> to vector<8x32xbf16>
    %cst_52 = arith.constant dense<0.000000e+00> : vector<8x8xf32>
    %172 = tpu.matmul %170, %171, %cst_52 {dimension_numbers = #tpu.dot_dimension_numbers<[1], [1], [0], [0], [0, 0, 1, 0], [], []>} : vector<8x32xbf16>, vector<8x32xbf16>, vector<8x8xf32> -> vector<8x8xf32>
    %cst_53 = arith.constant -1.000000e+30 : f32
    %173 = vector.shape_cast %40 : vector<1x8xi1> to vector<1x8xi1>
    %174 = vector.broadcast %173 : vector<1x8xi1> to vector<8x8xi1>
    %175 = vector.broadcast %cst_53 : f32 to vector<8x8xf32>
    %176 = arith.select %174, %172, %175 : vector<8x8xi1>, vector<8x8xf32>
    %cst_54 = arith.constant dense<0xFF800000> : vector<8xf32>
    %177 = vector.multi_reduction <maximumf>, %176, %cst_54 [1] : vector<8x8xf32> to vector<8xf32>
    %178 = vector.shape_cast %177 : vector<8xf32> to vector<8x1xf32>
    %179 = vector.broadcast %178 : vector<8x1xf32> to vector<8x8xf32>
    %180 = arith.subf %176, %179 : vector<8x8xf32>
    %181 = math.exp %180 : vector<8x8xf32>
    %cst_55 = arith.constant dense<0.000000e+00> : vector<8xf32>
    %182 = vector.multi_reduction <add>, %181, %cst_55 [1] : vector<8x8xf32> to vector<8xf32>
    %183 = vector.shape_cast %182 : vector<8xf32> to vector<8x1xf32>
    %184 = vector.broadcast %183 : vector<8x1xf32> to vector<8x8xf32>
    %185 = arith.divf %181, %184 : vector<8x8xf32>
    %186 = arith.truncf %185 : vector<8x8xf32> to vector<8x8xbf16>
    %187 = vector.extract_strided_slice %150 {offsets = [8, 0], sizes = [8, 32], strides = [1, 1]} : vector<16x32xbf16> to vector<8x32xbf16>
    %cst_56 = arith.constant dense<0.000000e+00> : vector<8x32xf32>
    %188 = tpu.matmul %186, %187, %cst_56 {dimension_numbers = #tpu.dot_dimension_numbers<[1], [0], [0], [1], [0, 0, 1, 1], [], []>} : vector<8x8xbf16>, vector<8x32xbf16>, vector<8x32xf32> -> vector<8x32xf32>
    %189 = tpu.concatenate %169, %188 in 0 : vector<8x32xf32>, vector<8x32xf32> -> vector<16x32xf32>
    %190 = arith.truncf %189 : vector<16x32xf32> to vector<16x32xbf16>
    %191 = vector.extract_strided_slice %42 {offsets = [64, 0], sizes = [32, 256], strides = [1, 1]} : vector<256x256xbf16> to vector<32x256xbf16>
    %cst_57 = arith.constant dense<0.000000e+00> : vector<16x256xf32>
    %192 = tpu.matmul %190, %191, %cst_57 {dimension_numbers = #tpu.dot_dimension_numbers<[1], [0], [0], [1], [0, 0, 1, 1], [], []>} : vector<16x32xbf16>, vector<32x256xbf16>, vector<16x256xf32> -> vector<16x256xf32>
    %193 = arith.addf %144, %192 : vector<16x256xf32>
    %194 = vector.extract_strided_slice %37 {offsets = [0, 96], sizes = [16, 32], strides = [1, 1]} : vector<16x768xf32> to vector<16x32xf32>
    %195 = arith.truncf %194 : vector<16x32xf32> to vector<16x32xbf16>
    %196 = vector.extract_strided_slice %37 {offsets = [0, 352], sizes = [16, 32], strides = [1, 1]} : vector<16x768xf32> to vector<16x32xf32>
    %197 = arith.truncf %196 : vector<16x32xf32> to vector<16x32xbf16>
    %198 = vector.extract_strided_slice %37 {offsets = [0, 608], sizes = [16, 32], strides = [1, 1]} : vector<16x768xf32> to vector<16x32xf32>
    %199 = arith.truncf %198 : vector<16x32xf32> to vector<16x32xbf16>
    %200 = vector.extract_strided_slice %195 {offsets = [0, 0], sizes = [8, 32], strides = [1, 1]} : vector<16x32xbf16> to vector<8x32xbf16>
    %201 = vector.extract_strided_slice %197 {offsets = [0, 0], sizes = [8, 32], strides = [1, 1]} : vector<16x32xbf16> to vector<8x32xbf16>
    %cst_58 = arith.constant dense<0.000000e+00> : vector<8x8xf32>
    %202 = tpu.matmul %200, %201, %cst_58 {dimension_numbers = #tpu.dot_dimension_numbers<[1], [1], [0], [0], [0, 0, 1, 0], [], []>} : vector<8x32xbf16>, vector<8x32xbf16>, vector<8x8xf32> -> vector<8x8xf32>
    %cst_59 = arith.constant -1.000000e+30 : f32
    %203 = vector.shape_cast %40 : vector<1x8xi1> to vector<1x8xi1>
    %204 = vector.broadcast %203 : vector<1x8xi1> to vector<8x8xi1>
    %205 = vector.broadcast %cst_59 : f32 to vector<8x8xf32>
    %206 = arith.select %204, %202, %205 : vector<8x8xi1>, vector<8x8xf32>
    %cst_60 = arith.constant dense<0xFF800000> : vector<8xf32>
    %207 = vector.multi_reduction <maximumf>, %206, %cst_60 [1] : vector<8x8xf32> to vector<8xf32>
    %208 = vector.shape_cast %207 : vector<8xf32> to vector<8x1xf32>
    %209 = vector.broadcast %208 : vector<8x1xf32> to vector<8x8xf32>
    %210 = arith.subf %206, %209 : vector<8x8xf32>
    %211 = math.exp %210 : vector<8x8xf32>
    %cst_61 = arith.constant dense<0.000000e+00> : vector<8xf32>
    %212 = vector.multi_reduction <add>, %211, %cst_61 [1] : vector<8x8xf32> to vector<8xf32>
    %213 = vector.shape_cast %212 : vector<8xf32> to vector<8x1xf32>
    %214 = vector.broadcast %213 : vector<8x1xf32> to vector<8x8xf32>
    %215 = arith.divf %211, %214 : vector<8x8xf32>
    %216 = arith.truncf %215 : vector<8x8xf32> to vector<8x8xbf16>
    %217 = vector.extract_strided_slice %199 {offsets = [0, 0], sizes = [8, 32], strides = [1, 1]} : vector<16x32xbf16> to vector<8x32xbf16>
    %cst_62 = arith.constant dense<0.000000e+00> : vector<8x32xf32>
    %218 = tpu.matmul %216, %217, %cst_62 {dimension_numbers = #tpu.dot_dimension_numbers<[1], [0], [0], [1], [0, 0, 1, 1], [], []>} : vector<8x8xbf16>, vector<8x32xbf16>, vector<8x32xf32> -> vector<8x32xf32>
    %219 = vector.extract_strided_slice %195 {offsets = [8, 0], sizes = [8, 32], strides = [1, 1]} : vector<16x32xbf16> to vector<8x32xbf16>
    %220 = vector.extract_strided_slice %197 {offsets = [8, 0], sizes = [8, 32], strides = [1, 1]} : vector<16x32xbf16> to vector<8x32xbf16>
    %cst_63 = arith.constant dense<0.000000e+00> : vector<8x8xf32>
    %221 = tpu.matmul %219, %220, %cst_63 {dimension_numbers = #tpu.dot_dimension_numbers<[1], [1], [0], [0], [0, 0, 1, 0], [], []>} : vector<8x32xbf16>, vector<8x32xbf16>, vector<8x8xf32> -> vector<8x8xf32>
    %cst_64 = arith.constant -1.000000e+30 : f32
    %222 = vector.shape_cast %40 : vector<1x8xi1> to vector<1x8xi1>
    %223 = vector.broadcast %222 : vector<1x8xi1> to vector<8x8xi1>
    %224 = vector.broadcast %cst_64 : f32 to vector<8x8xf32>
    %225 = arith.select %223, %221, %224 : vector<8x8xi1>, vector<8x8xf32>
    %cst_65 = arith.constant dense<0xFF800000> : vector<8xf32>
    %226 = vector.multi_reduction <maximumf>, %225, %cst_65 [1] : vector<8x8xf32> to vector<8xf32>
    %227 = vector.shape_cast %226 : vector<8xf32> to vector<8x1xf32>
    %228 = vector.broadcast %227 : vector<8x1xf32> to vector<8x8xf32>
    %229 = arith.subf %225, %228 : vector<8x8xf32>
    %230 = math.exp %229 : vector<8x8xf32>
    %cst_66 = arith.constant dense<0.000000e+00> : vector<8xf32>
    %231 = vector.multi_reduction <add>, %230, %cst_66 [1] : vector<8x8xf32> to vector<8xf32>
    %232 = vector.shape_cast %231 : vector<8xf32> to vector<8x1xf32>
    %233 = vector.broadcast %232 : vector<8x1xf32> to vector<8x8xf32>
    %234 = arith.divf %230, %233 : vector<8x8xf32>
    %235 = arith.truncf %234 : vector<8x8xf32> to vector<8x8xbf16>
    %236 = vector.extract_strided_slice %199 {offsets = [8, 0], sizes = [8, 32], strides = [1, 1]} : vector<16x32xbf16> to vector<8x32xbf16>
    %cst_67 = arith.constant dense<0.000000e+00> : vector<8x32xf32>
    %237 = tpu.matmul %235, %236, %cst_67 {dimension_numbers = #tpu.dot_dimension_numbers<[1], [0], [0], [1], [0, 0, 1, 1], [], []>} : vector<8x8xbf16>, vector<8x32xbf16>, vector<8x32xf32> -> vector<8x32xf32>
    %238 = tpu.concatenate %218, %237 in 0 : vector<8x32xf32>, vector<8x32xf32> -> vector<16x32xf32>
    %239 = arith.truncf %238 : vector<16x32xf32> to vector<16x32xbf16>
    %240 = vector.extract_strided_slice %42 {offsets = [96, 0], sizes = [32, 256], strides = [1, 1]} : vector<256x256xbf16> to vector<32x256xbf16>
    %cst_68 = arith.constant dense<0.000000e+00> : vector<16x256xf32>
    %241 = tpu.matmul %239, %240, %cst_68 {dimension_numbers = #tpu.dot_dimension_numbers<[1], [0], [0], [1], [0, 0, 1, 1], [], []>} : vector<16x32xbf16>, vector<32x256xbf16>, vector<16x256xf32> -> vector<16x256xf32>
    %242 = arith.addf %193, %241 : vector<16x256xf32>
    %243 = vector.extract_strided_slice %37 {offsets = [0, 128], sizes = [16, 32], strides = [1, 1]} : vector<16x768xf32> to vector<16x32xf32>
    %244 = arith.truncf %243 : vector<16x32xf32> to vector<16x32xbf16>
    %245 = vector.extract_strided_slice %37 {offsets = [0, 384], sizes = [16, 32], strides = [1, 1]} : vector<16x768xf32> to vector<16x32xf32>
    %246 = arith.truncf %245 : vector<16x32xf32> to vector<16x32xbf16>
    %247 = vector.extract_strided_slice %37 {offsets = [0, 640], sizes = [16, 32], strides = [1, 1]} : vector<16x768xf32> to vector<16x32xf32>
    %248 = arith.truncf %247 : vector<16x32xf32> to vector<16x32xbf16>
    %249 = vector.extract_strided_slice %244 {offsets = [0, 0], sizes = [8, 32], strides = [1, 1]} : vector<16x32xbf16> to vector<8x32xbf16>
    %250 = vector.extract_strided_slice %246 {offsets = [0, 0], sizes = [8, 32], strides = [1, 1]} : vector<16x32xbf16> to vector<8x32xbf16>
    %cst_69 = arith.constant dense<0.000000e+00> : vector<8x8xf32>
    %251 = tpu.matmul %249, %250, %cst_69 {dimension_numbers = #tpu.dot_dimension_numbers<[1], [1], [0], [0], [0, 0, 1, 0], [], []>} : vector<8x32xbf16>, vector<8x32xbf16>, vector<8x8xf32> -> vector<8x8xf32>
    %cst_70 = arith.constant -1.000000e+30 : f32
    %252 = vector.shape_cast %40 : vector<1x8xi1> to vector<1x8xi1>
    %253 = vector.broadcast %252 : vector<1x8xi1> to vector<8x8xi1>
    %254 = vector.broadcast %cst_70 : f32 to vector<8x8xf32>
    %255 = arith.select %253, %251, %254 : vector<8x8xi1>, vector<8x8xf32>
    %cst_71 = arith.constant dense<0xFF800000> : vector<8xf32>
    %256 = vector.multi_reduction <maximumf>, %255, %cst_71 [1] : vector<8x8xf32> to vector<8xf32>
    %257 = vector.shape_cast %256 : vector<8xf32> to vector<8x1xf32>
    %258 = vector.broadcast %257 : vector<8x1xf32> to vector<8x8xf32>
    %259 = arith.subf %255, %258 : vector<8x8xf32>
    %260 = math.exp %259 : vector<8x8xf32>
    %cst_72 = arith.constant dense<0.000000e+00> : vector<8xf32>
    %261 = vector.multi_reduction <add>, %260, %cst_72 [1] : vector<8x8xf32> to vector<8xf32>
    %262 = vector.shape_cast %261 : vector<8xf32> to vector<8x1xf32>
    %263 = vector.broadcast %262 : vector<8x1xf32> to vector<8x8xf32>
    %264 = arith.divf %260, %263 : vector<8x8xf32>
    %265 = arith.truncf %264 : vector<8x8xf32> to vector<8x8xbf16>
    %266 = vector.extract_strided_slice %248 {offsets = [0, 0], sizes = [8, 32], strides = [1, 1]} : vector<16x32xbf16> to vector<8x32xbf16>
    %cst_73 = arith.constant dense<0.000000e+00> : vector<8x32xf32>
    %267 = tpu.matmul %265, %266, %cst_73 {dimension_numbers = #tpu.dot_dimension_numbers<[1], [0], [0], [1], [0, 0, 1, 1], [], []>} : vector<8x8xbf16>, vector<8x32xbf16>, vector<8x32xf32> -> vector<8x32xf32>
    %268 = vector.extract_strided_slice %244 {offsets = [8, 0], sizes = [8, 32], strides = [1, 1]} : vector<16x32xbf16> to vector<8x32xbf16>
    %269 = vector.extract_strided_slice %246 {offsets = [8, 0], sizes = [8, 32], strides = [1, 1]} : vector<16x32xbf16> to vector<8x32xbf16>
    %cst_74 = arith.constant dense<0.000000e+00> : vector<8x8xf32>
    %270 = tpu.matmul %268, %269, %cst_74 {dimension_numbers = #tpu.dot_dimension_numbers<[1], [1], [0], [0], [0, 0, 1, 0], [], []>} : vector<8x32xbf16>, vector<8x32xbf16>, vector<8x8xf32> -> vector<8x8xf32>
    %cst_75 = arith.constant -1.000000e+30 : f32
    %271 = vector.shape_cast %40 : vector<1x8xi1> to vector<1x8xi1>
    %272 = vector.broadcast %271 : vector<1x8xi1> to vector<8x8xi1>
    %273 = vector.broadcast %cst_75 : f32 to vector<8x8xf32>
    %274 = arith.select %272, %270, %273 : vector<8x8xi1>, vector<8x8xf32>
    %cst_76 = arith.constant dense<0xFF800000> : vector<8xf32>
    %275 = vector.multi_reduction <maximumf>, %274, %cst_76 [1] : vector<8x8xf32> to vector<8xf32>
    %276 = vector.shape_cast %275 : vector<8xf32> to vector<8x1xf32>
    %277 = vector.broadcast %276 : vector<8x1xf32> to vector<8x8xf32>
    %278 = arith.subf %274, %277 : vector<8x8xf32>
    %279 = math.exp %278 : vector<8x8xf32>
    %cst_77 = arith.constant dense<0.000000e+00> : vector<8xf32>
    %280 = vector.multi_reduction <add>, %279, %cst_77 [1] : vector<8x8xf32> to vector<8xf32>
    %281 = vector.shape_cast %280 : vector<8xf32> to vector<8x1xf32>
    %282 = vector.broadcast %281 : vector<8x1xf32> to vector<8x8xf32>
    %283 = arith.divf %279, %282 : vector<8x8xf32>
    %284 = arith.truncf %283 : vector<8x8xf32> to vector<8x8xbf16>
    %285 = vector.extract_strided_slice %248 {offsets = [8, 0], sizes = [8, 32], strides = [1, 1]} : vector<16x32xbf16> to vector<8x32xbf16>
    %cst_78 = arith.constant dense<0.000000e+00> : vector<8x32xf32>
    %286 = tpu.matmul %284, %285, %cst_78 {dimension_numbers = #tpu.dot_dimension_numbers<[1], [0], [0], [1], [0, 0, 1, 1], [], []>} : vector<8x8xbf16>, vector<8x32xbf16>, vector<8x32xf32> -> vector<8x32xf32>
    %287 = tpu.concatenate %267, %286 in 0 : vector<8x32xf32>, vector<8x32xf32> -> vector<16x32xf32>
    %288 = arith.truncf %287 : vector<16x32xf32> to vector<16x32xbf16>
    %289 = vector.extract_strided_slice %42 {offsets = [128, 0], sizes = [32, 256], strides = [1, 1]} : vector<256x256xbf16> to vector<32x256xbf16>
    %cst_79 = arith.constant dense<0.000000e+00> : vector<16x256xf32>
    %290 = tpu.matmul %288, %289, %cst_79 {dimension_numbers = #tpu.dot_dimension_numbers<[1], [0], [0], [1], [0, 0, 1, 1], [], []>} : vector<16x32xbf16>, vector<32x256xbf16>, vector<16x256xf32> -> vector<16x256xf32>
    %291 = arith.addf %242, %290 : vector<16x256xf32>
    %292 = vector.extract_strided_slice %37 {offsets = [0, 160], sizes = [16, 32], strides = [1, 1]} : vector<16x768xf32> to vector<16x32xf32>
    %293 = arith.truncf %292 : vector<16x32xf32> to vector<16x32xbf16>
    %294 = vector.extract_strided_slice %37 {offsets = [0, 416], sizes = [16, 32], strides = [1, 1]} : vector<16x768xf32> to vector<16x32xf32>
    %295 = arith.truncf %294 : vector<16x32xf32> to vector<16x32xbf16>
    %296 = vector.extract_strided_slice %37 {offsets = [0, 672], sizes = [16, 32], strides = [1, 1]} : vector<16x768xf32> to vector<16x32xf32>
    %297 = arith.truncf %296 : vector<16x32xf32> to vector<16x32xbf16>
    %298 = vector.extract_strided_slice %293 {offsets = [0, 0], sizes = [8, 32], strides = [1, 1]} : vector<16x32xbf16> to vector<8x32xbf16>
    %299 = vector.extract_strided_slice %295 {offsets = [0, 0], sizes = [8, 32], strides = [1, 1]} : vector<16x32xbf16> to vector<8x32xbf16>
    %cst_80 = arith.constant dense<0.000000e+00> : vector<8x8xf32>
    %300 = tpu.matmul %298, %299, %cst_80 {dimension_numbers = #tpu.dot_dimension_numbers<[1], [1], [0], [0], [0, 0, 1, 0], [], []>} : vector<8x32xbf16>, vector<8x32xbf16>, vector<8x8xf32> -> vector<8x8xf32>
    %cst_81 = arith.constant -1.000000e+30 : f32
    %301 = vector.shape_cast %40 : vector<1x8xi1> to vector<1x8xi1>
    %302 = vector.broadcast %301 : vector<1x8xi1> to vector<8x8xi1>
    %303 = vector.broadcast %cst_81 : f32 to vector<8x8xf32>
    %304 = arith.select %302, %300, %303 : vector<8x8xi1>, vector<8x8xf32>
    %cst_82 = arith.constant dense<0xFF800000> : vector<8xf32>
    %305 = vector.multi_reduction <maximumf>, %304, %cst_82 [1] : vector<8x8xf32> to vector<8xf32>
    %306 = vector.shape_cast %305 : vector<8xf32> to vector<8x1xf32>
    %307 = vector.broadcast %306 : vector<8x1xf32> to vector<8x8xf32>
    %308 = arith.subf %304, %307 : vector<8x8xf32>
    %309 = math.exp %308 : vector<8x8xf32>
    %cst_83 = arith.constant dense<0.000000e+00> : vector<8xf32>
    %310 = vector.multi_reduction <add>, %309, %cst_83 [1] : vector<8x8xf32> to vector<8xf32>
    %311 = vector.shape_cast %310 : vector<8xf32> to vector<8x1xf32>
    %312 = vector.broadcast %311 : vector<8x1xf32> to vector<8x8xf32>
    %313 = arith.divf %309, %312 : vector<8x8xf32>
    %314 = arith.truncf %313 : vector<8x8xf32> to vector<8x8xbf16>
    %315 = vector.extract_strided_slice %297 {offsets = [0, 0], sizes = [8, 32], strides = [1, 1]} : vector<16x32xbf16> to vector<8x32xbf16>
    %cst_84 = arith.constant dense<0.000000e+00> : vector<8x32xf32>
    %316 = tpu.matmul %314, %315, %cst_84 {dimension_numbers = #tpu.dot_dimension_numbers<[1], [0], [0], [1], [0, 0, 1, 1], [], []>} : vector<8x8xbf16>, vector<8x32xbf16>, vector<8x32xf32> -> vector<8x32xf32>
    %317 = vector.extract_strided_slice %293 {offsets = [8, 0], sizes = [8, 32], strides = [1, 1]} : vector<16x32xbf16> to vector<8x32xbf16>
    %318 = vector.extract_strided_slice %295 {offsets = [8, 0], sizes = [8, 32], strides = [1, 1]} : vector<16x32xbf16> to vector<8x32xbf16>
    %cst_85 = arith.constant dense<0.000000e+00> : vector<8x8xf32>
    %319 = tpu.matmul %317, %318, %cst_85 {dimension_numbers = #tpu.dot_dimension_numbers<[1], [1], [0], [0], [0, 0, 1, 0], [], []>} : vector<8x32xbf16>, vector<8x32xbf16>, vector<8x8xf32> -> vector<8x8xf32>
    %cst_86 = arith.constant -1.000000e+30 : f32
    %320 = vector.shape_cast %40 : vector<1x8xi1> to vector<1x8xi1>
    %321 = vector.broadcast %320 : vector<1x8xi1> to vector<8x8xi1>
    %322 = vector.broadcast %cst_86 : f32 to vector<8x8xf32>
    %323 = arith.select %321, %319, %322 : vector<8x8xi1>, vector<8x8xf32>
    %cst_87 = arith.constant dense<0xFF800000> : vector<8xf32>
    %324 = vector.multi_reduction <maximumf>, %323, %cst_87 [1] : vector<8x8xf32> to vector<8xf32>
    %325 = vector.shape_cast %324 : vector<8xf32> to vector<8x1xf32>
    %326 = vector.broadcast %325 : vector<8x1xf32> to vector<8x8xf32>
    %327 = arith.subf %323, %326 : vector<8x8xf32>
    %328 = math.exp %327 : vector<8x8xf32>
    %cst_88 = arith.constant dense<0.000000e+00> : vector<8xf32>
    %329 = vector.multi_reduction <add>, %328, %cst_88 [1] : vector<8x8xf32> to vector<8xf32>
    %330 = vector.shape_cast %329 : vector<8xf32> to vector<8x1xf32>
    %331 = vector.broadcast %330 : vector<8x1xf32> to vector<8x8xf32>
    %332 = arith.divf %328, %331 : vector<8x8xf32>
    %333 = arith.truncf %332 : vector<8x8xf32> to vector<8x8xbf16>
    %334 = vector.extract_strided_slice %297 {offsets = [8, 0], sizes = [8, 32], strides = [1, 1]} : vector<16x32xbf16> to vector<8x32xbf16>
    %cst_89 = arith.constant dense<0.000000e+00> : vector<8x32xf32>
    %335 = tpu.matmul %333, %334, %cst_89 {dimension_numbers = #tpu.dot_dimension_numbers<[1], [0], [0], [1], [0, 0, 1, 1], [], []>} : vector<8x8xbf16>, vector<8x32xbf16>, vector<8x32xf32> -> vector<8x32xf32>
    %336 = tpu.concatenate %316, %335 in 0 : vector<8x32xf32>, vector<8x32xf32> -> vector<16x32xf32>
    %337 = arith.truncf %336 : vector<16x32xf32> to vector<16x32xbf16>
    %338 = vector.extract_strided_slice %42 {offsets = [160, 0], sizes = [32, 256], strides = [1, 1]} : vector<256x256xbf16> to vector<32x256xbf16>
    %cst_90 = arith.constant dense<0.000000e+00> : vector<16x256xf32>
    %339 = tpu.matmul %337, %338, %cst_90 {dimension_numbers = #tpu.dot_dimension_numbers<[1], [0], [0], [1], [0, 0, 1, 1], [], []>} : vector<16x32xbf16>, vector<32x256xbf16>, vector<16x256xf32> -> vector<16x256xf32>
    %340 = arith.addf %291, %339 : vector<16x256xf32>
    %341 = vector.extract_strided_slice %37 {offsets = [0, 192], sizes = [16, 32], strides = [1, 1]} : vector<16x768xf32> to vector<16x32xf32>
    %342 = arith.truncf %341 : vector<16x32xf32> to vector<16x32xbf16>
    %343 = vector.extract_strided_slice %37 {offsets = [0, 448], sizes = [16, 32], strides = [1, 1]} : vector<16x768xf32> to vector<16x32xf32>
    %344 = arith.truncf %343 : vector<16x32xf32> to vector<16x32xbf16>
    %345 = vector.extract_strided_slice %37 {offsets = [0, 704], sizes = [16, 32], strides = [1, 1]} : vector<16x768xf32> to vector<16x32xf32>
    %346 = arith.truncf %345 : vector<16x32xf32> to vector<16x32xbf16>
    %347 = vector.extract_strided_slice %342 {offsets = [0, 0], sizes = [8, 32], strides = [1, 1]} : vector<16x32xbf16> to vector<8x32xbf16>
    %348 = vector.extract_strided_slice %344 {offsets = [0, 0], sizes = [8, 32], strides = [1, 1]} : vector<16x32xbf16> to vector<8x32xbf16>
    %cst_91 = arith.constant dense<0.000000e+00> : vector<8x8xf32>
    %349 = tpu.matmul %347, %348, %cst_91 {dimension_numbers = #tpu.dot_dimension_numbers<[1], [1], [0], [0], [0, 0, 1, 0], [], []>} : vector<8x32xbf16>, vector<8x32xbf16>, vector<8x8xf32> -> vector<8x8xf32>
    %cst_92 = arith.constant -1.000000e+30 : f32
    %350 = vector.shape_cast %40 : vector<1x8xi1> to vector<1x8xi1>
    %351 = vector.broadcast %350 : vector<1x8xi1> to vector<8x8xi1>
    %352 = vector.broadcast %cst_92 : f32 to vector<8x8xf32>
    %353 = arith.select %351, %349, %352 : vector<8x8xi1>, vector<8x8xf32>
    %cst_93 = arith.constant dense<0xFF800000> : vector<8xf32>
    %354 = vector.multi_reduction <maximumf>, %353, %cst_93 [1] : vector<8x8xf32> to vector<8xf32>
    %355 = vector.shape_cast %354 : vector<8xf32> to vector<8x1xf32>
    %356 = vector.broadcast %355 : vector<8x1xf32> to vector<8x8xf32>
    %357 = arith.subf %353, %356 : vector<8x8xf32>
    %358 = math.exp %357 : vector<8x8xf32>
    %cst_94 = arith.constant dense<0.000000e+00> : vector<8xf32>
    %359 = vector.multi_reduction <add>, %358, %cst_94 [1] : vector<8x8xf32> to vector<8xf32>
    %360 = vector.shape_cast %359 : vector<8xf32> to vector<8x1xf32>
    %361 = vector.broadcast %360 : vector<8x1xf32> to vector<8x8xf32>
    %362 = arith.divf %358, %361 : vector<8x8xf32>
    %363 = arith.truncf %362 : vector<8x8xf32> to vector<8x8xbf16>
    %364 = vector.extract_strided_slice %346 {offsets = [0, 0], sizes = [8, 32], strides = [1, 1]} : vector<16x32xbf16> to vector<8x32xbf16>
    %cst_95 = arith.constant dense<0.000000e+00> : vector<8x32xf32>
    %365 = tpu.matmul %363, %364, %cst_95 {dimension_numbers = #tpu.dot_dimension_numbers<[1], [0], [0], [1], [0, 0, 1, 1], [], []>} : vector<8x8xbf16>, vector<8x32xbf16>, vector<8x32xf32> -> vector<8x32xf32>
    %366 = vector.extract_strided_slice %342 {offsets = [8, 0], sizes = [8, 32], strides = [1, 1]} : vector<16x32xbf16> to vector<8x32xbf16>
    %367 = vector.extract_strided_slice %344 {offsets = [8, 0], sizes = [8, 32], strides = [1, 1]} : vector<16x32xbf16> to vector<8x32xbf16>
    %cst_96 = arith.constant dense<0.000000e+00> : vector<8x8xf32>
    %368 = tpu.matmul %366, %367, %cst_96 {dimension_numbers = #tpu.dot_dimension_numbers<[1], [1], [0], [0], [0, 0, 1, 0], [], []>} : vector<8x32xbf16>, vector<8x32xbf16>, vector<8x8xf32> -> vector<8x8xf32>
    %cst_97 = arith.constant -1.000000e+30 : f32
    %369 = vector.shape_cast %40 : vector<1x8xi1> to vector<1x8xi1>
    %370 = vector.broadcast %369 : vector<1x8xi1> to vector<8x8xi1>
    %371 = vector.broadcast %cst_97 : f32 to vector<8x8xf32>
    %372 = arith.select %370, %368, %371 : vector<8x8xi1>, vector<8x8xf32>
    %cst_98 = arith.constant dense<0xFF800000> : vector<8xf32>
    %373 = vector.multi_reduction <maximumf>, %372, %cst_98 [1] : vector<8x8xf32> to vector<8xf32>
    %374 = vector.shape_cast %373 : vector<8xf32> to vector<8x1xf32>
    %375 = vector.broadcast %374 : vector<8x1xf32> to vector<8x8xf32>
    %376 = arith.subf %372, %375 : vector<8x8xf32>
    %377 = math.exp %376 : vector<8x8xf32>
    %cst_99 = arith.constant dense<0.000000e+00> : vector<8xf32>
    %378 = vector.multi_reduction <add>, %377, %cst_99 [1] : vector<8x8xf32> to vector<8xf32>
    %379 = vector.shape_cast %378 : vector<8xf32> to vector<8x1xf32>
    %380 = vector.broadcast %379 : vector<8x1xf32> to vector<8x8xf32>
    %381 = arith.divf %377, %380 : vector<8x8xf32>
    %382 = arith.truncf %381 : vector<8x8xf32> to vector<8x8xbf16>
    %383 = vector.extract_strided_slice %346 {offsets = [8, 0], sizes = [8, 32], strides = [1, 1]} : vector<16x32xbf16> to vector<8x32xbf16>
    %cst_100 = arith.constant dense<0.000000e+00> : vector<8x32xf32>
    %384 = tpu.matmul %382, %383, %cst_100 {dimension_numbers = #tpu.dot_dimension_numbers<[1], [0], [0], [1], [0, 0, 1, 1], [], []>} : vector<8x8xbf16>, vector<8x32xbf16>, vector<8x32xf32> -> vector<8x32xf32>
    %385 = tpu.concatenate %365, %384 in 0 : vector<8x32xf32>, vector<8x32xf32> -> vector<16x32xf32>
    %386 = arith.truncf %385 : vector<16x32xf32> to vector<16x32xbf16>
    %387 = vector.extract_strided_slice %42 {offsets = [192, 0], sizes = [32, 256], strides = [1, 1]} : vector<256x256xbf16> to vector<32x256xbf16>
    %cst_101 = arith.constant dense<0.000000e+00> : vector<16x256xf32>
    %388 = tpu.matmul %386, %387, %cst_101 {dimension_numbers = #tpu.dot_dimension_numbers<[1], [0], [0], [1], [0, 0, 1, 1], [], []>} : vector<16x32xbf16>, vector<32x256xbf16>, vector<16x256xf32> -> vector<16x256xf32>
    %389 = arith.addf %340, %388 : vector<16x256xf32>
    %390 = vector.extract_strided_slice %37 {offsets = [0, 224], sizes = [16, 32], strides = [1, 1]} : vector<16x768xf32> to vector<16x32xf32>
    %391 = arith.truncf %390 : vector<16x32xf32> to vector<16x32xbf16>
    %392 = vector.extract_strided_slice %37 {offsets = [0, 480], sizes = [16, 32], strides = [1, 1]} : vector<16x768xf32> to vector<16x32xf32>
    %393 = arith.truncf %392 : vector<16x32xf32> to vector<16x32xbf16>
    %394 = vector.extract_strided_slice %37 {offsets = [0, 736], sizes = [16, 32], strides = [1, 1]} : vector<16x768xf32> to vector<16x32xf32>
    %395 = arith.truncf %394 : vector<16x32xf32> to vector<16x32xbf16>
    %396 = vector.extract_strided_slice %391 {offsets = [0, 0], sizes = [8, 32], strides = [1, 1]} : vector<16x32xbf16> to vector<8x32xbf16>
    %397 = vector.extract_strided_slice %393 {offsets = [0, 0], sizes = [8, 32], strides = [1, 1]} : vector<16x32xbf16> to vector<8x32xbf16>
    %cst_102 = arith.constant dense<0.000000e+00> : vector<8x8xf32>
    %398 = tpu.matmul %396, %397, %cst_102 {dimension_numbers = #tpu.dot_dimension_numbers<[1], [1], [0], [0], [0, 0, 1, 0], [], []>} : vector<8x32xbf16>, vector<8x32xbf16>, vector<8x8xf32> -> vector<8x8xf32>
    %cst_103 = arith.constant -1.000000e+30 : f32
    %399 = vector.shape_cast %40 : vector<1x8xi1> to vector<1x8xi1>
    %400 = vector.broadcast %399 : vector<1x8xi1> to vector<8x8xi1>
    %401 = vector.broadcast %cst_103 : f32 to vector<8x8xf32>
    %402 = arith.select %400, %398, %401 : vector<8x8xi1>, vector<8x8xf32>
    %cst_104 = arith.constant dense<0xFF800000> : vector<8xf32>
    %403 = vector.multi_reduction <maximumf>, %402, %cst_104 [1] : vector<8x8xf32> to vector<8xf32>
    %404 = vector.shape_cast %403 : vector<8xf32> to vector<8x1xf32>
    %405 = vector.broadcast %404 : vector<8x1xf32> to vector<8x8xf32>
    %406 = arith.subf %402, %405 : vector<8x8xf32>
    %407 = math.exp %406 : vector<8x8xf32>
    %cst_105 = arith.constant dense<0.000000e+00> : vector<8xf32>
    %408 = vector.multi_reduction <add>, %407, %cst_105 [1] : vector<8x8xf32> to vector<8xf32>
    %409 = vector.shape_cast %408 : vector<8xf32> to vector<8x1xf32>
    %410 = vector.broadcast %409 : vector<8x1xf32> to vector<8x8xf32>
    %411 = arith.divf %407, %410 : vector<8x8xf32>
    %412 = arith.truncf %411 : vector<8x8xf32> to vector<8x8xbf16>
    %413 = vector.extract_strided_slice %395 {offsets = [0, 0], sizes = [8, 32], strides = [1, 1]} : vector<16x32xbf16> to vector<8x32xbf16>
    %cst_106 = arith.constant dense<0.000000e+00> : vector<8x32xf32>
    %414 = tpu.matmul %412, %413, %cst_106 {dimension_numbers = #tpu.dot_dimension_numbers<[1], [0], [0], [1], [0, 0, 1, 1], [], []>} : vector<8x8xbf16>, vector<8x32xbf16>, vector<8x32xf32> -> vector<8x32xf32>
    %415 = vector.extract_strided_slice %391 {offsets = [8, 0], sizes = [8, 32], strides = [1, 1]} : vector<16x32xbf16> to vector<8x32xbf16>
    %416 = vector.extract_strided_slice %393 {offsets = [8, 0], sizes = [8, 32], strides = [1, 1]} : vector<16x32xbf16> to vector<8x32xbf16>
    %cst_107 = arith.constant dense<0.000000e+00> : vector<8x8xf32>
    %417 = tpu.matmul %415, %416, %cst_107 {dimension_numbers = #tpu.dot_dimension_numbers<[1], [1], [0], [0], [0, 0, 1, 0], [], []>} : vector<8x32xbf16>, vector<8x32xbf16>, vector<8x8xf32> -> vector<8x8xf32>
    %cst_108 = arith.constant -1.000000e+30 : f32
    %418 = vector.shape_cast %40 : vector<1x8xi1> to vector<1x8xi1>
    %419 = vector.broadcast %418 : vector<1x8xi1> to vector<8x8xi1>
    %420 = vector.broadcast %cst_108 : f32 to vector<8x8xf32>
    %421 = arith.select %419, %417, %420 : vector<8x8xi1>, vector<8x8xf32>
    %cst_109 = arith.constant dense<0xFF800000> : vector<8xf32>
    %422 = vector.multi_reduction <maximumf>, %421, %cst_109 [1] : vector<8x8xf32> to vector<8xf32>
    %423 = vector.shape_cast %422 : vector<8xf32> to vector<8x1xf32>
    %424 = vector.broadcast %423 : vector<8x1xf32> to vector<8x8xf32>
    %425 = arith.subf %421, %424 : vector<8x8xf32>
    %426 = math.exp %425 : vector<8x8xf32>
    %cst_110 = arith.constant dense<0.000000e+00> : vector<8xf32>
    %427 = vector.multi_reduction <add>, %426, %cst_110 [1] : vector<8x8xf32> to vector<8xf32>
    %428 = vector.shape_cast %427 : vector<8xf32> to vector<8x1xf32>
    %429 = vector.broadcast %428 : vector<8x1xf32> to vector<8x8xf32>
    %430 = arith.divf %426, %429 : vector<8x8xf32>
    %431 = arith.truncf %430 : vector<8x8xf32> to vector<8x8xbf16>
    %432 = vector.extract_strided_slice %395 {offsets = [8, 0], sizes = [8, 32], strides = [1, 1]} : vector<16x32xbf16> to vector<8x32xbf16>
    %cst_111 = arith.constant dense<0.000000e+00> : vector<8x32xf32>
    %433 = tpu.matmul %431, %432, %cst_111 {dimension_numbers = #tpu.dot_dimension_numbers<[1], [0], [0], [1], [0, 0, 1, 1], [], []>} : vector<8x8xbf16>, vector<8x32xbf16>, vector<8x32xf32> -> vector<8x32xf32>
    %434 = tpu.concatenate %414, %433 in 0 : vector<8x32xf32>, vector<8x32xf32> -> vector<16x32xf32>
    %435 = arith.truncf %434 : vector<16x32xf32> to vector<16x32xbf16>
    %436 = vector.extract_strided_slice %42 {offsets = [224, 0], sizes = [32, 256], strides = [1, 1]} : vector<256x256xbf16> to vector<32x256xbf16>
    %cst_112 = arith.constant dense<0.000000e+00> : vector<16x256xf32>
    %437 = tpu.matmul %435, %436, %cst_112 {dimension_numbers = #tpu.dot_dimension_numbers<[1], [0], [0], [1], [0, 0, 1, 1], [], []>} : vector<16x32xbf16>, vector<32x256xbf16>, vector<16x256xf32> -> vector<16x256xf32>
    %438 = arith.addf %389, %437 : vector<16x256xf32>
    %c0_113 = arith.constant 0 : index
    %c0_114 = arith.constant 0 : index
    %c0_115 = arith.constant 0 : index
    %439 = vector.load %arg11[%c0_113, %c0_114, %c0_115] : memref<1x1x256xf32, #tpu.memory_space<vmem>>, vector<1x1x256xf32>
    %440 = vector.shape_cast %439 : vector<1x1x256xf32> to vector<1x256xf32>
    %c0_116 = arith.constant 0 : index
    %c0_117 = arith.constant 0 : index
    %c0_118 = arith.constant 0 : index
    %441 = vector.load %arg12[%c0_116, %c0_117, %c0_118] : memref<1x1x256xf32, #tpu.memory_space<vmem>>, vector<1x1x256xf32>
    %442 = vector.shape_cast %441 : vector<1x1x256xf32> to vector<1x256xf32>
    %cst_119 = arith.constant dense<0.000000e+00> : vector<16xf32>
    %443 = vector.multi_reduction <add>, %438, %cst_119 [1] : vector<16x256xf32> to vector<16xf32>
    %444 = vector.shape_cast %443 : vector<16xf32> to vector<16x1xf32>
    %cst_120 = arith.constant 2.560000e+02 : f32
    %445 = vector.broadcast %cst_120 : f32 to vector<16x1xf32>
    %446 = arith.divf %444, %445 : vector<16x1xf32>
    %447 = vector.broadcast %446 : vector<16x1xf32> to vector<16x256xf32>
    %448 = arith.subf %438, %447 : vector<16x256xf32>
    %449 = arith.mulf %448, %448 : vector<16x256xf32>
    %cst_121 = arith.constant dense<0.000000e+00> : vector<16xf32>
    %450 = vector.multi_reduction <add>, %449, %cst_121 [1] : vector<16x256xf32> to vector<16xf32>
    %451 = vector.shape_cast %450 : vector<16xf32> to vector<16x1xf32>
    %cst_122 = arith.constant 2.560000e+02 : f32
    %452 = vector.broadcast %cst_122 : f32 to vector<16x1xf32>
    %453 = arith.divf %451, %452 : vector<16x1xf32>
    %454 = vector.broadcast %446 : vector<16x1xf32> to vector<16x256xf32>
    %455 = arith.subf %438, %454 : vector<16x256xf32>
    %cst_123 = arith.constant 9.99999997E-7 : f32
    %456 = vector.broadcast %cst_123 : f32 to vector<16x1xf32>
    %457 = arith.addf %453, %456 : vector<16x1xf32>
    %458 = math.rsqrt %457 : vector<16x1xf32>
    %459 = vector.broadcast %458 : vector<16x1xf32> to vector<16x256xf32>
    %460 = arith.mulf %455, %459 : vector<16x256xf32>
    %461 = vector.broadcast %440 : vector<1x256xf32> to vector<16x256xf32>
    %462 = arith.mulf %460, %461 : vector<16x256xf32>
    %463 = vector.broadcast %442 : vector<1x256xf32> to vector<16x256xf32>
    %464 = arith.addf %462, %463 : vector<16x256xf32>
    %465 = arith.truncf %464 : vector<16x256xf32> to vector<16x256xbf16>
    %c0_124 = arith.constant 0 : index
    %c0_125 = arith.constant 0 : index
    %c0_126 = arith.constant 0 : index
    %466 = vector.load %arg13[%c0_124, %c0_125, %c0_126] : memref<1x256x1024xbf16, #tpu.memory_space<vmem>>, vector<1x256x1024xbf16>
    %467 = vector.shape_cast %466 : vector<1x256x1024xbf16> to vector<256x1024xbf16>
    %cst_127 = arith.constant dense<0.000000e+00> : vector<16x1024xf32>
    %468 = tpu.matmul %465, %467, %cst_127 {dimension_numbers = #tpu.dot_dimension_numbers<[1], [0], [0], [1], [0, 0, 1, 1], [], []>} : vector<16x256xbf16>, vector<256x1024xbf16>, vector<16x1024xf32> -> vector<16x1024xf32>
    %c0_128 = arith.constant 0 : index
    %c0_129 = arith.constant 0 : index
    %c0_130 = arith.constant 0 : index
    %469 = vector.load %arg14[%c0_128, %c0_129, %c0_130] : memref<1x1x1024xf32, #tpu.memory_space<vmem>>, vector<1x1x1024xf32>
    %470 = vector.shape_cast %469 : vector<1x1x1024xf32> to vector<1x1024xf32>
    %471 = vector.broadcast %470 : vector<1x1024xf32> to vector<16x1024xf32>
    %472 = arith.addf %468, %471 : vector<16x1024xf32>
    %473 = arith.mulf %472, %472 : vector<16x1024xf32>
    %474 = arith.mulf %472, %473 : vector<16x1024xf32>
    %cst_131 = arith.constant 4.471500e-02 : f32
    %475 = vector.broadcast %cst_131 : f32 to vector<16x1024xf32>
    %476 = arith.mulf %475, %474 : vector<16x1024xf32>
    %477 = arith.addf %472, %476 : vector<16x1024xf32>
    %cst_132 = arith.constant 0.797884583 : f32
    %478 = vector.broadcast %cst_132 : f32 to vector<16x1024xf32>
    %479 = arith.mulf %478, %477 : vector<16x1024xf32>
    %480 = math.tanh %479 : vector<16x1024xf32>
    %cst_133 = arith.constant 1.000000e+00 : f32
    %481 = vector.broadcast %cst_133 : f32 to vector<16x1024xf32>
    %482 = arith.addf %481, %480 : vector<16x1024xf32>
    %cst_134 = arith.constant 5.000000e-01 : f32
    %483 = vector.broadcast %cst_134 : f32 to vector<16x1024xf32>
    %484 = arith.mulf %483, %482 : vector<16x1024xf32>
    %485 = arith.mulf %472, %484 : vector<16x1024xf32>
    %486 = arith.truncf %485 : vector<16x1024xf32> to vector<16x1024xbf16>
    %c0_135 = arith.constant 0 : index
    %c0_136 = arith.constant 0 : index
    %c0_137 = arith.constant 0 : index
    %487 = vector.load %arg15[%c0_135, %c0_136, %c0_137] : memref<1x1024x256xbf16, #tpu.memory_space<vmem>>, vector<1x1024x256xbf16>
    %488 = vector.shape_cast %487 : vector<1x1024x256xbf16> to vector<1024x256xbf16>
    %cst_138 = arith.constant dense<0.000000e+00> : vector<16x256xf32>
    %489 = tpu.matmul %486, %488, %cst_138 {dimension_numbers = #tpu.dot_dimension_numbers<[1], [0], [0], [1], [0, 0, 1, 1], [], []>} : vector<16x1024xbf16>, vector<1024x256xbf16>, vector<16x256xf32> -> vector<16x256xf32>
    %490 = arith.addf %438, %489 : vector<16x256xf32>
    %c0_139 = arith.constant 0 : index
    %c0_140 = arith.constant 0 : index
    %c0_141 = arith.constant 0 : index
    %491 = vector.load %arg16[%c0_139, %c0_140, %c0_141] : memref<1x1x256xf32, #tpu.memory_space<vmem>>, vector<1x1x256xf32>
    %492 = vector.shape_cast %491 : vector<1x1x256xf32> to vector<1x256xf32>
    %493 = vector.broadcast %492 : vector<1x256xf32> to vector<16x256xf32>
    %494 = arith.addf %490, %493 : vector<16x256xf32>
    %c0_142 = arith.constant 0 : index
    %c0_143 = arith.constant 0 : index
    %495 = vector.load %arg19[%c0_142, %c0_143] : memref<16x256xf32, #tpu.memory_space<vmem>>, vector<16x256xf32>
    tpu.vector_store %arg19[%c0_142, %c0_143], %494 {strides = array<i32>} : memref<16x256xf32, #tpu.memory_space<vmem>>, vector<16x256xf32>,
    %c11_i32 = arith.constant 11 : i32
    %496 = arith.cmpi eq, %arg1, %c11_i32 : i32
    %497 = arith.extui %496 : i1 to i32
    %c0_i32_144 = arith.constant 0 : i32
    %498 = arith.cmpi ne, %497, %c0_i32_144 : i32
    scf.if %498 {
      %c0_145 = arith.constant 0 : index
      %c0_146 = arith.constant 0 : index
      %499 = vector.load %arg17[%c0_145, %c0_146] : memref<1x256xf32, #tpu.memory_space<vmem>>, vector<1x256xf32>
      %c0_147 = arith.constant 0 : index
      %c0_148 = arith.constant 0 : index
      %500 = vector.load %arg18[%c0_147, %c0_148] : memref<1x256xf32, #tpu.memory_space<vmem>>, vector<1x256xf32>
      %cst_149 = arith.constant dense<0.000000e+00> : vector<16xf32>
      %501 = vector.multi_reduction <add>, %494, %cst_149 [1] : vector<16x256xf32> to vector<16xf32>
      %502 = vector.shape_cast %501 : vector<16xf32> to vector<16x1xf32>
      %cst_150 = arith.constant 2.560000e+02 : f32
      %503 = vector.broadcast %cst_150 : f32 to vector<16x1xf32>
      %504 = arith.divf %502, %503 : vector<16x1xf32>
      %505 = vector.broadcast %504 : vector<16x1xf32> to vector<16x256xf32>
      %506 = arith.subf %494, %505 : vector<16x256xf32>
      %507 = arith.mulf %506, %506 : vector<16x256xf32>
      %cst_151 = arith.constant dense<0.000000e+00> : vector<16xf32>
      %508 = vector.multi_reduction <add>, %507, %cst_151 [1] : vector<16x256xf32> to vector<16xf32>
      %509 = vector.shape_cast %508 : vector<16xf32> to vector<16x1xf32>
      %cst_152 = arith.constant 2.560000e+02 : f32
      %510 = vector.broadcast %cst_152 : f32 to vector<16x1xf32>
      %511 = arith.divf %509, %510 : vector<16x1xf32>
      %512 = vector.broadcast %504 : vector<16x1xf32> to vector<16x256xf32>
      %513 = arith.subf %494, %512 : vector<16x256xf32>
      %cst_153 = arith.constant 9.99999997E-7 : f32
      %514 = vector.broadcast %cst_153 : f32 to vector<16x1xf32>
      %515 = arith.addf %511, %514 : vector<16x1xf32>
      %516 = math.rsqrt %515 : vector<16x1xf32>
      %517 = vector.broadcast %516 : vector<16x1xf32> to vector<16x256xf32>
      %518 = arith.mulf %513, %517 : vector<16x256xf32>
      %519 = vector.broadcast %499 : vector<1x256xf32> to vector<16x256xf32>
      %520 = arith.mulf %518, %519 : vector<16x256xf32>
      %521 = vector.broadcast %500 : vector<1x256xf32> to vector<16x256xf32>
      %522 = arith.addf %520, %521 : vector<16x256xf32>
      %c0_154 = arith.constant 0 : index
      %c0_155 = arith.constant 0 : index
      %523 = vector.load %arg19[%c0_154, %c0_155] : memref<16x256xf32, #tpu.memory_space<vmem>>, vector<16x256xf32>
      tpu.vector_store %arg19[%c0_154, %c0_155], %522 {strides = array<i32>} : memref<16x256xf32, #tpu.memory_space<vmem>>, vector<16x256xf32>,
    } else {
    }
    return
  }
  func.func @transform_0(%arg0: i32, %arg1: i32) -> (i32, i32) {
    %c0_i32 = arith.constant 0 : i32
    %c0_i32_0 = arith.constant 0 : i32
    return %arg0, %c0_i32 : i32, i32
  }
  func.func @transform_1(%arg0: i32, %arg1: i32) -> (i32, i32) {
    %c0_i32 = arith.constant 0 : i32
    %c0_i32_0 = arith.constant 0 : i32
    %c0_i32_1 = arith.constant 0 : i32
    return %c0_i32, %c0_i32_0 : i32, i32
  }
  func.func @transform_2(%arg0: i32, %arg1: i32) -> (i32, i32) {
    %c0_i32 = arith.constant 0 : i32
    %c0_i32_0 = arith.constant 0 : i32
    return %arg0, %c0_i32 : i32, i32
  }
  func.func @transform_3(%arg0: i32, %arg1: i32) -> (i32, i32, i32) {
    %c0_i32 = arith.constant 0 : i32
    %c0_i32_0 = arith.constant 0 : i32
    %c0_i32_1 = arith.constant 0 : i32
    return %arg1, %c0_i32, %c0_i32_0 : i32, i32, i32
  }
  func.func @transform_4(%arg0: i32, %arg1: i32) -> (i32, i32, i32) {
    %c0_i32 = arith.constant 0 : i32
    %c0_i32_0 = arith.constant 0 : i32
    %c0_i32_1 = arith.constant 0 : i32
    return %arg1, %c0_i32, %c0_i32_0 : i32, i32, i32
  }
  func.func @transform_5(%arg0: i32, %arg1: i32) -> (i32, i32, i32) {
    %c0_i32 = arith.constant 0 : i32
    %c0_i32_0 = arith.constant 0 : i32
    %c0_i32_1 = arith.constant 0 : i32
    return %arg1, %c0_i32, %c0_i32_0 : i32, i32, i32
  }
  func.func @transform_6(%arg0: i32, %arg1: i32) -> (i32, i32, i32) {
    %c0_i32 = arith.constant 0 : i32
    %c0_i32_0 = arith.constant 0 : i32
    %c0_i32_1 = arith.constant 0 : i32
    return %arg1, %c0_i32, %c0_i32_0 : i32, i32, i32
  }
  func.func @transform_7(%arg0: i32, %arg1: i32) -> (i32, i32, i32) {
    %c0_i32 = arith.constant 0 : i32
    %c0_i32_0 = arith.constant 0 : i32
    %c0_i32_1 = arith.constant 0 : i32
    return %arg1, %c0_i32, %c0_i32_0 : i32, i32, i32
  }
  func.func @transform_8(%arg0: i32, %arg1: i32) -> (i32, i32, i32) {
    %c0_i32 = arith.constant 0 : i32
    %c0_i32_0 = arith.constant 0 : i32
    %c0_i32_1 = arith.constant 0 : i32
    return %arg1, %c0_i32, %c0_i32_0 : i32, i32, i32
  }
  func.func @transform_9(%arg0: i32, %arg1: i32) -> (i32, i32, i32) {
    %c0_i32 = arith.constant 0 : i32
    %c0_i32_0 = arith.constant 0 : i32
    %c0_i32_1 = arith.constant 0 : i32
    return %arg1, %c0_i32, %c0_i32_0 : i32, i32, i32
  }
  func.func @transform_10(%arg0: i32, %arg1: i32) -> (i32, i32, i32) {
    %c0_i32 = arith.constant 0 : i32
    %c0_i32_0 = arith.constant 0 : i32
    %c0_i32_1 = arith.constant 0 : i32
    return %arg1, %c0_i32, %c0_i32_0 : i32, i32, i32
  }
  func.func @transform_11(%arg0: i32, %arg1: i32) -> (i32, i32, i32) {
    %c0_i32 = arith.constant 0 : i32
    %c0_i32_0 = arith.constant 0 : i32
    %c0_i32_1 = arith.constant 0 : i32
    return %arg1, %c0_i32, %c0_i32_0 : i32, i32, i32
  }
  func.func @transform_12(%arg0: i32, %arg1: i32) -> (i32, i32, i32) {
    %c0_i32 = arith.constant 0 : i32
    %c0_i32_0 = arith.constant 0 : i32
    %c0_i32_1 = arith.constant 0 : i32
    return %arg1, %c0_i32, %c0_i32_0 : i32, i32, i32
  }
  func.func @transform_13(%arg0: i32, %arg1: i32) -> (i32, i32, i32) {
    %c0_i32 = arith.constant 0 : i32
    %c0_i32_0 = arith.constant 0 : i32
    %c0_i32_1 = arith.constant 0 : i32
    return %arg1, %c0_i32, %c0_i32_0 : i32, i32, i32
  }
  func.func @transform_14(%arg0: i32, %arg1: i32) -> (i32, i32, i32) {
    %c0_i32 = arith.constant 0 : i32
    %c0_i32_0 = arith.constant 0 : i32
    %c0_i32_1 = arith.constant 0 : i32
    return %arg1, %c0_i32, %c0_i32_0 : i32, i32, i32
  }
  func.func @transform_15(%arg0: i32, %arg1: i32) -> (i32, i32) {
    %c0_i32 = arith.constant 0 : i32
    %c0_i32_0 = arith.constant 0 : i32
    %c0_i32_1 = arith.constant 0 : i32
    return %c0_i32, %c0_i32_0 : i32, i32
  }
  func.func @transform_16(%arg0: i32, %arg1: i32) -> (i32, i32) {
    %c0_i32 = arith.constant 0 : i32
    %c0_i32_0 = arith.constant 0 : i32
    %c0_i32_1 = arith.constant 0 : i32
    return %c0_i32, %c0_i32_0 : i32, i32
  }
  func.func @transform_17(%arg0: i32, %arg1: i32) -> (i32, i32) {
    %c0_i32 = arith.constant 0 : i32
    %c0_i32_0 = arith.constant 0 : i32
    return %arg0, %c0_i32 : i32, i32
  }
}

</mosaic_0001>

<llo_original>
// kernel: global_branch_forward.1
$region0: #{global_branch_forward.1}
  #allocation0 [shape = 'u32[]', space=smem, size = 0x4, offset = 0x4, fixed_abs, tag = 'smem constant byte address 0x4 - core index']
  #allocation1 [shape = 'u32[144,128]{1,0:T(1,128)}', space=vmem, size = 0x12000, scoped, tag = 'internal scratch']
  %s0 = inlined_call_operand.vmem [shape: bf16[16,1536], index: 0, kind: input, shape index: {}]
  %s1 = inlined_call_operand.hbm [shape: bf16[1536,256], index: 1, kind: input, shape index: {}]
  %s2 = inlined_call_operand.vmem [shape: f32[16,256], index: 2, kind: input, shape index: {}]
  %s3 = inlined_call_operand.hbm [shape: f32[12,1,256], index: 3, kind: input, shape index: {}]
  %s4 = inlined_call_operand.hbm [shape: f32[12,1,256], index: 4, kind: input, shape index: {}]
  %s5 = inlined_call_operand.hbm [shape: bf16[12,256,768], index: 5, kind: input, shape index: {}]
  %s6 = inlined_call_operand.hbm [shape: f32[12,1,768], index: 6, kind: input, shape index: {}]
  %s7 = inlined_call_operand.hbm [shape: bf16[12,256,256], index: 7, kind: input, shape index: {}]
  %s8 = inlined_call_operand.hbm [shape: f32[12,1,256], index: 8, kind: input, shape index: {}]
  %s9 = inlined_call_operand.hbm [shape: f32[12,1,256], index: 9, kind: input, shape index: {}]
  %s10 = inlined_call_operand.hbm [shape: f32[12,1,256], index: 10, kind: input, shape index: {}]
  %s11 = inlined_call_operand.hbm [shape: bf16[12,256,1024], index: 11, kind: input, shape index: {}]
  %s12 = inlined_call_operand.hbm [shape: f32[12,1,1024], index: 12, kind: input, shape index: {}]
  %s13 = inlined_call_operand.hbm [shape: bf16[12,1024,256], index: 13, kind: input, shape index: {}]
  %s14 = inlined_call_operand.hbm [shape: f32[12,1,256], index: 14, kind: input, shape index: {}]
  %s15 = inlined_call_operand.hbm [shape: f32[1,256], index: 15, kind: input, shape index: {}]
  %s16 = inlined_call_operand.hbm [shape: f32[1,256], index: 16, kind: input, shape index: {}]
  %s17 = inlined_call_operand.vmem [shape: f32[16,256], index: 17, kind: output, shape index: {}]
  %s18 = sld [smem:[#allocation0]]
  $region169: #{global_branch_forward.1} parent=0
    _
  %s20 = ssub.s32 1, %s18
  %s21 = scalar_select 0, %s20, %s18
  $region1: #{global_branch_forward.1} parent=0
    #allocation2 [shape = 'u8[786432]{0}', space=vmem, size = 0xc0000, scoped, tag = 'input window, operand 1, single buffered']
    #allocation3 [shape = 's32[2]{0}', space=sflag, size = 0x8, scoped, tag = 'scoped memory for global_branch_forward.1']
    #allocation4 [shape = 'u8[2048]{0}', space=vmem, size = 0x800, scoped, tag = 'input window, operand 3']
    #allocation5 [shape = 's32[2]{0}', space=sflag, size = 0x8, scoped, tag = 'scoped memory for global_branch_forward.1']
    #allocation6 [shape = 'u8[2048]{0}', space=vmem, size = 0x800, scoped, tag = 'input window, operand 4']
    #allocation7 [shape = 'u8[786432]{0}', space=vmem, size = 0xc0000, scoped, tag = 'input window, operand 5']
    #allocation8 [shape = 's32[2]{0}', space=sflag, size = 0x8, scoped, tag = 'scoped memory for global_branch_forward.1']
    #allocation9 [shape = 'u8[6144]{0}', space=vmem, size = 0x1800, scoped, tag = 'input window, operand 6']
    #allocation10 [shape = 'u8[262144]{0}', space=vmem, size = 0x40000, scoped, tag = 'input window, operand 7']
    #allocation11 [shape = 's32[2]{0}', space=sflag, size = 0x8, scoped, tag = 'scoped memory for global_branch_forward.1']
    #allocation12 [shape = 'u8[2048]{0}', space=vmem, size = 0x800, scoped, tag = 'input window, operand 8']
    #allocation13 [shape = 'u8[2048]{0}', space=vmem, size = 0x800, scoped, tag = 'input window, operand 9']
    #allocation14 [shape = 's32[2]{0}', space=sflag, size = 0x8, scoped, tag = 'scoped memory for global_branch_forward.1']
    #allocation15 [shape = 'u8[2048]{0}', space=vmem, size = 0x800, scoped, tag = 'input window, operand 10']
    #allocation16 [shape = 'u8[1048576]{0}', space=vmem, size = 0x100000, scoped, tag = 'input window, operand 11']
    #allocation17 [shape = 's32[2]{0}', space=sflag, size = 0x8, scoped, tag = 'scoped memory for global_branch_forward.1']
    #allocation18 [shape = 'u8[8192]{0}', space=vmem, size = 0x2000, scoped, tag = 'input window, operand 12']
    #allocation19 [shape = 'u8[1048576]{0}', space=vmem, size = 0x100000, scoped, tag = 'input window, operand 13']
    #allocation20 [shape = 's32[2]{0}', space=sflag, size = 0x8, scoped, tag = 'scoped memory for global_branch_forward.1']
    #allocation21 [shape = 'u8[2048]{0}', space=vmem, size = 0x800, scoped, tag = 'input window, operand 14']
    #allocation22 [shape = 'u8[1024]{0}', space=vmem, size = 0x400, scoped, tag = 'input window, operand 15, single buffered']
    #allocation23 [shape = 's32[1]{0}', space=sflag, size = 0x4, scoped, tag = 'scoped memory for global_branch_forward.1']
    #allocation24 [shape = 'u8[1024]{0}', space=vmem, size = 0x400, scoped, tag = 'input window, operand 16, single buffered']
    %22 = vsyncpa [#allocation3], 0
    %23 = vsyncpa [#allocation5], 0
    %s24 = scalar_lea.sflag [#allocation5], 1
    %25 = vsyncpa %s24, 0
    %26 = vsyncpa [#allocation8], 0
    %s27 = scalar_lea.sflag [#allocation8], 1
    %28 = vsyncpa %s27, 0
    %29 = vsyncpa [#allocation11], 0
    %s30 = scalar_lea.sflag [#allocation11], 1
    %31 = vsyncpa %s30, 0
    %32 = vsyncpa [#allocation14], 0
    %s33 = scalar_lea.sflag [#allocation14], 1
    %34 = vsyncpa %s33, 0
    %35 = vsyncpa [#allocation17], 0
    %s36 = scalar_lea.sflag [#allocation17], 1
    %37 = vsyncpa %s36, 0
    %38 = vsyncpa [#allocation20], 0
    %s39 = scalar_lea.sflag [#allocation20], 1
    %40 = vsyncpa %s39, 0
    %41 = vsyncpa [#allocation23], 0
    loop: start=0, step=1, limit=14
    $region2: #{global_branch_forward.1} parent=1 // loop_pre_header
      _
    $region3: #{global_branch_forward.1} parent=1 // loop_header
      %s43 = sphi 0, %s47
      %p44 = scmp.ge.s32.totalorder %s43, 14
      %s50 = sphi 0, %s62
      %s51 = sphi 0, %s58
      %s52 = sphi 0, %s50
      %s53 = sphi 0, %s51
      %s54 = sphi 0, %s52
      %s55 = sphi 0, %s53
      %s65 = sphi 0, %s67
      %s68 = sphi 0, %s65
      %s69 = sphi 0, %s68
      %s85 = sphi 0, %s69
      %s89 = sphi 0, %s89
      %s91 = sphi 0, %s89
      %s92 = sphi 0, %s91
      %s106 = sphi 0, %s92
      %s112 = sphi 0, %s114
      %s115 = sphi 0, %s112
      %s116 = sphi 0, %s115
      %s132 = sphi 0, %s116
      %s138 = sphi 0, %s140
      %s141 = sphi 0, %s138
      %s142 = sphi 0, %s141
      %s158 = sphi 0, %s142
      %s164 = sphi 0, %s166
      %s167 = sphi 0, %s164
      %s168 = sphi 0, %s167
      %s184 = sphi 0, %s168
      %s190 = sphi 0, %s192
      %s193 = sphi 0, %s190
      %s194 = sphi 0, %s193
      %s210 = sphi 0, %s194
      %s216 = sphi 0, %s218
      %s219 = sphi 0, %s216
      %s220 = sphi 0, %s219
      %s236 = sphi 0, %s220
      %s242 = sphi 0, %s244
      %s245 = sphi 0, %s242
      %s246 = sphi 0, %s245
      %s262 = sphi 0, %s246
      %s268 = sphi 0, %s270
      %s271 = sphi 0, %s268
      %s272 = sphi 0, %s271
      %s288 = sphi 0, %s272
      %s294 = sphi 0, %s296
      %s297 = sphi 0, %s294
      %s298 = sphi 0, %s297
      %s314 = sphi 0, %s298
      %s320 = sphi 0, %s322
      %s323 = sphi 0, %s320
      %s324 = sphi 0, %s323
      %s340 = sphi 0, %s324
      %s346 = sphi 0, %s348
      %s349 = sphi 0, %s346
      %s350 = sphi 0, %s349
      %s366 = sphi 0, %s350
      %s372 = sphi 0, %s374
      %s375 = sphi 0, %s372
      %s376 = sphi 0, %s375
      %s392 = sphi 0, %s376
      %s398 = sphi 0, %s400
      %s401 = sphi 0, %s398
      %s402 = sphi 0, %s401
      %s418 = sphi 0, %s402
      %s424 = sphi 0, %s426
      %s427 = sphi 0, %s424
      %s428 = sphi 0, %s427
      %s444 = sphi 0, %s428
      %s448 = sphi 0, %s448
      %s450 = sphi 0, %s448
      %s451 = sphi 0, %s450
      %s465 = sphi 0, %s451
      %s469 = sphi 0, %s469
      %s471 = sphi 0, %s469
      %s472 = sphi 0, %s471
      %s486 = sphi 0, %s472
      %s492 = sphi 0, %s494
      %s495 = sphi 0, %s492
      %s496 = sphi 0, %s495
      %s512 = sphi 0, %s496
    $region4: #{global_branch_forward.1} parent=1 // loop_header_branch
      %46 = sbr.rel (%p44) target = $region8
    $region5: #{global_branch_forward.1} parent=1 // loop_body
      %s48 = ssub.s32 %s43, 1
      %s49 = ssub.s32 %s43, 2
      %s56 = sadd.s32 1, %s51
      %p57 = scmp.ge.s32.totalorder %s56, 12
      %s58 = scalar_select %p57, 0, %s56
      %s59 = sadd.s32 1, %s50
      %s60 = scalar_select %p57, %s59, %s50
      %p61 = scmp.ge.s32.totalorder %s60, 1
      %s62 = scalar_select %p61, 0, %s60
      %s63 = ssub.s32 %s50, %s62
      %p64 = scmp.eq.s32.totalorder %s63, 0
      %s66 = sadd.s32 %s65, 1
      %s67 = scalar_select %p64, %s65, %s66
      %p70 = pneg %p64
      %p71 = scmp.eq.s32.totalorder %s43, 11
      %p72 = por %p70, %p71
      %p73 = scmp.ne.s32.totalorder %s65, %s68
      %p74 = scmp.eq.s32.totalorder %s43, 0
      %p75 = por %p73, %p74
      %p76 = scmp.ne.s32.totalorder %s65, %s68
      %p77 = scmp.eq.s32.totalorder %s48, 11
      %p78 = por %p76, %p77
      %p79 = scmp.ne.s32.totalorder %s68, %s69
      %p80 = scmp.eq.s32.totalorder %s48, 0
      %p81 = por %p79, %p80
      %p82 = scmp.ne.s32.totalorder %s68, %s69
      %p83 = scmp.eq.s32.totalorder %s49, 11
      %p84 = por %p82, %p83
      %p86 = scmp.ne.s32.totalorder %s69, %s85
      %p87 = scmp.eq.s32.totalorder %s49, 0
      %p88 = por %p86, %p87
      %s90 = sadd.s32 %s89, 1
      %p93 = scmp.eq.s32.totalorder %s43, 11
      %p94 = scmp.ne.s32.totalorder %s89, %s91
      %p95 = scmp.eq.s32.totalorder %s43, 0
      %p96 = por %p94, %p95
      %p97 = scmp.ne.s32.totalorder %s89, %s91
      %p98 = scmp.eq.s32.totalorder %s48, 11
      %p99 = por %p97, %p98
      %p100 = scmp.ne.s32.totalorder %s91, %s92
      %p101 = scmp.eq.s32.totalorder %s48, 0
      %p102 = por %p100, %p101
      %p103 = scmp.ne.s32.totalorder %s91, %s92
      %p104 = scmp.eq.s32.totalorder %s49, 11
      %p105 = por %p103, %p104
      %p107 = scmp.ne.s32.totalorder %s92, %s106
      %p108 = scmp.eq.s32.totalorder %s49, 0
      %p109 = por %p107, %p108
      %s110 = ssub.s32 %s50, %s62
      %p111 = scmp.eq.s32.totalorder %s110, 0
      %s113 = sadd.s32 %s112, 1
      %s114 = scalar_select %p111, %s112, %s113
      %p117 = pneg %p111
      %p118 = scmp.eq.s32.totalorder %s43, 11
      %p119 = por %p117, %p118
      %p120 = scmp.ne.s32.totalorder %s112, %s115
      %p121 = scmp.eq.s32.totalorder %s43, 0
      %p122 = por %p120, %p121
      %p123 = scmp.ne.s32.totalorder %s112, %s115
      %p124 = scmp.eq.s32.totalorder %s48, 11
      %p125 = por %p123, %p124
      %p126 = scmp.ne.s32.totalorder %s115, %s116
      %p127 = scmp.eq.s32.totalorder %s48, 0
      %p128 = por %p126, %p127
      %p129 = scmp.ne.s32.totalorder %s115, %s116
      %p130 = scmp.eq.s32.totalorder %s49, 11
      %p131 = por %p129, %p130
      %p133 = scmp.ne.s32.totalorder %s116, %s132
      %p134 = scmp.eq.s32.totalorder %s49, 0
      %p135 = por %p133, %p134
      %s136 = ssub.s32 %s51, %s58
      %p137 = scmp.eq.s32.totalorder %s136, 0
      %s139 = sadd.s32 %s138, 1
      %s140 = scalar_select %p137, %s138, %s139
      %p143 = pneg %p137
      %p144 = scmp.eq.s32.totalorder %s43, 11
      %p145 = por %p143, %p144
      %p146 = scmp.ne.s32.totalorder %s138, %s141
      %p147 = scmp.eq.s32.totalorder %s43, 0
      %p148 = por %p146, %p147
      %p149 = scmp.ne.s32.totalorder %s138, %s141
      %p150 = scmp.eq.s32.totalorder %s48, 11
      %p151 = por %p149, %p150
      %p152 = scmp.ne.s32.totalorder %s141, %s142
      %p153 = scmp.eq.s32.totalorder %s48, 0
      %p154 = por %p152, %p153
      %p155 = scmp.ne.s32.totalorder %s141, %s142
      %p156 = scmp.eq.s32.totalorder %s49, 11
      %p157 = por %p155, %p156
      %p159 = scmp.ne.s32.totalorder %s142, %s158
      %p160 = scmp.eq.s32.totalorder %s49, 0
      %p161 = por %p159, %p160
      %s162 = ssub.s32 %s51, %s58
      %p163 = scmp.eq.s32.totalorder %s162, 0
      %s165 = sadd.s32 %s164, 1
      %s166 = scalar_select %p163, %s164, %s165
      %p169 = pneg %p163
      %p170 = scmp.eq.s32.totalorder %s43, 11
      %p171 = por %p169, %p170
      %p172 = scmp.ne.s32.totalorder %s164, %s167
      %p173 = scmp.eq.s32.totalorder %s43, 0
      %p174 = por %p172, %p173
      %p175 = scmp.ne.s32.totalorder %s164, %s167
      %p176 = scmp.eq.s32.totalorder %s48, 11
      %p177 = por %p175, %p176
      %p178 = scmp.ne.s32.totalorder %s167, %s168
      %p179 = scmp.eq.s32.totalorder %s48, 0
      %p180 = por %p178, %p179
      %p181 = scmp.ne.s32.totalorder %s167, %s168
      %p182 = scmp.eq.s32.totalorder %s49, 11
      %p183 = por %p181, %p182
      %p185 = scmp.ne.s32.totalorder %s168, %s184
      %p186 = scmp.eq.s32.totalorder %s49, 0
      %p187 = por %p185, %p186
      %s188 = ssub.s32 %s51, %s58
      %p189 = scmp.eq.s32.totalorder %s188, 0
      %s191 = sadd.s32 %s190, 1
      %s192 = scalar_select %p189, %s190, %s191
      %p195 = pneg %p189
      %p196 = scmp.eq.s32.totalorder %s43, 11
      %p197 = por %p195, %p196
      %p198 = scmp.ne.s32.totalorder %s190, %s193
      %p199 = scmp.eq.s32.totalorder %s43, 0
      %p200 = por %p198, %p199
      %p201 = scmp.ne.s32.totalorder %s190, %s193
      %p202 = scmp.eq.s32.totalorder %s48, 11
      %p203 = por %p201, %p202
      %p204 = scmp.ne.s32.totalorder %s193, %s194
      %p205 = scmp.eq.s32.totalorder %s48, 0
      %p206 = por %p204, %p205
      %p207 = scmp.ne.s32.totalorder %s193, %s194
      %p208 = scmp.eq.s32.totalorder %s49, 11
      %p209 = por %p207, %p208
      %p211 = scmp.ne.s32.totalorder %s194, %s210
      %p212 = scmp.eq.s32.totalorder %s49, 0
      %p213 = por %p211, %p212
      %s214 = ssub.s32 %s51, %s58
      %p215 = scmp.eq.s32.totalorder %s214, 0
      %s217 = sadd.s32 %s216, 1
      %s218 = scalar_select %p215, %s216, %s217
      %p221 = pneg %p215
      %p222 = scmp.eq.s32.totalorder %s43, 11
      %p223 = por %p221, %p222
      %p224 = scmp.ne.s32.totalorder %s216, %s219
      %p225 = scmp.eq.s32.totalorder %s43, 0
      %p226 = por %p224, %p225
      %p227 = scmp.ne.s32.totalorder %s216, %s219
      %p228 = scmp.eq.s32.totalorder %s48, 11
      %p229 = por %p227, %p228
      %p230 = scmp.ne.s32.totalorder %s219, %s220
      %p231 = scmp.eq.s32.totalorder %s48, 0
      %p232 = por %p230, %p231
      %p233 = scmp.ne.s32.totalorder %s219, %s220
      %p234 = scmp.eq.s32.totalorder %s49, 11
      %p235 = por %p233, %p234
      %p237 = scmp.ne.s32.totalorder %s220, %s236
      %p238 = scmp.eq.s32.totalorder %s49, 0
      %p239 = por %p237, %p238
      %s240 = ssub.s32 %s51, %s58
      %p241 = scmp.eq.s32.totalorder %s240, 0
      %s243 = sadd.s32 %s242, 1
      %s244 = scalar_select %p241, %s242, %s243
      %p247 = pneg %p241
      %p248 = scmp.eq.s32.totalorder %s43, 11
      %p249 = por %p247, %p248
      %p250 = scmp.ne.s32.totalorder %s242, %s245
      %p251 = scmp.eq.s32.totalorder %s43, 0
      %p252 = por %p250, %p251
      %p253 = scmp.ne.s32.totalorder %s242, %s245
      %p254 = scmp.eq.s32.totalorder %s48, 11
      %p255 = por %p253, %p254
      %p256 = scmp.ne.s32.totalorder %s245, %s246
      %p257 = scmp.eq.s32.totalorder %s48, 0
      %p258 = por %p256, %p257
      %p259 = scmp.ne.s32.totalorder %s245, %s246
      %p260 = scmp.eq.s32.totalorder %s49, 11
      %p261 = por %p259, %p260
      %p263 = scmp.ne.s32.totalorder %s246, %s262
      %p264 = scmp.eq.s32.totalorder %s49, 0
      %p265 = por %p263, %p264
      %s266 = ssub.s32 %s51, %s58
      %p267 = scmp.eq.s32.totalorder %s266, 0
      %s269 = sadd.s32 %s268, 1
      %s270 = scalar_select %p267, %s268, %s269
      %p273 = pneg %p267
      %p274 = scmp.eq.s32.totalorder %s43, 11
      %p275 = por %p273, %p274
      %p276 = scmp.ne.s32.totalorder %s268, %s271
      %p277 = scmp.eq.s32.totalorder %s43, 0
      %p278 = por %p276, %p277
      %p279 = scmp.ne.s32.totalorder %s268, %s271
      %p280 = scmp.eq.s32.totalorder %s48, 11
      %p281 = por %p279, %p280
      %p282 = scmp.ne.s32.totalorder %s271, %s272
      %p283 = scmp.eq.s32.totalorder %s48, 0
      %p284 = por %p282, %p283
      %p285 = scmp.ne.s32.totalorder %s271, %s272
      %p286 = scmp.eq.s32.totalorder %s49, 11
      %p287 = por %p285, %p286
      %p289 = scmp.ne.s32.totalorder %s272, %s288
      %p290 = scmp.eq.s32.totalorder %s49, 0
      %p291 = por %p289, %p290
      %s292 = ssub.s32 %s51, %s58
      %p293 = scmp.eq.s32.totalorder %s292, 0
      %s295 = sadd.s32 %s294, 1
      %s296 = scalar_select %p293, %s294, %s295
      %p299 = pneg %p293
      %p300 = scmp.eq.s32.totalorder %s43, 11
      %p301 = por %p299, %p300
      %p302 = scmp.ne.s32.totalorder %s294, %s297
      %p303 = scmp.eq.s32.totalorder %s43, 0
      %p304 = por %p302, %p303
      %p305 = scmp.ne.s32.totalorder %s294, %s297
      %p306 = scmp.eq.s32.totalorder %s48, 11
      %p307 = por %p305, %p306
      %p308 = scmp.ne.s32.totalorder %s297, %s298
      %p309 = scmp.eq.s32.totalorder %s48, 0
      %p310 = por %p308, %p309
      %p311 = scmp.ne.s32.totalorder %s297, %s298
      %p312 = scmp.eq.s32.totalorder %s49, 11
      %p313 = por %p311, %p312
      %p315 = scmp.ne.s32.totalorder %s298, %s314
      %p316 = scmp.eq.s32.totalorder %s49, 0
      %p317 = por %p315, %p316
      %s318 = ssub.s32 %s51, %s58
      %p319 = scmp.eq.s32.totalorder %s318, 0
      %s321 = sadd.s32 %s320, 1
      %s322 = scalar_select %p319, %s320, %s321
      %p325 = pneg %p319
      %p326 = scmp.eq.s32.totalorder %s43, 11
      %p327 = por %p325, %p326
      %p328 = scmp.ne.s32.totalorder %s320, %s323
      %p329 = scmp.eq.s32.totalorder %s43, 0
      %p330 = por %p328, %p329
      %p331 = scmp.ne.s32.totalorder %s320, %s323
      %p332 = scmp.eq.s32.totalorder %s48, 11
      %p333 = por %p331, %p332
      %p334 = scmp.ne.s32.totalorder %s323, %s324
      %p335 = scmp.eq.s32.totalorder %s48, 0
      %p336 = por %p334, %p335
      %p337 = scmp.ne.s32.totalorder %s323, %s324
      %p338 = scmp.eq.s32.totalorder %s49, 11
      %p339 = por %p337, %p338
      %p341 = scmp.ne.s32.totalorder %s324, %s340
      %p342 = scmp.eq.s32.totalorder %s49, 0
      %p343 = por %p341, %p342
      %s344 = ssub.s32 %s51, %s58
      %p345 = scmp.eq.s32.totalorder %s344, 0
      %s347 = sadd.s32 %s346, 1
      %s348 = scalar_select %p345, %s346, %s347
      %p351 = pneg %p345
      %p352 = scmp.eq.s32.totalorder %s43, 11
      %p353 = por %p351, %p352
      %p354 = scmp.ne.s32.totalorder %s346, %s349
      %p355 = scmp.eq.s32.totalorder %s43, 0
      %p356 = por %p354, %p355
      %p357 = scmp.ne.s32.totalorder %s346, %s349
      %p358 = scmp.eq.s32.totalorder %s48, 11
      %p359 = por %p357, %p358
      %p360 = scmp.ne.s32.totalorder %s349, %s350
      %p361 = scmp.eq.s32.totalorder %s48, 0
      %p362 = por %p360, %p361
      %p363 = scmp.ne.s32.totalorder %s349, %s350
      %p364 = scmp.eq.s32.totalorder %s49, 11
      %p365 = por %p363, %p364
      %p367 = scmp.ne.s32.totalorder %s350, %s366
      %p368 = scmp.eq.s32.totalorder %s49, 0
      %p369 = por %p367, %p368
      %s370 = ssub.s32 %s51, %s58
      %p371 = scmp.eq.s32.totalorder %s370, 0
      %s373 = sadd.s32 %s372, 1
      %s374 = scalar_select %p371, %s372, %s373
      %p377 = pneg %p371
      %p378 = scmp.eq.s32.totalorder %s43, 11
      %p379 = por %p377, %p378
      %p380 = scmp.ne.s32.totalorder %s372, %s375
      %p381 = scmp.eq.s32.totalorder %s43, 0
      %p382 = por %p380, %p381
      %p383 = scmp.ne.s32.totalorder %s372, %s375
      %p384 = scmp.eq.s32.totalorder %s48, 11
      %p385 = por %p383, %p384
      %p386 = scmp.ne.s32.totalorder %s375, %s376
      %p387 = scmp.eq.s32.totalorder %s48, 0
      %p388 = por %p386, %p387
      %p389 = scmp.ne.s32.totalorder %s375, %s376
      %p390 = scmp.eq.s32.totalorder %s49, 11
      %p391 = por %p389, %p390
      %p393 = scmp.ne.s32.totalorder %s376, %s392
      %p394 = scmp.eq.s32.totalorder %s49, 0
      %p395 = por %p393, %p394
      %s396 = ssub.s32 %s51, %s58
      %p397 = scmp.eq.s32.totalorder %s396, 0
      %s399 = sadd.s32 %s398, 1
      %s400 = scalar_select %p397, %s398, %s399
      %p403 = pneg %p397
      %p404 = scmp.eq.s32.totalorder %s43, 11
      %p405 = por %p403, %p404
      %p406 = scmp.ne.s32.totalorder %s398, %s401
      %p407 = scmp.eq.s32.totalorder %s43, 0
      %p408 = por %p406, %p407
      %p409 = scmp.ne.s32.totalorder %s398, %s401
      %p410 = scmp.eq.s32.totalorder %s48, 11
      %p411 = por %p409, %p410
      %p412 = scmp.ne.s32.totalorder %s401, %s402
      %p413 = scmp.eq.s32.totalorder %s48, 0
      %p414 = por %p412, %p413
      %p415 = scmp.ne.s32.totalorder %s401, %s402
      %p416 = scmp.eq.s32.totalorder %s49, 11
      %p417 = por %p415, %p416
      %p419 = scmp.ne.s32.totalorder %s402, %s418
      %p420 = scmp.eq.s32.totalorder %s49, 0
      %p421 = por %p419, %p420
      %s422 = ssub.s32 %s51, %s58
      %p423 = scmp.eq.s32.totalorder %s422, 0
      %s425 = sadd.s32 %s424, 1
      %s426 = scalar_select %p423, %s424, %s425
      %p429 = pneg %p423
      %p430 = scmp.eq.s32.totalorder %s43, 11
      %p431 = por %p429, %p430
      %p432 = scmp.ne.s32.totalorder %s424, %s427
      %p433 = scmp.eq.s32.totalorder %s43, 0
      %p434 = por %p432, %p433
      %p435 = scmp.ne.s32.totalorder %s424, %s427
      %p436 = scmp.eq.s32.totalorder %s48, 11
      %p437 = por %p435, %p436
      %p438 = scmp.ne.s32.totalorder %s427, %s428
      %p439 = scmp.eq.s32.totalorder %s48, 0
      %p440 = por %p438, %p439
      %p441 = scmp.ne.s32.totalorder %s427, %s428
      %p442 = scmp.eq.s32.totalorder %s49, 11
      %p443 = por %p441, %p442
      %p445 = scmp.ne.s32.totalorder %s428, %s444
      %p446 = scmp.eq.s32.totalorder %s49, 0
      %p447 = por %p445, %p446
      %s449 = sadd.s32 %s448, 1
      %p452 = scmp.eq.s32.totalorder %s43, 11
      %p453 = scmp.ne.s32.totalorder %s448, %s450
      %p454 = scmp.eq.s32.totalorder %s43, 0
      %p455 = por %p453, %p454
      %p456 = scmp.ne.s32.totalorder %s448, %s450
      %p457 = scmp.eq.s32.totalorder %s48, 11
      %p458 = por %p456, %p457
      %p459 = scmp.ne.s32.totalorder %s450, %s451
      %p460 = scmp.eq.s32.totalorder %s48, 0
      %p461 = por %p459, %p460
      %p462 = scmp.ne.s32.totalorder %s450, %s451
      %p463 = scmp.eq.s32.totalorder %s49, 11
      %p464 = por %p462, %p463
      %p466 = scmp.ne.s32.totalorder %s451, %s465
      %p467 = scmp.eq.s32.totalorder %s49, 0
      %p468 = por %p466, %p467
      %s470 = sadd.s32 %s469, 1
      %p473 = scmp.eq.s32.totalorder %s43, 11
      %p474 = scmp.ne.s32.totalorder %s469, %s471
      %p475 = scmp.eq.s32.totalorder %s43, 0
      %p476 = por %p474, %p475
      %p477 = scmp.ne.s32.totalorder %s469, %s471
      %p478 = scmp.eq.s32.totalorder %s48, 11
      %p479 = por %p477, %p478
      %p480 = scmp.ne.s32.totalorder %s471, %s472
      %p481 = scmp.eq.s32.totalorder %s48, 0
      %p482 = por %p480, %p481
      %p483 = scmp.ne.s32.totalorder %s471, %s472
      %p484 = scmp.eq.s32.totalorder %s49, 11
      %p485 = por %p483, %p484
      %p487 = scmp.ne.s32.totalorder %s472, %s486
      %p488 = scmp.eq.s32.totalorder %s49, 0
      %p489 = por %p487, %p488
      %s490 = ssub.s32 %s50, %s62
      %p491 = scmp.eq.s32.totalorder %s490, 0
      %s493 = sadd.s32 %s492, 1
      %s494 = scalar_select %p491, %s492, %s493
      %p497 = pneg %p491
      %p498 = scmp.eq.s32.totalorder %s43, 11
      %p499 = por %p497, %p498
      %p500 = scmp.ne.s32.totalorder %s492, %s495
      %p501 = scmp.eq.s32.totalorder %s43, 0
      %p502 = por %p500, %p501
      %p503 = scmp.ne.s32.totalorder %s492, %s495
      %p504 = scmp.eq.s32.totalorder %s48, 11
      %p505 = por %p503, %p504
      %p506 = scmp.ne.s32.totalorder %s495, %s496
      %p507 = scmp.eq.s32.totalorder %s48, 0
      %p508 = por %p506, %p507
      %p509 = scmp.ne.s32.totalorder %s495, %s496
      %p510 = scmp.eq.s32.totalorder %s49, 11
      %p511 = por %p509, %p510
      %p513 = scmp.ne.s32.totalorder %s496, %s512
      %p514 = scmp.eq.s32.totalorder %s49, 0
      %p515 = por %p513, %p514
      %p516 = scmp.le.s32.totalorder 1, %s43
      %p517 = scmp.lt.s32.totalorder %s43, 13
      %p518 = pnand %p516, %p517
      %p519 = pneg %p518
      // Predicated region
      $region9: #{global_branch_forward.1} parent=5 // pred_check
        _
      $region10: #{global_branch_forward.1} parent=5 // pred_check_branch
        %521 = sbr.rel (%p518) target = $region12
      $region11: #{global_branch_forward.1} parent=5 // pred_region
        %s522 = ssub.s32 %s43, 1
        // Predicated region
        $region13: #{global_branch_forward.1} parent=11 // pred_check
          %p523 = pneg %p81
        $region14: #{global_branch_forward.1} parent=11 // pred_check_branch
          %525 = sbr.rel (%p523) target = $region16
        $region15: #{global_branch_forward.1} parent=11 // pred_region
          %s526 = smul.u32 2, %s52
          %p527 = scmp.lt.s32.totalorder %s526, 1
          %s528 = scalar_select %p527, %s526, 1
          %s529 = smul.addr %s528, 12
          %s530 = smul.addr %s529, 4
          %s531 = scalar_lea.vmem %s0, %s530
          %s532 = smul.u32 2, %s52
        $region16: #{global_branch_forward.1} parent=11 // pred_fallthru
          _
        // Predicated region
        $region17: #{global_branch_forward.1} parent=11 // pred_check
          %p533 = pneg %p102
        $region18: #{global_branch_forward.1} parent=11 // pred_check_branch
          %535 = sbr.rel (%p533) target = $region20
        $region19: #{global_branch_forward.1} parent=11 // pred_region
          %s537 = ssub.s32 24576, 24576
          %538 = vsyncadd [#allocation3], %s537
          %s539 = sshll.u32 [#allocation2], 4
          %s540 = int_to_ptr.vmem [resolvable:$true] %s539
          %545 = dma.hbm_to_vmem [thread:$0]  %s1, 24576, %s540, [#allocation3], 128, 128, 8
        $region20: #{global_branch_forward.1} parent=11 // pred_fallthru
          _
        // Predicated region
        $region21: #{global_branch_forward.1} parent=11 // pred_check
          %p546 = pneg %p128
        $region22: #{global_branch_forward.1} parent=11 // pred_check_branch
          %548 = sbr.rel (%p546) target = $region24
        $region23: #{global_branch_forward.1} parent=11 // pred_region
          %s549 = smul.u32 2, %s52
          %p550 = scmp.lt.s32.totalorder %s549, 1
          %s551 = scalar_select %p550, %s549, 1
          %s552 = smul.addr %s551, 2
          %s553 = smul.addr %s552, 8
          %s554 = scalar_lea.vmem %s2, %s553
          %s555 = smul.u32 2, %s52
        $region24: #{global_branch_forward.1} parent=11 // pred_fallthru
          _
        // Predicated region
        $region25: #{global_branch_forward.1} parent=11 // pred_check
          %p556 = pneg %p461
        $region26: #{global_branch_forward.1} parent=11 // pred_check_branch
          %558 = sbr.rel (%p556) target = $region28
        $region27: #{global_branch_forward.1} parent=11 // pred_region
          %s560 = ssub.s32 32, 32
          %561 = vsyncadd [#allocation23], %s560
          %s563 = sshll.u32 [#allocation22], 4
          %s564 = int_to_ptr.vmem [resolvable:$true] %s563
          %566 = dma.hbm_to_vmem [thread:$0]  %s15, 32, %s564, [#allocation23]
        $region28: #{global_branch_forward.1} parent=11 // pred_fallthru
          _
        // Predicated region
        $region29: #{global_branch_forward.1} parent=11 // pred_check
          %p567 = pneg %p482
        $region30: #{global_branch_forward.1} parent=11 // pred_check_branch
          %569 = sbr.rel (%p567) target = $region32
        $region31: #{global_branch_forward.1} parent=11 // pred_region
          %s571 = ssub.s32 32, 32
          %572 = vsyncadd [#allocation23], %s571
          %s574 = sshll.u32 [#allocation24], 4
          %s575 = int_to_ptr.vmem [resolvable:$true] %s574
          %577 = dma.hbm_to_vmem [thread:$0]  %s16, 32, %s575, [#allocation23]
        $region32: #{global_branch_forward.1} parent=11 // pred_fallthru
          _
      $region12: #{global_branch_forward.1} parent=5 // pred_fallthru
        _
      %p578 = scmp.lt.s32.totalorder %s43, 12
      // Predicated region
      $region33: #{global_branch_forward.1} parent=5 // pred_check
        %p579 = pneg %p578
      $region34: #{global_branch_forward.1} parent=5 // pred_check_branch
        %581 = sbr.rel (%p579) target = $region36
      $region35: #{global_branch_forward.1} parent=5 // pred_region
        // Predicated region
        $region37: #{global_branch_forward.1} parent=35 // pred_check
          %p582 = pneg %p148
        $region38: #{global_branch_forward.1} parent=35 // pred_check_branch
          %584 = sbr.rel (%p582) target = $region40
        $region39: #{global_branch_forward.1} parent=35 // pred_region
          %s585 = sand.u32 %s43, 1
          %s586 = scalar_lea.sflag [#allocation5], %s585
          %s587 = sand.u32 %s138, 1
          %s588 = smul.addr %s587, 2
          %s589 = scalar_lea.vmem [#allocation4], %s588
          %s591 = ssub.s32 32, 32
          %592 = vsyncadd %s586, %s591
          %s593 = smul.addr %s51, 2
          %s594 = smul.addr %s593, 16
          %s595 = scalar_lea.hbm %s3, %s594
          %s597 = sshll.u32 %s589, 4
          %s598 = int_to_ptr.vmem [resolvable:$true] %s597
          %600 = dma.hbm_to_vmem [thread:$0]  %s595, 32, %s598, %s586
        $region40: #{global_branch_forward.1} parent=35 // pred_fallthru
          _
        // Predicated region
        $region41: #{global_branch_forward.1} parent=35 // pred_check
          %p601 = pneg %p174
        $region42: #{global_branch_forward.1} parent=35 // pred_check_branch
          %603 = sbr.rel (%p601) target = $region44
        $region43: #{global_branch_forward.1} parent=35 // pred_region
          %s604 = sand.u32 %s43, 1
          %s605 = scalar_lea.sflag [#allocation5], %s604
          %s606 = sand.u32 %s164, 1
          %s607 = smul.addr %s606, 2
          %s608 = scalar_lea.vmem [#allocation6], %s607
          %s610 = ssub.s32 32, 32
          %611 = vsyncadd %s605, %s610
          %s612 = smul.addr %s51, 2
          %s613 = smul.addr %s612, 16
          %s614 = scalar_lea.hbm %s4, %s613
          %s616 = sshll.u32 %s608, 4
          %s617 = int_to_ptr.vmem [resolvable:$true] %s616
          %619 = dma.hbm_to_vmem [thread:$0]  %s614, 32, %s617, %s605
        $region44: #{global_branch_forward.1} parent=35 // pred_fallthru
          _
        // Predicated region
        $region45: #{global_branch_forward.1} parent=35 // pred_check
          %p620 = pneg %p200
        $region46: #{global_branch_forward.1} parent=35 // pred_check_branch
          %622 = sbr.rel (%p620) target = $region48
        $region47: #{global_branch_forward.1} parent=35 // pred_region
          %s623 = sand.u32 %s43, 1
          %s624 = scalar_lea.sflag [#allocation8], %s623
          %s625 = sand.u32 %s190, 1
          %s626 = smul.addr %s625, 768
          %s627 = scalar_lea.vmem [#allocation7], %s626
          %s629 = ssub.s32 12288, 12288
          %630 = vsyncadd %s624, %s629
          %s631 = smul.addr %s51, 192
          %s632 = smul.addr %s631, 64
          %s633 = scalar_lea.hbm %s5, %s632
          %s634 = sshll.u32 %s627, 4
          %s635 = int_to_ptr.vmem [resolvable:$true] %s634
          %640 = dma.hbm_to_vmem [thread:$0]  %s633, 12288, %s635, %s624, 384, 384, 24
        $region48: #{global_branch_forward.1} parent=35 // pred_fallthru
          _
        // Predicated region
        $region49: #{global_branch_forward.1} parent=35 // pred_check
          %p641 = pneg %p226
        $region50: #{global_branch_forward.1} parent=35 // pred_check_branch
          %643 = sbr.rel (%p641) target = $region52
        $region51: #{global_branch_forward.1} parent=35 // pred_region
          %s644 = sand.u32 %s43, 1
          %s645 = scalar_lea.sflag [#allocation8], %s644
          %s646 = sand.u32 %s216, 1
          %s647 = smul.addr %s646, 6
          %s648 = scalar_lea.vmem [#allocation9], %s647
          %s650 = ssub.s32 96, 96
          %651 = vsyncadd %s645, %s650
          %s652 = smul.addr %s51, 6
          %s653 = smul.addr %s652, 16
          %s654 = scalar_lea.hbm %s6, %s653
          %s656 = sshll.u32 %s648, 4
          %s657 = int_to_ptr.vmem [resolvable:$true] %s656
          %659 = dma.hbm_to_vmem [thread:$0]  %s654, 96, %s657, %s645
        $region52: #{global_branch_forward.1} parent=35 // pred_fallthru
          _
        // Predicated region
        $region53: #{global_branch_forward.1} parent=35 // pred_check
          %p660 = pneg %p252
        $region54: #{global_branch_forward.1} parent=35 // pred_check_branch
          %662 = sbr.rel (%p660) target = $region56
        $region55: #{global_branch_forward.1} parent=35 // pred_region
          %s663 = sand.u32 %s43, 1
          %s664 = scalar_lea.sflag [#allocation11], %s663
          %s665 = sand.u32 %s242, 1
          %s666 = smul.addr %s665, 256
          %s667 = scalar_lea.vmem [#allocation10], %s666
          %s669 = ssub.s32 4096, 4096
          %670 = vsyncadd %s664, %s669
          %s671 = smul.addr %s51, 64
          %s672 = smul.addr %s671, 64
          %s673 = scalar_lea.hbm %s7, %s672
          %s674 = sshll.u32 %s667, 4
          %s675 = int_to_ptr.vmem [resolvable:$true] %s674
          %680 = dma.hbm_to_vmem [thread:$0]  %s673, 4096, %s675, %s664, 128, 128, 8
        $region56: #{global_branch_forward.1} parent=35 // pred_fallthru
          _
        // Predicated region
        $region57: #{global_branch_forward.1} parent=35 // pred_check
          %p681 = pneg %p278
        $region58: #{global_branch_forward.1} parent=35 // pred_check_branch
          %683 = sbr.rel (%p681) target = $region60
        $region59: #{global_branch_forward.1} parent=35 // pred_region
          %s684 = sand.u32 %s43, 1
          %s685 = scalar_lea.sflag [#allocation11], %s684
          %s686 = sand.u32 %s268, 1
          %s687 = smul.addr %s686, 2
          %s688 = scalar_lea.vmem [#allocation12], %s687
          %s690 = ssub.s32 32, 32
          %691 = vsyncadd %s685, %s690
          %s692 = smul.addr %s51, 2
          %s693 = smul.addr %s692, 16
          %s694 = scalar_lea.hbm %s8, %s693
          %s696 = sshll.u32 %s688, 4
          %s697 = int_to_ptr.vmem [resolvable:$true] %s696
          %699 = dma.hbm_to_vmem [thread:$0]  %s694, 32, %s697, %s685
        $region60: #{global_branch_forward.1} parent=35 // pred_fallthru
          _
        // Predicated region
        $region61: #{global_branch_forward.1} parent=35 // pred_check
          %p700 = pneg %p304
        $region62: #{global_branch_forward.1} parent=35 // pred_check_branch
          %702 = sbr.rel (%p700) target = $region64
        $region63: #{global_branch_forward.1} parent=35 // pred_region
          %s703 = sand.u32 %s43, 1
          %s704 = scalar_lea.sflag [#allocation14], %s703
          %s705 = sand.u32 %s294, 1
          %s706 = smul.addr %s705, 2
          %s707 = scalar_lea.vmem [#allocation13], %s706
          %s709 = ssub.s32 32, 32
          %710 = vsyncadd %s704, %s709
          %s711 = smul.addr %s51, 2
          %s712 = smul.addr %s711, 16
          %s713 = scalar_lea.hbm %s9, %s712
          %s715 = sshll.u32 %s707, 4
          %s716 = int_to_ptr.vmem [resolvable:$true] %s715
          %718 = dma.hbm_to_vmem [thread:$0]  %s713, 32, %s716, %s704
        $region64: #{global_branch_forward.1} parent=35 // pred_fallthru
          _
        // Predicated region
        $region65: #{global_branch_forward.1} parent=35 // pred_check
          %p719 = pneg %p330
        $region66: #{global_branch_forward.1} parent=35 // pred_check_branch
          %721 = sbr.rel (%p719) target = $region68
        $region67: #{global_branch_forward.1} parent=35 // pred_region
          %s722 = sand.u32 %s43, 1
          %s723 = scalar_lea.sflag [#allocation14], %s722
          %s724 = sand.u32 %s320, 1
          %s725 = smul.addr %s724, 2
          %s726 = scalar_lea.vmem [#allocation15], %s725
          %s728 = ssub.s32 32, 32
          %729 = vsyncadd %s723, %s728
          %s730 = smul.addr %s51, 2
          %s731 = smul.addr %s730, 16
          %s732 = scalar_lea.hbm %s10, %s731
          %s734 = sshll.u32 %s726, 4
          %s735 = int_to_ptr.vmem [resolvable:$true] %s734
          %737 = dma.hbm_to_vmem [thread:$0]  %s732, 32, %s735, %s723
        $region68: #{global_branch_forward.1} parent=35 // pred_fallthru
          _
        // Predicated region
        $region69: #{global_branch_forward.1} parent=35 // pred_check
          %p738 = pneg %p356
        $region70: #{global_branch_forward.1} parent=35 // pred_check_branch
          %740 = sbr.rel (%p738) target = $region72
        $region71: #{global_branch_forward.1} parent=35 // pred_region
          %s741 = sand.u32 %s43, 1
          %s742 = scalar_lea.sflag [#allocation17], %s741
          %s743 = sand.u32 %s346, 1
          %s744 = smul.addr %s743, 1024
          %s745 = scalar_lea.vmem [#allocation16], %s744
          %s747 = ssub.s32 16384, 16384
          %748 = vsyncadd %s742, %s747
          %s749 = smul.addr %s51, 256
          %s750 = smul.addr %s749, 64
          %s751 = scalar_lea.hbm %s11, %s750
          %s752 = sshll.u32 %s745, 4
          %s753 = int_to_ptr.vmem [resolvable:$true] %s752
          %758 = dma.hbm_to_vmem [thread:$0]  %s751, 16384, %s753, %s742, 512, 512, 32
        $region72: #{global_branch_forward.1} parent=35 // pred_fallthru
          _
        // Predicated region
        $region73: #{global_branch_forward.1} parent=35 // pred_check
          %p759 = pneg %p382
        $region74: #{global_branch_forward.1} parent=35 // pred_check_branch
          %761 = sbr.rel (%p759) target = $region76
        $region75: #{global_branch_forward.1} parent=35 // pred_region
          %s762 = sand.u32 %s43, 1
          %s763 = scalar_lea.sflag [#allocation17], %s762
          %s764 = sand.u32 %s372, 1
          %s765 = smul.addr %s764, 8
          %s766 = scalar_lea.vmem [#allocation18], %s765
          %s768 = ssub.s32 128, 128
          %769 = vsyncadd %s763, %s768
          %s770 = smul.addr %s51, 8
          %s771 = smul.addr %s770, 16
          %s772 = scalar_lea.hbm %s12, %s771
          %s774 = sshll.u32 %s766, 4
          %s775 = int_to_ptr.vmem [resolvable:$true] %s774
          %777 = dma.hbm_to_vmem [thread:$0]  %s772, 128, %s775, %s763
        $region76: #{global_branch_forward.1} parent=35 // pred_fallthru
          _
        // Predicated region
        $region77: #{global_branch_forward.1} parent=35 // pred_check
          %p778 = pneg %p408
        $region78: #{global_branch_forward.1} parent=35 // pred_check_branch
          %780 = sbr.rel (%p778) target = $region80
        $region79: #{global_branch_forward.1} parent=35 // pred_region
          %s781 = sand.u32 %s43, 1
          %s782 = scalar_lea.sflag [#allocation20], %s781
          %s783 = sand.u32 %s398, 1
          %s784 = smul.addr %s783, 1024
          %s785 = scalar_lea.vmem [#allocation19], %s784
          %s787 = ssub.s32 16384, 16384
          %788 = vsyncadd %s782, %s787
          %s789 = smul.addr %s51, 256
          %s790 = smul.addr %s789, 64
          %s791 = scalar_lea.hbm %s13, %s790
          %s792 = sshll.u32 %s785, 4
          %s793 = int_to_ptr.vmem [resolvable:$true] %s792
          %798 = dma.hbm_to_vmem [thread:$0]  %s791, 16384, %s793, %s782, 128, 128, 8
        $region80: #{global_branch_forward.1} parent=35 // pred_fallthru
          _
        // Predicated region
        $region81: #{global_branch_forward.1} parent=35 // pred_check
          %p799 = pneg %p434
        $region82: #{global_branch_forward.1} parent=35 // pred_check_branch
          %801 = sbr.rel (%p799) target = $region84
        $region83: #{global_branch_forward.1} parent=35 // pred_region
          %s802 = sand.u32 %s43, 1
          %s803 = scalar_lea.sflag [#allocation20], %s802
          %s804 = sand.u32 %s424, 1
          %s805 = smul.addr %s804, 2
          %s806 = scalar_lea.vmem [#allocation21], %s805
          %s808 = ssub.s32 32, 32
          %809 = vsyncadd %s803, %s808
          %s810 = smul.addr %s51, 2
          %s811 = smul.addr %s810, 16
          %s812 = scalar_lea.hbm %s14, %s811
          %s814 = sshll.u32 %s806, 4
          %s815 = int_to_ptr.vmem [resolvable:$true] %s814
          %817 = dma.hbm_to_vmem [thread:$0]  %s812, 32, %s815, %s803
        $region84: #{global_branch_forward.1} parent=35 // pred_fallthru
          _
      $region36: #{global_branch_forward.1} parent=5 // pred_fallthru
        _
      %p818 = scmp.le.s32.totalorder 1, %s43
      %p819 = scmp.lt.s32.totalorder %s43, 13
      %p820 = pnand %p818, %p819
      %p821 = pneg %p820
      // Predicated region
      $region85: #{global_branch_forward.1} parent=5 // pred_check
        _
      $region86: #{global_branch_forward.1} parent=5 // pred_check_branch
        %823 = sbr.rel (%p820) target = $region88
      $region87: #{global_branch_forward.1} parent=5 // pred_region
        %s824 = ssub.s32 %s43, 1
        // Predicated region
        $region89: #{global_branch_forward.1} parent=87 // pred_check
          %p825 = pneg %p102
        $region90: #{global_branch_forward.1} parent=87 // pred_check_branch
          %827 = sbr.rel (%p825) target = $region92
        $region91: #{global_branch_forward.1} parent=87 // pred_region
          %828 = dma.done [#allocation3], 24576
        $region92: #{global_branch_forward.1} parent=87 // pred_fallthru
          _
        %s829 = sand.u32 %s48, 1
        %s830 = scalar_lea.sflag [#allocation5], %s829
        %s831 = sand.u32 %s141, 1
        %s832 = smul.addr %s831, 2
        %s833 = scalar_lea.vmem [#allocation4], %s832
        // Predicated region
        $region93: #{global_branch_forward.1} parent=87 // pred_check
          %p834 = pneg %p154
        $region94: #{global_branch_forward.1} parent=87 // pred_check_branch
          %836 = sbr.rel (%p834) target = $region96
        $region95: #{global_branch_forward.1} parent=87 // pred_region
          %837 = dma.done %s830, 32
        $region96: #{global_branch_forward.1} parent=87 // pred_fallthru
          _
        %s838 = sand.u32 %s48, 1
        %s839 = scalar_lea.sflag [#allocation5], %s838
        %s840 = sand.u32 %s167, 1
        %s841 = smul.addr %s840, 2
        %s842 = scalar_lea.vmem [#allocation6], %s841
        // Predicated region
        $region97: #{global_branch_forward.1} parent=87 // pred_check
          %p843 = pneg %p180
        $region98: #{global_branch_forward.1} parent=87 // pred_check_branch
          %845 = sbr.rel (%p843) target = $region100
        $region99: #{global_branch_forward.1} parent=87 // pred_region
          %846 = dma.done %s839, 32
        $region100: #{global_branch_forward.1} parent=87 // pred_fallthru
          _
        %s847 = sand.u32 %s48, 1
        %s848 = scalar_lea.sflag [#allocation8], %s847
        %s849 = sand.u32 %s193, 1
        %s850 = smul.addr %s849, 768
        %s851 = scalar_lea.vmem [#allocation7], %s850
        // Predicated region
        $region101: #{global_branch_forward.1} parent=87 // pred_check
          %p852 = pneg %p206
        $region102: #{global_branch_forward.1} parent=87 // pred_check_branch
          %854 = sbr.rel (%p852) target = $region104
        $region103: #{global_branch_forward.1} parent=87 // pred_region
          %855 = dma.done %s848, 12288
        $region104: #{global_branch_forward.1} parent=87 // pred_fallthru
          _
        %s856 = sand.u32 %s48, 1
        %s857 = scalar_lea.sflag [#allocation8], %s856
        %s858 = sand.u32 %s219, 1
        %s859 = smul.addr %s858, 6
        %s860 = scalar_lea.vmem [#allocation9], %s859
        // Predicated region
        $region105: #{global_branch_forward.1} parent=87 // pred_check
          %p861 = pneg %p232
        $region106: #{global_branch_forward.1} parent=87 // pred_check_branch
          %863 = sbr.rel (%p861) target = $region108
        $region107: #{global_branch_forward.1} parent=87 // pred_region
          %864 = dma.done %s857, 96
        $region108: #{global_branch_forward.1} parent=87 // pred_fallthru
          _
        %s865 = sand.u32 %s48, 1
        %s866 = scalar_lea.sflag [#allocation11], %s865
        %s867 = sand.u32 %s245, 1
        %s868 = smul.addr %s867, 256
        %s869 = scalar_lea.vmem [#allocation10], %s868
        // Predicated region
        $region109: #{global_branch_forward.1} parent=87 // pred_check
          %p870 = pneg %p258
        $region110: #{global_branch_forward.1} parent=87 // pred_check_branch
          %872 = sbr.rel (%p870) target = $region112
        $region111: #{global_branch_forward.1} parent=87 // pred_region
          %873 = dma.done %s866, 4096
        $region112: #{global_branch_forward.1} parent=87 // pred_fallthru
          _
        %s874 = sand.u32 %s48, 1
        %s875 = scalar_lea.sflag [#allocation11], %s874
        %s876 = sand.u32 %s271, 1
        %s877 = smul.addr %s876, 2
        %s878 = scalar_lea.vmem [#allocation12], %s877
        // Predicated region
        $region113: #{global_branch_forward.1} parent=87 // pred_check
          %p879 = pneg %p284
        $region114: #{global_branch_forward.1} parent=87 // pred_check_branch
          %881 = sbr.rel (%p879) target = $region116
        $region115: #{global_branch_forward.1} parent=87 // pred_region
          %882 = dma.done %s875, 32
        $region116: #{global_branch_forward.1} parent=87 // pred_fallthru
          _
        %s883 = sand.u32 %s48, 1
        %s884 = scalar_lea.sflag [#allocation14], %s883
        %s885 = sand.u32 %s297, 1
        %s886 = smul.addr %s885, 2
        %s887 = scalar_lea.vmem [#allocation13], %s886
        // Predicated region
        $region117: #{global_branch_forward.1} parent=87 // pred_check
          %p888 = pneg %p310
        $region118: #{global_branch_forward.1} parent=87 // pred_check_branch
          %890 = sbr.rel (%p888) target = $region120
        $region119: #{global_branch_forward.1} parent=87 // pred_region
          %891 = dma.done %s884, 32
        $region120: #{global_branch_forward.1} parent=87 // pred_fallthru
          _
        %s892 = sand.u32 %s48, 1
        %s893 = scalar_lea.sflag [#allocation14], %s892
        %s894 = sand.u32 %s323, 1
        %s895 = smul.addr %s894, 2
        %s896 = scalar_lea.vmem [#allocation15], %s895
        // Predicated region
        $region121: #{global_branch_forward.1} parent=87 // pred_check
          %p897 = pneg %p336
        $region122: #{global_branch_forward.1} parent=87 // pred_check_branch
          %899 = sbr.rel (%p897) target = $region124
        $region123: #{global_branch_forward.1} parent=87 // pred_region
          %900 = dma.done %s893, 32
        $region124: #{global_branch_forward.1} parent=87 // pred_fallthru
          _
        %s901 = sand.u32 %s48, 1
        %s902 = scalar_lea.sflag [#allocation17], %s901
        %s903 = sand.u32 %s349, 1
        %s904 = smul.addr %s903, 1024
        %s905 = scalar_lea.vmem [#allocation16], %s904
        // Predicated region
        $region125: #{global_branch_forward.1} parent=87 // pred_check
          %p906 = pneg %p362
        $region126: #{global_branch_forward.1} parent=87 // pred_check_branch
          %908 = sbr.rel (%p906) target = $region128
        $region127: #{global_branch_forward.1} parent=87 // pred_region
          %909 = dma.done %s902, 16384
        $region128: #{global_branch_forward.1} parent=87 // pred_fallthru
          _
        %s910 = sand.u32 %s48, 1
        %s911 = scalar_lea.sflag [#allocation17], %s910
        %s912 = sand.u32 %s375, 1
        %s913 = smul.addr %s912, 8
        %s914 = scalar_lea.vmem [#allocation18], %s913
        // Predicated region
        $region129: #{global_branch_forward.1} parent=87 // pred_check
          %p915 = pneg %p388
        $region130: #{global_branch_forward.1} parent=87 // pred_check_branch
          %917 = sbr.rel (%p915) target = $region132
        $region131: #{global_branch_forward.1} parent=87 // pred_region
          %918 = dma.done %s911, 128
        $region132: #{global_branch_forward.1} parent=87 // pred_fallthru
          _
        %s919 = sand.u32 %s48, 1
        %s920 = scalar_lea.sflag [#allocation20], %s919
        %s921 = sand.u32 %s401, 1
        %s922 = smul.addr %s921, 1024
        %s923 = scalar_lea.vmem [#allocation19], %s922
        // Predicated region
        $region133: #{global_branch_forward.1} parent=87 // pred_check
          %p924 = pneg %p414
        $region134: #{global_branch_forward.1} parent=87 // pred_check_branch
          %926 = sbr.rel (%p924) target = $region136
        $region135: #{global_branch_forward.1} parent=87 // pred_region
          %927 = dma.done %s920, 16384
        $region136: #{global_branch_forward.1} parent=87 // pred_fallthru
          _
        %s928 = sand.u32 %s48, 1
        %s929 = scalar_lea.sflag [#allocation20], %s928
        %s930 = sand.u32 %s427, 1
        %s931 = smul.addr %s930, 2
        %s932 = scalar_lea.vmem [#allocation21], %s931
        // Predicated region
        $region137: #{global_branch_forward.1} parent=87 // pred_check
          %p933 = pneg %p440
        $region138: #{global_branch_forward.1} parent=87 // pred_check_branch
          %935 = sbr.rel (%p933) target = $region140
        $region139: #{global_branch_forward.1} parent=87 // pred_region
          %936 = dma.done %s929, 32
        $region140: #{global_branch_forward.1} parent=87 // pred_fallthru
          _
        // Predicated region
        $region141: #{global_branch_forward.1} parent=87 // pred_check
          %p937 = pneg %p461
        $region142: #{global_branch_forward.1} parent=87 // pred_check_branch
          %939 = sbr.rel (%p937) target = $region144
        $region143: #{global_branch_forward.1} parent=87 // pred_region
          %940 = dma.done [#allocation23], 32
        $region144: #{global_branch_forward.1} parent=87 // pred_fallthru
          _
        // Predicated region
        $region145: #{global_branch_forward.1} parent=87 // pred_check
          %p941 = pneg %p482
        $region146: #{global_branch_forward.1} parent=87 // pred_check_branch
          %943 = sbr.rel (%p941) target = $region148
        $region147: #{global_branch_forward.1} parent=87 // pred_region
          %944 = dma.done [#allocation23], 32
        $region148: #{global_branch_forward.1} parent=87 // pred_fallthru
          _
        %s945 = smul.u32 2, %s52
        %p946 = scmp.lt.s32.totalorder %s945, 1
        %s947 = scalar_select %p946, %s945, 1
        %s948 = smul.addr %s947, 12
        %s949 = smul.addr %s948, 4
        %s950 = scalar_lea.vmem %s0, %s949
        %p951 = pneg %p81
        %p952 = pneg %p78
        %p953 = pneg %p102
        %p954 = pneg %p99
        %s955 = smul.u32 2, %s52
        %p956 = scmp.lt.s32.totalorder %s955, 1
        %s957 = scalar_select %p956, %s955, 1
        %s958 = smul.addr %s957, 2
        %s959 = smul.addr %s958, 8
        %s960 = scalar_lea.vmem %s2, %s959
        %p961 = pneg %p128
        %p962 = pneg %p125
        %s963 = sand.u32 %s48, 1
        %s964 = scalar_lea.sflag [#allocation5], %s963
        %s965 = sand.u32 %s141, 1
        %s966 = smul.addr %s965, 2
        %s967 = scalar_lea.vmem [#allocation4], %s966
        %p968 = pneg %p154
        %p969 = pneg %p151
        %s970 = sand.u32 %s48, 1
        %s971 = scalar_lea.sflag [#allocation5], %s970
        %s972 = sand.u32 %s167, 1
        %s973 = smul.addr %s972, 2
        %s974 = scalar_lea.vmem [#allocation6], %s973
        %p975 = pneg %p180
        %p976 = pneg %p177
        %s977 = sand.u32 %s48, 1
        %s978 = scalar_lea.sflag [#allocation8], %s977
        %s979 = sand.u32 %s193, 1
        %s980 = smul.addr %s979, 768
        %s981 = scalar_lea.vmem [#allocation7], %s980
        %p982 = pneg %p206
        %p983 = pneg %p203
        %s984 = sand.u32 %s48, 1
        %s985 = scalar_lea.sflag [#allocation8], %s984
        %s986 = sand.u32 %s219, 1
        %s987 = smul.addr %s986, 6
        %s988 = scalar_lea.vmem [#allocation9], %s987
        %p989 = pneg %p232
        %p990 = pneg %p229
        %s991 = sand.u32 %s48, 1
        %s992 = scalar_lea.sflag [#allocation11], %s991
        %s993 = sand.u32 %s245, 1
        %s994 = smul.addr %s993, 256
        %s995 = scalar_lea.vmem [#allocation10], %s994
        %p996 = pneg %p258
        %p997 = pneg %p255
        %s998 = sand.u32 %s48, 1
        %s999 = scalar_lea.sflag [#allocation11], %s998
        %s1000 = sand.u32 %s271, 1
        %s1001 = smul.addr %s1000, 2
        %s1002 = scalar_lea.vmem [#allocation12], %s1001
        %p1003 = pneg %p284
        %p1004 = pneg %p281
        %s1005 = sand.u32 %s48, 1
        %s1006 = scalar_lea.sflag [#allocation14], %s1005
        %s1007 = sand.u32 %s297, 1
        %s1008 = smul.addr %s1007, 2
        %s1009 = scalar_lea.vmem [#allocation13], %s1008
        %p1010 = pneg %p310
        %p1011 = pneg %p307
        %s1012 = sand.u32 %s48, 1
        %s1013 = scalar_lea.sflag [#allocation14], %s1012
        %s1014 = sand.u32 %s323, 1
        %s1015 = smul.addr %s1014, 2
        %s1016 = scalar_lea.vmem [#allocation15], %s1015
        %p1017 = pneg %p336
        %p1018 = pneg %p333
        %s1019 = sand.u32 %s48, 1
        %s1020 = scalar_lea.sflag [#allocation17], %s1019
        %s1021 = sand.u32 %s349, 1
        %s1022 = smul.addr %s1021, 1024
        %s1023 = scalar_lea.vmem [#allocation16], %s1022
        %p1024 = pneg %p362
        %p1025 = pneg %p359
        %s1026 = sand.u32 %s48, 1
        %s1027 = scalar_lea.sflag [#allocation17], %s1026
        %s1028 = sand.u32 %s375, 1
        %s1029 = smul.addr %s1028, 8
        %s1030 = scalar_lea.vmem [#allocation18], %s1029
        %p1031 = pneg %p388
        %p1032 = pneg %p385
        %s1033 = sand.u32 %s48, 1
        %s1034 = scalar_lea.sflag [#allocation20], %s1033
        %s1035 = sand.u32 %s401, 1
        %s1036 = smul.addr %s1035, 1024
        %s1037 = scalar_lea.vmem [#allocation19], %s1036
        %p1038 = pneg %p414
        %p1039 = pneg %p411
        %s1040 = sand.u32 %s48, 1
        %s1041 = scalar_lea.sflag [#allocation20], %s1040
        %s1042 = sand.u32 %s427, 1
        %s1043 = smul.addr %s1042, 2
        %s1044 = scalar_lea.vmem [#allocation21], %s1043
        %p1045 = pneg %p440
        %p1046 = pneg %p437
        %p1047 = pneg %p461
        %p1048 = pneg %p458
        %p1049 = pneg %p482
        %p1050 = pneg %p479
        %p1051 = pneg %p508
        %p1052 = pneg %p505
        %s1053 = smul.u32 2, %s52
        %p1054 = scmp.lt.s32.totalorder %s1053, 1
        %s1055 = scalar_select %p1054, %s1053, 1
        %s1056 = smul.addr %s1055, 2
        %s1057 = smul.addr %s1056, 8
        %s1058 = scalar_lea.vmem %s17, %s1057
        %s1059 = smul.u32 2, %s52
        %p1060 = scmp.lt.s32.totalorder %s1059, 1
        %s1061 = scalar_select %p1060, %s1059, 1
        %s1062 = smul.addr %s1061, 12
        %s1063 = smul.addr %s1062, 4
        %s1064 = scalar_lea.vmem %s0, %s1063
        %s1065 = smul.u32 2, %s52
        %s1066 = smul.u32 2, %s52
        %p1067 = scmp.lt.s32.totalorder %s1066, 1
        %s1068 = scalar_select %p1067, %s1066, 1
        %s1069 = smul.addr %s1068, 2
        %s1070 = smul.addr %s1069, 8
        %s1071 = scalar_lea.vmem %s2, %s1070
        %s1072 = smul.u32 2, %s52
        %s1073 = smul.u32 2, %s52
        %p1074 = scmp.lt.s32.totalorder %s1073, 1
        %s1075 = scalar_select %p1074, %s1073, 1
        %s1076 = smul.addr %s1075, 2
        %s1077 = smul.addr %s1076, 8
        %s1078 = scalar_lea.vmem %s17, %s1077
        %s1079 = smul.u32 2, %s52
        %p1081 = scmp.eq.s32.totalorder %s53, 0
        // Predicated region
        $region149: #{global_branch_forward.1} parent=87 // pred_check
          %p1082 = pneg %p1081
        $region150: #{global_branch_forward.1} parent=87 // pred_check_branch
          %1084 = sbr.rel (%p1082) target = $region152
        $region151: #{global_branch_forward.1} parent=87 // pred_region
          %v1085 = vld [vmem:[%s1064] sm:$0xff]
          %v1086 = vld [vmem:[%s1064 + $0x8] sm:$0xff]
          %v1087 = vld [vmem:[%s1064 + $0x10] sm:$0xff]
          %v1088 = vld [vmem:[%s1064 + $0x18] sm:$0xff]
          %v1089 = vld [vmem:[%s1064 + $0x20] sm:$0xff]
          %v1090 = vld [vmem:[%s1064 + $0x28] sm:$0xff]
          %v1091 = vld [vmem:[%s1064 + $0x30] sm:$0xff]
          %v1092 = vld [vmem:[%s1064 + $0x38] sm:$0xff]
          %v1093 = vld [vmem:[%s1064 + $0x40] sm:$0xff]
          %v1094 = vld [vmem:[%s1064 + $0x48] sm:$0xff]
          %v1095 = vld [vmem:[%s1064 + $0x50] sm:$0xff]
          %v1096 = vld [vmem:[%s1064 + $0x58] sm:$0xff]
          %v1097 = vld [vmem:[#allocation2] sm:$0xff]
          %v1098 = vld [vmem:[#allocation2 + $0x8] sm:$0xff]
          %v1099 = vld [vmem:[#allocation2 + $0x10] sm:$0xff]
          %v1100 = vld [vmem:[#allocation2 + $0x18] sm:$0xff]
          %v1101 = vld [vmem:[#allocation2 + $0x20] sm:$0xff]
          %v1102 = vld [vmem:[#allocation2 + $0x28] sm:$0xff]
          %v1103 = vld [vmem:[#allocation2 + $0x30] sm:$0xff]
          %v1104 = vld [vmem:[#allocation2 + $0x38] sm:$0xff]
          %v1105 = vld [vmem:[#allocation2 + $0x40] sm:$0xff]
          %v1106 = vld [vmem:[#allocation2 + $0x48] sm:$0xff]
          %v1107 = vld [vmem:[#allocation2 + $0x50] sm:$0xff]
          %v1108 = vld [vmem:[#allocation2 + $0x58] sm:$0xff]
          %v1109 = vld [vmem:[#allocation2 + $0x60] sm:$0xff]
          %v1110 = vld [vmem:[#allocation2 + $0x68] sm:$0xff]
          %v1111 = vld [vmem:[#allocation2 + $0x70] sm:$0xff]
          %v1112 = vld [vmem:[#allocation2 + $0x78] sm:$0xff]
          %v1113 = vld [vmem:[#allocation2 + $0x80] sm:$0xff]
          %v1114 = vld [vmem:[#allocation2 + $0x88] sm:$0xff]
          %v1115 = vld [vmem:[#allocation2 + $0x90] sm:$0xff]
          %v1116 = vld [vmem:[#allocation2 + $0x98] sm:$0xff]
          %v1117 = vld [vmem:[#allocation2 + $0xa0] sm:$0xff]
          %v1118 = vld [vmem:[#allocation2 + $0xa8] sm:$0xff]
          %v1119 = vld [vmem:[#allocation2 + $0xb0] sm:$0xff]
          %v1120 = vld [vmem:[#allocation2 + $0xb8] sm:$0xff]
          %v1121 = vld [vmem:[#allocation2 + $0xc0] sm:$0xff]
          %v1122 = vld [vmem:[#allocation2 + $0xc8] sm:$0xff]
          %v1123 = vld [vmem:[#allocation2 + $0xd0] sm:$0xff]
          %v1124 = vld [vmem:[#allocation2 + $0xd8] sm:$0xff]
          %v1125 = vld [vmem:[#allocation2 + $0xe0] sm:$0xff]
          %v1126 = vld [vmem:[#allocation2 + $0xe8] sm:$0xff]
          %v1127 = vld [vmem:[#allocation2 + $0xf0] sm:$0xff]
          %v1128 = vld [vmem:[#allocation2 + $0xf8] sm:$0xff]
          %v1129 = vld [vmem:[#allocation2 + $0x100] sm:$0xff]
          %v1130 = vld [vmem:[#allocation2 + $0x108] sm:$0xff]
          %v1131 = vld [vmem:[#allocation2 + $0x110] sm:$0xff]
          %v1132 = vld [vmem:[#allocation2 + $0x118] sm:$0xff]
          %v1133 = vld [vmem:[#allocation2 + $0x120] sm:$0xff]
          %v1134 = vld [vmem:[#allocation2 + $0x128] sm:$0xff]
          %v1135 = vld [vmem:[#allocation2 + $0x130] sm:$0xff]
          %v1136 = vld [vmem:[#allocation2 + $0x138] sm:$0xff]
          %v1137 = vld [vmem:[#allocation2 + $0x140] sm:$0xff]
          %v1138 = vld [vmem:[#allocation2 + $0x148] sm:$0xff]
          %v1139 = vld [vmem:[#allocation2 + $0x150] sm:$0xff]
          %v1140 = vld [vmem:[#allocation2 + $0x158] sm:$0xff]
          %v1141 = vld [vmem:[#allocation2 + $0x160] sm:$0xff]
          %v1142 = vld [vmem:[#allocation2 + $0x168] sm:$0xff]
          %v1143 = vld [vmem:[#allocation2 + $0x170] sm:$0xff]
          %v1144 = vld [vmem:[#allocation2 + $0x178] sm:$0xff]
          %v1145 = vld [vmem:[#allocation2 + $0x180] sm:$0xff]
          %v1146 = vld [vmem:[#allocation2 + $0x188] sm:$0xff]
          %v1147 = vld [vmem:[#allocation2 + $0x190] sm:$0xff]
          %v1148 = vld [vmem:[#allocation2 + $0x198] sm:$0xff]
          %v1149 = vld [vmem:[#allocation2 + $0x1a0] sm:$0xff]
          %v1150 = vld [vmem:[#allocation2 + $0x1a8] sm:$0xff]
          %v1151 = vld [vmem:[#allocation2 + $0x1b0] sm:$0xff]
          %v1152 = vld [vmem:[#allocation2 + $0x1b8] sm:$0xff]
          %v1153 = vld [vmem:[#allocation2 + $0x1c0] sm:$0xff]
          %v1154 = vld [vmem:[#allocation2 + $0x1c8] sm:$0xff]
          %v1155 = vld [vmem:[#allocation2 + $0x1d0] sm:$0xff]
          %v1156 = vld [vmem:[#allocation2 + $0x1d8] sm:$0xff]
          %v1157 = vld [vmem:[#allocation2 + $0x1e0] sm:$0xff]
          %v1158 = vld [vmem:[#allocation2 + $0x1e8] sm:$0xff]
          %v1159 = vld [vmem:[#allocation2 + $0x1f0] sm:$0xff]
          %v1160 = vld [vmem:[#allocation2 + $0x1f8] sm:$0xff]
          %v1161 = vld [vmem:[#allocation2 + $0x200] sm:$0xff]
          %v1162 = vld [vmem:[#allocation2 + $0x208] sm:$0xff]
          %v1163 = vld [vmem:[#allocation2 + $0x210] sm:$0xff]
          %v1164 = vld [vmem:[#allocation2 + $0x218] sm:$0xff]
          %v1165 = vld [vmem:[#allocation2 + $0x220] sm:$0xff]
          %v1166 = vld [vmem:[#allocation2 + $0x228] sm:$0xff]
          %v1167 = vld [vmem:[#allocation2 + $0x230] sm:$0xff]
          %v1168 = vld [vmem:[#allocation2 + $0x238] sm:$0xff]
          %v1169 = vld [vmem:[#allocation2 + $0x240] sm:$0xff]
          %v1170 = vld [vmem:[#allocation2 + $0x248] sm:$0xff]
          %v1171 = vld [vmem:[#allocation2 + $0x250] sm:$0xff]
          %v1172 = vld [vmem:[#allocation2 + $0x258] sm:$0xff]
          %v1173 = vld [vmem:[#allocation2 + $0x260] sm:$0xff]
          %v1174 = vld [vmem:[#allocation2 + $0x268] sm:$0xff]
          %v1175 = vld [vmem:[#allocation2 + $0x270] sm:$0xff]
          %v1176 = vld [vmem:[#allocation2 + $0x278] sm:$0xff]
          %v1177 = vld [vmem:[#allocation2 + $0x280] sm:$0xff]
          %v1178 = vld [vmem:[#allocation2 + $0x288] sm:$0xff]
          %v1179 = vld [vmem:[#allocation2 + $0x290] sm:$0xff]
          %v1180 = vld [vmem:[#allocation2 + $0x298] sm:$0xff]
          %v1181 = vld [vmem:[#allocation2 + $0x2a0] sm:$0xff]
          %v1182 = vld [vmem:[#allocation2 + $0x2a8] sm:$0xff]
          %v1183 = vld [vmem:[#allocation2 + $0x2b0] sm:$0xff]
          %v1184 = vld [vmem:[#allocation2 + $0x2b8] sm:$0xff]
          %v1185 = vld [vmem:[#allocation2 + $0x2c0] sm:$0xff]
          %v1186 = vld [vmem:[#allocation2 + $0x2c8] sm:$0xff]
          %v1187 = vld [vmem:[#allocation2 + $0x2d0] sm:$0xff]
          %v1188 = vld [vmem:[#allocation2 + $0x2d8] sm:$0xff]
          %v1189 = vld [vmem:[#allocation2 + $0x2e0] sm:$0xff]
          %v1190 = vld [vmem:[#allocation2 + $0x2e8] sm:$0xff]
          %v1191 = vld [vmem:[#allocation2 + $0x2f0] sm:$0xff]
          %v1192 = vld [vmem:[#allocation2 + $0x2f8] sm:$0xff]
          %v1193 = vld [vmem:[#allocation2 + $0x300] sm:$0xff]
          %v1194 = vld [vmem:[#allocation2 + $0x308] sm:$0xff]
          %v1195 = vld [vmem:[#allocation2 + $0x310] sm:$0xff]
          %v1196 = vld [vmem:[#allocation2 + $0x318] sm:$0xff]
          %v1197 = vld [vmem:[#allocation2 + $0x320] sm:$0xff]
          %v1198 = vld [vmem:[#allocation2 + $0x328] sm:$0xff]
          %v1199 = vld [vmem:[#allocation2 + $0x330] sm:$0xff]
          %v1200 = vld [vmem:[#allocation2 + $0x338] sm:$0xff]
          %v1201 = vld [vmem:[#allocation2 + $0x340] sm:$0xff]
          %v1202 = vld [vmem:[#allocation2 + $0x348] sm:$0xff]
          %v1203 = vld [vmem:[#allocation2 + $0x350] sm:$0xff]
          %v1204 = vld [vmem:[#allocation2 + $0x358] sm:$0xff]
          %v1205 = vld [vmem:[#allocation2 + $0x360] sm:$0xff]
          %v1206 = vld [vmem:[#allocation2 + $0x368] sm:$0xff]
          %v1207 = vld [vmem:[#allocation2 + $0x370] sm:$0xff]
          %v1208 = vld [vmem:[#allocation2 + $0x378] sm:$0xff]
          %v1209 = vld [vmem:[#allocation2 + $0x380] sm:$0xff]
          %v1210 = vld [vmem:[#allocation2 + $0x388] sm:$0xff]
          %v1211 = vld [vmem:[#allocation2 + $0x390] sm:$0xff]
          %v1212 = vld [vmem:[#allocation2 + $0x398] sm:$0xff]
          %v1213 = vld [vmem:[#allocation2 + $0x3a0] sm:$0xff]
          %v1214 = vld [vmem:[#allocation2 + $0x3a8] sm:$0xff]
          %v1215 = vld [vmem:[#allocation2 + $0x3b0] sm:$0xff]
          %v1216 = vld [vmem:[#allocation2 + $0x3b8] sm:$0xff]
          %v1217 = vld [vmem:[#allocation2 + $0x3c0] sm:$0xff]
          %v1218 = vld [vmem:[#allocation2 + $0x3c8] sm:$0xff]
          %v1219 = vld [vmem:[#allocation2 + $0x3d0] sm:$0xff]
          %v1220 = vld [vmem:[#allocation2 + $0x3d8] sm:$0xff]
          %v1221 = vld [vmem:[#allocation2 + $0x3e0] sm:$0xff]
          %v1222 = vld [vmem:[#allocation2 + $0x3e8] sm:$0xff]
          %v1223 = vld [vmem:[#allocation2 + $0x3f0] sm:$0xff]
          %v1224 = vld [vmem:[#allocation2 + $0x3f8] sm:$0xff]
          %v1225 = vld [vmem:[#allocation2 + $0x400] sm:$0xff]
          %v1226 = vld [vmem:[#allocation2 + $0x408] sm:$0xff]
          %v1227 = vld [vmem:[#allocation2 + $0x410] sm:$0xff]
          %v1228 = vld [vmem:[#allocation2 + $0x418] sm:$0xff]
          %v1229 = vld [vmem:[#allocation2 + $0x420] sm:$0xff]
          %v1230 = vld [vmem:[#allocation2 + $0x428] sm:$0xff]
          %v1231 = vld [vmem:[#allocation2 + $0x430] sm:$0xff]
          %v1232 = vld [vmem:[#allocation2 + $0x438] sm:$0xff]
          %v1233 = vld [vmem:[#allocation2 + $0x440] sm:$0xff]
          %v1234 = vld [vmem:[#allocation2 + $0x448] sm:$0xff]
          %v1235 = vld [vmem:[#allocation2 + $0x450] sm:$0xff]
          %v1236 = vld [vmem:[#allocation2 + $0x458] sm:$0xff]
          %v1237 = vld [vmem:[#allocation2 + $0x460] sm:$0xff]
          %v1238 = vld [vmem:[#allocation2 + $0x468] sm:$0xff]
          %v1239 = vld [vmem:[#allocation2 + $0x470] sm:$0xff]
          %v1240 = vld [vmem:[#allocation2 + $0x478] sm:$0xff]
          %v1241 = vld [vmem:[#allocation2 + $0x480] sm:$0xff]
          %v1242 = vld [vmem:[#allocation2 + $0x488] sm:$0xff]
          %v1243 = vld [vmem:[#allocation2 + $0x490] sm:$0xff]
          %v1244 = vld [vmem:[#allocation2 + $0x498] sm:$0xff]
          %v1245 = vld [vmem:[#allocation2 + $0x4a0] sm:$0xff]
          %v1246 = vld [vmem:[#allocation2 + $0x4a8] sm:$0xff]
          %v1247 = vld [vmem:[#allocation2 + $0x4b0] sm:$0xff]
          %v1248 = vld [vmem:[#allocation2 + $0x4b8] sm:$0xff]
          %v1249 = vld [vmem:[#allocation2 + $0x4c0] sm:$0xff]
          %v1250 = vld [vmem:[#allocation2 + $0x4c8] sm:$0xff]
          %v1251 = vld [vmem:[#allocation2 + $0x4d0] sm:$0xff]
          %v1252 = vld [vmem:[#allocation2 + $0x4d8] sm:$0xff]
          %v1253 = vld [vmem:[#allocation2 + $0x4e0] sm:$0xff]
          %v1254 = vld [vmem:[#allocation2 + $0x4e8] sm:$0xff]
          %v1255 = vld [vmem:[#allocation2 + $0x4f0] sm:$0xff]
          %v1256 = vld [vmem:[#allocation2 + $0x4f8] sm:$0xff]
          %v1257 = vld [vmem:[#allocation2 + $0x500] sm:$0xff]
          %v1258 = vld [vmem:[#allocation2 + $0x508] sm:$0xff]
          %v1259 = vld [vmem:[#allocation2 + $0x510] sm:$0xff]
          %v1260 = vld [vmem:[#allocation2 + $0x518] sm:$0xff]
          %v1261 = vld [vmem:[#allocation2 + $0x520] sm:$0xff]
          %v1262 = vld [vmem:[#allocation2 + $0x528] sm:$0xff]
          %v1263 = vld [vmem:[#allocation2 + $0x530] sm:$0xff]
          %v1264 = vld [vmem:[#allocation2 + $0x538] sm:$0xff]
          %v1265 = vld [vmem:[#allocation2 + $0x540] sm:$0xff]
          %v1266 = vld [vmem:[#allocation2 + $0x548] sm:$0xff]
          %v1267 = vld [vmem:[#allocation2 + $0x550] sm:$0xff]
          %v1268 = vld [vmem:[#allocation2 + $0x558] sm:$0xff]
          %v1269 = vld [vmem:[#allocation2 + $0x560] sm:$0xff]
          %v1270 = vld [vmem:[#allocation2 + $0x568] sm:$0xff]
          %v1271 = vld [vmem:[#allocation2 + $0x570] sm:$0xff]
          %v1272 = vld [vmem:[#allocation2 + $0x578] sm:$0xff]
          %v1273 = vld [vmem:[#allocation2 + $0x580] sm:$0xff]
          %v1274 = vld [vmem:[#allocation2 + $0x588] sm:$0xff]
          %v1275 = vld [vmem:[#allocation2 + $0x590] sm:$0xff]
          %v1276 = vld [vmem:[#allocation2 + $0x598] sm:$0xff]
          %v1277 = vld [vmem:[#allocation2 + $0x5a0] sm:$0xff]
          %v1278 = vld [vmem:[#allocation2 + $0x5a8] sm:$0xff]
          %v1279 = vld [vmem:[#allocation2 + $0x5b0] sm:$0xff]
          %v1280 = vld [vmem:[#allocation2 + $0x5b8] sm:$0xff]
          %v1281 = vld [vmem:[#allocation2 + $0x5c0] sm:$0xff]
          %v1282 = vld [vmem:[#allocation2 + $0x5c8] sm:$0xff]
          %v1283 = vld [vmem:[#allocation2 + $0x5d0] sm:$0xff]
          %v1284 = vld [vmem:[#allocation2 + $0x5d8] sm:$0xff]
          %v1285 = vld [vmem:[#allocation2 + $0x5e0] sm:$0xff]
          %v1286 = vld [vmem:[#allocation2 + $0x5e8] sm:$0xff]
          %v1287 = vld [vmem:[#allocation2 + $0x5f0] sm:$0xff]
          %v1288 = vld [vmem:[#allocation2 + $0x5f8] sm:$0xff]
          %v1289 = vld [vmem:[%s1071] sm:$0xff]
          %v1290 = vld [vmem:[%s1071 + $0x8] sm:$0xff]
          %v1291 = vld [vmem:[%s1071 + $0x10] sm:$0xff]
          %v1292 = vld [vmem:[%s1071 + $0x18] sm:$0xff]
          %v1305 = vunpack.c.l.b16 %v1085
          %v1306 = vunpack.c.h.b16 %v1085
          %v1307 = vunpack.c.l.b16 %v1086
          %v1308 = vunpack.c.h.b16 %v1086
          %v1309 = vunpack.c.l.b16 %v1087
          %v1310 = vunpack.c.h.b16 %v1087
          %v1311 = vunpack.c.l.b16 %v1088
          %v1312 = vunpack.c.h.b16 %v1088
          %v1313 = vunpack.c.l.b16 %v1089
          %v1314 = vunpack.c.h.b16 %v1089
          %v1315 = vunpack.c.l.b16 %v1090
          %v1316 = vunpack.c.h.b16 %v1090
          %v1317 = vunpack.c.l.b16 %v1091
          %v1318 = vunpack.c.h.b16 %v1091
          %v1319 = vunpack.c.l.b16 %v1092
          %v1320 = vunpack.c.h.b16 %v1092
          %v1321 = vunpack.c.l.b16 %v1093
          %v1322 = vunpack.c.h.b16 %v1093
          %v1323 = vunpack.c.l.b16 %v1094
          %v1324 = vunpack.c.h.b16 %v1094
          %v1325 = vunpack.c.l.b16 %v1095
          %v1326 = vunpack.c.h.b16 %v1095
          %v1327 = vunpack.c.l.b16 %v1096
          %v1328 = vunpack.c.h.b16 %v1096
          %v1329 = vpack.c.b16 %v1317, %v1305
          %v1330 = vpack.c.b16 %v1318, %v1306
          %v1331 = vpack.c.b16 %v1319, %v1307
          %v1332 = vpack.c.b16 %v1320, %v1308
          %v1333 = vpack.c.b16 %v1321, %v1309
          %v1334 = vpack.c.b16 %v1322, %v1310
          %v1335 = vpack.c.b16 %v1323, %v1311
          %v1336 = vpack.c.b16 %v1324, %v1312
          %v1337 = vpack.c.b16 %v1325, %v1313
          %v1338 = vpack.c.b16 %v1326, %v1314
          %v1339 = vpack.c.b16 %v1327, %v1315
          %v1340 = vpack.c.b16 %v1328, %v1316
          %v1545 = vunpack.c.l.b16 %v1097
          %v1546 = vunpack.c.h.b16 %v1097
          %v1547 = vunpack.c.l.b16 %v1098
          %v1548 = vunpack.c.h.b16 %v1098
          %v1549 = vunpack.c.l.b16 %v1099
          %v1550 = vunpack.c.h.b16 %v1099
          %v1551 = vunpack.c.l.b16 %v1100
          %v1552 = vunpack.c.h.b16 %v1100
          %v1553 = vunpack.c.l.b16 %v1101
          %v1554 = vunpack.c.h.b16 %v1101
          %v1555 = vunpack.c.l.b16 %v1102
          %v1556 = vunpack.c.h.b16 %v1102
          %v1557 = vunpack.c.l.b16 %v1103
          %v1558 = vunpack.c.h.b16 %v1103
          %v1559 = vunpack.c.l.b16 %v1104
          %v1560 = vunpack.c.h.b16 %v1104
          %v1561 = vunpack.c.l.b16 %v1105
          %v1562 = vunpack.c.h.b16 %v1105
          %v1563 = vunpack.c.l.b16 %v1106
          %v1564 = vunpack.c.h.b16 %v1106
          %v1565 = vunpack.c.l.b16 %v1107
          %v1566 = vunpack.c.h.b16 %v1107
          %v1567 = vunpack.c.l.b16 %v1108
          %v1568 = vunpack.c.h.b16 %v1108
          %v1569 = vunpack.c.l.b16 %v1109
          %v1570 = vunpack.c.h.b16 %v1109
          %v1571 = vunpack.c.l.b16 %v1110
          %v1572 = vunpack.c.h.b16 %v1110
          %v1573 = vunpack.c.l.b16 %v1111
          %v1574 = vunpack.c.h.b16 %v1111
          %v1575 = vunpack.c.l.b16 %v1112
          %v1576 = vunpack.c.h.b16 %v1112
          %v1577 = vunpack.c.l.b16 %v1113
          %v1578 = vunpack.c.h.b16 %v1113
          %v1579 = vunpack.c.l.b16 %v1114
          %v1580 = vunpack.c.h.b16 %v1114
          %v1581 = vunpack.c.l.b16 %v1115
          %v1582 = vunpack.c.h.b16 %v1115
          %v1583 = vunpack.c.l.b16 %v1116
          %v1584 = vunpack.c.h.b16 %v1116
          %v1585 = vunpack.c.l.b16 %v1117
          %v1586 = vunpack.c.h.b16 %v1117
          %v1587 = vunpack.c.l.b16 %v1118
          %v1588 = vunpack.c.h.b16 %v1118
          %v1589 = vunpack.c.l.b16 %v1119
          %v1590 = vunpack.c.h.b16 %v1119
          %v1591 = vunpack.c.l.b16 %v1120
          %v1592 = vunpack.c.h.b16 %v1120
          %v1593 = vunpack.c.l.b16 %v1121
          %v1594 = vunpack.c.h.b16 %v1121
          %v1595 = vunpack.c.l.b16 %v1122
          %v1596 = vunpack.c.h.b16 %v1122
          %v1597 = vunpack.c.l.b16 %v1123
          %v1598 = vunpack.c.h.b16 %v1123
          %v1599 = vunpack.c.l.b16 %v1124
          %v1600 = vunpack.c.h.b16 %v1124
          %v1601 = vunpack.c.l.b16 %v1125
          %v1602 = vunpack.c.h.b16 %v1125
          %v1603 = vunpack.c.l.b16 %v1126
          %v1604 = vunpack.c.h.b16 %v1126
          %v1605 = vunpack.c.l.b16 %v1127
          %v1606 = vunpack.c.h.b16 %v1127
          %v1607 = vunpack.c.l.b16 %v1128
          %v1608 = vunpack.c.h.b16 %v1128
          %v1609 = vunpack.c.l.b16 %v1129
          %v1610 = vunpack.c.h.b16 %v1129
          %v1611 = vunpack.c.l.b16 %v1130
          %v1612 = vunpack.c.h.b16 %v1130
          %v1613 = vunpack.c.l.b16 %v1131
          %v1614 = vunpack.c.h.b16 %v1131
          %v1615 = vunpack.c.l.b16 %v1132
          %v1616 = vunpack.c.h.b16 %v1132
          %v1617 = vunpack.c.l.b16 %v1133
          %v1618 = vunpack.c.h.b16 %v1133
          %v1619 = vunpack.c.l.b16 %v1134
          %v1620 = vunpack.c.h.b16 %v1134
          %v1621 = vunpack.c.l.b16 %v1135
          %v1622 = vunpack.c.h.b16 %v1135
          %v1623 = vunpack.c.l.b16 %v1136
          %v1624 = vunpack.c.h.b16 %v1136
          %v1625 = vunpack.c.l.b16 %v1137
          %v1626 = vunpack.c.h.b16 %v1137
          %v1627 = vunpack.c.l.b16 %v1138
          %v1628 = vunpack.c.h.b16 %v1138
          %v1629 = vunpack.c.l.b16 %v1139
          %v1630 = vunpack.c.h.b16 %v1139
          %v1631 = vunpack.c.l.b16 %v1140
          %v1632 = vunpack.c.h.b16 %v1140
          %v1633 = vunpack.c.l.b16 %v1141
          %v1634 = vunpack.c.h.b16 %v1141
          %v1635 = vunpack.c.l.b16 %v1142
          %v1636 = vunpack.c.h.b16 %v1142
          %v1637 = vunpack.c.l.b16 %v1143
          %v1638 = vunpack.c.h.b16 %v1143
          %v1639 = vunpack.c.l.b16 %v1144
          %v1640 = vunpack.c.h.b16 %v1144
          %v1641 = vunpack.c.l.b16 %v1145
          %v1642 = vunpack.c.h.b16 %v1145
          %v1643 = vunpack.c.l.b16 %v1146
          %v1644 = vunpack.c.h.b16 %v1146
          %v1645 = vunpack.c.l.b16 %v1147
          %v1646 = vunpack.c.h.b16 %v1147
          %v1647 = vunpack.c.l.b16 %v1148
          %v1648 = vunpack.c.h.b16 %v1148
          %v1649 = vunpack.c.l.b16 %v1149
          %v1650 = vunpack.c.h.b16 %v1149
          %v1651 = vunpack.c.l.b16 %v1150
          %v1652 = vunpack.c.h.b16 %v1150
          %v1653 = vunpack.c.l.b16 %v1151
          %v1654 = vunpack.c.h.b16 %v1151
          %v1655 = vunpack.c.l.b16 %v1152
          %v1656 = vunpack.c.h.b16 %v1152
          %v1657 = vunpack.c.l.b16 %v1153
          %v1658 = vunpack.c.h.b16 %v1153
          %v1659 = vunpack.c.l.b16 %v1154
          %v1660 = vunpack.c.h.b16 %v1154
          %v1661 = vunpack.c.l.b16 %v1155
          %v1662 = vunpack.c.h.b16 %v1155
          %v1663 = vunpack.c.l.b16 %v1156
          %v1664 = vunpack.c.h.b16 %v1156
          %v1665 = vunpack.c.l.b16 %v1157
          %v1666 = vunpack.c.h.b16 %v1157
          %v1667 = vunpack.c.l.b16 %v1158
          %v1668 = vunpack.c.h.b16 %v1158
          %v1669 = vunpack.c.l.b16 %v1159
          %v1670 = vunpack.c.h.b16 %v1159
          %v1671 = vunpack.c.l.b16 %v1160
          %v1672 = vunpack.c.h.b16 %v1160
          %v1673 = vunpack.c.l.b16 %v1161
          %v1674 = vunpack.c.h.b16 %v1161
          %v1675 = vunpack.c.l.b16 %v1162
          %v1676 = vunpack.c.h.b16 %v1162
          %v1677 = vunpack.c.l.b16 %v1163
          %v1678 = vunpack.c.h.b16 %v1163
          %v1679 = vunpack.c.l.b16 %v1164
          %v1680 = vunpack.c.h.b16 %v1164
          %v1681 = vunpack.c.l.b16 %v1165
          %v1682 = vunpack.c.h.b16 %v1165
          %v1683 = vunpack.c.l.b16 %v1166
          %v1684 = vunpack.c.h.b16 %v1166
          %v1685 = vunpack.c.l.b16 %v1167
          %v1686 = vunpack.c.h.b16 %v1167
          %v1687 = vunpack.c.l.b16 %v1168
          %v1688 = vunpack.c.h.b16 %v1168
          %v1689 = vunpack.c.l.b16 %v1169
          %v1690 = vunpack.c.h.b16 %v1169
          %v1691 = vunpack.c.l.b16 %v1170
          %v1692 = vunpack.c.h.b16 %v1170
          %v1693 = vunpack.c.l.b16 %v1171
          %v1694 = vunpack.c.h.b16 %v1171
          %v1695 = vunpack.c.l.b16 %v1172
          %v1696 = vunpack.c.h.b16 %v1172
          %v1697 = vunpack.c.l.b16 %v1173
          %v1698 = vunpack.c.h.b16 %v1173
          %v1699 = vunpack.c.l.b16 %v1174
          %v1700 = vunpack.c.h.b16 %v1174
          %v1701 = vunpack.c.l.b16 %v1175
          %v1702 = vunpack.c.h.b16 %v1175
          %v1703 = vunpack.c.l.b16 %v1176
          %v1704 = vunpack.c.h.b16 %v1176
          %v1705 = vunpack.c.l.b16 %v1177
          %v1706 = vunpack.c.h.b16 %v1177
          %v1707 = vunpack.c.l.b16 %v1178
          %v1708 = vunpack.c.h.b16 %v1178
          %v1709 = vunpack.c.l.b16 %v1179
          %v1710 = vunpack.c.h.b16 %v1179
          %v1711 = vunpack.c.l.b16 %v1180
          %v1712 = vunpack.c.h.b16 %v1180
          %v1713 = vunpack.c.l.b16 %v1181
          %v1714 = vunpack.c.h.b16 %v1181
          %v1715 = vunpack.c.l.b16 %v1182
          %v1716 = vunpack.c.h.b16 %v1182
          %v1717 = vunpack.c.l.b16 %v1183
          %v1718 = vunpack.c.h.b16 %v1183
          %v1719 = vunpack.c.l.b16 %v1184
          %v1720 = vunpack.c.h.b16 %v1184
          %v1721 = vunpack.c.l.b16 %v1185
          %v1722 = vunpack.c.h.b16 %v1185
          %v1723 = vunpack.c.l.b16 %v1186
          %v1724 = vunpack.c.h.b16 %v1186
          %v1725 = vunpack.c.l.b16 %v1187
          %v1726 = vunpack.c.h.b16 %v1187
          %v1727 = vunpack.c.l.b16 %v1188
          %v1728 = vunpack.c.h.b16 %v1188
          %v1729 = vunpack.c.l.b16 %v1189
          %v1730 = vunpack.c.h.b16 %v1189
          %v1731 = vunpack.c.l.b16 %v1190
          %v1732 = vunpack.c.h.b16 %v1190
          %v1733 = vunpack.c.l.b16 %v1191
          %v1734 = vunpack.c.h.b16 %v1191
          %v1735 = vunpack.c.l.b16 %v1192
          %v1736 = vunpack.c.h.b16 %v1192
          %v1737 = vunpack.c.l.b16 %v1193
          %v1738 = vunpack.c.h.b16 %v1193
          %v1739 = vunpack.c.l.b16 %v1194
          %v1740 = vunpack.c.h.b16 %v1194
          %v1741 = vunpack.c.l.b16 %v1195
          %v1742 = vunpack.c.h.b16 %v1195
          %v1743 = vunpack.c.l.b16 %v1196
          %v1744 = vunpack.c.h.b16 %v1196
          %v1745 = vunpack.c.l.b16 %v1197
          %v1746 = vunpack.c.h.b16 %v1197
          %v1747 = vunpack.c.l.b16 %v1198
          %v1748 = vunpack.c.h.b16 %v1198
          %v1749 = vunpack.c.l.b16 %v1199
          %v1750 = vunpack.c.h.b16 %v1199
          %v1751 = vunpack.c.l.b16 %v1200
          %v1752 = vunpack.c.h.b16 %v1200
          %v1753 = vunpack.c.l.b16 %v1201
          %v1754 = vunpack.c.h.b16 %v1201
          %v1755 = vunpack.c.l.b16 %v1202
          %v1756 = vunpack.c.h.b16 %v1202
          %v1757 = vunpack.c.l.b16 %v1203
          %v1758 = vunpack.c.h.b16 %v1203
          %v1759 = vunpack.c.l.b16 %v1204
          %v1760 = vunpack.c.h.b16 %v1204
          %v1761 = vunpack.c.l.b16 %v1205
          %v1762 = vunpack.c.h.b16 %v1205
          %v1763 = vunpack.c.l.b16 %v1206
          %v1764 = vunpack.c.h.b16 %v1206
          %v1765 = vunpack.c.l.b16 %v1207
          %v1766 = vunpack.c.h.b16 %v1207
          %v1767 = vunpack.c.l.b16 %v1208
          %v1768 = vunpack.c.h.b16 %v1208
          %v1769 = vunpack.c.l.b16 %v1209
          %v1770 = vunpack.c.h.b16 %v1209
          %v1771 = vunpack.c.l.b16 %v1210
          %v1772 = vunpack.c.h.b16 %v1210
          %v1773 = vunpack.c.l.b16 %v1211
          %v1774 = vunpack.c.h.b16 %v1211
          %v1775 = vunpack.c.l.b16 %v1212
          %v1776 = vunpack.c.h.b16 %v1212
          %v1777 = vunpack.c.l.b16 %v1213
          %v1778 = vunpack.c.h.b16 %v1213
          %v1779 = vunpack.c.l.b16 %v1214
          %v1780 = vunpack.c.h.b16 %v1214
          %v1781 = vunpack.c.l.b16 %v1215
          %v1782 = vunpack.c.h.b16 %v1215
          %v1783 = vunpack.c.l.b16 %v1216
          %v1784 = vunpack.c.h.b16 %v1216
          %v1785 = vunpack.c.l.b16 %v1217
          %v1786 = vunpack.c.h.b16 %v1217
          %v1787 = vunpack.c.l.b16 %v1218
          %v1788 = vunpack.c.h.b16 %v1218
          %v1789 = vunpack.c.l.b16 %v1219
          %v1790 = vunpack.c.h.b16 %v1219
          %v1791 = vunpack.c.l.b16 %v1220
          %v1792 = vunpack.c.h.b16 %v1220
          %v1793 = vunpack.c.l.b16 %v1221
          %v1794 = vunpack.c.h.b16 %v1221
          %v1795 = vunpack.c.l.b16 %v1222
          %v1796 = vunpack.c.h.b16 %v1222
          %v1797 = vunpack.c.l.b16 %v1223
          %v1798 = vunpack.c.h.b16 %v1223
          %v1799 = vunpack.c.l.b16 %v1224
          %v1800 = vunpack.c.h.b16 %v1224
          %v1801 = vunpack.c.l.b16 %v1225
          %v1802 = vunpack.c.h.b16 %v1225
          %v1803 = vunpack.c.l.b16 %v1226
          %v1804 = vunpack.c.h.b16 %v1226
          %v1805 = vunpack.c.l.b16 %v1227
          %v1806 = vunpack.c.h.b16 %v1227
          %v1807 = vunpack.c.l.b16 %v1228
          %v1808 = vunpack.c.h.b16 %v1228
          %v1809 = vunpack.c.l.b16 %v1229
          %v1810 = vunpack.c.h.b16 %v1229
          %v1811 = vunpack.c.l.b16 %v1230
          %v1812 = vunpack.c.h.b16 %v1230
          %v1813 = vunpack.c.l.b16 %v1231
          %v1814 = vunpack.c.h.b16 %v1231
          %v1815 = vunpack.c.l.b16 %v1232
          %v1816 = vunpack.c.h.b16 %v1232
          %v1817 = vunpack.c.l.b16 %v1233
          %v1818 = vunpack.c.h.b16 %v1233
          %v1819 = vunpack.c.l.b16 %v1234
          %v1820 = vunpack.c.h.b16 %v1234
          %v1821 = vunpack.c.l.b16 %v1235
          %v1822 = vunpack.c.h.b16 %v1235
          %v1823 = vunpack.c.l.b16 %v1236
          %v1824 = vunpack.c.h.b16 %v1236
          %v1825 = vunpack.c.l.b16 %v1237
          %v1826 = vunpack.c.h.b16 %v1237
          %v1827 = vunpack.c.l.b16 %v1238
          %v1828 = vunpack.c.h.b16 %v1238
          %v1829 = vunpack.c.l.b16 %v1239
          %v1830 = vunpack.c.h.b16 %v1239
          %v1831 = vunpack.c.l.b16 %v1240
          %v1832 = vunpack.c.h.b16 %v1240
          %v1833 = vunpack.c.l.b16 %v1241
          %v1834 = vunpack.c.h.b16 %v1241
          %v1835 = vunpack.c.l.b16 %v1242
          %v1836 = vunpack.c.h.b16 %v1242
          %v1837 = vunpack.c.l.b16 %v1243
          %v1838 = vunpack.c.h.b16 %v1243
          %v1839 = vunpack.c.l.b16 %v1244
          %v1840 = vunpack.c.h.b16 %v1244
          %v1841 = vunpack.c.l.b16 %v1245
          %v1842 = vunpack.c.h.b16 %v1245
          %v1843 = vunpack.c.l.b16 %v1246
          %v1844 = vunpack.c.h.b16 %v1246
          %v1845 = vunpack.c.l.b16 %v1247
          %v1846 = vunpack.c.h.b16 %v1247
          %v1847 = vunpack.c.l.b16 %v1248
          %v1848 = vunpack.c.h.b16 %v1248
          %v1849 = vunpack.c.l.b16 %v1249
          %v1850 = vunpack.c.h.b16 %v1249
          %v1851 = vunpack.c.l.b16 %v1250
          %v1852 = vunpack.c.h.b16 %v1250
          %v1853 = vunpack.c.l.b16 %v1251
          %v1854 = vunpack.c.h.b16 %v1251
          %v1855 = vunpack.c.l.b16 %v1252
          %v1856 = vunpack.c.h.b16 %v1252
          %v1857 = vunpack.c.l.b16 %v1253
          %v1858 = vunpack.c.h.b16 %v1253
          %v1859 = vunpack.c.l.b16 %v1254
          %v1860 = vunpack.c.h.b16 %v1254
          %v1861 = vunpack.c.l.b16 %v1255
          %v1862 = vunpack.c.h.b16 %v1255
          %v1863 = vunpack.c.l.b16 %v1256
          %v1864 = vunpack.c.h.b16 %v1256
          %v1865 = vunpack.c.l.b16 %v1257
          %v1866 = vunpack.c.h.b16 %v1257
          %v1867 = vunpack.c.l.b16 %v1258
          %v1868 = vunpack.c.h.b16 %v1258
          %v1869 = vunpack.c.l.b16 %v1259
          %v1870 = vunpack.c.h.b16 %v1259
          %v1871 = vunpack.c.l.b16 %v1260
          %v1872 = vunpack.c.h.b16 %v1260
          %v1873 = vunpack.c.l.b16 %v1261
          %v1874 = vunpack.c.h.b16 %v1261
          %v1875 = vunpack.c.l.b16 %v1262
          %v1876 = vunpack.c.h.b16 %v1262
          %v1877 = vunpack.c.l.b16 %v1263
          %v1878 = vunpack.c.h.b16 %v1263
          %v1879 = vunpack.c.l.b16 %v1264
          %v1880 = vunpack.c.h.b16 %v1264
          %v1881 = vunpack.c.l.b16 %v1265
          %v1882 = vunpack.c.h.b16 %v1265
          %v1883 = vunpack.c.l.b16 %v1266
          %v1884 = vunpack.c.h.b16 %v1266
          %v1885 = vunpack.c.l.b16 %v1267
          %v1886 = vunpack.c.h.b16 %v1267
          %v1887 = vunpack.c.l.b16 %v1268
          %v1888 = vunpack.c.h.b16 %v1268
          %v1889 = vunpack.c.l.b16 %v1269
          %v1890 = vunpack.c.h.b16 %v1269
          %v1891 = vunpack.c.l.b16 %v1270
          %v1892 = vunpack.c.h.b16 %v1270
          %v1893 = vunpack.c.l.b16 %v1271
          %v1894 = vunpack.c.h.b16 %v1271
          %v1895 = vunpack.c.l.b16 %v1272
          %v1896 = vunpack.c.h.b16 %v1272
          %v1897 = vunpack.c.l.b16 %v1273
          %v1898 = vunpack.c.h.b16 %v1273
          %v1899 = vunpack.c.l.b16 %v1274
          %v1900 = vunpack.c.h.b16 %v1274
          %v1901 = vunpack.c.l.b16 %v1275
          %v1902 = vunpack.c.h.b16 %v1275
          %v1903 = vunpack.c.l.b16 %v1276
          %v1904 = vunpack.c.h.b16 %v1276
          %v1905 = vunpack.c.l.b16 %v1277
          %v1906 = vunpack.c.h.b16 %v1277
          %v1907 = vunpack.c.l.b16 %v1278
          %v1908 = vunpack.c.h.b16 %v1278
          %v1909 = vunpack.c.l.b16 %v1279
          %v1910 = vunpack.c.h.b16 %v1279
          %v1911 = vunpack.c.l.b16 %v1280
          %v1912 = vunpack.c.h.b16 %v1280
          %v1913 = vunpack.c.l.b16 %v1281
          %v1914 = vunpack.c.h.b16 %v1281
          %v1915 = vunpack.c.l.b16 %v1282
          %v1916 = vunpack.c.h.b16 %v1282
          %v1917 = vunpack.c.l.b16 %v1283
          %v1918 = vunpack.c.h.b16 %v1283
          %v1919 = vunpack.c.l.b16 %v1284
          %v1920 = vunpack.c.h.b16 %v1284
          %v1921 = vunpack.c.l.b16 %v1285
          %v1922 = vunpack.c.h.b16 %v1285
          %v1923 = vunpack.c.l.b16 %v1286
          %v1924 = vunpack.c.h.b16 %v1286
          %v1925 = vunpack.c.l.b16 %v1287
          %v1926 = vunpack.c.h.b16 %v1287
          %v1927 = vunpack.c.l.b16 %v1288
          %v1928 = vunpack.c.h.b16 %v1288
          %v1929 = vpack.c.b16 %v1547, %v1545
          %v1930 = vpack.c.b16 %v1548, %v1546
          %v1931 = vpack.c.b16 %v1551, %v1549
          %v1932 = vpack.c.b16 %v1552, %v1550
          %v1933 = vpack.c.b16 %v1555, %v1553
          %v1934 = vpack.c.b16 %v1556, %v1554
          %v1935 = vpack.c.b16 %v1559, %v1557
          %v1936 = vpack.c.b16 %v1560, %v1558
          %v1937 = vpack.c.b16 %v1563, %v1561
          %v1938 = vpack.c.b16 %v1564, %v1562
          %v1939 = vpack.c.b16 %v1567, %v1565
          %v1940 = vpack.c.b16 %v1568, %v1566
          %v1941 = vpack.c.b16 %v1571, %v1569
          %v1942 = vpack.c.b16 %v1572, %v1570
          %v1943 = vpack.c.b16 %v1575, %v1573
          %v1944 = vpack.c.b16 %v1576, %v1574
          %v1945 = vpack.c.b16 %v1579, %v1577
          %v1946 = vpack.c.b16 %v1580, %v1578
          %v1947 = vpack.c.b16 %v1583, %v1581
          %v1948 = vpack.c.b16 %v1584, %v1582
          %v1949 = vpack.c.b16 %v1587, %v1585
          %v1950 = vpack.c.b16 %v1588, %v1586
          %v1951 = vpack.c.b16 %v1591, %v1589
          %v1952 = vpack.c.b16 %v1592, %v1590
          %v1953 = vpack.c.b16 %v1595, %v1593
          %v1954 = vpack.c.b16 %v1596, %v1594
          %v1955 = vpack.c.b16 %v1599, %v1597
          %v1956 = vpack.c.b16 %v1600, %v1598
          %v1957 = vpack.c.b16 %v1603, %v1601
          %v1958 = vpack.c.b16 %v1604, %v1602
          %v1959 = vpack.c.b16 %v1607, %v1605
          %v1960 = vpack.c.b16 %v1608, %v1606
          %v1961 = vpack.c.b16 %v1611, %v1609
          %v1962 = vpack.c.b16 %v1612, %v1610
          %v1963 = vpack.c.b16 %v1615, %v1613
          %v1964 = vpack.c.b16 %v1616, %v1614
          %v1965 = vpack.c.b16 %v1619, %v1617
          %v1966 = vpack.c.b16 %v1620, %v1618
          %v1967 = vpack.c.b16 %v1623, %v1621
          %v1968 = vpack.c.b16 %v1624, %v1622
          %v1969 = vpack.c.b16 %v1627, %v1625
          %v1970 = vpack.c.b16 %v1628, %v1626
          %v1971 = vpack.c.b16 %v1631, %v1629
          %v1972 = vpack.c.b16 %v1632, %v1630
          %v1973 = vpack.c.b16 %v1635, %v1633
          %v1974 = vpack.c.b16 %v1636, %v1634
          %v1975 = vpack.c.b16 %v1639, %v1637
          %v1976 = vpack.c.b16 %v1640, %v1638
          %v1977 = vpack.c.b16 %v1643, %v1641
          %v1978 = vpack.c.b16 %v1644, %v1642
          %v1979 = vpack.c.b16 %v1647, %v1645
          %v1980 = vpack.c.b16 %v1648, %v1646
          %v1981 = vpack.c.b16 %v1651, %v1649
          %v1982 = vpack.c.b16 %v1652, %v1650
          %v1983 = vpack.c.b16 %v1655, %v1653
          %v1984 = vpack.c.b16 %v1656, %v1654
          %v1985 = vpack.c.b16 %v1659, %v1657
          %v1986 = vpack.c.b16 %v1660, %v1658
          %v1987 = vpack.c.b16 %v1663, %v1661
          %v1988 = vpack.c.b16 %v1664, %v1662
          %v1989 = vpack.c.b16 %v1667, %v1665
          %v1990 = vpack.c.b16 %v1668, %v1666
          %v1991 = vpack.c.b16 %v1671, %v1669
          %v1992 = vpack.c.b16 %v1672, %v1670
          %v1993 = vpack.c.b16 %v1675, %v1673
          %v1994 = vpack.c.b16 %v1676, %v1674
          %v1995 = vpack.c.b16 %v1679, %v1677
          %v1996 = vpack.c.b16 %v1680, %v1678
          %v1997 = vpack.c.b16 %v1683, %v1681
          %v1998 = vpack.c.b16 %v1684, %v1682
          %v1999 = vpack.c.b16 %v1687, %v1685
          %v2000 = vpack.c.b16 %v1688, %v1686
          %v2001 = vpack.c.b16 %v1691, %v1689
          %v2002 = vpack.c.b16 %v1692, %v1690
          %v2003 = vpack.c.b16 %v1695, %v1693
          %v2004 = vpack.c.b16 %v1696, %v1694
          %v2005 = vpack.c.b16 %v1699, %v1697
          %v2006 = vpack.c.b16 %v1700, %v1698
          %v2007 = vpack.c.b16 %v1703, %v1701
          %v2008 = vpack.c.b16 %v1704, %v1702
          %v2009 = vpack.c.b16 %v1707, %v1705
          %v2010 = vpack.c.b16 %v1708, %v1706
          %v2011 = vpack.c.b16 %v1711, %v1709
          %v2012 = vpack.c.b16 %v1712, %v1710
          %v2013 = vpack.c.b16 %v1715, %v1713
          %v2014 = vpack.c.b16 %v1716, %v1714
          %v2015 = vpack.c.b16 %v1719, %v1717
          %v2016 = vpack.c.b16 %v1720, %v1718
          %v2017 = vpack.c.b16 %v1723, %v1721
          %v2018 = vpack.c.b16 %v1724, %v1722
          %v2019 = vpack.c.b16 %v1727, %v1725
          %v2020 = vpack.c.b16 %v1728, %v1726
          %v2021 = vpack.c.b16 %v1731, %v1729
          %v2022 = vpack.c.b16 %v1732, %v1730
          %v2023 = vpack.c.b16 %v1735, %v1733
          %v2024 = vpack.c.b16 %v1736, %v1734
          %v2025 = vpack.c.b16 %v1739, %v1737
          %v2026 = vpack.c.b16 %v1740, %v1738
          %v2027 = vpack.c.b16 %v1743, %v1741
          %v2028 = vpack.c.b16 %v1744, %v1742
          %v2029 = vpack.c.b16 %v1747, %v1745
          %v2030 = vpack.c.b16 %v1748, %v1746
          %v2031 = vpack.c.b16 %v1751, %v1749
          %v2032 = vpack.c.b16 %v1752, %v1750
          %v2033 = vpack.c.b16 %v1755, %v1753
          %v2034 = vpack.c.b16 %v1756, %v1754
          %v2035 = vpack.c.b16 %v1759, %v1757
          %v2036 = vpack.c.b16 %v1760, %v1758
          %v2037 = vpack.c.b16 %v1763, %v1761
          %v2038 = vpack.c.b16 %v1764, %v1762
          %v2039 = vpack.c.b16 %v1767, %v1765
          %v2040 = vpack.c.b16 %v1768, %v1766
          %v2041 = vpack.c.b16 %v1771, %v1769
          %v2042 = vpack.c.b16 %v1772, %v1770
          %v2043 = vpack.c.b16 %v1775, %v1773
          %v2044 = vpack.c.b16 %v1776, %v1774
          %v2045 = vpack.c.b16 %v1779, %v1777
          %v2046 = vpack.c.b16 %v1780, %v1778
          %v2047 = vpack.c.b16 %v1783, %v1781
          %v2048 = vpack.c.b16 %v1784, %v1782
          %v2049 = vpack.c.b16 %v1787, %v1785
          %v2050 = vpack.c.b16 %v1788, %v1786
          %v2051 = vpack.c.b16 %v1791, %v1789
          %v2052 = vpack.c.b16 %v1792, %v1790
          %v2053 = vpack.c.b16 %v1795, %v1793
          %v2054 = vpack.c.b16 %v1796, %v1794
          %v2055 = vpack.c.b16 %v1799, %v1797
          %v2056 = vpack.c.b16 %v1800, %v1798
          %v2057 = vpack.c.b16 %v1803, %v1801
          %v2058 = vpack.c.b16 %v1804, %v1802
          %v2059 = vpack.c.b16 %v1807, %v1805
          %v2060 = vpack.c.b16 %v1808, %v1806
          %v2061 = vpack.c.b16 %v1811, %v1809
          %v2062 = vpack.c.b16 %v1812, %v1810
          %v2063 = vpack.c.b16 %v1815, %v1813
          %v2064 = vpack.c.b16 %v1816, %v1814
          %v2065 = vpack.c.b16 %v1819, %v1817
          %v2066 = vpack.c.b16 %v1820, %v1818
          %v2067 = vpack.c.b16 %v1823, %v1821
          %v2068 = vpack.c.b16 %v1824, %v1822
          %v2069 = vpack.c.b16 %v1827, %v1825
          %v2070 = vpack.c.b16 %v1828, %v1826
          %v2071 = vpack.c.b16 %v1831, %v1829
          %v2072 = vpack.c.b16 %v1832, %v1830
          %v2073 = vpack.c.b16 %v1835, %v1833
          %v2074 = vpack.c.b16 %v1836, %v1834
          %v2075 = vpack.c.b16 %v1839, %v1837
          %v2076 = vpack.c.b16 %v1840, %v1838
          %v2077 = vpack.c.b16 %v1843, %v1841
          %v2078 = vpack.c.b16 %v1844, %v1842
          %v2079 = vpack.c.b16 %v1847, %v1845
          %v2080 = vpack.c.b16 %v1848, %v1846
          %v2081 = vpack.c.b16 %v1851, %v1849
          %v2082 = vpack.c.b16 %v1852, %v1850
          %v2083 = vpack.c.b16 %v1855, %v1853
          %v2084 = vpack.c.b16 %v1856, %v1854
          %v2085 = vpack.c.b16 %v1859, %v1857
          %v2086 = vpack.c.b16 %v1860, %v1858
          %v2087 = vpack.c.b16 %v1863, %v1861
          %v2088 = vpack.c.b16 %v1864, %v1862
          %v2089 = vpack.c.b16 %v1867, %v1865
          %v2090 = vpack.c.b16 %v1868, %v1866
          %v2091 = vpack.c.b16 %v1871, %v1869
          %v2092 = vpack.c.b16 %v1872, %v1870
          %v2093 = vpack.c.b16 %v1875, %v1873
          %v2094 = vpack.c.b16 %v1876, %v1874
          %v2095 = vpack.c.b16 %v1879, %v1877
          %v2096 = vpack.c.b16 %v1880, %v1878
          %v2097 = vpack.c.b16 %v1883, %v1881
          %v2098 = vpack.c.b16 %v1884, %v1882
          %v2099 = vpack.c.b16 %v1887, %v1885
          %v2100 = vpack.c.b16 %v1888, %v1886
          %v2101 = vpack.c.b16 %v1891, %v1889
          %v2102 = vpack.c.b16 %v1892, %v1890
          %v2103 = vpack.c.b16 %v1895, %v1893
          %v2104 = vpack.c.b16 %v1896, %v1894
          %v2105 = vpack.c.b16 %v1899, %v1897
          %v2106 = vpack.c.b16 %v1900, %v1898
          %v2107 = vpack.c.b16 %v1903, %v1901
          %v2108 = vpack.c.b16 %v1904, %v1902
          %v2109 = vpack.c.b16 %v1907, %v1905
          %v2110 = vpack.c.b16 %v1908, %v1906
          %v2111 = vpack.c.b16 %v1911, %v1909
          %v2112 = vpack.c.b16 %v1912, %v1910
          %v2113 = vpack.c.b16 %v1915, %v1913
          %v2114 = vpack.c.b16 %v1916, %v1914
          %v2115 = vpack.c.b16 %v1919, %v1917
          %v2116 = vpack.c.b16 %v1920, %v1918
          %v2117 = vpack.c.b16 %v1923, %v1921
          %v2118 = vpack.c.b16 %v1924, %v1922
          %v2119 = vpack.c.b16 %v1927, %v1925
          %v2120 = vpack.c.b16 %v1928, %v1926
          %2313 = vmatprep.subr.bf16.mxu0 %v1944
          %2314 = vmatpush1.bf16.msra.mxu0 %v1943
          %2315 = vmatprep.subr.bf16.mxu0 %v1942
          %2316 = vmatpush1.bf16.msra.mxu0 %v1941
          %2317 = vmatprep.subr.bf16.mxu0 %v1940
          %2318 = vmatpush1.bf16.msra.mxu0 %v1939
          %2319 = vmatprep.subr.bf16.mxu0 %v1938
          %2320 = vmatpush1.bf16.msra.mxu0 %v1937
          %2321 = vmatprep.subr.bf16.mxu0 %v1936
          %2322 = vmatpush1.bf16.msra.mxu0 %v1935
          %2323 = vmatprep.subr.bf16.mxu0 %v1934
          %2324 = vmatpush1.bf16.msra.mxu0 %v1933
          %2325 = vmatprep.subr.bf16.mxu0 %v1932
          %2326 = vmatpush1.bf16.msra.mxu0 %v1931
          %2327 = vmatprep.subr.bf16.mxu0 %v1930
          %2328 = vmatpush1.bf16.msra.mxu0 %v1929
          %2329 = vmatprep.subr.bf16.mxu0 %v1960
          %2330 = vmatpush2.bf16.msra.mxu0 %v1959
          %2331 = vmatprep.subr.bf16.mxu0 %v1958
          %2332 = vmatpush2.bf16.msra.mxu0 %v1957
          %2333 = vmatprep.subr.bf16.mxu0 %v1956
          %2334 = vmatpush2.bf16.msra.mxu0 %v1955
          %2335 = vmatprep.subr.bf16.mxu0 %v1954
          %2336 = vmatpush2.bf16.msra.mxu0 %v1953
          %2337 = vmatprep.subr.bf16.mxu0 %v1952
          %2338 = vmatpush2.bf16.msra.mxu0 %v1951
          %2339 = vmatprep.subr.bf16.mxu0 %v1950
          %2340 = vmatpush2.bf16.msra.mxu0 %v1949
          %2341 = vmatprep.subr.bf16.mxu0 %v1948
          %2342 = vmatpush2.bf16.msra.mxu0 %v1947
          %2343 = vmatprep.subr.bf16.mxu0 %v1946
          %2344 = vmatpush2.bf16.msra.mxu0 %v1945
          %2345 = vmatprep.mubr.bf16.mxu0 %v1330
          %2346 = vmatmul.mubr.bf16.gmra.mxu0 %v1329
          %v2347 = vpop.f32.mrf.mxu0
          %v2348 = vadd.f32 %v1289, %v2347
          %v2349 = vpop.f32.mrf.mxu0
          %v2350 = vadd.f32 %v1290, %v2349
          %v2351 = vpop.f32.mrf.mxu0
          %v2352 = vadd.f32 %v1291, %v2351
          %v2353 = vpop.f32.mrf.mxu0
          %v2354 = vadd.f32 %v1292, %v2353
          %2355 = vdwg.mxu0
          %2356 = vmatprep.subr.bf16.mxu0 %v1976
          %2357 = vmatpush1.bf16.msra.mxu0 %v1975
          %2358 = vmatprep.subr.bf16.mxu0 %v1974
          %2359 = vmatpush1.bf16.msra.mxu0 %v1973
          %2360 = vmatprep.subr.bf16.mxu0 %v1972
          %2361 = vmatpush1.bf16.msra.mxu0 %v1971
          %2362 = vmatprep.subr.bf16.mxu0 %v1970
          %2363 = vmatpush1.bf16.msra.mxu0 %v1969
          %2364 = vmatprep.subr.bf16.mxu0 %v1968
          %2365 = vmatpush1.bf16.msra.mxu0 %v1967
          %2366 = vmatprep.subr.bf16.mxu0 %v1966
          %2367 = vmatpush1.bf16.msra.mxu0 %v1965
          %2368 = vmatprep.subr.bf16.mxu0 %v1964
          %2369 = vmatpush1.bf16.msra.mxu0 %v1963
          %2370 = vmatprep.subr.bf16.mxu0 %v1962
          %2371 = vmatpush1.bf16.msra.mxu0 %v1961
          %2372 = vmatprep.subr.bf16.mxu0 %v1992
          %2373 = vmatpush2.bf16.msra.mxu0 %v1991
          %2374 = vmatprep.subr.bf16.mxu0 %v1990
          %2375 = vmatpush2.bf16.msra.mxu0 %v1989
          %2376 = vmatprep.subr.bf16.mxu0 %v1988
          %2377 = vmatpush2.bf16.msra.mxu0 %v1987
          %2378 = vmatprep.subr.bf16.mxu0 %v1986
          %2379 = vmatpush2.bf16.msra.mxu0 %v1985
          %2380 = vmatprep.subr.bf16.mxu0 %v1984
          %2381 = vmatpush2.bf16.msra.mxu0 %v1983
          %2382 = vmatprep.subr.bf16.mxu0 %v1982
          %2383 = vmatpush2.bf16.msra.mxu0 %v1981
          %2384 = vmatprep.subr.bf16.mxu0 %v1980
          %2385 = vmatpush2.bf16.msra.mxu0 %v1979
          %2386 = vmatprep.subr.bf16.mxu0 %v1978
          %2387 = vmatpush2.bf16.msra.mxu0 %v1977
          %2388 = vmatprep.mubr.bf16.mxu0 %v1332
          %2389 = vmatmul.mubr.bf16.gmra.mxu0 %v1331
          %v2390 = vpop.f32.mrf.mxu0
          %v2391 = vadd.f32 %v2348, %v2390
          %v2392 = vpop.f32.mrf.mxu0
          %v2393 = vadd.f32 %v2350, %v2392
          %v2394 = vpop.f32.mrf.mxu0
          %v2395 = vadd.f32 %v2352, %v2394
          %v2396 = vpop.f32.mrf.mxu0
          %v2397 = vadd.f32 %v2354, %v2396
          %2398 = vdwg.mxu0
          %2399 = vmatprep.subr.bf16.mxu0 %v2008
          %2400 = vmatpush1.bf16.msra.mxu0 %v2007
          %2401 = vmatprep.subr.bf16.mxu0 %v2006
          %2402 = vmatpush1.bf16.msra.mxu0 %v2005
          %2403 = vmatprep.subr.bf16.mxu0 %v2004
          %2404 = vmatpush1.bf16.msra.mxu0 %v2003
          %2405 = vmatprep.subr.bf16.mxu0 %v2002
          %2406 = vmatpush1.bf16.msra.mxu0 %v2001
          %2407 = vmatprep.subr.bf16.mxu0 %v2000
          %2408 = vmatpush1.bf16.msra.mxu0 %v1999
          %2409 = vmatprep.subr.bf16.mxu0 %v1998
          %2410 = vmatpush1.bf16.msra.mxu0 %v1997
          %2411 = vmatprep.subr.bf16.mxu0 %v1996
          %2412 = vmatpush1.bf16.msra.mxu0 %v1995
          %2413 = vmatprep.subr.bf16.mxu0 %v1994
          %2414 = vmatpush1.bf16.msra.mxu0 %v1993
          %2415 = vmatprep.subr.bf16.mxu0 %v2024
          %2416 = vmatpush2.bf16.msra.mxu0 %v2023
          %2417 = vmatprep.subr.bf16.mxu0 %v2022
          %2418 = vmatpush2.bf16.msra.mxu0 %v2021
          %2419 = vmatprep.subr.bf16.mxu0 %v2020
          %2420 = vmatpush2.bf16.msra.mxu0 %v2019
          %2421 = vmatprep.subr.bf16.mxu0 %v2018
          %2422 = vmatpush2.bf16.msra.mxu0 %v2017
          %2423 = vmatprep.subr.bf16.mxu0 %v2016
          %2424 = vmatpush2.bf16.msra.mxu0 %v2015
          %2425 = vmatprep.subr.bf16.mxu0 %v2014
          %2426 = vmatpush2.bf16.msra.mxu0 %v2013
          %2427 = vmatprep.subr.bf16.mxu0 %v2012
          %2428 = vmatpush2.bf16.msra.mxu0 %v2011
          %2429 = vmatprep.subr.bf16.mxu0 %v2010
          %2430 = vmatpush2.bf16.msra.mxu0 %v2009
          %2431 = vmatprep.mubr.bf16.mxu0 %v1334
          %2432 = vmatmul.mubr.bf16.gmra.mxu0 %v1333
          %v2433 = vpop.f32.mrf.mxu0
          %v2434 = vadd.f32 %v2391, %v2433
          %v2435 = vpop.f32.mrf.mxu0
          %v2436 = vadd.f32 %v2393, %v2435
          %v2437 = vpop.f32.mrf.mxu0
          %v2438 = vadd.f32 %v2395, %v2437
          %v2439 = vpop.f32.mrf.mxu0
          %v2440 = vadd.f32 %v2397, %v2439
          %2441 = vdwg.mxu0
          %2442 = vmatprep.subr.bf16.mxu0 %v2040
          %2443 = vmatpush1.bf16.msra.mxu0 %v2039
          %2444 = vmatprep.subr.bf16.mxu0 %v2038
          %2445 = vmatpush1.bf16.msra.mxu0 %v2037
          %2446 = vmatprep.subr.bf16.mxu0 %v2036
          %2447 = vmatpush1.bf16.msra.mxu0 %v2035
          %2448 = vmatprep.subr.bf16.mxu0 %v2034
          %2449 = vmatpush1.bf16.msra.mxu0 %v2033
          %2450 = vmatprep.subr.bf16.mxu0 %v2032
          %2451 = vmatpush1.bf16.msra.mxu0 %v2031
          %2452 = vmatprep.subr.bf16.mxu0 %v2030
          %2453 = vmatpush1.bf16.msra.mxu0 %v2029
          %2454 = vmatprep.subr.bf16.mxu0 %v2028
          %2455 = vmatpush1.bf16.msra.mxu0 %v2027
          %2456 = vmatprep.subr.bf16.mxu0 %v2026
          %2457 = vmatpush1.bf16.msra.mxu0 %v2025
          %2458 = vmatprep.subr.bf16.mxu0 %v2056
          %2459 = vmatpush2.bf16.msra.mxu0 %v2055
          %2460 = vmatprep.subr.bf16.mxu0 %v2054
          %2461 = vmatpush2.bf16.msra.mxu0 %v2053
          %2462 = vmatprep.subr.bf16.mxu0 %v2052
          %2463 = vmatpush2.bf16.msra.mxu0 %v2051
          %2464 = vmatprep.subr.bf16.mxu0 %v2050
          %2465 = vmatpush2.bf16.msra.mxu0 %v2049
          %2466 = vmatprep.subr.bf16.mxu0 %v2048
          %2467 = vmatpush2.bf16.msra.mxu0 %v2047
          %2468 = vmatprep.subr.bf16.mxu0 %v2046
          %2469 = vmatpush2.bf16.msra.mxu0 %v2045
          %2470 = vmatprep.subr.bf16.mxu0 %v2044
          %2471 = vmatpush2.bf16.msra.mxu0 %v2043
          %2472 = vmatprep.subr.bf16.mxu0 %v2042
          %2473 = vmatpush2.bf16.msra.mxu0 %v2041
          %2474 = vmatprep.mubr.bf16.mxu0 %v1336
          %2475 = vmatmul.mubr.bf16.gmra.mxu0 %v1335
          %v2476 = vpop.f32.mrf.mxu0
          %v2477 = vadd.f32 %v2434, %v2476
          %v2478 = vpop.f32.mrf.mxu0
          %v2479 = vadd.f32 %v2436, %v2478
          %v2480 = vpop.f32.mrf.mxu0
          %v2481 = vadd.f32 %v2438, %v2480
          %v2482 = vpop.f32.mrf.mxu0
          %v2483 = vadd.f32 %v2440, %v2482
          %2484 = vdwg.mxu0
          %2485 = vmatprep.subr.bf16.mxu0 %v2072
          %2486 = vmatpush1.bf16.msra.mxu0 %v2071
          %2487 = vmatprep.subr.bf16.mxu0 %v2070
          %2488 = vmatpush1.bf16.msra.mxu0 %v2069
          %2489 = vmatprep.subr.bf16.mxu0 %v2068
          %2490 = vmatpush1.bf16.msra.mxu0 %v2067
          %2491 = vmatprep.subr.bf16.mxu0 %v2066
          %2492 = vmatpush1.bf16.msra.mxu0 %v2065
          %2493 = vmatprep.subr.bf16.mxu0 %v2064
          %2494 = vmatpush1.bf16.msra.mxu0 %v2063
          %2495 = vmatprep.subr.bf16.mxu0 %v2062
          %2496 = vmatpush1.bf16.msra.mxu0 %v2061
          %2497 = vmatprep.subr.bf16.mxu0 %v2060
          %2498 = vmatpush1.bf16.msra.mxu0 %v2059
          %2499 = vmatprep.subr.bf16.mxu0 %v2058
          %2500 = vmatpush1.bf16.msra.mxu0 %v2057
          %2501 = vmatprep.subr.bf16.mxu0 %v2088
          %2502 = vmatpush2.bf16.msra.mxu0 %v2087
          %2503 = vmatprep.subr.bf16.mxu0 %v2086
          %2504 = vmatpush2.bf16.msra.mxu0 %v2085
          %2505 = vmatprep.subr.bf16.mxu0 %v2084
          %2506 = vmatpush2.bf16.msra.mxu0 %v2083
          %2507 = vmatprep.subr.bf16.mxu0 %v2082
          %2508 = vmatpush2.bf16.msra.mxu0 %v2081
          %2509 = vmatprep.subr.bf16.mxu0 %v2080
          %2510 = vmatpush2.bf16.msra.mxu0 %v2079
          %2511 = vmatprep.subr.bf16.mxu0 %v2078
          %2512 = vmatpush2.bf16.msra.mxu0 %v2077
          %2513 = vmatprep.subr.bf16.mxu0 %v2076
          %2514 = vmatpush2.bf16.msra.mxu0 %v2075
          %2515 = vmatprep.subr.bf16.mxu0 %v2074
          %2516 = vmatpush2.bf16.msra.mxu0 %v2073
          %2517 = vmatprep.mubr.bf16.mxu0 %v1338
          %2518 = vmatmul.mubr.bf16.gmra.mxu0 %v1337
          %v2519 = vpop.f32.mrf.mxu0
          %v2520 = vadd.f32 %v2477, %v2519
          %v2521 = vpop.f32.mrf.mxu0
          %v2522 = vadd.f32 %v2479, %v2521
          %v2523 = vpop.f32.mrf.mxu0
          %v2524 = vadd.f32 %v2481, %v2523
          %v2525 = vpop.f32.mrf.mxu0
          %v2526 = vadd.f32 %v2483, %v2525
          %2527 = vdwg.mxu0
          %2528 = vmatprep.subr.bf16.mxu0 %v2104
          %2529 = vmatpush1.bf16.msra.mxu0 %v2103
          %2530 = vmatprep.subr.bf16.mxu0 %v2102
          %2531 = vmatpush1.bf16.msra.mxu0 %v2101
          %2532 = vmatprep.subr.bf16.mxu0 %v2100
          %2533 = vmatpush1.bf16.msra.mxu0 %v2099
          %2534 = vmatprep.subr.bf16.mxu0 %v2098
          %2535 = vmatpush1.bf16.msra.mxu0 %v2097
          %2536 = vmatprep.subr.bf16.mxu0 %v2096
          %2537 = vmatpush1.bf16.msra.mxu0 %v2095
          %2538 = vmatprep.subr.bf16.mxu0 %v2094
          %2539 = vmatpush1.bf16.msra.mxu0 %v2093
          %2540 = vmatprep.subr.bf16.mxu0 %v2092
          %2541 = vmatpush1.bf16.msra.mxu0 %v2091
          %2542 = vmatprep.subr.bf16.mxu0 %v2090
          %2543 = vmatpush1.bf16.msra.mxu0 %v2089
          %2544 = vmatprep.subr.bf16.mxu0 %v2120
          %2545 = vmatpush2.bf16.msra.mxu0 %v2119
          %2546 = vmatprep.subr.bf16.mxu0 %v2118
          %2547 = vmatpush2.bf16.msra.mxu0 %v2117
          %2548 = vmatprep.subr.bf16.mxu0 %v2116
          %2549 = vmatpush2.bf16.msra.mxu0 %v2115
          %2550 = vmatprep.subr.bf16.mxu0 %v2114
          %2551 = vmatpush2.bf16.msra.mxu0 %v2113
          %2552 = vmatprep.subr.bf16.mxu0 %v2112
          %2553 = vmatpush2.bf16.msra.mxu0 %v2111
          %2554 = vmatprep.subr.bf16.mxu0 %v2110
          %2555 = vmatpush2.bf16.msra.mxu0 %v2109
          %2556 = vmatprep.subr.bf16.mxu0 %v2108
          %2557 = vmatpush2.bf16.msra.mxu0 %v2107
          %2558 = vmatprep.subr.bf16.mxu0 %v2106
          %2559 = vmatpush2.bf16.msra.mxu0 %v2105
          %2560 = vmatprep.mubr.bf16.mxu0 %v1340
          %2561 = vmatmul.mubr.bf16.gmra.mxu0 %v1339
          %v2562 = vpop.f32.mrf.mxu0
          %v2563 = vadd.f32 %v2520, %v2562
          %v2564 = vpop.f32.mrf.mxu0
          %v2565 = vadd.f32 %v2522, %v2564
          %v2566 = vpop.f32.mrf.mxu0
          %v2567 = vadd.f32 %v2524, %v2566
          %v2568 = vpop.f32.mrf.mxu0
          %v2569 = vadd.f32 %v2526, %v2568
          %2570 = vdwg.mxu0
          %2571 = vst [vmem:[%s1078] sm:$0xff] %v2563
          %2572 = vst [vmem:[%s1078 + $0x8] sm:$0xff] %v2565
          %2573 = vst [vmem:[%s1078 + $0x10] sm:$0xff] %v2567
          %2574 = vst [vmem:[%s1078 + $0x18] sm:$0xff] %v2569
        $region152: #{global_branch_forward.1} parent=87 // pred_fallthru
          _
        %v2575 = vld [vmem:[%s1078] sm:$0xff]
        %v2576 = vld [vmem:[%s1078 + $0x8] sm:$0xff]
        %v2577 = vld [vmem:[%s1078 + $0x10] sm:$0xff]
        %v2578 = vld [vmem:[%s1078 + $0x18] sm:$0xff]
        %v2579 = vld [vmem:[%s833] sm:$0x3]
        %v2580 = vld [vmem:[%s842] sm:$0x3]
        %v2581 = vadd.f32 %v2575, %v2576
        %2582 = vadd.xlane.f32.xlu0 %v2581
        %v2583 = vpop.xlane.xlu0 %2582
        %v2584 = vadd.f32 %v2577, %v2578
        %2585 = vadd.xlane.f32.xlu0 %v2584
        %v2586 = vpop.xlane.xlu0 %2585
        %v2587 = vrcp.pop 256.0
        %v2588 = vmul.f32 %v2583, %v2587
        %v2589 = vmul.f32 %v2586, %v2587
        %v2590 = vsub.f32 %v2575, %v2588
        %v2591 = vsub.f32 %v2576, %v2588
        %v2592 = vsub.f32 %v2577, %v2589
        %v2593 = vsub.f32 %v2578, %v2589
        %v2594 = vmul.f32 %v2590, %v2590
        %v2595 = vmul.f32 %v2591, %v2591
        %v2596 = vmul.f32 %v2592, %v2592
        %v2597 = vmul.f32 %v2593, %v2593
        %v2598 = vadd.f32 %v2594, %v2595
        %2599 = vadd.xlane.f32.xlu0 %v2598
        %v2600 = vpop.xlane.xlu0 %2599
        %v2601 = vadd.f32 %v2596, %v2597
        %2602 = vadd.xlane.f32.xlu0 %v2601
        %v2603 = vpop.xlane.xlu0 %2602
        %v2604 = vmul.f32 %v2600, %v2587
        %v2605 = vmul.f32 %v2603, %v2587
        %v2606 = vadd.f32 %v2604, 1e-06
        %v2607 = vadd.f32 %v2605, 1e-06
        %v2608 = vrsqrt.pop %v2606
        %v2609 = vrsqrt.pop %v2607
        %v2610 = vmul.f32 %v2590, %v2608
        %v2611 = vmul.f32 %v2591, %v2608
        %v2612 = vmul.f32 %v2592, %v2609
        %v2613 = vmul.f32 %v2593, %v2609
        %v2615 = vlaneseq
        %v2616 = vshrl.u32 %v2615, 7
        %v2617 = vsub.s32 0, %v2616
        %v2618 = vrot.slane %v2579, %v2617
        %v2619 = vlaneseq
        %v2620 = vshrl.u32 %v2619, 7
        %v2621 = vsub.s32 1, %v2620
        %v2622 = vrot.slane %v2579, %v2621
        %v2625 = vmul.f32 %v2610, %v2618
        %v2626 = vmul.f32 %v2611, %v2622
        %v2627 = vmul.f32 %v2612, %v2618
        %v2628 = vmul.f32 %v2613, %v2622
        %v2630 = vlaneseq
        %v2631 = vshrl.u32 %v2630, 7
        %v2632 = vsub.s32 0, %v2631
        %v2633 = vrot.slane %v2580, %v2632
        %v2634 = vlaneseq
        %v2635 = vshrl.u32 %v2634, 7
        %v2636 = vsub.s32 1, %v2635
        %v2637 = vrot.slane %v2580, %v2636
        %v2640 = vadd.f32 %v2625, %v2633
        %v2641 = vadd.f32 %v2626, %v2637
        %v2642 = vadd.f32 %v2627, %v2633
        %v2643 = vadd.f32 %v2628, %v2637
        %v2644 = vpack.c.bf16 %v2642, %v2640
        %v2645 = vpack.c.bf16 %v2643, %v2641
        %v2646 = vld [vmem:[%s851] sm:$0xff]
        %v2647 = vld [vmem:[%s851 + $0x8] sm:$0xff]
        %v2648 = vld [vmem:[%s851 + $0x10] sm:$0xff]
        %v2649 = vld [vmem:[%s851 + $0x18] sm:$0xff]
        %v2650 = vld [vmem:[%s851 + $0x20] sm:$0xff]
        %v2651 = vld [vmem:[%s851 + $0x28] sm:$0xff]
        %v2652 = vld [vmem:[%s851 + $0x30] sm:$0xff]
        %v2653 = vld [vmem:[%s851 + $0x38] sm:$0xff]
        %v2654 = vld [vmem:[%s851 + $0x40] sm:$0xff]
        %v2655 = vld [vmem:[%s851 + $0x48] sm:$0xff]
        %v2656 = vld [vmem:[%s851 + $0x50] sm:$0xff]
        %v2657 = vld [vmem:[%s851 + $0x58] sm:$0xff]
        %v2658 = vld [vmem:[%s851 + $0x60] sm:$0xff]
        %v2659 = vld [vmem:[%s851 + $0x68] sm:$0xff]
        %v2660 = vld [vmem:[%s851 + $0x70] sm:$0xff]
        %v2661 = vld [vmem:[%s851 + $0x78] sm:$0xff]
        %v2662 = vld [vmem:[%s851 + $0x80] sm:$0xff]
        %v2663 = vld [vmem:[%s851 + $0x88] sm:$0xff]
        %v2664 = vld [vmem:[%s851 + $0x90] sm:$0xff]
        %v2665 = vld [vmem:[%s851 + $0x98] sm:$0xff]
        %v2666 = vld [vmem:[%s851 + $0xa0] sm:$0xff]
        %v2667 = vld [vmem:[%s851 + $0xa8] sm:$0xff]
        %v2668 = vld [vmem:[%s851 + $0xb0] sm:$0xff]
        %v2669 = vld [vmem:[%s851 + $0xb8] sm:$0xff]
        %v2670 = vld [vmem:[%s851 + $0xc0] sm:$0xff]
        %v2671 = vld [vmem:[%s851 + $0xc8] sm:$0xff]
        %v2672 = vld [vmem:[%s851 + $0xd0] sm:$0xff]
        %v2673 = vld [vmem:[%s851 + $0xd8] sm:$0xff]
        %v2674 = vld [vmem:[%s851 + $0xe0] sm:$0xff]
        %v2675 = vld [vmem:[%s851 + $0xe8] sm:$0xff]
        %v2676 = vld [vmem:[%s851 + $0xf0] sm:$0xff]
        %v2677 = vld [vmem:[%s851 + $0xf8] sm:$0xff]
        %v2678 = vld [vmem:[%s851 + $0x100] sm:$0xff]
        %v2679 = vld [vmem:[%s851 + $0x108] sm:$0xff]
        %v2680 = vld [vmem:[%s851 + $0x110] sm:$0xff]
        %v2681 = vld [vmem:[%s851 + $0x118] sm:$0xff]
        %v2682 = vld [vmem:[%s851 + $0x120] sm:$0xff]
        %v2683 = vld [vmem:[%s851 + $0x128] sm:$0xff]
        %v2684 = vld [vmem:[%s851 + $0x130] sm:$0xff]
        %v2685 = vld [vmem:[%s851 + $0x138] sm:$0xff]
        %v2686 = vld [vmem:[%s851 + $0x140] sm:$0xff]
        %v2687 = vld [vmem:[%s851 + $0x148] sm:$0xff]
        %v2688 = vld [vmem:[%s851 + $0x150] sm:$0xff]
        %v2689 = vld [vmem:[%s851 + $0x158] sm:$0xff]
        %v2690 = vld [vmem:[%s851 + $0x160] sm:$0xff]
        %v2691 = vld [vmem:[%s851 + $0x168] sm:$0xff]
        %v2692 = vld [vmem:[%s851 + $0x170] sm:$0xff]
        %v2693 = vld [vmem:[%s851 + $0x178] sm:$0xff]
        %v2694 = vld [vmem:[%s851 + $0x180] sm:$0xff]
        %v2695 = vld [vmem:[%s851 + $0x188] sm:$0xff]
        %v2696 = vld [vmem:[%s851 + $0x190] sm:$0xff]
        %v2697 = vld [vmem:[%s851 + $0x198] sm:$0xff]
        %v2698 = vld [vmem:[%s851 + $0x1a0] sm:$0xff]
        %v2699 = vld [vmem:[%s851 + $0x1a8] sm:$0xff]
        %v2700 = vld [vmem:[%s851 + $0x1b0] sm:$0xff]
        %v2701 = vld [vmem:[%s851 + $0x1b8] sm:$0xff]
        %v2702 = vld [vmem:[%s851 + $0x1c0] sm:$0xff]
        %v2703 = vld [vmem:[%s851 + $0x1c8] sm:$0xff]
        %v2704 = vld [vmem:[%s851 + $0x1d0] sm:$0xff]
        %v2705 = vld [vmem:[%s851 + $0x1d8] sm:$0xff]
        %v2706 = vld [vmem:[%s851 + $0x1e0] sm:$0xff]
        %v2707 = vld [vmem:[%s851 + $0x1e8] sm:$0xff]
        %v2708 = vld [vmem:[%s851 + $0x1f0] sm:$0xff]
        %v2709 = vld [vmem:[%s851 + $0x1f8] sm:$0xff]
        %v2710 = vld [vmem:[%s851 + $0x200] sm:$0xff]
        %v2711 = vld [vmem:[%s851 + $0x208] sm:$0xff]
        %v2712 = vld [vmem:[%s851 + $0x210] sm:$0xff]
        %v2713 = vld [vmem:[%s851 + $0x218] sm:$0xff]
        %v2714 = vld [vmem:[%s851 + $0x220] sm:$0xff]
        %v2715 = vld [vmem:[%s851 + $0x228] sm:$0xff]
        %v2716 = vld [vmem:[%s851 + $0x230] sm:$0xff]
        %v2717 = vld [vmem:[%s851 + $0x238] sm:$0xff]
        %v2718 = vld [vmem:[%s851 + $0x240] sm:$0xff]
        %v2719 = vld [vmem:[%s851 + $0x248] sm:$0xff]
        %v2720 = vld [vmem:[%s851 + $0x250] sm:$0xff]
        %v2721 = vld [vmem:[%s851 + $0x258] sm:$0xff]
        %v2722 = vld [vmem:[%s851 + $0x260] sm:$0xff]
        %v2723 = vld [vmem:[%s851 + $0x268] sm:$0xff]
        %v2724 = vld [vmem:[%s851 + $0x270] sm:$0xff]
        %v2725 = vld [vmem:[%s851 + $0x278] sm:$0xff]
        %v2726 = vld [vmem:[%s851 + $0x280] sm:$0xff]
        %v2727 = vld [vmem:[%s851 + $0x288] sm:$0xff]
        %v2728 = vld [vmem:[%s851 + $0x290] sm:$0xff]
        %v2729 = vld [vmem:[%s851 + $0x298] sm:$0xff]
        %v2730 = vld [vmem:[%s851 + $0x2a0] sm:$0xff]
        %v2731 = vld [vmem:[%s851 + $0x2a8] sm:$0xff]
        %v2732 = vld [vmem:[%s851 + $0x2b0] sm:$0xff]
        %v2733 = vld [vmem:[%s851 + $0x2b8] sm:$0xff]
        %v2734 = vld [vmem:[%s851 + $0x2c0] sm:$0xff]
        %v2735 = vld [vmem:[%s851 + $0x2c8] sm:$0xff]
        %v2736 = vld [vmem:[%s851 + $0x2d0] sm:$0xff]
        %v2737 = vld [vmem:[%s851 + $0x2d8] sm:$0xff]
        %v2738 = vld [vmem:[%s851 + $0x2e0] sm:$0xff]
        %v2739 = vld [vmem:[%s851 + $0x2e8] sm:$0xff]
        %v2740 = vld [vmem:[%s851 + $0x2f0] sm:$0xff]
        %v2741 = vld [vmem:[%s851 + $0x2f8] sm:$0xff]
        %v2742 = vld [vmem:[%s860] sm:$0x3f]
        %v2744 = vlaneseq
        %v2745 = vshrl.u32 %v2744, 7
        %v2746 = vsub.s32 0, %v2745
        %v2747 = vrot.slane %v2742, %v2746
        %v2748 = vlaneseq
        %v2749 = vshrl.u32 %v2748, 7
        %v2750 = vsub.s32 1, %v2749
        %v2751 = vrot.slane %v2742, %v2750
        %v2752 = vlaneseq
        %v2753 = vshrl.u32 %v2752, 7
        %v2754 = vsub.s32 2, %v2753
        %v2755 = vrot.slane %v2742, %v2754
        %v2756 = vlaneseq
        %v2757 = vshrl.u32 %v2756, 7
        %v2758 = vsub.s32 3, %v2757
        %v2759 = vrot.slane %v2742, %v2758
        %v2760 = vlaneseq
        %v2761 = vshrl.u32 %v2760, 7
        %v2762 = vsub.s32 4, %v2761
        %v2763 = vrot.slane %v2742, %v2762
        %v2764 = vlaneseq
        %v2765 = vshrl.u32 %v2764, 7
        %v2766 = vsub.s32 5, %v2765
        %v2767 = vrot.slane %v2742, %v2766
        %v2870 = vunpack.c.l.b16 %v2646
        %v2871 = vunpack.c.h.b16 %v2646
        %v2872 = vunpack.c.l.b16 %v2647
        %v2873 = vunpack.c.h.b16 %v2647
        %v2874 = vunpack.c.l.b16 %v2648
        %v2875 = vunpack.c.h.b16 %v2648
        %v2876 = vunpack.c.l.b16 %v2649
        %v2877 = vunpack.c.h.b16 %v2649
        %v2878 = vunpack.c.l.b16 %v2650
        %v2879 = vunpack.c.h.b16 %v2650
        %v2880 = vunpack.c.l.b16 %v2651
        %v2881 = vunpack.c.h.b16 %v2651
        %v2882 = vunpack.c.l.b16 %v2652
        %v2883 = vunpack.c.h.b16 %v2652
        %v2884 = vunpack.c.l.b16 %v2653
        %v2885 = vunpack.c.h.b16 %v2653
        %v2886 = vunpack.c.l.b16 %v2654
        %v2887 = vunpack.c.h.b16 %v2654
        %v2888 = vunpack.c.l.b16 %v2655
        %v2889 = vunpack.c.h.b16 %v2655
        %v2890 = vunpack.c.l.b16 %v2656
        %v2891 = vunpack.c.h.b16 %v2656
        %v2892 = vunpack.c.l.b16 %v2657
        %v2893 = vunpack.c.h.b16 %v2657
        %v2894 = vunpack.c.l.b16 %v2658
        %v2895 = vunpack.c.h.b16 %v2658
        %v2896 = vunpack.c.l.b16 %v2659
        %v2897 = vunpack.c.h.b16 %v2659
        %v2898 = vunpack.c.l.b16 %v2660
        %v2899 = vunpack.c.h.b16 %v2660
        %v2900 = vunpack.c.l.b16 %v2661
        %v2901 = vunpack.c.h.b16 %v2661
        %v2902 = vunpack.c.l.b16 %v2662
        %v2903 = vunpack.c.h.b16 %v2662
        %v2904 = vunpack.c.l.b16 %v2663
        %v2905 = vunpack.c.h.b16 %v2663
        %v2906 = vunpack.c.l.b16 %v2664
        %v2907 = vunpack.c.h.b16 %v2664
        %v2908 = vunpack.c.l.b16 %v2665
        %v2909 = vunpack.c.h.b16 %v2665
        %v2910 = vunpack.c.l.b16 %v2666
        %v2911 = vunpack.c.h.b16 %v2666
        %v2912 = vunpack.c.l.b16 %v2667
        %v2913 = vunpack.c.h.b16 %v2667
        %v2914 = vunpack.c.l.b16 %v2668
        %v2915 = vunpack.c.h.b16 %v2668
        %v2916 = vunpack.c.l.b16 %v2669
        %v2917 = vunpack.c.h.b16 %v2669
        %v2918 = vunpack.c.l.b16 %v2670
        %v2919 = vunpack.c.h.b16 %v2670
        %v2920 = vunpack.c.l.b16 %v2671
        %v2921 = vunpack.c.h.b16 %v2671
        %v2922 = vunpack.c.l.b16 %v2672
        %v2923 = vunpack.c.h.b16 %v2672
        %v2924 = vunpack.c.l.b16 %v2673
        %v2925 = vunpack.c.h.b16 %v2673
        %v2926 = vunpack.c.l.b16 %v2674
        %v2927 = vunpack.c.h.b16 %v2674
        %v2928 = vunpack.c.l.b16 %v2675
        %v2929 = vunpack.c.h.b16 %v2675
        %v2930 = vunpack.c.l.b16 %v2676
        %v2931 = vunpack.c.h.b16 %v2676
        %v2932 = vunpack.c.l.b16 %v2677
        %v2933 = vunpack.c.h.b16 %v2677
        %v2934 = vunpack.c.l.b16 %v2678
        %v2935 = vunpack.c.h.b16 %v2678
        %v2936 = vunpack.c.l.b16 %v2679
        %v2937 = vunpack.c.h.b16 %v2679
        %v2938 = vunpack.c.l.b16 %v2680
        %v2939 = vunpack.c.h.b16 %v2680
        %v2940 = vunpack.c.l.b16 %v2681
        %v2941 = vunpack.c.h.b16 %v2681
        %v2942 = vunpack.c.l.b16 %v2682
        %v2943 = vunpack.c.h.b16 %v2682
        %v2944 = vunpack.c.l.b16 %v2683
        %v2945 = vunpack.c.h.b16 %v2683
        %v2946 = vunpack.c.l.b16 %v2684
        %v2947 = vunpack.c.h.b16 %v2684
        %v2948 = vunpack.c.l.b16 %v2685
        %v2949 = vunpack.c.h.b16 %v2685
        %v2950 = vunpack.c.l.b16 %v2686
        %v2951 = vunpack.c.h.b16 %v2686
        %v2952 = vunpack.c.l.b16 %v2687
        %v2953 = vunpack.c.h.b16 %v2687
        %v2954 = vunpack.c.l.b16 %v2688
        %v2955 = vunpack.c.h.b16 %v2688
        %v2956 = vunpack.c.l.b16 %v2689
        %v2957 = vunpack.c.h.b16 %v2689
        %v2958 = vunpack.c.l.b16 %v2690
        %v2959 = vunpack.c.h.b16 %v2690
        %v2960 = vunpack.c.l.b16 %v2691
        %v2961 = vunpack.c.h.b16 %v2691
        %v2962 = vunpack.c.l.b16 %v2692
        %v2963 = vunpack.c.h.b16 %v2692
        %v2964 = vunpack.c.l.b16 %v2693
        %v2965 = vunpack.c.h.b16 %v2693
        %v2966 = vunpack.c.l.b16 %v2694
        %v2967 = vunpack.c.h.b16 %v2694
        %v2968 = vunpack.c.l.b16 %v2695
        %v2969 = vunpack.c.h.b16 %v2695
        %v2970 = vunpack.c.l.b16 %v2696
        %v2971 = vunpack.c.h.b16 %v2696
        %v2972 = vunpack.c.l.b16 %v2697
        %v2973 = vunpack.c.h.b16 %v2697
        %v2974 = vunpack.c.l.b16 %v2698
        %v2975 = vunpack.c.h.b16 %v2698
        %v2976 = vunpack.c.l.b16 %v2699
        %v2977 = vunpack.c.h.b16 %v2699
        %v2978 = vunpack.c.l.b16 %v2700
        %v2979 = vunpack.c.h.b16 %v2700
        %v2980 = vunpack.c.l.b16 %v2701
        %v2981 = vunpack.c.h.b16 %v2701
        %v2982 = vunpack.c.l.b16 %v2702
        %v2983 = vunpack.c.h.b16 %v2702
        %v2984 = vunpack.c.l.b16 %v2703
        %v2985 = vunpack.c.h.b16 %v2703
        %v2986 = vunpack.c.l.b16 %v2704
        %v2987 = vunpack.c.h.b16 %v2704
        %v2988 = vunpack.c.l.b16 %v2705
        %v2989 = vunpack.c.h.b16 %v2705
        %v2990 = vunpack.c.l.b16 %v2706
        %v2991 = vunpack.c.h.b16 %v2706
        %v2992 = vunpack.c.l.b16 %v2707
        %v2993 = vunpack.c.h.b16 %v2707
        %v2994 = vunpack.c.l.b16 %v2708
        %v2995 = vunpack.c.h.b16 %v2708
        %v2996 = vunpack.c.l.b16 %v2709
        %v2997 = vunpack.c.h.b16 %v2709
        %v2998 = vunpack.c.l.b16 %v2710
        %v2999 = vunpack.c.h.b16 %v2710
        %v3000 = vunpack.c.l.b16 %v2711
        %v3001 = vunpack.c.h.b16 %v2711
        %v3002 = vunpack.c.l.b16 %v2712
        %v3003 = vunpack.c.h.b16 %v2712
        %v3004 = vunpack.c.l.b16 %v2713
        %v3005 = vunpack.c.h.b16 %v2713
        %v3006 = vunpack.c.l.b16 %v2714
        %v3007 = vunpack.c.h.b16 %v2714
        %v3008 = vunpack.c.l.b16 %v2715
        %v3009 = vunpack.c.h.b16 %v2715
        %v3010 = vunpack.c.l.b16 %v2716
        %v3011 = vunpack.c.h.b16 %v2716
        %v3012 = vunpack.c.l.b16 %v2717
        %v3013 = vunpack.c.h.b16 %v2717
        %v3014 = vunpack.c.l.b16 %v2718
        %v3015 = vunpack.c.h.b16 %v2718
        %v3016 = vunpack.c.l.b16 %v2719
        %v3017 = vunpack.c.h.b16 %v2719
        %v3018 = vunpack.c.l.b16 %v2720
        %v3019 = vunpack.c.h.b16 %v2720
        %v3020 = vunpack.c.l.b16 %v2721
        %v3021 = vunpack.c.h.b16 %v2721
        %v3022 = vunpack.c.l.b16 %v2722
        %v3023 = vunpack.c.h.b16 %v2722
        %v3024 = vunpack.c.l.b16 %v2723
        %v3025 = vunpack.c.h.b16 %v2723
        %v3026 = vunpack.c.l.b16 %v2724
        %v3027 = vunpack.c.h.b16 %v2724
        %v3028 = vunpack.c.l.b16 %v2725
        %v3029 = vunpack.c.h.b16 %v2725
        %v3030 = vunpack.c.l.b16 %v2726
        %v3031 = vunpack.c.h.b16 %v2726
        %v3032 = vunpack.c.l.b16 %v2727
        %v3033 = vunpack.c.h.b16 %v2727
        %v3034 = vunpack.c.l.b16 %v2728
        %v3035 = vunpack.c.h.b16 %v2728
        %v3036 = vunpack.c.l.b16 %v2729
        %v3037 = vunpack.c.h.b16 %v2729
        %v3038 = vunpack.c.l.b16 %v2730
        %v3039 = vunpack.c.h.b16 %v2730
        %v3040 = vunpack.c.l.b16 %v2731
        %v3041 = vunpack.c.h.b16 %v2731
        %v3042 = vunpack.c.l.b16 %v2732
        %v3043 = vunpack.c.h.b16 %v2732
        %v3044 = vunpack.c.l.b16 %v2733
        %v3045 = vunpack.c.h.b16 %v2733
        %v3046 = vunpack.c.l.b16 %v2734
        %v3047 = vunpack.c.h.b16 %v2734
        %v3048 = vunpack.c.l.b16 %v2735
        %v3049 = vunpack.c.h.b16 %v2735
        %v3050 = vunpack.c.l.b16 %v2736
        %v3051 = vunpack.c.h.b16 %v2736
        %v3052 = vunpack.c.l.b16 %v2737
        %v3053 = vunpack.c.h.b16 %v2737
        %v3054 = vunpack.c.l.b16 %v2738
        %v3055 = vunpack.c.h.b16 %v2738
        %v3056 = vunpack.c.l.b16 %v2739
        %v3057 = vunpack.c.h.b16 %v2739
        %v3058 = vunpack.c.l.b16 %v2740
        %v3059 = vunpack.c.h.b16 %v2740
        %v3060 = vunpack.c.l.b16 %v2741
        %v3061 = vunpack.c.h.b16 %v2741
        %v3062 = vpack.c.b16 %v2876, %v2870
        %v3063 = vpack.c.b16 %v2877, %v2871
        %v3064 = vpack.c.b16 %v2878, %v2872
        %v3065 = vpack.c.b16 %v2879, %v2873
        %v3066 = vpack.c.b16 %v2880, %v2874
        %v3067 = vpack.c.b16 %v2881, %v2875
        %v3068 = vpack.c.b16 %v2888, %v2882
        %v3069 = vpack.c.b16 %v2889, %v2883
        %v3070 = vpack.c.b16 %v2890, %v2884
        %v3071 = vpack.c.b16 %v2891, %v2885
        %v3072 = vpack.c.b16 %v2892, %v2886
        %v3073 = vpack.c.b16 %v2893, %v2887
        %v3074 = vpack.c.b16 %v2900, %v2894
        %v3075 = vpack.c.b16 %v2901, %v2895
        %v3076 = vpack.c.b16 %v2902, %v2896
        %v3077 = vpack.c.b16 %v2903, %v2897
        %v3078 = vpack.c.b16 %v2904, %v2898
        %v3079 = vpack.c.b16 %v2905, %v2899
        %v3080 = vpack.c.b16 %v2912, %v2906
        %v3081 = vpack.c.b16 %v2913, %v2907
        %v3082 = vpack.c.b16 %v2914, %v2908
        %v3083 = vpack.c.b16 %v2915, %v2909
        %v3084 = vpack.c.b16 %v2916, %v2910
        %v3085 = vpack.c.b16 %v2917, %v2911
        %v3086 = vpack.c.b16 %v2924, %v2918
        %v3087 = vpack.c.b16 %v2925, %v2919
        %v3088 = vpack.c.b16 %v2926, %v2920
        %v3089 = vpack.c.b16 %v2927, %v2921
        %v3090 = vpack.c.b16 %v2928, %v2922
        %v3091 = vpack.c.b16 %v2929, %v2923
        %v3092 = vpack.c.b16 %v2936, %v2930
        %v3093 = vpack.c.b16 %v2937, %v2931
        %v3094 = vpack.c.b16 %v2938, %v2932
        %v3095 = vpack.c.b16 %v2939, %v2933
        %v3096 = vpack.c.b16 %v2940, %v2934
        %v3097 = vpack.c.b16 %v2941, %v2935
        %v3098 = vpack.c.b16 %v2948, %v2942
        %v3099 = vpack.c.b16 %v2949, %v2943
        %v3100 = vpack.c.b16 %v2950, %v2944
        %v3101 = vpack.c.b16 %v2951, %v2945
        %v3102 = vpack.c.b16 %v2952, %v2946
        %v3103 = vpack.c.b16 %v2953, %v2947
        %v3104 = vpack.c.b16 %v2960, %v2954
        %v3105 = vpack.c.b16 %v2961, %v2955
        %v3106 = vpack.c.b16 %v2962, %v2956
        %v3107 = vpack.c.b16 %v2963, %v2957
        %v3108 = vpack.c.b16 %v2964, %v2958
        %v3109 = vpack.c.b16 %v2965, %v2959
        %v3110 = vpack.c.b16 %v2972, %v2966
        %v3111 = vpack.c.b16 %v2973, %v2967
        %v3112 = vpack.c.b16 %v2974, %v2968
        %v3113 = vpack.c.b16 %v2975, %v2969
        %v3114 = vpack.c.b16 %v2976, %v2970
        %v3115 = vpack.c.b16 %v2977, %v2971
        %v3116 = vpack.c.b16 %v2984, %v2978
        %v3117 = vpack.c.b16 %v2985, %v2979
        %v3118 = vpack.c.b16 %v2986, %v2980
        %v3119 = vpack.c.b16 %v2987, %v2981
        %v3120 = vpack.c.b16 %v2988, %v2982
        %v3121 = vpack.c.b16 %v2989, %v2983
        %v3122 = vpack.c.b16 %v2996, %v2990
        %v3123 = vpack.c.b16 %v2997, %v2991
        %v3124 = vpack.c.b16 %v2998, %v2992
        %v3125 = vpack.c.b16 %v2999, %v2993
        %v3126 = vpack.c.b16 %v3000, %v2994
        %v3127 = vpack.c.b16 %v3001, %v2995
        %v3128 = vpack.c.b16 %v3008, %v3002
        %v3129 = vpack.c.b16 %v3009, %v3003
        %v3130 = vpack.c.b16 %v3010, %v3004
        %v3131 = vpack.c.b16 %v3011, %v3005
        %v3132 = vpack.c.b16 %v3012, %v3006
        %v3133 = vpack.c.b16 %v3013, %v3007
        %v3134 = vpack.c.b16 %v3020, %v3014
        %v3135 = vpack.c.b16 %v3021, %v3015
        %v3136 = vpack.c.b16 %v3022, %v3016
        %v3137 = vpack.c.b16 %v3023, %v3017
        %v3138 = vpack.c.b16 %v3024, %v3018
        %v3139 = vpack.c.b16 %v3025, %v3019
        %v3140 = vpack.c.b16 %v3032, %v3026
        %v3141 = vpack.c.b16 %v3033, %v3027
        %v3142 = vpack.c.b16 %v3034, %v3028
        %v3143 = vpack.c.b16 %v3035, %v3029
        %v3144 = vpack.c.b16 %v3036, %v3030
        %v3145 = vpack.c.b16 %v3037, %v3031
        %v3146 = vpack.c.b16 %v3044, %v3038
        %v3147 = vpack.c.b16 %v3045, %v3039
        %v3148 = vpack.c.b16 %v3046, %v3040
        %v3149 = vpack.c.b16 %v3047, %v3041
        %v3150 = vpack.c.b16 %v3048, %v3042
        %v3151 = vpack.c.b16 %v3049, %v3043
        %v3152 = vpack.c.b16 %v3056, %v3050
        %v3153 = vpack.c.b16 %v3057, %v3051
        %v3154 = vpack.c.b16 %v3058, %v3052
        %v3155 = vpack.c.b16 %v3059, %v3053
        %v3156 = vpack.c.b16 %v3060, %v3054
        %v3157 = vpack.c.b16 %v3061, %v3055
        %3254 = vmatprep.subr.bf16.mxu0 %v3105
        %3255 = vmatpush1.bf16.msra.mxu0 %v3104
        %3256 = vmatprep.subr.bf16.mxu0 %v3099
        %3257 = vmatpush1.bf16.msra.mxu0 %v3098
        %3258 = vmatprep.subr.bf16.mxu0 %v3093
        %3259 = vmatpush1.bf16.msra.mxu0 %v3092
        %3260 = vmatprep.subr.bf16.mxu0 %v3087
        %3261 = vmatpush1.bf16.msra.mxu0 %v3086
        %3262 = vmatprep.subr.bf16.mxu0 %v3081
        %3263 = vmatpush1.bf16.msra.mxu0 %v3080
        %3264 = vmatprep.subr.bf16.mxu0 %v3075
        %3265 = vmatpush1.bf16.msra.mxu0 %v3074
        %3266 = vmatprep.subr.bf16.mxu0 %v3069
        %3267 = vmatpush1.bf16.msra.mxu0 %v3068
        %3268 = vmatprep.subr.bf16.mxu0 %v3063
        %3269 = vmatpush1.bf16.msra.mxu0 %v3062
        %3270 = vmatprep.subr.bf16.mxu0 %v3153
        %3271 = vmatpush2.bf16.msra.mxu0 %v3152
        %3272 = vmatprep.subr.bf16.mxu0 %v3147
        %3273 = vmatpush2.bf16.msra.mxu0 %v3146
        %3274 = vmatprep.subr.bf16.mxu0 %v3141
        %3275 = vmatpush2.bf16.msra.mxu0 %v3140
        %3276 = vmatprep.subr.bf16.mxu0 %v3135
        %3277 = vmatpush2.bf16.msra.mxu0 %v3134
        %3278 = vmatprep.subr.bf16.mxu0 %v3129
        %3279 = vmatpush2.bf16.msra.mxu0 %v3128
        %3280 = vmatprep.subr.bf16.mxu0 %v3123
        %3281 = vmatpush2.bf16.msra.mxu0 %v3122
        %3282 = vmatprep.subr.bf16.mxu0 %v3117
        %3283 = vmatpush2.bf16.msra.mxu0 %v3116
        %3284 = vmatprep.subr.bf16.mxu0 %v3111
        %3285 = vmatpush2.bf16.msra.mxu0 %v3110
        %3286 = vmatprep.mubr.bf16.mxu0 %v2645
        %3287 = vmatmul.mubr.bf16.gmra.mxu0 %v2644
        %v3288 = vpop.f32.mrf.mxu0
        %v3289 = vadd.f32 %v2747, %v3288
        %v3290 = vpop.f32.mrf.mxu0
        %v3291 = vadd.f32 %v2751, %v3290
        %v3292 = vpop.f32.mrf.mxu0
        %v3293 = vadd.f32 %v2747, %v3292
        %v3294 = vpop.f32.mrf.mxu0
        %v3295 = vadd.f32 %v2751, %v3294
        %3296 = vdwg.mxu0
        %3297 = vmatprep.subr.bf16.mxu0 %v3107
        %3298 = vmatpush1.bf16.msra.mxu0 %v3106
        %3299 = vmatprep.subr.bf16.mxu0 %v3101
        %3300 = vmatpush1.bf16.msra.mxu0 %v3100
        %3301 = vmatprep.subr.bf16.mxu0 %v3095
        %3302 = vmatpush1.bf16.msra.mxu0 %v3094
        %3303 = vmatprep.subr.bf16.mxu0 %v3089
        %3304 = vmatpush1.bf16.msra.mxu0 %v3088
        %3305 = vmatprep.subr.bf16.mxu0 %v3083
        %3306 = vmatpush1.bf16.msra.mxu0 %v3082
        %3307 = vmatprep.subr.bf16.mxu0 %v3077
        %3308 = vmatpush1.bf16.msra.mxu0 %v3076
        %3309 = vmatprep.subr.bf16.mxu0 %v3071
        %3310 = vmatpush1.bf16.msra.mxu0 %v3070
        %3311 = vmatprep.subr.bf16.mxu0 %v3065
        %3312 = vmatpush1.bf16.msra.mxu0 %v3064
        %3313 = vmatprep.subr.bf16.mxu0 %v3155
        %3314 = vmatpush2.bf16.msra.mxu0 %v3154
        %3315 = vmatprep.subr.bf16.mxu0 %v3149
        %3316 = vmatpush2.bf16.msra.mxu0 %v3148
        %3317 = vmatprep.subr.bf16.mxu0 %v3143
        %3318 = vmatpush2.bf16.msra.mxu0 %v3142
        %3319 = vmatprep.subr.bf16.mxu0 %v3137
        %3320 = vmatpush2.bf16.msra.mxu0 %v3136
        %3321 = vmatprep.subr.bf16.mxu0 %v3131
        %3322 = vmatpush2.bf16.msra.mxu0 %v3130
        %3323 = vmatprep.subr.bf16.mxu0 %v3125
        %3324 = vmatpush2.bf16.msra.mxu0 %v3124
        %3325 = vmatprep.subr.bf16.mxu0 %v3119
        %3326 = vmatpush2.bf16.msra.mxu0 %v3118
        %3327 = vmatprep.subr.bf16.mxu0 %v3113
        %3328 = vmatpush2.bf16.msra.mxu0 %v3112
        %3329 = vmatprep.mubr.bf16.mxu0 %v2645
        %3330 = vmatmul.mubr.bf16.gmra.mxu0 %v2644
        %v3331 = vpop.f32.mrf.mxu0
        %v3332 = vadd.f32 %v2755, %v3331
        %v3333 = vpop.f32.mrf.mxu0
        %v3334 = vadd.f32 %v2759, %v3333
        %v3335 = vpop.f32.mrf.mxu0
        %v3336 = vadd.f32 %v2755, %v3335
        %v3337 = vpop.f32.mrf.mxu0
        %v3338 = vadd.f32 %v2759, %v3337
        %3339 = vdwg.mxu0
        %3340 = vmatprep.subr.bf16.mxu0 %v3109
        %3341 = vmatpush1.bf16.msra.mxu0 %v3108
        %3342 = vmatprep.subr.bf16.mxu0 %v3103
        %3343 = vmatpush1.bf16.msra.mxu0 %v3102
        %3344 = vmatprep.subr.bf16.mxu0 %v3097
        %3345 = vmatpush1.bf16.msra.mxu0 %v3096
        %3346 = vmatprep.subr.bf16.mxu0 %v3091
        %3347 = vmatpush1.bf16.msra.mxu0 %v3090
        %3348 = vmatprep.subr.bf16.mxu0 %v3085
        %3349 = vmatpush1.bf16.msra.mxu0 %v3084
        %3350 = vmatprep.subr.bf16.mxu0 %v3079
        %3351 = vmatpush1.bf16.msra.mxu0 %v3078
        %3352 = vmatprep.subr.bf16.mxu0 %v3073
        %3353 = vmatpush1.bf16.msra.mxu0 %v3072
        %3354 = vmatprep.subr.bf16.mxu0 %v3067
        %3355 = vmatpush1.bf16.msra.mxu0 %v3066
        %3356 = vmatprep.subr.bf16.mxu0 %v3157
        %3357 = vmatpush2.bf16.msra.mxu0 %v3156
        %3358 = vmatprep.subr.bf16.mxu0 %v3151
        %3359 = vmatpush2.bf16.msra.mxu0 %v3150
        %3360 = vmatprep.subr.bf16.mxu0 %v3145
        %3361 = vmatpush2.bf16.msra.mxu0 %v3144
        %3362 = vmatprep.subr.bf16.mxu0 %v3139
        %3363 = vmatpush2.bf16.msra.mxu0 %v3138
        %3364 = vmatprep.subr.bf16.mxu0 %v3133
        %3365 = vmatpush2.bf16.msra.mxu0 %v3132
        %3366 = vmatprep.subr.bf16.mxu0 %v3127
        %3367 = vmatpush2.bf16.msra.mxu0 %v3126
        %3368 = vmatprep.subr.bf16.mxu0 %v3121
        %3369 = vmatpush2.bf16.msra.mxu0 %v3120
        %3370 = vmatprep.subr.bf16.mxu0 %v3115
        %3371 = vmatpush2.bf16.msra.mxu0 %v3114
        %3372 = vmatprep.mubr.bf16.mxu0 %v2645
        %3373 = vmatmul.mubr.bf16.gmra.mxu0 %v2644
        %v3374 = vpop.f32.mrf.mxu0
        %v3375 = vadd.f32 %v2763, %v3374
        %v3376 = vpop.f32.mrf.mxu0
        %v3377 = vadd.f32 %v2767, %v3376
        %v3378 = vpop.f32.mrf.mxu0
        %v3379 = vadd.f32 %v2763, %v3378
        %v3380 = vpop.f32.mrf.mxu0
        %v3381 = vadd.f32 %v2767, %v3380
        %3382 = vdwg.mxu0
        %v3383 = vlaneseq
        %v3384 = vand.u32 %v3383, 127
        %vm3385 = vcmp.lt.s32.totalorder %v3384, 5
        %v3386 = vld [vmem:[%s869] sm:$0xff]
        %v3387 = vld [vmem:[%s869 + $0x8] sm:$0xff]
        %v3388 = vld [vmem:[%s869 + $0x10] sm:$0xff]
        %v3389 = vld [vmem:[%s869 + $0x18] sm:$0xff]
        %v3390 = vld [vmem:[%s869 + $0x20] sm:$0xff]
        %v3391 = vld [vmem:[%s869 + $0x28] sm:$0xff]
        %v3392 = vld [vmem:[%s869 + $0x30] sm:$0xff]
        %v3393 = vld [vmem:[%s869 + $0x38] sm:$0xff]
        %v3394 = vld [vmem:[%s869 + $0x40] sm:$0xff]
        %v3395 = vld [vmem:[%s869 + $0x48] sm:$0xff]
        %v3396 = vld [vmem:[%s869 + $0x50] sm:$0xff]
        %v3397 = vld [vmem:[%s869 + $0x58] sm:$0xff]
        %v3398 = vld [vmem:[%s869 + $0x60] sm:$0xff]
        %v3399 = vld [vmem:[%s869 + $0x68] sm:$0xff]
        %v3400 = vld [vmem:[%s869 + $0x70] sm:$0xff]
        %v3401 = vld [vmem:[%s869 + $0x78] sm:$0xff]
        %v3402 = vld [vmem:[%s869 + $0x80] sm:$0xff]
        %v3403 = vld [vmem:[%s869 + $0x88] sm:$0xff]
        %v3404 = vld [vmem:[%s869 + $0x90] sm:$0xff]
        %v3405 = vld [vmem:[%s869 + $0x98] sm:$0xff]
        %v3406 = vld [vmem:[%s869 + $0xa0] sm:$0xff]
        %v3407 = vld [vmem:[%s869 + $0xa8] sm:$0xff]
        %v3408 = vld [vmem:[%s869 + $0xb0] sm:$0xff]
        %v3409 = vld [vmem:[%s869 + $0xb8] sm:$0xff]
        %v3410 = vld [vmem:[%s869 + $0xc0] sm:$0xff]
        %v3411 = vld [vmem:[%s869 + $0xc8] sm:$0xff]
        %v3412 = vld [vmem:[%s869 + $0xd0] sm:$0xff]
        %v3413 = vld [vmem:[%s869 + $0xd8] sm:$0xff]
        %v3414 = vld [vmem:[%s869 + $0xe0] sm:$0xff]
        %v3415 = vld [vmem:[%s869 + $0xe8] sm:$0xff]
        %v3416 = vld [vmem:[%s869 + $0xf0] sm:$0xff]
        %v3417 = vld [vmem:[%s869 + $0xf8] sm:$0xff]
        %v3418 = vld [vmem:[%s878] sm:$0x3]
        %v3420 = vlaneseq
        %v3421 = vshrl.u32 %v3420, 7
        %v3422 = vsub.s32 0, %v3421
        %v3423 = vrot.slane %v3418, %v3422
        %v3424 = vlaneseq
        %v3425 = vshrl.u32 %v3424, 7
        %v3426 = vsub.s32 1, %v3425
        %v3427 = vrot.slane %v3418, %v3426
        %v3430 = vadd.f32 %v2575, %v3423
        %v3431 = vadd.f32 %v2576, %v3427
        %v3432 = vadd.f32 %v2577, %v3423
        %v3433 = vadd.f32 %v2578, %v3427
        %v3434 = vpack.c.bf16 %v3293, %v3289
        %v3435 = vpack.c.bf16 %v3336, %v3332
        %v3436 = vpack.c.bf16 %v3379, %v3375
        %vm3437 = vcmask 261120
        %v3439 = vsel %vm3437, %v3434, 0
        %v3442 = vsel %vm3437, %v3435, 0
        %3444 = vmatprep.subr.bf16.mxu0 0
        %3445 = vmatpush1.bf16.xpose.msra.mxu0 0
        %3446 = vmatprep.subr.bf16.mxu0 0
        %3447 = vmatpush1.bf16.xpose.msra.mxu0 0
        %3448 = vmatprep.subr.bf16.mxu0 0
        %3449 = vmatpush1.bf16.xpose.msra.mxu0 0
        %3450 = vmatprep.subr.bf16.mxu0 0
        %3451 = vmatpush1.bf16.xpose.msra.mxu0 0
        %3452 = vmatprep.subr.bf16.mxu0 0
        %3453 = vmatpush1.bf16.xpose.msra.mxu0 0
        %3454 = vmatprep.subr.bf16.mxu0 0
        %3455 = vmatpush1.bf16.xpose.msra.mxu0 0
        %3456 = vmatprep.subr.bf16.mxu0 0
        %3457 = vmatpush1.bf16.xpose.msra.mxu0 0
        %3458 = vmatprep.subr.bf16.mxu0 0
        %3459 = vmatpush1.bf16.xpose.msra.mxu0 %v3442
        %3460 = vmatprep.subr.bf16.mxu0 0
        %3461 = vmatpush2.bf16.xpose.msra.mxu0 0
        %3462 = vmatprep.subr.bf16.mxu0 0
        %3463 = vmatpush2.bf16.xpose.msra.mxu0 0
        %3464 = vmatprep.subr.bf16.mxu0 0
        %3465 = vmatpush2.bf16.xpose.msra.mxu0 0
        %3466 = vmatprep.subr.bf16.mxu0 0
        %3467 = vmatpush2.bf16.xpose.msra.mxu0 0
        %3468 = vmatprep.subr.bf16.mxu0 0
        %3469 = vmatpush2.bf16.xpose.msra.mxu0 0
        %3470 = vmatprep.subr.bf16.mxu0 0
        %3471 = vmatpush2.bf16.xpose.msra.mxu0 0
        %3472 = vmatprep.subr.bf16.mxu0 0
        %3473 = vmatpush2.bf16.xpose.msra.mxu0 0
        %3474 = vmatprep.subr.bf16.mxu0 0
        %3475 = vmatpush2.bf16.xpose.msra.mxu0 0
        %3476 = vmatprep.mubr.bf16.mxu0 0
        %3477 = vmatmul.mubr.bf16.gmra.mxu0 %v3439
        %v3478 = vpop.f32.mrf.mxu0
        %v3479 = vadd.f32 0.0, %v3478
        %v3480 = vpop.f32.mrf.mxu0
        %v3481 = vpop.f32.mrf.mxu0
        %v3482 = vpop.f32.mrf.mxu0
        %3483 = vdwg.mxu0
        %v3484 = vsel %vm3385, 1, 0
        %vm3485 = vcmp.eq.s32.totalorder %v3484, 1
        %v3486 = vsel %vm3485, %v3479, -1e+30
        %vm3487 = vcmask 64512
        %v3488 = vsel %vm3487, %v3486, -inf
        %3489 = vmax.xlane.f32.xlu0 %v3488
        %v3490 = vpop.xlane.xlu0 %3489
        %v3491 = vsub.f32 %v3486, %v3490
        %v3492 = vmul.f32 %v3491, 1.442695
        %v3493 = vpow.pop %v3492
        %v3494 = vsel %vm3487, %v3493, 0.0
        %3495 = vadd.xlane.f32.xlu0 %v3494
        %v3496 = vpop.xlane.xlu0 %3495
        %v3497 = vrcp.pop %v3496
        %v3498 = vmul.f32 %v3493, %v3497
        %v3499 = vpack.c.bf16 %v3498, %v3498
        %v3501 = vsel %vm3487, %v3499, 0
        %vm3503 = vcmask 1043456
        %v3505 = vsel %vm3503, %v3436, 0
        %3507 = vmatprep.subr.bf16.mxu0 0
        %3508 = vmatpush1.bf16.msra.mxu0 0
        %3509 = vmatprep.subr.bf16.mxu0 0
        %3510 = vmatpush1.bf16.msra.mxu0 0
        %3511 = vmatprep.subr.bf16.mxu0 0
        %3512 = vmatpush1.bf16.msra.mxu0 0
        %3513 = vmatprep.subr.bf16.mxu0 0
        %3514 = vmatpush1.bf16.msra.mxu0 0
        %3515 = vmatprep.subr.bf16.mxu0 0
        %3516 = vmatpush1.bf16.msra.mxu0 0
        %3517 = vmatprep.subr.bf16.mxu0 0
        %3518 = vmatpush1.bf16.msra.mxu0 0
        %3519 = vmatprep.subr.bf16.mxu0 0
        %3520 = vmatpush1.bf16.msra.mxu0 0
        %3521 = vmatprep.subr.bf16.mxu0 0
        %3522 = vmatpush1.bf16.msra.mxu0 %v3505
        %3523 = vmatprep.subr.bf16.mxu0 0
        %3524 = vmatpush2.bf16.msra.mxu0 0
        %3525 = vmatprep.subr.bf16.mxu0 0
        %3526 = vmatpush2.bf16.msra.mxu0 0
        %3527 = vmatprep.subr.bf16.mxu0 0
        %3528 = vmatpush2.bf16.msra.mxu0 0
        %3529 = vmatprep.subr.bf16.mxu0 0
        %3530 = vmatpush2.bf16.msra.mxu0 0
        %3531 = vmatprep.subr.bf16.mxu0 0
        %3532 = vmatpush2.bf16.msra.mxu0 0
        %3533 = vmatprep.subr.bf16.mxu0 0
        %3534 = vmatpush2.bf16.msra.mxu0 0
        %3535 = vmatprep.subr.bf16.mxu0 0
        %3536 = vmatpush2.bf16.msra.mxu0 0
        %3537 = vmatprep.subr.bf16.mxu0 0
        %3538 = vmatpush2.bf16.msra.mxu0 0
        %3539 = vmatprep.mubr.bf16.mxu0 0
        %3540 = vmatmul.mubr.bf16.gmra.mxu0 %v3501
        %v3541 = vpop.f32.mrf.mxu0
        %v3542 = vadd.f32 0.0, %v3541
        %v3543 = vpop.f32.mrf.mxu0
        %v3544 = vpop.f32.mrf.mxu0
        %v3545 = vpop.f32.mrf.mxu0
        %3546 = vdwg.mxu0
        %v3548 = vrot.slane %v3434, 4
        %v3550 = vrot.slane %v3435, 4
        %v3552 = vsel %vm3437, %v3548, 0
        %v3555 = vsel %vm3437, %v3550, 0
        %3557 = vmatprep.subr.bf16.mxu0 0
        %3558 = vmatpush1.bf16.xpose.msra.mxu0 0
        %3559 = vmatprep.subr.bf16.mxu0 0
        %3560 = vmatpush1.bf16.xpose.msra.mxu0 0
        %3561 = vmatprep.subr.bf16.mxu0 0
        %3562 = vmatpush1.bf16.xpose.msra.mxu0 0
        %3563 = vmatprep.subr.bf16.mxu0 0
        %3564 = vmatpush1.bf16.xpose.msra.mxu0 0
        %3565 = vmatprep.subr.bf16.mxu0 0
        %3566 = vmatpush1.bf16.xpose.msra.mxu0 0
        %3567 = vmatprep.subr.bf16.mxu0 0
        %3568 = vmatpush1.bf16.xpose.msra.mxu0 0
        %3569 = vmatprep.subr.bf16.mxu0 0
        %3570 = vmatpush1.bf16.xpose.msra.mxu0 0
        %3571 = vmatprep.subr.bf16.mxu0 0
        %3572 = vmatpush1.bf16.xpose.msra.mxu0 %v3555
        %3573 = vmatprep.subr.bf16.mxu0 0
        %3574 = vmatpush2.bf16.xpose.msra.mxu0 0
        %3575 = vmatprep.subr.bf16.mxu0 0
        %3576 = vmatpush2.bf16.xpose.msra.mxu0 0
        %3577 = vmatprep.subr.bf16.mxu0 0
        %3578 = vmatpush2.bf16.xpose.msra.mxu0 0
        %3579 = vmatprep.subr.bf16.mxu0 0
        %3580 = vmatpush2.bf16.xpose.msra.mxu0 0
        %3581 = vmatprep.subr.bf16.mxu0 0
        %3582 = vmatpush2.bf16.xpose.msra.mxu0 0
        %3583 = vmatprep.subr.bf16.mxu0 0
        %3584 = vmatpush2.bf16.xpose.msra.mxu0 0
        %3585 = vmatprep.subr.bf16.mxu0 0
        %3586 = vmatpush2.bf16.xpose.msra.mxu0 0
        %3587 = vmatprep.subr.bf16.mxu0 0
        %3588 = vmatpush2.bf16.xpose.msra.mxu0 0
        %3589 = vmatprep.mubr.bf16.mxu0 0
        %3590 = vmatmul.mubr.bf16.gmra.mxu0 %v3552
        %v3591 = vpop.f32.mrf.mxu0
        %v3592 = vadd.f32 0.0, %v3591
        %v3593 = vpop.f32.mrf.mxu0
        %v3594 = vpop.f32.mrf.mxu0
        %v3595 = vpop.f32.mrf.mxu0
        %3596 = vdwg.mxu0
        %v3597 = vsel %vm3485, %v3592, -1e+30
        %v3598 = vsel %vm3487, %v3597, -inf
        %3599 = vmax.xlane.f32.xlu0 %v3598
        %v3600 = vpop.xlane.xlu0 %3599
        %v3601 = vsub.f32 %v3597, %v3600
        %v3602 = vmul.f32 %v3601, 1.442695
        %v3603 = vpow.pop %v3602
        %v3604 = vsel %vm3487, %v3603, 0.0
        %3605 = vadd.xlane.f32.xlu0 %v3604
        %v3606 = vpop.xlane.xlu0 %3605
        %v3607 = vrcp.pop %v3606
        %v3608 = vmul.f32 %v3603, %v3607
        %v3609 = vpack.c.bf16 %v3608, %v3608
        %v3611 = vrot.slane %v3436, 4
        %v3613 = vsel %vm3487, %v3609, 0
        %v3616 = vsel %vm3503, %v3611, 0
        %3618 = vmatprep.subr.bf16.mxu0 0
        %3619 = vmatpush1.bf16.msra.mxu0 0
        %3620 = vmatprep.subr.bf16.mxu0 0
        %3621 = vmatpush1.bf16.msra.mxu0 0
        %3622 = vmatprep.subr.bf16.mxu0 0
        %3623 = vmatpush1.bf16.msra.mxu0 0
        %3624 = vmatprep.subr.bf16.mxu0 0
        %3625 = vmatpush1.bf16.msra.mxu0 0
        %3626 = vmatprep.subr.bf16.mxu0 0
        %3627 = vmatpush1.bf16.msra.mxu0 0
        %3628 = vmatprep.subr.bf16.mxu0 0
        %3629 = vmatpush1.bf16.msra.mxu0 0
        %3630 = vmatprep.subr.bf16.mxu0 0
        %3631 = vmatpush1.bf16.msra.mxu0 0
        %3632 = vmatprep.subr.bf16.mxu0 0
        %3633 = vmatpush1.bf16.msra.mxu0 %v3616
        %3634 = vmatprep.subr.bf16.mxu0 0
        %3635 = vmatpush2.bf16.msra.mxu0 0
        %3636 = vmatprep.subr.bf16.mxu0 0
        %3637 = vmatpush2.bf16.msra.mxu0 0
        %3638 = vmatprep.subr.bf16.mxu0 0
        %3639 = vmatpush2.bf16.msra.mxu0 0
        %3640 = vmatprep.subr.bf16.mxu0 0
        %3641 = vmatpush2.bf16.msra.mxu0 0
        %3642 = vmatprep.subr.bf16.mxu0 0
        %3643 = vmatpush2.bf16.msra.mxu0 0
        %3644 = vmatprep.subr.bf16.mxu0 0
        %3645 = vmatpush2.bf16.msra.mxu0 0
        %3646 = vmatprep.subr.bf16.mxu0 0
        %3647 = vmatpush2.bf16.msra.mxu0 0
        %3648 = vmatprep.subr.bf16.mxu0 0
        %3649 = vmatpush2.bf16.msra.mxu0 0
        %3650 = vmatprep.mubr.bf16.mxu0 0
        %3651 = vmatmul.mubr.bf16.gmra.mxu0 %v3613
        %v3652 = vpop.f32.mrf.mxu0
        %v3653 = vadd.f32 0.0, %v3652
        %v3654 = vpop.f32.mrf.mxu0
        %v3655 = vpop.f32.mrf.mxu0
        %v3656 = vpop.f32.mrf.mxu0
        %3657 = vdwg.mxu0
        %v3658 = vpack.c.bf16 %v3653, %v3542
        %v3663 = vunpack.c.l.b16 %v3386
        %v3664 = vunpack.c.h.b16 %v3386
        %v3665 = vunpack.c.l.b16 %v3387
        %v3666 = vunpack.c.h.b16 %v3387
        %v3667 = vunpack.c.l.b16 %v3388
        %v3668 = vunpack.c.h.b16 %v3388
        %v3669 = vunpack.c.l.b16 %v3389
        %v3670 = vunpack.c.h.b16 %v3389
        %v3671 = vpack.c.b16 %v3665, %v3663
        %v3672 = vpack.c.b16 %v3666, %v3664
        %v3673 = vpack.c.b16 %v3669, %v3667
        %v3674 = vpack.c.b16 %v3670, %v3668
        %v3680 = vsel %vm3437, %v3658, 0
        %3682 = vmatprep.subr.bf16.mxu0 0
        %3683 = vmatpush1.bf16.msra.mxu0 0
        %3684 = vmatprep.subr.bf16.mxu0 0
        %3685 = vmatpush1.bf16.msra.mxu0 0
        %3686 = vmatprep.subr.bf16.mxu0 0
        %3687 = vmatpush1.bf16.msra.mxu0 0
        %3688 = vmatprep.subr.bf16.mxu0 0
        %3689 = vmatpush1.bf16.msra.mxu0 0
        %3690 = vmatprep.subr.bf16.mxu0 0
        %3691 = vmatpush1.bf16.msra.mxu0 0
        %3692 = vmatprep.subr.bf16.mxu0 0
        %3693 = vmatpush1.bf16.msra.mxu0 0
        %3694 = vmatprep.subr.bf16.mxu0 %v3674
        %3695 = vmatpush1.bf16.msra.mxu0 %v3673
        %3696 = vmatprep.subr.bf16.mxu0 %v3672
        %3697 = vmatpush1.bf16.msra.mxu0 %v3671
        %3698 = vmatprep.subr.bf16.mxu0 0
        %3699 = vmatpush2.bf16.msra.mxu0 0
        %3700 = vmatprep.subr.bf16.mxu0 0
        %3701 = vmatpush2.bf16.msra.mxu0 0
        %3702 = vmatprep.subr.bf16.mxu0 0
        %3703 = vmatpush2.bf16.msra.mxu0 0
        %3704 = vmatprep.subr.bf16.mxu0 0
        %3705 = vmatpush2.bf16.msra.mxu0 0
        %3706 = vmatprep.subr.bf16.mxu0 0
        %3707 = vmatpush2.bf16.msra.mxu0 0
        %3708 = vmatprep.subr.bf16.mxu0 0
        %3709 = vmatpush2.bf16.msra.mxu0 0
        %3710 = vmatprep.subr.bf16.mxu0 0
        %3711 = vmatpush2.bf16.msra.mxu0 0
        %3712 = vmatprep.subr.bf16.mxu0 0
        %3713 = vmatpush2.bf16.msra.mxu0 0
        %3714 = vmatprep.mubr.bf16.mxu0 0
        %3715 = vmatmul.mubr.bf16.gmra.mxu0 %v3680
        %v3716 = vpop.f32.mrf.mxu0
        %v3717 = vadd.f32 0.0, %v3716
        %v3718 = vpop.f32.mrf.mxu0
        %v3719 = vadd.f32 0.0, %v3718
        %v3720 = vpop.f32.mrf.mxu0
        %v3721 = vadd.f32 0.0, %v3720
        %v3722 = vpop.f32.mrf.mxu0
        %v3723 = vadd.f32 0.0, %v3722
        %3724 = vdwg.mxu0
        %v3725 = vadd.f32 %v3430, %v3717
        %v3726 = vadd.f32 %v3431, %v3719
        %v3727 = vadd.f32 %v3432, %v3721
        %v3728 = vadd.f32 %v3433, %v3723
        %3729 = vrot.lane.b32.xlu0 %v3434, 96
        %v3730 = vpop.permute.xlu0 %3729
        %3731 = vrot.lane.b32.xlu0 %v3435, 96
        %v3732 = vpop.permute.xlu0 %3731
        %v3734 = vsel %vm3437, %v3730, 0
        %v3737 = vsel %vm3437, %v3732, 0
        %3739 = vmatprep.subr.bf16.mxu0 0
        %3740 = vmatpush1.bf16.xpose.msra.mxu0 0
        %3741 = vmatprep.subr.bf16.mxu0 0
        %3742 = vmatpush1.bf16.xpose.msra.mxu0 0
        %3743 = vmatprep.subr.bf16.mxu0 0
        %3744 = vmatpush1.bf16.xpose.msra.mxu0 0
        %3745 = vmatprep.subr.bf16.mxu0 0
        %3746 = vmatpush1.bf16.xpose.msra.mxu0 0
        %3747 = vmatprep.subr.bf16.mxu0 0
        %3748 = vmatpush1.bf16.xpose.msra.mxu0 0
        %3749 = vmatprep.subr.bf16.mxu0 0
        %3750 = vmatpush1.bf16.xpose.msra.mxu0 0
        %3751 = vmatprep.subr.bf16.mxu0 0
        %3752 = vmatpush1.bf16.xpose.msra.mxu0 0
        %3753 = vmatprep.subr.bf16.mxu0 0
        %3754 = vmatpush1.bf16.xpose.msra.mxu0 %v3737
        %3755 = vmatprep.subr.bf16.mxu0 0
        %3756 = vmatpush2.bf16.xpose.msra.mxu0 0
        %3757 = vmatprep.subr.bf16.mxu0 0
        %3758 = vmatpush2.bf16.xpose.msra.mxu0 0
        %3759 = vmatprep.subr.bf16.mxu0 0
        %3760 = vmatpush2.bf16.xpose.msra.mxu0 0
        %3761 = vmatprep.subr.bf16.mxu0 0
        %3762 = vmatpush2.bf16.xpose.msra.mxu0 0
        %3763 = vmatprep.subr.bf16.mxu0 0
        %3764 = vmatpush2.bf16.xpose.msra.mxu0 0
        %3765 = vmatprep.subr.bf16.mxu0 0
        %3766 = vmatpush2.bf16.xpose.msra.mxu0 0
        %3767 = vmatprep.subr.bf16.mxu0 0
        %3768 = vmatpush2.bf16.xpose.msra.mxu0 0
        %3769 = vmatprep.subr.bf16.mxu0 0
        %3770 = vmatpush2.bf16.xpose.msra.mxu0 0
        %3771 = vmatprep.mubr.bf16.mxu0 0
        %3772 = vmatmul.mubr.bf16.gmra.mxu0 %v3734
        %v3773 = vpop.f32.mrf.mxu0
        %v3774 = vadd.f32 0.0, %v3773
        %v3775 = vpop.f32.mrf.mxu0
        %v3776 = vpop.f32.mrf.mxu0
        %v3777 = vpop.f32.mrf.mxu0
        %3778 = vdwg.mxu0
        %v3779 = vsel %vm3485, %v3774, -1e+30
        %v3780 = vsel %vm3487, %v3779, -inf
        %3781 = vmax.xlane.f32.xlu0 %v3780
        %v3782 = vpop.xlane.xlu0 %3781
        %v3783 = vsub.f32 %v3779, %v3782
        %v3784 = vmul.f32 %v3783, 1.442695
        %v3785 = vpow.pop %v3784
        %v3786 = vsel %vm3487, %v3785, 0.0
        %3787 = vadd.xlane.f32.xlu0 %v3786
        %v3788 = vpop.xlane.xlu0 %3787
        %v3789 = vrcp.pop %v3788
        %v3790 = vmul.f32 %v3785, %v3789
        %v3791 = vpack.c.bf16 %v3790, %v3790
        %3792 = vrot.lane.b32.xlu0 %v3436, 96
        %v3793 = vpop.permute.xlu0 %3792
        %v3795 = vsel %vm3487, %v3791, 0
        %v3798 = vsel %vm3503, %v3793, 0
        %3800 = vmatprep.subr.bf16.mxu0 0
        %3801 = vmatpush1.bf16.msra.mxu0 0
        %3802 = vmatprep.subr.bf16.mxu0 0
        %3803 = vmatpush1.bf16.msra.mxu0 0
        %3804 = vmatprep.subr.bf16.mxu0 0
        %3805 = vmatpush1.bf16.msra.mxu0 0
        %3806 = vmatprep.subr.bf16.mxu0 0
        %3807 = vmatpush1.bf16.msra.mxu0 0
        %3808 = vmatprep.subr.bf16.mxu0 0
        %3809 = vmatpush1.bf16.msra.mxu0 0
        %3810 = vmatprep.subr.bf16.mxu0 0
        %3811 = vmatpush1.bf16.msra.mxu0 0
        %3812 = vmatprep.subr.bf16.mxu0 0
        %3813 = vmatpush1.bf16.msra.mxu0 0
        %3814 = vmatprep.subr.bf16.mxu0 0
        %3815 = vmatpush1.bf16.msra.mxu0 %v3798
        %3816 = vmatprep.subr.bf16.mxu0 0
        %3817 = vmatpush2.bf16.msra.mxu0 0
        %3818 = vmatprep.subr.bf16.mxu0 0
        %3819 = vmatpush2.bf16.msra.mxu0 0
        %3820 = vmatprep.subr.bf16.mxu0 0
        %3821 = vmatpush2.bf16.msra.mxu0 0
        %3822 = vmatprep.subr.bf16.mxu0 0
        %3823 = vmatpush2.bf16.msra.mxu0 0
        %3824 = vmatprep.subr.bf16.mxu0 0
        %3825 = vmatpush2.bf16.msra.mxu0 0
        %3826 = vmatprep.subr.bf16.mxu0 0
        %3827 = vmatpush2.bf16.msra.mxu0 0
        %3828 = vmatprep.subr.bf16.mxu0 0
        %3829 = vmatpush2.bf16.msra.mxu0 0
        %3830 = vmatprep.subr.bf16.mxu0 0
        %3831 = vmatpush2.bf16.msra.mxu0 0
        %3832 = vmatprep.mubr.bf16.mxu0 0
        %3833 = vmatmul.mubr.bf16.gmra.mxu0 %v3795
        %v3834 = vpop.f32.mrf.mxu0
        %v3835 = vadd.f32 0.0, %v3834
        %v3836 = vpop.f32.mrf.mxu0
        %v3837 = vpop.f32.mrf.mxu0
        %v3838 = vpop.f32.mrf.mxu0
        %3839 = vdwg.mxu0
        %3840 = vrot.lane.b32.xlu0 %v3548, 96
        %v3841 = vpop.permute.xlu0 %3840
        %3842 = vrot.lane.b32.xlu0 %v3550, 96
        %v3843 = vpop.permute.xlu0 %3842
        %v3845 = vsel %vm3437, %v3841, 0
        %v3848 = vsel %vm3437, %v3843, 0
        %3850 = vmatprep.subr.bf16.mxu0 0
        %3851 = vmatpush1.bf16.xpose.msra.mxu0 0
        %3852 = vmatprep.subr.bf16.mxu0 0
        %3853 = vmatpush1.bf16.xpose.msra.mxu0 0
        %3854 = vmatprep.subr.bf16.mxu0 0
        %3855 = vmatpush1.bf16.xpose.msra.mxu0 0
        %3856 = vmatprep.subr.bf16.mxu0 0
        %3857 = vmatpush1.bf16.xpose.msra.mxu0 0
        %3858 = vmatprep.subr.bf16.mxu0 0
        %3859 = vmatpush1.bf16.xpose.msra.mxu0 0
        %3860 = vmatprep.subr.bf16.mxu0 0
        %3861 = vmatpush1.bf16.xpose.msra.mxu0 0
        %3862 = vmatprep.subr.bf16.mxu0 0
        %3863 = vmatpush1.bf16.xpose.msra.mxu0 0
        %3864 = vmatprep.subr.bf16.mxu0 0
        %3865 = vmatpush1.bf16.xpose.msra.mxu0 %v3848
        %3866 = vmatprep.subr.bf16.mxu0 0
        %3867 = vmatpush2.bf16.xpose.msra.mxu0 0
        %3868 = vmatprep.subr.bf16.mxu0 0
        %3869 = vmatpush2.bf16.xpose.msra.mxu0 0
        %3870 = vmatprep.subr.bf16.mxu0 0
        %3871 = vmatpush2.bf16.xpose.msra.mxu0 0
        %3872 = vmatprep.subr.bf16.mxu0 0
        %3873 = vmatpush2.bf16.xpose.msra.mxu0 0
        %3874 = vmatprep.subr.bf16.mxu0 0
        %3875 = vmatpush2.bf16.xpose.msra.mxu0 0
        %3876 = vmatprep.subr.bf16.mxu0 0
        %3877 = vmatpush2.bf16.xpose.msra.mxu0 0
        %3878 = vmatprep.subr.bf16.mxu0 0
        %3879 = vmatpush2.bf16.xpose.msra.mxu0 0
        %3880 = vmatprep.subr.bf16.mxu0 0
        %3881 = vmatpush2.bf16.xpose.msra.mxu0 0
        %3882 = vmatprep.mubr.bf16.mxu0 0
        %3883 = vmatmul.mubr.bf16.gmra.mxu0 %v3845
        %v3884 = vpop.f32.mrf.mxu0
        %v3885 = vadd.f32 0.0, %v3884
        %v3886 = vpop.f32.mrf.mxu0
        %v3887 = vpop.f32.mrf.mxu0
        %v3888 = vpop.f32.mrf.mxu0
        %3889 = vdwg.mxu0
        %v3890 = vsel %vm3485, %v3885, -1e+30
        %v3891 = vsel %vm3487, %v3890, -inf
        %3892 = vmax.xlane.f32.xlu0 %v3891
        %v3893 = vpop.xlane.xlu0 %3892
        %v3894 = vsub.f32 %v3890, %v3893
        %v3895 = vmul.f32 %v3894, 1.442695
        %v3896 = vpow.pop %v3895
        %v3897 = vsel %vm3487, %v3896, 0.0
        %3898 = vadd.xlane.f32.xlu0 %v3897
        %v3899 = vpop.xlane.xlu0 %3898
        %v3900 = vrcp.pop %v3899
        %v3901 = vmul.f32 %v3896, %v3900
        %v3902 = vpack.c.bf16 %v3901, %v3901
        %3903 = vrot.lane.b32.xlu0 %v3611, 96
        %v3904 = vpop.permute.xlu0 %3903
        %v3906 = vsel %vm3487, %v3902, 0
        %v3909 = vsel %vm3503, %v3904, 0
        %3911 = vmatprep.subr.bf16.mxu0 0
        %3912 = vmatpush1.bf16.msra.mxu0 0
        %3913 = vmatprep.subr.bf16.mxu0 0
        %3914 = vmatpush1.bf16.msra.mxu0 0
        %3915 = vmatprep.subr.bf16.mxu0 0
        %3916 = vmatpush1.bf16.msra.mxu0 0
        %3917 = vmatprep.subr.bf16.mxu0 0
        %3918 = vmatpush1.bf16.msra.mxu0 0
        %3919 = vmatprep.subr.bf16.mxu0 0
        %3920 = vmatpush1.bf16.msra.mxu0 0
        %3921 = vmatprep.subr.bf16.mxu0 0
        %3922 = vmatpush1.bf16.msra.mxu0 0
        %3923 = vmatprep.subr.bf16.mxu0 0
        %3924 = vmatpush1.bf16.msra.mxu0 0
        %3925 = vmatprep.subr.bf16.mxu0 0
        %3926 = vmatpush1.bf16.msra.mxu0 %v3909
        %3927 = vmatprep.subr.bf16.mxu0 0
        %3928 = vmatpush2.bf16.msra.mxu0 0
        %3929 = vmatprep.subr.bf16.mxu0 0
        %3930 = vmatpush2.bf16.msra.mxu0 0
        %3931 = vmatprep.subr.bf16.mxu0 0
        %3932 = vmatpush2.bf16.msra.mxu0 0
        %3933 = vmatprep.subr.bf16.mxu0 0
        %3934 = vmatpush2.bf16.msra.mxu0 0
        %3935 = vmatprep.subr.bf16.mxu0 0
        %3936 = vmatpush2.bf16.msra.mxu0 0
        %3937 = vmatprep.subr.bf16.mxu0 0
        %3938 = vmatpush2.bf16.msra.mxu0 0
        %3939 = vmatprep.subr.bf16.mxu0 0
        %3940 = vmatpush2.bf16.msra.mxu0 0
        %3941 = vmatprep.subr.bf16.mxu0 0
        %3942 = vmatpush2.bf16.msra.mxu0 0
        %3943 = vmatprep.mubr.bf16.mxu0 0
        %3944 = vmatmul.mubr.bf16.gmra.mxu0 %v3906
        %v3945 = vpop.f32.mrf.mxu0
        %v3946 = vadd.f32 0.0, %v3945
        %v3947 = vpop.f32.mrf.mxu0
        %v3948 = vpop.f32.mrf.mxu0
        %v3949 = vpop.f32.mrf.mxu0
        %3950 = vdwg.mxu0
        %v3951 = vpack.c.bf16 %v3946, %v3835
        %v3956 = vunpack.c.l.b16 %v3390
        %v3957 = vunpack.c.h.b16 %v3390
        %v3958 = vunpack.c.l.b16 %v3391
        %v3959 = vunpack.c.h.b16 %v3391
        %v3960 = vunpack.c.l.b16 %v3392
        %v3961 = vunpack.c.h.b16 %v3392
        %v3962 = vunpack.c.l.b16 %v3393
        %v3963 = vunpack.c.h.b16 %v3393
        %v3964 = vpack.c.b16 %v3958, %v3956
        %v3965 = vpack.c.b16 %v3959, %v3957
        %v3966 = vpack.c.b16 %v3962, %v3960
        %v3967 = vpack.c.b16 %v3963, %v3961
        %v3973 = vsel %vm3437, %v3951, 0
        %3975 = vmatprep.subr.bf16.mxu0 0
        %3976 = vmatpush1.bf16.msra.mxu0 0
        %3977 = vmatprep.subr.bf16.mxu0 0
        %3978 = vmatpush1.bf16.msra.mxu0 0
        %3979 = vmatprep.subr.bf16.mxu0 0
        %3980 = vmatpush1.bf16.msra.mxu0 0
        %3981 = vmatprep.subr.bf16.mxu0 0
        %3982 = vmatpush1.bf16.msra.mxu0 0
        %3983 = vmatprep.subr.bf16.mxu0 0
        %3984 = vmatpush1.bf16.msra.mxu0 0
        %3985 = vmatprep.subr.bf16.mxu0 0
        %3986 = vmatpush1.bf16.msra.mxu0 0
        %3987 = vmatprep.subr.bf16.mxu0 %v3967
        %3988 = vmatpush1.bf16.msra.mxu0 %v3966
        %3989 = vmatprep.subr.bf16.mxu0 %v3965
        %3990 = vmatpush1.bf16.msra.mxu0 %v3964
        %3991 = vmatprep.subr.bf16.mxu0 0
        %3992 = vmatpush2.bf16.msra.mxu0 0
        %3993 = vmatprep.subr.bf16.mxu0 0
        %3994 = vmatpush2.bf16.msra.mxu0 0
        %3995 = vmatprep.subr.bf16.mxu0 0
        %3996 = vmatpush2.bf16.msra.mxu0 0
        %3997 = vmatprep.subr.bf16.mxu0 0
        %3998 = vmatpush2.bf16.msra.mxu0 0
        %3999 = vmatprep.subr.bf16.mxu0 0
        %4000 = vmatpush2.bf16.msra.mxu0 0
        %4001 = vmatprep.subr.bf16.mxu0 0
        %4002 = vmatpush2.bf16.msra.mxu0 0
        %4003 = vmatprep.subr.bf16.mxu0 0
        %4004 = vmatpush2.bf16.msra.mxu0 0
        %4005 = vmatprep.subr.bf16.mxu0 0
        %4006 = vmatpush2.bf16.msra.mxu0 0
        %4007 = vmatprep.mubr.bf16.mxu0 0
        %4008 = vmatmul.mubr.bf16.gmra.mxu0 %v3973
        %v4009 = vpop.f32.mrf.mxu0
        %v4010 = vadd.f32 0.0, %v4009
        %v4011 = vpop.f32.mrf.mxu0
        %v4012 = vadd.f32 0.0, %v4011
        %v4013 = vpop.f32.mrf.mxu0
        %v4014 = vadd.f32 0.0, %v4013
        %v4015 = vpop.f32.mrf.mxu0
        %v4016 = vadd.f32 0.0, %v4015
        %4017 = vdwg.mxu0
        %v4018 = vadd.f32 %v3725, %v4010
        %v4019 = vadd.f32 %v3726, %v4012
        %v4020 = vadd.f32 %v3727, %v4014
        %v4021 = vadd.f32 %v3728, %v4016
        %4022 = vrot.lane.b32.xlu0 %v3434, 64
        %v4023 = vpop.permute.xlu0 %4022
        %4024 = vrot.lane.b32.xlu0 %v3435, 64
        %v4025 = vpop.permute.xlu0 %4024
        %v4027 = vsel %vm3437, %v4023, 0
        %v4030 = vsel %vm3437, %v4025, 0
        %4032 = vmatprep.subr.bf16.mxu0 0
        %4033 = vmatpush1.bf16.xpose.msra.mxu0 0
        %4034 = vmatprep.subr.bf16.mxu0 0
        %4035 = vmatpush1.bf16.xpose.msra.mxu0 0
        %4036 = vmatprep.subr.bf16.mxu0 0
        %4037 = vmatpush1.bf16.xpose.msra.mxu0 0
        %4038 = vmatprep.subr.bf16.mxu0 0
        %4039 = vmatpush1.bf16.xpose.msra.mxu0 0
        %4040 = vmatprep.subr.bf16.mxu0 0
        %4041 = vmatpush1.bf16.xpose.msra.mxu0 0
        %4042 = vmatprep.subr.bf16.mxu0 0
        %4043 = vmatpush1.bf16.xpose.msra.mxu0 0
        %4044 = vmatprep.subr.bf16.mxu0 0
        %4045 = vmatpush1.bf16.xpose.msra.mxu0 0
        %4046 = vmatprep.subr.bf16.mxu0 0
        %4047 = vmatpush1.bf16.xpose.msra.mxu0 %v4030
        %4048 = vmatprep.subr.bf16.mxu0 0
        %4049 = vmatpush2.bf16.xpose.msra.mxu0 0
        %4050 = vmatprep.subr.bf16.mxu0 0
        %4051 = vmatpush2.bf16.xpose.msra.mxu0 0
        %4052 = vmatprep.subr.bf16.mxu0 0
        %4053 = vmatpush2.bf16.xpose.msra.mxu0 0
        %4054 = vmatprep.subr.bf16.mxu0 0
        %4055 = vmatpush2.bf16.xpose.msra.mxu0 0
        %4056 = vmatprep.subr.bf16.mxu0 0
        %4057 = vmatpush2.bf16.xpose.msra.mxu0 0
        %4058 = vmatprep.subr.bf16.mxu0 0
        %4059 = vmatpush2.bf16.xpose.msra.mxu0 0
        %4060 = vmatprep.subr.bf16.mxu0 0
        %4061 = vmatpush2.bf16.xpose.msra.mxu0 0
        %4062 = vmatprep.subr.bf16.mxu0 0
        %4063 = vmatpush2.bf16.xpose.msra.mxu0 0
        %4064 = vmatprep.mubr.bf16.mxu0 0
        %4065 = vmatmul.mubr.bf16.gmra.mxu0 %v4027
        %v4066 = vpop.f32.mrf.mxu0
        %v4067 = vadd.f32 0.0, %v4066
        %v4068 = vpop.f32.mrf.mxu0
        %v4069 = vpop.f32.mrf.mxu0
        %v4070 = vpop.f32.mrf.mxu0
        %4071 = vdwg.mxu0
        %v4072 = vsel %vm3485, %v4067, -1e+30
        %v4073 = vsel %vm3487, %v4072, -inf
        %4074 = vmax.xlane.f32.xlu0 %v4073
        %v4075 = vpop.xlane.xlu0 %4074
        %v4076 = vsub.f32 %v4072, %v4075
        %v4077 = vmul.f32 %v4076, 1.442695
        %v4078 = vpow.pop %v4077
        %v4079 = vsel %vm3487, %v4078, 0.0
        %4080 = vadd.xlane.f32.xlu0 %v4079
        %v4081 = vpop.xlane.xlu0 %4080
        %v4082 = vrcp.pop %v4081
        %v4083 = vmul.f32 %v4078, %v4082
        %v4084 = vpack.c.bf16 %v4083, %v4083
        %4085 = vrot.lane.b32.xlu0 %v3436, 64
        %v4086 = vpop.permute.xlu0 %4085
        %v4088 = vsel %vm3487, %v4084, 0
        %v4091 = vsel %vm3503, %v4086, 0
        %4093 = vmatprep.subr.bf16.mxu0 0
        %4094 = vmatpush1.bf16.msra.mxu0 0
        %4095 = vmatprep.subr.bf16.mxu0 0
        %4096 = vmatpush1.bf16.msra.mxu0 0
        %4097 = vmatprep.subr.bf16.mxu0 0
        %4098 = vmatpush1.bf16.msra.mxu0 0
        %4099 = vmatprep.subr.bf16.mxu0 0
        %4100 = vmatpush1.bf16.msra.mxu0 0
        %4101 = vmatprep.subr.bf16.mxu0 0
        %4102 = vmatpush1.bf16.msra.mxu0 0
        %4103 = vmatprep.subr.bf16.mxu0 0
        %4104 = vmatpush1.bf16.msra.mxu0 0
        %4105 = vmatprep.subr.bf16.mxu0 0
        %4106 = vmatpush1.bf16.msra.mxu0 0
        %4107 = vmatprep.subr.bf16.mxu0 0
        %4108 = vmatpush1.bf16.msra.mxu0 %v4091
        %4109 = vmatprep.subr.bf16.mxu0 0
        %4110 = vmatpush2.bf16.msra.mxu0 0
        %4111 = vmatprep.subr.bf16.mxu0 0
        %4112 = vmatpush2.bf16.msra.mxu0 0
        %4113 = vmatprep.subr.bf16.mxu0 0
        %4114 = vmatpush2.bf16.msra.mxu0 0
        %4115 = vmatprep.subr.bf16.mxu0 0
        %4116 = vmatpush2.bf16.msra.mxu0 0
        %4117 = vmatprep.subr.bf16.mxu0 0
        %4118 = vmatpush2.bf16.msra.mxu0 0
        %4119 = vmatprep.subr.bf16.mxu0 0
        %4120 = vmatpush2.bf16.msra.mxu0 0
        %4121 = vmatprep.subr.bf16.mxu0 0
        %4122 = vmatpush2.bf16.msra.mxu0 0
        %4123 = vmatprep.subr.bf16.mxu0 0
        %4124 = vmatpush2.bf16.msra.mxu0 0
        %4125 = vmatprep.mubr.bf16.mxu0 0
        %4126 = vmatmul.mubr.bf16.gmra.mxu0 %v4088
        %v4127 = vpop.f32.mrf.mxu0
        %v4128 = vadd.f32 0.0, %v4127
        %v4129 = vpop.f32.mrf.mxu0
        %v4130 = vpop.f32.mrf.mxu0
        %v4131 = vpop.f32.mrf.mxu0
        %4132 = vdwg.mxu0
        %4133 = vrot.lane.b32.xlu0 %v3548, 64
        %v4134 = vpop.permute.xlu0 %4133
        %4135 = vrot.lane.b32.xlu0 %v3550, 64
        %v4136 = vpop.permute.xlu0 %4135
        %v4138 = vsel %vm3437, %v4134, 0
        %v4141 = vsel %vm3437, %v4136, 0
        %4143 = vmatprep.subr.bf16.mxu0 0
        %4144 = vmatpush1.bf16.xpose.msra.mxu0 0
        %4145 = vmatprep.subr.bf16.mxu0 0
        %4146 = vmatpush1.bf16.xpose.msra.mxu0 0
        %4147 = vmatprep.subr.bf16.mxu0 0
        %4148 = vmatpush1.bf16.xpose.msra.mxu0 0
        %4149 = vmatprep.subr.bf16.mxu0 0
        %4150 = vmatpush1.bf16.xpose.msra.mxu0 0
        %4151 = vmatprep.subr.bf16.mxu0 0
        %4152 = vmatpush1.bf16.xpose.msra.mxu0 0
        %4153 = vmatprep.subr.bf16.mxu0 0
        %4154 = vmatpush1.bf16.xpose.msra.mxu0 0
        %4155 = vmatprep.subr.bf16.mxu0 0
        %4156 = vmatpush1.bf16.xpose.msra.mxu0 0
        %4157 = vmatprep.subr.bf16.mxu0 0
        %4158 = vmatpush1.bf16.xpose.msra.mxu0 %v4141
        %4159 = vmatprep.subr.bf16.mxu0 0
        %4160 = vmatpush2.bf16.xpose.msra.mxu0 0
        %4161 = vmatprep.subr.bf16.mxu0 0
        %4162 = vmatpush2.bf16.xpose.msra.mxu0 0
        %4163 = vmatprep.subr.bf16.mxu0 0
        %4164 = vmatpush2.bf16.xpose.msra.mxu0 0
        %4165 = vmatprep.subr.bf16.mxu0 0
        %4166 = vmatpush2.bf16.xpose.msra.mxu0 0
        %4167 = vmatprep.subr.bf16.mxu0 0
        %4168 = vmatpush2.bf16.xpose.msra.mxu0 0
        %4169 = vmatprep.subr.bf16.mxu0 0
        %4170 = vmatpush2.bf16.xpose.msra.mxu0 0
        %4171 = vmatprep.subr.bf16.mxu0 0
        %4172 = vmatpush2.bf16.xpose.msra.mxu0 0
        %4173 = vmatprep.subr.bf16.mxu0 0
        %4174 = vmatpush2.bf16.xpose.msra.mxu0 0
        %4175 = vmatprep.mubr.bf16.mxu0 0
        %4176 = vmatmul.mubr.bf16.gmra.mxu0 %v4138
        %v4177 = vpop.f32.mrf.mxu0
        %v4178 = vadd.f32 0.0, %v4177
        %v4179 = vpop.f32.mrf.mxu0
        %v4180 = vpop.f32.mrf.mxu0
        %v4181 = vpop.f32.mrf.mxu0
        %4182 = vdwg.mxu0
        %v4183 = vsel %vm3485, %v4178, -1e+30
        %v4184 = vsel %vm3487, %v4183, -inf
        %4185 = vmax.xlane.f32.xlu0 %v4184
        %v4186 = vpop.xlane.xlu0 %4185
        %v4187 = vsub.f32 %v4183, %v4186
        %v4188 = vmul.f32 %v4187, 1.442695
        %v4189 = vpow.pop %v4188
        %v4190 = vsel %vm3487, %v4189, 0.0
        %4191 = vadd.xlane.f32.xlu0 %v4190
        %v4192 = vpop.xlane.xlu0 %4191
        %v4193 = vrcp.pop %v4192
        %v4194 = vmul.f32 %v4189, %v4193
        %v4195 = vpack.c.bf16 %v4194, %v4194
        %4196 = vrot.lane.b32.xlu0 %v3611, 64
        %v4197 = vpop.permute.xlu0 %4196
        %v4199 = vsel %vm3487, %v4195, 0
        %v4202 = vsel %vm3503, %v4197, 0
        %4204 = vmatprep.subr.bf16.mxu0 0
        %4205 = vmatpush1.bf16.msra.mxu0 0
        %4206 = vmatprep.subr.bf16.mxu0 0
        %4207 = vmatpush1.bf16.msra.mxu0 0
        %4208 = vmatprep.subr.bf16.mxu0 0
        %4209 = vmatpush1.bf16.msra.mxu0 0
        %4210 = vmatprep.subr.bf16.mxu0 0
        %4211 = vmatpush1.bf16.msra.mxu0 0
        %4212 = vmatprep.subr.bf16.mxu0 0
        %4213 = vmatpush1.bf16.msra.mxu0 0
        %4214 = vmatprep.subr.bf16.mxu0 0
        %4215 = vmatpush1.bf16.msra.mxu0 0
        %4216 = vmatprep.subr.bf16.mxu0 0
        %4217 = vmatpush1.bf16.msra.mxu0 0
        %4218 = vmatprep.subr.bf16.mxu0 0
        %4219 = vmatpush1.bf16.msra.mxu0 %v4202
        %4220 = vmatprep.subr.bf16.mxu0 0
        %4221 = vmatpush2.bf16.msra.mxu0 0
        %4222 = vmatprep.subr.bf16.mxu0 0
        %4223 = vmatpush2.bf16.msra.mxu0 0
        %4224 = vmatprep.subr.bf16.mxu0 0
        %4225 = vmatpush2.bf16.msra.mxu0 0
        %4226 = vmatprep.subr.bf16.mxu0 0
        %4227 = vmatpush2.bf16.msra.mxu0 0
        %4228 = vmatprep.subr.bf16.mxu0 0
        %4229 = vmatpush2.bf16.msra.mxu0 0
        %4230 = vmatprep.subr.bf16.mxu0 0
        %4231 = vmatpush2.bf16.msra.mxu0 0
        %4232 = vmatprep.subr.bf16.mxu0 0
        %4233 = vmatpush2.bf16.msra.mxu0 0
        %4234 = vmatprep.subr.bf16.mxu0 0
        %4235 = vmatpush2.bf16.msra.mxu0 0
        %4236 = vmatprep.mubr.bf16.mxu0 0
        %4237 = vmatmul.mubr.bf16.gmra.mxu0 %v4199
        %v4238 = vpop.f32.mrf.mxu0
        %v4239 = vadd.f32 0.0, %v4238
        %v4240 = vpop.f32.mrf.mxu0
        %v4241 = vpop.f32.mrf.mxu0
        %v4242 = vpop.f32.mrf.mxu0
        %4243 = vdwg.mxu0
        %v4244 = vpack.c.bf16 %v4239, %v4128
        %v4249 = vunpack.c.l.b16 %v3394
        %v4250 = vunpack.c.h.b16 %v3394
        %v4251 = vunpack.c.l.b16 %v3395
        %v4252 = vunpack.c.h.b16 %v3395
        %v4253 = vunpack.c.l.b16 %v3396
        %v4254 = vunpack.c.h.b16 %v3396
        %v4255 = vunpack.c.l.b16 %v3397
        %v4256 = vunpack.c.h.b16 %v3397
        %v4257 = vpack.c.b16 %v4251, %v4249
        %v4258 = vpack.c.b16 %v4252, %v4250
        %v4259 = vpack.c.b16 %v4255, %v4253
        %v4260 = vpack.c.b16 %v4256, %v4254
        %v4266 = vsel %vm3437, %v4244, 0
        %4268 = vmatprep.subr.bf16.mxu0 0
        %4269 = vmatpush1.bf16.msra.mxu0 0
        %4270 = vmatprep.subr.bf16.mxu0 0
        %4271 = vmatpush1.bf16.msra.mxu0 0
        %4272 = vmatprep.subr.bf16.mxu0 0
        %4273 = vmatpush1.bf16.msra.mxu0 0
        %4274 = vmatprep.subr.bf16.mxu0 0
        %4275 = vmatpush1.bf16.msra.mxu0 0
        %4276 = vmatprep.subr.bf16.mxu0 0
        %4277 = vmatpush1.bf16.msra.mxu0 0
        %4278 = vmatprep.subr.bf16.mxu0 0
        %4279 = vmatpush1.bf16.msra.mxu0 0
        %4280 = vmatprep.subr.bf16.mxu0 %v4260
        %4281 = vmatpush1.bf16.msra.mxu0 %v4259
        %4282 = vmatprep.subr.bf16.mxu0 %v4258
        %4283 = vmatpush1.bf16.msra.mxu0 %v4257
        %4284 = vmatprep.subr.bf16.mxu0 0
        %4285 = vmatpush2.bf16.msra.mxu0 0
        %4286 = vmatprep.subr.bf16.mxu0 0
        %4287 = vmatpush2.bf16.msra.mxu0 0
        %4288 = vmatprep.subr.bf16.mxu0 0
        %4289 = vmatpush2.bf16.msra.mxu0 0
        %4290 = vmatprep.subr.bf16.mxu0 0
        %4291 = vmatpush2.bf16.msra.mxu0 0
        %4292 = vmatprep.subr.bf16.mxu0 0
        %4293 = vmatpush2.bf16.msra.mxu0 0
        %4294 = vmatprep.subr.bf16.mxu0 0
        %4295 = vmatpush2.bf16.msra.mxu0 0
        %4296 = vmatprep.subr.bf16.mxu0 0
        %4297 = vmatpush2.bf16.msra.mxu0 0
        %4298 = vmatprep.subr.bf16.mxu0 0
        %4299 = vmatpush2.bf16.msra.mxu0 0
        %4300 = vmatprep.mubr.bf16.mxu0 0
        %4301 = vmatmul.mubr.bf16.gmra.mxu0 %v4266
        %v4302 = vpop.f32.mrf.mxu0
        %v4303 = vadd.f32 0.0, %v4302
        %v4304 = vpop.f32.mrf.mxu0
        %v4305 = vadd.f32 0.0, %v4304
        %v4306 = vpop.f32.mrf.mxu0
        %v4307 = vadd.f32 0.0, %v4306
        %v4308 = vpop.f32.mrf.mxu0
        %v4309 = vadd.f32 0.0, %v4308
        %4310 = vdwg.mxu0
        %v4311 = vadd.f32 %v4018, %v4303
        %v4312 = vadd.f32 %v4019, %v4305
        %v4313 = vadd.f32 %v4020, %v4307
        %v4314 = vadd.f32 %v4021, %v4309
        %4315 = vrot.lane.b32.xlu0 %v3434, 32
        %v4316 = vpop.permute.xlu0 %4315
        %4317 = vrot.lane.b32.xlu0 %v3435, 32
        %v4318 = vpop.permute.xlu0 %4317
        %v4320 = vsel %vm3437, %v4316, 0
        %v4323 = vsel %vm3437, %v4318, 0
        %4325 = vmatprep.subr.bf16.mxu0 0
        %4326 = vmatpush1.bf16.xpose.msra.mxu0 0
        %4327 = vmatprep.subr.bf16.mxu0 0
        %4328 = vmatpush1.bf16.xpose.msra.mxu0 0
        %4329 = vmatprep.subr.bf16.mxu0 0
        %4330 = vmatpush1.bf16.xpose.msra.mxu0 0
        %4331 = vmatprep.subr.bf16.mxu0 0
        %4332 = vmatpush1.bf16.xpose.msra.mxu0 0
        %4333 = vmatprep.subr.bf16.mxu0 0
        %4334 = vmatpush1.bf16.xpose.msra.mxu0 0
        %4335 = vmatprep.subr.bf16.mxu0 0
        %4336 = vmatpush1.bf16.xpose.msra.mxu0 0
        %4337 = vmatprep.subr.bf16.mxu0 0
        %4338 = vmatpush1.bf16.xpose.msra.mxu0 0
        %4339 = vmatprep.subr.bf16.mxu0 0
        %4340 = vmatpush1.bf16.xpose.msra.mxu0 %v4323
        %4341 = vmatprep.subr.bf16.mxu0 0
        %4342 = vmatpush2.bf16.xpose.msra.mxu0 0
        %4343 = vmatprep.subr.bf16.mxu0 0
        %4344 = vmatpush2.bf16.xpose.msra.mxu0 0
        %4345 = vmatprep.subr.bf16.mxu0 0
        %4346 = vmatpush2.bf16.xpose.msra.mxu0 0
        %4347 = vmatprep.subr.bf16.mxu0 0
        %4348 = vmatpush2.bf16.xpose.msra.mxu0 0
        %4349 = vmatprep.subr.bf16.mxu0 0
        %4350 = vmatpush2.bf16.xpose.msra.mxu0 0
        %4351 = vmatprep.subr.bf16.mxu0 0
        %4352 = vmatpush2.bf16.xpose.msra.mxu0 0
        %4353 = vmatprep.subr.bf16.mxu0 0
        %4354 = vmatpush2.bf16.xpose.msra.mxu0 0
        %4355 = vmatprep.subr.bf16.mxu0 0
        %4356 = vmatpush2.bf16.xpose.msra.mxu0 0
        %4357 = vmatprep.mubr.bf16.mxu0 0
        %4358 = vmatmul.mubr.bf16.gmra.mxu0 %v4320
        %v4359 = vpop.f32.mrf.mxu0
        %v4360 = vadd.f32 0.0, %v4359
        %v4361 = vpop.f32.mrf.mxu0
        %v4362 = vpop.f32.mrf.mxu0
        %v4363 = vpop.f32.mrf.mxu0
        %4364 = vdwg.mxu0
        %v4365 = vsel %vm3485, %v4360, -1e+30
        %v4366 = vsel %vm3487, %v4365, -inf
        %4367 = vmax.xlane.f32.xlu0 %v4366
        %v4368 = vpop.xlane.xlu0 %4367
        %v4369 = vsub.f32 %v4365, %v4368
        %v4370 = vmul.f32 %v4369, 1.442695
        %v4371 = vpow.pop %v4370
        %v4372 = vsel %vm3487, %v4371, 0.0
        %4373 = vadd.xlane.f32.xlu0 %v4372
        %v4374 = vpop.xlane.xlu0 %4373
        %v4375 = vrcp.pop %v4374
        %v4376 = vmul.f32 %v4371, %v4375
        %v4377 = vpack.c.bf16 %v4376, %v4376
        %4378 = vrot.lane.b32.xlu0 %v3436, 32
        %v4379 = vpop.permute.xlu0 %4378
        %v4381 = vsel %vm3487, %v4377, 0
        %v4384 = vsel %vm3503, %v4379, 0
        %4386 = vmatprep.subr.bf16.mxu0 0
        %4387 = vmatpush1.bf16.msra.mxu0 0
        %4388 = vmatprep.subr.bf16.mxu0 0
        %4389 = vmatpush1.bf16.msra.mxu0 0
        %4390 = vmatprep.subr.bf16.mxu0 0
        %4391 = vmatpush1.bf16.msra.mxu0 0
        %4392 = vmatprep.subr.bf16.mxu0 0
        %4393 = vmatpush1.bf16.msra.mxu0 0
        %4394 = vmatprep.subr.bf16.mxu0 0
        %4395 = vmatpush1.bf16.msra.mxu0 0
        %4396 = vmatprep.subr.bf16.mxu0 0
        %4397 = vmatpush1.bf16.msra.mxu0 0
        %4398 = vmatprep.subr.bf16.mxu0 0
        %4399 = vmatpush1.bf16.msra.mxu0 0
        %4400 = vmatprep.subr.bf16.mxu0 0
        %4401 = vmatpush1.bf16.msra.mxu0 %v4384
        %4402 = vmatprep.subr.bf16.mxu0 0
        %4403 = vmatpush2.bf16.msra.mxu0 0
        %4404 = vmatprep.subr.bf16.mxu0 0
        %4405 = vmatpush2.bf16.msra.mxu0 0
        %4406 = vmatprep.subr.bf16.mxu0 0
        %4407 = vmatpush2.bf16.msra.mxu0 0
        %4408 = vmatprep.subr.bf16.mxu0 0
        %4409 = vmatpush2.bf16.msra.mxu0 0
        %4410 = vmatprep.subr.bf16.mxu0 0
        %4411 = vmatpush2.bf16.msra.mxu0 0
        %4412 = vmatprep.subr.bf16.mxu0 0
        %4413 = vmatpush2.bf16.msra.mxu0 0
        %4414 = vmatprep.subr.bf16.mxu0 0
        %4415 = vmatpush2.bf16.msra.mxu0 0
        %4416 = vmatprep.subr.bf16.mxu0 0
        %4417 = vmatpush2.bf16.msra.mxu0 0
        %4418 = vmatprep.mubr.bf16.mxu0 0
        %4419 = vmatmul.mubr.bf16.gmra.mxu0 %v4381
        %v4420 = vpop.f32.mrf.mxu0
        %v4421 = vadd.f32 0.0, %v4420
        %v4422 = vpop.f32.mrf.mxu0
        %v4423 = vpop.f32.mrf.mxu0
        %v4424 = vpop.f32.mrf.mxu0
        %4425 = vdwg.mxu0
        %4426 = vrot.lane.b32.xlu0 %v3548, 32
        %v4427 = vpop.permute.xlu0 %4426
        %4428 = vrot.lane.b32.xlu0 %v3550, 32
        %v4429 = vpop.permute.xlu0 %4428
        %v4431 = vsel %vm3437, %v4427, 0
        %v4434 = vsel %vm3437, %v4429, 0
        %4436 = vmatprep.subr.bf16.mxu0 0
        %4437 = vmatpush1.bf16.xpose.msra.mxu0 0
        %4438 = vmatprep.subr.bf16.mxu0 0
        %4439 = vmatpush1.bf16.xpose.msra.mxu0 0
        %4440 = vmatprep.subr.bf16.mxu0 0
        %4441 = vmatpush1.bf16.xpose.msra.mxu0 0
        %4442 = vmatprep.subr.bf16.mxu0 0
        %4443 = vmatpush1.bf16.xpose.msra.mxu0 0
        %4444 = vmatprep.subr.bf16.mxu0 0
        %4445 = vmatpush1.bf16.xpose.msra.mxu0 0
        %4446 = vmatprep.subr.bf16.mxu0 0
        %4447 = vmatpush1.bf16.xpose.msra.mxu0 0
        %4448 = vmatprep.subr.bf16.mxu0 0
        %4449 = vmatpush1.bf16.xpose.msra.mxu0 0
        %4450 = vmatprep.subr.bf16.mxu0 0
        %4451 = vmatpush1.bf16.xpose.msra.mxu0 %v4434
        %4452 = vmatprep.subr.bf16.mxu0 0
        %4453 = vmatpush2.bf16.xpose.msra.mxu0 0
        %4454 = vmatprep.subr.bf16.mxu0 0
        %4455 = vmatpush2.bf16.xpose.msra.mxu0 0
        %4456 = vmatprep.subr.bf16.mxu0 0
        %4457 = vmatpush2.bf16.xpose.msra.mxu0 0
        %4458 = vmatprep.subr.bf16.mxu0 0
        %4459 = vmatpush2.bf16.xpose.msra.mxu0 0
        %4460 = vmatprep.subr.bf16.mxu0 0
        %4461 = vmatpush2.bf16.xpose.msra.mxu0 0
        %4462 = vmatprep.subr.bf16.mxu0 0
        %4463 = vmatpush2.bf16.xpose.msra.mxu0 0
        %4464 = vmatprep.subr.bf16.mxu0 0
        %4465 = vmatpush2.bf16.xpose.msra.mxu0 0
        %4466 = vmatprep.subr.bf16.mxu0 0
        %4467 = vmatpush2.bf16.xpose.msra.mxu0 0
        %4468 = vmatprep.mubr.bf16.mxu0 0
        %4469 = vmatmul.mubr.bf16.gmra.mxu0 %v4431
        %v4470 = vpop.f32.mrf.mxu0
        %v4471 = vadd.f32 0.0, %v4470
        %v4472 = vpop.f32.mrf.mxu0
        %v4473 = vpop.f32.mrf.mxu0
        %v4474 = vpop.f32.mrf.mxu0
        %4475 = vdwg.mxu0
        %v4476 = vsel %vm3485, %v4471, -1e+30
        %v4477 = vsel %vm3487, %v4476, -inf
        %4478 = vmax.xlane.f32.xlu0 %v4477
        %v4479 = vpop.xlane.xlu0 %4478
        %v4480 = vsub.f32 %v4476, %v4479
        %v4481 = vmul.f32 %v4480, 1.442695
        %v4482 = vpow.pop %v4481
        %v4483 = vsel %vm3487, %v4482, 0.0
        %4484 = vadd.xlane.f32.xlu0 %v4483
        %v4485 = vpop.xlane.xlu0 %4484
        %v4486 = vrcp.pop %v4485
        %v4487 = vmul.f32 %v4482, %v4486
        %v4488 = vpack.c.bf16 %v4487, %v4487
        %4489 = vrot.lane.b32.xlu0 %v3611, 32
        %v4490 = vpop.permute.xlu0 %4489
        %v4492 = vsel %vm3487, %v4488, 0
        %v4495 = vsel %vm3503, %v4490, 0
        %4497 = vmatprep.subr.bf16.mxu0 0
        %4498 = vmatpush1.bf16.msra.mxu0 0
        %4499 = vmatprep.subr.bf16.mxu0 0
        %4500 = vmatpush1.bf16.msra.mxu0 0
        %4501 = vmatprep.subr.bf16.mxu0 0
        %4502 = vmatpush1.bf16.msra.mxu0 0
        %4503 = vmatprep.subr.bf16.mxu0 0
        %4504 = vmatpush1.bf16.msra.mxu0 0
        %4505 = vmatprep.subr.bf16.mxu0 0
        %4506 = vmatpush1.bf16.msra.mxu0 0
        %4507 = vmatprep.subr.bf16.mxu0 0
        %4508 = vmatpush1.bf16.msra.mxu0 0
        %4509 = vmatprep.subr.bf16.mxu0 0
        %4510 = vmatpush1.bf16.msra.mxu0 0
        %4511 = vmatprep.subr.bf16.mxu0 0
        %4512 = vmatpush1.bf16.msra.mxu0 %v4495
        %4513 = vmatprep.subr.bf16.mxu0 0
        %4514 = vmatpush2.bf16.msra.mxu0 0
        %4515 = vmatprep.subr.bf16.mxu0 0
        %4516 = vmatpush2.bf16.msra.mxu0 0
        %4517 = vmatprep.subr.bf16.mxu0 0
        %4518 = vmatpush2.bf16.msra.mxu0 0
        %4519 = vmatprep.subr.bf16.mxu0 0
        %4520 = vmatpush2.bf16.msra.mxu0 0
        %4521 = vmatprep.subr.bf16.mxu0 0
        %4522 = vmatpush2.bf16.msra.mxu0 0
        %4523 = vmatprep.subr.bf16.mxu0 0
        %4524 = vmatpush2.bf16.msra.mxu0 0
        %4525 = vmatprep.subr.bf16.mxu0 0
        %4526 = vmatpush2.bf16.msra.mxu0 0
        %4527 = vmatprep.subr.bf16.mxu0 0
        %4528 = vmatpush2.bf16.msra.mxu0 0
        %4529 = vmatprep.mubr.bf16.mxu0 0
        %4530 = vmatmul.mubr.bf16.gmra.mxu0 %v4492
        %v4531 = vpop.f32.mrf.mxu0
        %v4532 = vadd.f32 0.0, %v4531
        %v4533 = vpop.f32.mrf.mxu0
        %v4534 = vpop.f32.mrf.mxu0
        %v4535 = vpop.f32.mrf.mxu0
        %4536 = vdwg.mxu0
        %v4537 = vpack.c.bf16 %v4532, %v4421
        %v4542 = vunpack.c.l.b16 %v3398
        %v4543 = vunpack.c.h.b16 %v3398
        %v4544 = vunpack.c.l.b16 %v3399
        %v4545 = vunpack.c.h.b16 %v3399
        %v4546 = vunpack.c.l.b16 %v3400
        %v4547 = vunpack.c.h.b16 %v3400
        %v4548 = vunpack.c.l.b16 %v3401
        %v4549 = vunpack.c.h.b16 %v3401
        %v4550 = vpack.c.b16 %v4544, %v4542
        %v4551 = vpack.c.b16 %v4545, %v4543
        %v4552 = vpack.c.b16 %v4548, %v4546
        %v4553 = vpack.c.b16 %v4549, %v4547
        %v4559 = vsel %vm3437, %v4537, 0
        %4561 = vmatprep.subr.bf16.mxu0 0
        %4562 = vmatpush1.bf16.msra.mxu0 0
        %4563 = vmatprep.subr.bf16.mxu0 0
        %4564 = vmatpush1.bf16.msra.mxu0 0
        %4565 = vmatprep.subr.bf16.mxu0 0
        %4566 = vmatpush1.bf16.msra.mxu0 0
        %4567 = vmatprep.subr.bf16.mxu0 0
        %4568 = vmatpush1.bf16.msra.mxu0 0
        %4569 = vmatprep.subr.bf16.mxu0 0
        %4570 = vmatpush1.bf16.msra.mxu0 0
        %4571 = vmatprep.subr.bf16.mxu0 0
        %4572 = vmatpush1.bf16.msra.mxu0 0
        %4573 = vmatprep.subr.bf16.mxu0 %v4553
        %4574 = vmatpush1.bf16.msra.mxu0 %v4552
        %4575 = vmatprep.subr.bf16.mxu0 %v4551
        %4576 = vmatpush1.bf16.msra.mxu0 %v4550
        %4577 = vmatprep.subr.bf16.mxu0 0
        %4578 = vmatpush2.bf16.msra.mxu0 0
        %4579 = vmatprep.subr.bf16.mxu0 0
        %4580 = vmatpush2.bf16.msra.mxu0 0
        %4581 = vmatprep.subr.bf16.mxu0 0
        %4582 = vmatpush2.bf16.msra.mxu0 0
        %4583 = vmatprep.subr.bf16.mxu0 0
        %4584 = vmatpush2.bf16.msra.mxu0 0
        %4585 = vmatprep.subr.bf16.mxu0 0
        %4586 = vmatpush2.bf16.msra.mxu0 0
        %4587 = vmatprep.subr.bf16.mxu0 0
        %4588 = vmatpush2.bf16.msra.mxu0 0
        %4589 = vmatprep.subr.bf16.mxu0 0
        %4590 = vmatpush2.bf16.msra.mxu0 0
        %4591 = vmatprep.subr.bf16.mxu0 0
        %4592 = vmatpush2.bf16.msra.mxu0 0
        %4593 = vmatprep.mubr.bf16.mxu0 0
        %4594 = vmatmul.mubr.bf16.gmra.mxu0 %v4559
        %v4595 = vpop.f32.mrf.mxu0
        %v4596 = vadd.f32 0.0, %v4595
        %v4597 = vpop.f32.mrf.mxu0
        %v4598 = vadd.f32 0.0, %v4597
        %v4599 = vpop.f32.mrf.mxu0
        %v4600 = vadd.f32 0.0, %v4599
        %v4601 = vpop.f32.mrf.mxu0
        %v4602 = vadd.f32 0.0, %v4601
        %4603 = vdwg.mxu0
        %v4604 = vadd.f32 %v4311, %v4596
        %v4605 = vadd.f32 %v4312, %v4598
        %v4606 = vadd.f32 %v4313, %v4600
        %v4607 = vadd.f32 %v4314, %v4602
        %v4608 = vpack.c.bf16 %v3295, %v3291
        %v4609 = vpack.c.bf16 %v3338, %v3334
        %v4610 = vpack.c.bf16 %v3381, %v3377
        %v4612 = vsel %vm3437, %v4608, 0
        %v4615 = vsel %vm3437, %v4609, 0
        %4617 = vmatprep.subr.bf16.mxu0 0
        %4618 = vmatpush1.bf16.xpose.msra.mxu0 0
        %4619 = vmatprep.subr.bf16.mxu0 0
        %4620 = vmatpush1.bf16.xpose.msra.mxu0 0
        %4621 = vmatprep.subr.bf16.mxu0 0
        %4622 = vmatpush1.bf16.xpose.msra.mxu0 0
        %4623 = vmatprep.subr.bf16.mxu0 0
        %4624 = vmatpush1.bf16.xpose.msra.mxu0 0
        %4625 = vmatprep.subr.bf16.mxu0 0
        %4626 = vmatpush1.bf16.xpose.msra.mxu0 0
        %4627 = vmatprep.subr.bf16.mxu0 0
        %4628 = vmatpush1.bf16.xpose.msra.mxu0 0
        %4629 = vmatprep.subr.bf16.mxu0 0
        %4630 = vmatpush1.bf16.xpose.msra.mxu0 0
        %4631 = vmatprep.subr.bf16.mxu0 0
        %4632 = vmatpush1.bf16.xpose.msra.mxu0 %v4615
        %4633 = vmatprep.subr.bf16.mxu0 0
        %4634 = vmatpush2.bf16.xpose.msra.mxu0 0
        %4635 = vmatprep.subr.bf16.mxu0 0
        %4636 = vmatpush2.bf16.xpose.msra.mxu0 0
        %4637 = vmatprep.subr.bf16.mxu0 0
        %4638 = vmatpush2.bf16.xpose.msra.mxu0 0
        %4639 = vmatprep.subr.bf16.mxu0 0
        %4640 = vmatpush2.bf16.xpose.msra.mxu0 0
        %4641 = vmatprep.subr.bf16.mxu0 0
        %4642 = vmatpush2.bf16.xpose.msra.mxu0 0
        %4643 = vmatprep.subr.bf16.mxu0 0
        %4644 = vmatpush2.bf16.xpose.msra.mxu0 0
        %4645 = vmatprep.subr.bf16.mxu0 0
        %4646 = vmatpush2.bf16.xpose.msra.mxu0 0
        %4647 = vmatprep.subr.bf16.mxu0 0
        %4648 = vmatpush2.bf16.xpose.msra.mxu0 0
        %4649 = vmatprep.mubr.bf16.mxu0 0
        %4650 = vmatmul.mubr.bf16.gmra.mxu0 %v4612
        %v4651 = vpop.f32.mrf.mxu0
        %v4652 = vadd.f32 0.0, %v4651
        %v4653 = vpop.f32.mrf.mxu0
        %v4654 = vpop.f32.mrf.mxu0
        %v4655 = vpop.f32.mrf.mxu0
        %4656 = vdwg.mxu0
        %v4657 = vsel %vm3485, %v4652, -1e+30
        %v4658 = vsel %vm3487, %v4657, -inf
        %4659 = vmax.xlane.f32.xlu0 %v4658
        %v4660 = vpop.xlane.xlu0 %4659
        %v4661 = vsub.f32 %v4657, %v4660
        %v4662 = vmul.f32 %v4661, 1.442695
        %v4663 = vpow.pop %v4662
        %v4664 = vsel %vm3487, %v4663, 0.0
        %4665 = vadd.xlane.f32.xlu0 %v4664
        %v4666 = vpop.xlane.xlu0 %4665
        %v4667 = vrcp.pop %v4666
        %v4668 = vmul.f32 %v4663, %v4667
        %v4669 = vpack.c.bf16 %v4668, %v4668
        %v4671 = vsel %vm3487, %v4669, 0
        %v4674 = vsel %vm3503, %v4610, 0
        %4676 = vmatprep.subr.bf16.mxu0 0
        %4677 = vmatpush1.bf16.msra.mxu0 0
        %4678 = vmatprep.subr.bf16.mxu0 0
        %4679 = vmatpush1.bf16.msra.mxu0 0
        %4680 = vmatprep.subr.bf16.mxu0 0
        %4681 = vmatpush1.bf16.msra.mxu0 0
        %4682 = vmatprep.subr.bf16.mxu0 0
        %4683 = vmatpush1.bf16.msra.mxu0 0
        %4684 = vmatprep.subr.bf16.mxu0 0
        %4685 = vmatpush1.bf16.msra.mxu0 0
        %4686 = vmatprep.subr.bf16.mxu0 0
        %4687 = vmatpush1.bf16.msra.mxu0 0
        %4688 = vmatprep.subr.bf16.mxu0 0
        %4689 = vmatpush1.bf16.msra.mxu0 0
        %4690 = vmatprep.subr.bf16.mxu0 0
        %4691 = vmatpush1.bf16.msra.mxu0 %v4674
        %4692 = vmatprep.subr.bf16.mxu0 0
        %4693 = vmatpush2.bf16.msra.mxu0 0
        %4694 = vmatprep.subr.bf16.mxu0 0
        %4695 = vmatpush2.bf16.msra.mxu0 0
        %4696 = vmatprep.subr.bf16.mxu0 0
        %4697 = vmatpush2.bf16.msra.mxu0 0
        %4698 = vmatprep.subr.bf16.mxu0 0
        %4699 = vmatpush2.bf16.msra.mxu0 0
        %4700 = vmatprep.subr.bf16.mxu0 0
        %4701 = vmatpush2.bf16.msra.mxu0 0
        %4702 = vmatprep.subr.bf16.mxu0 0
        %4703 = vmatpush2.bf16.msra.mxu0 0
        %4704 = vmatprep.subr.bf16.mxu0 0
        %4705 = vmatpush2.bf16.msra.mxu0 0
        %4706 = vmatprep.subr.bf16.mxu0 0
        %4707 = vmatpush2.bf16.msra.mxu0 0
        %4708 = vmatprep.mubr.bf16.mxu0 0
        %4709 = vmatmul.mubr.bf16.gmra.mxu0 %v4671
        %v4710 = vpop.f32.mrf.mxu0
        %v4711 = vadd.f32 0.0, %v4710
        %v4712 = vpop.f32.mrf.mxu0
        %v4713 = vpop.f32.mrf.mxu0
        %v4714 = vpop.f32.mrf.mxu0
        %4715 = vdwg.mxu0
        %v4717 = vrot.slane %v4608, 4
        %v4719 = vrot.slane %v4609, 4
        %v4721 = vsel %vm3437, %v4717, 0
        %v4724 = vsel %vm3437, %v4719, 0
        %4726 = vmatprep.subr.bf16.mxu0 0
        %4727 = vmatpush1.bf16.xpose.msra.mxu0 0
        %4728 = vmatprep.subr.bf16.mxu0 0
        %4729 = vmatpush1.bf16.xpose.msra.mxu0 0
        %4730 = vmatprep.subr.bf16.mxu0 0
        %4731 = vmatpush1.bf16.xpose.msra.mxu0 0
        %4732 = vmatprep.subr.bf16.mxu0 0
        %4733 = vmatpush1.bf16.xpose.msra.mxu0 0
        %4734 = vmatprep.subr.bf16.mxu0 0
        %4735 = vmatpush1.bf16.xpose.msra.mxu0 0
        %4736 = vmatprep.subr.bf16.mxu0 0
        %4737 = vmatpush1.bf16.xpose.msra.mxu0 0
        %4738 = vmatprep.subr.bf16.mxu0 0
        %4739 = vmatpush1.bf16.xpose.msra.mxu0 0
        %4740 = vmatprep.subr.bf16.mxu0 0
        %4741 = vmatpush1.bf16.xpose.msra.mxu0 %v4724
        %4742 = vmatprep.subr.bf16.mxu0 0
        %4743 = vmatpush2.bf16.xpose.msra.mxu0 0
        %4744 = vmatprep.subr.bf16.mxu0 0
        %4745 = vmatpush2.bf16.xpose.msra.mxu0 0
        %4746 = vmatprep.subr.bf16.mxu0 0
        %4747 = vmatpush2.bf16.xpose.msra.mxu0 0
        %4748 = vmatprep.subr.bf16.mxu0 0
        %4749 = vmatpush2.bf16.xpose.msra.mxu0 0
        %4750 = vmatprep.subr.bf16.mxu0 0
        %4751 = vmatpush2.bf16.xpose.msra.mxu0 0
        %4752 = vmatprep.subr.bf16.mxu0 0
        %4753 = vmatpush2.bf16.xpose.msra.mxu0 0
        %4754 = vmatprep.subr.bf16.mxu0 0
        %4755 = vmatpush2.bf16.xpose.msra.mxu0 0
        %4756 = vmatprep.subr.bf16.mxu0 0
        %4757 = vmatpush2.bf16.xpose.msra.mxu0 0
        %4758 = vmatprep.mubr.bf16.mxu0 0
        %4759 = vmatmul.mubr.bf16.gmra.mxu0 %v4721
        %v4760 = vpop.f32.mrf.mxu0
        %v4761 = vadd.f32 0.0, %v4760
        %v4762 = vpop.f32.mrf.mxu0
        %v4763 = vpop.f32.mrf.mxu0
        %v4764 = vpop.f32.mrf.mxu0
        %4765 = vdwg.mxu0
        %v4766 = vsel %vm3485, %v4761, -1e+30
        %v4767 = vsel %vm3487, %v4766, -inf
        %4768 = vmax.xlane.f32.xlu0 %v4767
        %v4769 = vpop.xlane.xlu0 %4768
        %v4770 = vsub.f32 %v4766, %v4769
        %v4771 = vmul.f32 %v4770, 1.442695
        %v4772 = vpow.pop %v4771
        %v4773 = vsel %vm3487, %v4772, 0.0
        %4774 = vadd.xlane.f32.xlu0 %v4773
        %v4775 = vpop.xlane.xlu0 %4774
        %v4776 = vrcp.pop %v4775
        %v4777 = vmul.f32 %v4772, %v4776
        %v4778 = vpack.c.bf16 %v4777, %v4777
        %v4780 = vrot.slane %v4610, 4
        %v4782 = vsel %vm3487, %v4778, 0
        %v4785 = vsel %vm3503, %v4780, 0
        %4787 = vmatprep.subr.bf16.mxu0 0
        %4788 = vmatpush1.bf16.msra.mxu0 0
        %4789 = vmatprep.subr.bf16.mxu0 0
        %4790 = vmatpush1.bf16.msra.mxu0 0
        %4791 = vmatprep.subr.bf16.mxu0 0
        %4792 = vmatpush1.bf16.msra.mxu0 0
        %4793 = vmatprep.subr.bf16.mxu0 0
        %4794 = vmatpush1.bf16.msra.mxu0 0
        %4795 = vmatprep.subr.bf16.mxu0 0
        %4796 = vmatpush1.bf16.msra.mxu0 0
        %4797 = vmatprep.subr.bf16.mxu0 0
        %4798 = vmatpush1.bf16.msra.mxu0 0
        %4799 = vmatprep.subr.bf16.mxu0 0
        %4800 = vmatpush1.bf16.msra.mxu0 0
        %4801 = vmatprep.subr.bf16.mxu0 0
        %4802 = vmatpush1.bf16.msra.mxu0 %v4785
        %4803 = vmatprep.subr.bf16.mxu0 0
        %4804 = vmatpush2.bf16.msra.mxu0 0
        %4805 = vmatprep.subr.bf16.mxu0 0
        %4806 = vmatpush2.bf16.msra.mxu0 0
        %4807 = vmatprep.subr.bf16.mxu0 0
        %4808 = vmatpush2.bf16.msra.mxu0 0
        %4809 = vmatprep.subr.bf16.mxu0 0
        %4810 = vmatpush2.bf16.msra.mxu0 0
        %4811 = vmatprep.subr.bf16.mxu0 0
        %4812 = vmatpush2.bf16.msra.mxu0 0
        %4813 = vmatprep.subr.bf16.mxu0 0
        %4814 = vmatpush2.bf16.msra.mxu0 0
        %4815 = vmatprep.subr.bf16.mxu0 0
        %4816 = vmatpush2.bf16.msra.mxu0 0
        %4817 = vmatprep.subr.bf16.mxu0 0
        %4818 = vmatpush2.bf16.msra.mxu0 0
        %4819 = vmatprep.mubr.bf16.mxu0 0
        %4820 = vmatmul.mubr.bf16.gmra.mxu0 %v4782
        %v4821 = vpop.f32.mrf.mxu0
        %v4822 = vadd.f32 0.0, %v4821
        %v4823 = vpop.f32.mrf.mxu0
        %v4824 = vpop.f32.mrf.mxu0
        %v4825 = vpop.f32.mrf.mxu0
        %4826 = vdwg.mxu0
        %v4827 = vpack.c.bf16 %v4822, %v4711
        %v4832 = vunpack.c.l.b16 %v3402
        %v4833 = vunpack.c.h.b16 %v3402
        %v4834 = vunpack.c.l.b16 %v3403
        %v4835 = vunpack.c.h.b16 %v3403
        %v4836 = vunpack.c.l.b16 %v3404
        %v4837 = vunpack.c.h.b16 %v3404
        %v4838 = vunpack.c.l.b16 %v3405
        %v4839 = vunpack.c.h.b16 %v3405
        %v4840 = vpack.c.b16 %v4834, %v4832
        %v4841 = vpack.c.b16 %v4835, %v4833
        %v4842 = vpack.c.b16 %v4838, %v4836
        %v4843 = vpack.c.b16 %v4839, %v4837
        %v4849 = vsel %vm3437, %v4827, 0
        %4851 = vmatprep.subr.bf16.mxu0 0
        %4852 = vmatpush1.bf16.msra.mxu0 0
        %4853 = vmatprep.subr.bf16.mxu0 0
        %4854 = vmatpush1.bf16.msra.mxu0 0
        %4855 = vmatprep.subr.bf16.mxu0 0
        %4856 = vmatpush1.bf16.msra.mxu0 0
        %4857 = vmatprep.subr.bf16.mxu0 0
        %4858 = vmatpush1.bf16.msra.mxu0 0
        %4859 = vmatprep.subr.bf16.mxu0 0
        %4860 = vmatpush1.bf16.msra.mxu0 0
        %4861 = vmatprep.subr.bf16.mxu0 0
        %4862 = vmatpush1.bf16.msra.mxu0 0
        %4863 = vmatprep.subr.bf16.mxu0 %v4843
        %4864 = vmatpush1.bf16.msra.mxu0 %v4842
        %4865 = vmatprep.subr.bf16.mxu0 %v4841
        %4866 = vmatpush1.bf16.msra.mxu0 %v4840
        %4867 = vmatprep.subr.bf16.mxu0 0
        %4868 = vmatpush2.bf16.msra.mxu0 0
        %4869 = vmatprep.subr.bf16.mxu0 0
        %4870 = vmatpush2.bf16.msra.mxu0 0
        %4871 = vmatprep.subr.bf16.mxu0 0
        %4872 = vmatpush2.bf16.msra.mxu0 0
        %4873 = vmatprep.subr.bf16.mxu0 0
        %4874 = vmatpush2.bf16.msra.mxu0 0
        %4875 = vmatprep.subr.bf16.mxu0 0
        %4876 = vmatpush2.bf16.msra.mxu0 0
        %4877 = vmatprep.subr.bf16.mxu0 0
        %4878 = vmatpush2.bf16.msra.mxu0 0
        %4879 = vmatprep.subr.bf16.mxu0 0
        %4880 = vmatpush2.bf16.msra.mxu0 0
        %4881 = vmatprep.subr.bf16.mxu0 0
        %4882 = vmatpush2.bf16.msra.mxu0 0
        %4883 = vmatprep.mubr.bf16.mxu0 0
        %4884 = vmatmul.mubr.bf16.gmra.mxu0 %v4849
        %v4885 = vpop.f32.mrf.mxu0
        %v4886 = vadd.f32 0.0, %v4885
        %v4887 = vpop.f32.mrf.mxu0
        %v4888 = vadd.f32 0.0, %v4887
        %v4889 = vpop.f32.mrf.mxu0
        %v4890 = vadd.f32 0.0, %v4889
        %v4891 = vpop.f32.mrf.mxu0
        %v4892 = vadd.f32 0.0, %v4891
        %4893 = vdwg.mxu0
        %v4894 = vadd.f32 %v4604, %v4886
        %v4895 = vadd.f32 %v4605, %v4888
        %v4896 = vadd.f32 %v4606, %v4890
        %v4897 = vadd.f32 %v4607, %v4892
        %4898 = vrot.lane.b32.xlu0 %v4608, 96
        %v4899 = vpop.permute.xlu0 %4898
        %4900 = vrot.lane.b32.xlu0 %v4609, 96
        %v4901 = vpop.permute.xlu0 %4900
        %v4903 = vsel %vm3437, %v4899, 0
        %v4906 = vsel %vm3437, %v4901, 0
        %4908 = vmatprep.subr.bf16.mxu0 0
        %4909 = vmatpush1.bf16.xpose.msra.mxu0 0
        %4910 = vmatprep.subr.bf16.mxu0 0
        %4911 = vmatpush1.bf16.xpose.msra.mxu0 0
        %4912 = vmatprep.subr.bf16.mxu0 0
        %4913 = vmatpush1.bf16.xpose.msra.mxu0 0
        %4914 = vmatprep.subr.bf16.mxu0 0
        %4915 = vmatpush1.bf16.xpose.msra.mxu0 0
        %4916 = vmatprep.subr.bf16.mxu0 0
        %4917 = vmatpush1.bf16.xpose.msra.mxu0 0
        %4918 = vmatprep.subr.bf16.mxu0 0
        %4919 = vmatpush1.bf16.xpose.msra.mxu0 0
        %4920 = vmatprep.subr.bf16.mxu0 0
        %4921 = vmatpush1.bf16.xpose.msra.mxu0 0
        %4922 = vmatprep.subr.bf16.mxu0 0
        %4923 = vmatpush1.bf16.xpose.msra.mxu0 %v4906
        %4924 = vmatprep.subr.bf16.mxu0 0
        %4925 = vmatpush2.bf16.xpose.msra.mxu0 0
        %4926 = vmatprep.subr.bf16.mxu0 0
        %4927 = vmatpush2.bf16.xpose.msra.mxu0 0
        %4928 = vmatprep.subr.bf16.mxu0 0
        %4929 = vmatpush2.bf16.xpose.msra.mxu0 0
        %4930 = vmatprep.subr.bf16.mxu0 0
        %4931 = vmatpush2.bf16.xpose.msra.mxu0 0
        %4932 = vmatprep.subr.bf16.mxu0 0
        %4933 = vmatpush2.bf16.xpose.msra.mxu0 0
        %4934 = vmatprep.subr.bf16.mxu0 0
        %4935 = vmatpush2.bf16.xpose.msra.mxu0 0
        %4936 = vmatprep.subr.bf16.mxu0 0
        %4937 = vmatpush2.bf16.xpose.msra.mxu0 0
        %4938 = vmatprep.subr.bf16.mxu0 0
        %4939 = vmatpush2.bf16.xpose.msra.mxu0 0
        %4940 = vmatprep.mubr.bf16.mxu0 0
        %4941 = vmatmul.mubr.bf16.gmra.mxu0 %v4903
        %v4942 = vpop.f32.mrf.mxu0
        %v4943 = vadd.f32 0.0, %v4942
        %v4944 = vpop.f32.mrf.mxu0
        %v4945 = vpop.f32.mrf.mxu0
        %v4946 = vpop.f32.mrf.mxu0
        %4947 = vdwg.mxu0
        %v4948 = vsel %vm3485, %v4943, -1e+30
        %v4949 = vsel %vm3487, %v4948, -inf
        %4950 = vmax.xlane.f32.xlu0 %v4949
        %v4951 = vpop.xlane.xlu0 %4950
        %v4952 = vsub.f32 %v4948, %v4951
        %v4953 = vmul.f32 %v4952, 1.442695
        %v4954 = vpow.pop %v4953
        %v4955 = vsel %vm3487, %v4954, 0.0
        %4956 = vadd.xlane.f32.xlu0 %v4955
        %v4957 = vpop.xlane.xlu0 %4956
        %v4958 = vrcp.pop %v4957
        %v4959 = vmul.f32 %v4954, %v4958
        %v4960 = vpack.c.bf16 %v4959, %v4959
        %4961 = vrot.lane.b32.xlu0 %v4610, 96
        %v4962 = vpop.permute.xlu0 %4961
        %v4964 = vsel %vm3487, %v4960, 0
        %v4967 = vsel %vm3503, %v4962, 0
        %4969 = vmatprep.subr.bf16.mxu0 0
        %4970 = vmatpush1.bf16.msra.mxu0 0
        %4971 = vmatprep.subr.bf16.mxu0 0
        %4972 = vmatpush1.bf16.msra.mxu0 0
        %4973 = vmatprep.subr.bf16.mxu0 0
        %4974 = vmatpush1.bf16.msra.mxu0 0
        %4975 = vmatprep.subr.bf16.mxu0 0
        %4976 = vmatpush1.bf16.msra.mxu0 0
        %4977 = vmatprep.subr.bf16.mxu0 0
        %4978 = vmatpush1.bf16.msra.mxu0 0
        %4979 = vmatprep.subr.bf16.mxu0 0
        %4980 = vmatpush1.bf16.msra.mxu0 0
        %4981 = vmatprep.subr.bf16.mxu0 0
        %4982 = vmatpush1.bf16.msra.mxu0 0
        %4983 = vmatprep.subr.bf16.mxu0 0
        %4984 = vmatpush1.bf16.msra.mxu0 %v4967
        %4985 = vmatprep.subr.bf16.mxu0 0
        %4986 = vmatpush2.bf16.msra.mxu0 0
        %4987 = vmatprep.subr.bf16.mxu0 0
        %4988 = vmatpush2.bf16.msra.mxu0 0
        %4989 = vmatprep.subr.bf16.mxu0 0
        %4990 = vmatpush2.bf16.msra.mxu0 0
        %4991 = vmatprep.subr.bf16.mxu0 0
        %4992 = vmatpush2.bf16.msra.mxu0 0
        %4993 = vmatprep.subr.bf16.mxu0 0
        %4994 = vmatpush2.bf16.msra.mxu0 0
        %4995 = vmatprep.subr.bf16.mxu0 0
        %4996 = vmatpush2.bf16.msra.mxu0 0
        %4997 = vmatprep.subr.bf16.mxu0 0
        %4998 = vmatpush2.bf16.msra.mxu0 0
        %4999 = vmatprep.subr.bf16.mxu0 0
        %5000 = vmatpush2.bf16.msra.mxu0 0
        %5001 = vmatprep.mubr.bf16.mxu0 0
        %5002 = vmatmul.mubr.bf16.gmra.mxu0 %v4964
        %v5003 = vpop.f32.mrf.mxu0
        %v5004 = vadd.f32 0.0, %v5003
        %v5005 = vpop.f32.mrf.mxu0
        %v5006 = vpop.f32.mrf.mxu0
        %v5007 = vpop.f32.mrf.mxu0
        %5008 = vdwg.mxu0
        %5009 = vrot.lane.b32.xlu0 %v4717, 96
        %v5010 = vpop.permute.xlu0 %5009
        %5011 = vrot.lane.b32.xlu0 %v4719, 96
        %v5012 = vpop.permute.xlu0 %5011
        %v5014 = vsel %vm3437, %v5010, 0
        %v5017 = vsel %vm3437, %v5012, 0
        %5019 = vmatprep.subr.bf16.mxu0 0
        %5020 = vmatpush1.bf16.xpose.msra.mxu0 0
        %5021 = vmatprep.subr.bf16.mxu0 0
        %5022 = vmatpush1.bf16.xpose.msra.mxu0 0
        %5023 = vmatprep.subr.bf16.mxu0 0
        %5024 = vmatpush1.bf16.xpose.msra.mxu0 0
        %5025 = vmatprep.subr.bf16.mxu0 0
        %5026 = vmatpush1.bf16.xpose.msra.mxu0 0
        %5027 = vmatprep.subr.bf16.mxu0 0
        %5028 = vmatpush1.bf16.xpose.msra.mxu0 0
        %5029 = vmatprep.subr.bf16.mxu0 0
        %5030 = vmatpush1.bf16.xpose.msra.mxu0 0
        %5031 = vmatprep.subr.bf16.mxu0 0
        %5032 = vmatpush1.bf16.xpose.msra.mxu0 0
        %5033 = vmatprep.subr.bf16.mxu0 0
        %5034 = vmatpush1.bf16.xpose.msra.mxu0 %v5017
        %5035 = vmatprep.subr.bf16.mxu0 0
        %5036 = vmatpush2.bf16.xpose.msra.mxu0 0
        %5037 = vmatprep.subr.bf16.mxu0 0
        %5038 = vmatpush2.bf16.xpose.msra.mxu0 0
        %5039 = vmatprep.subr.bf16.mxu0 0
        %5040 = vmatpush2.bf16.xpose.msra.mxu0 0
        %5041 = vmatprep.subr.bf16.mxu0 0
        %5042 = vmatpush2.bf16.xpose.msra.mxu0 0
        %5043 = vmatprep.subr.bf16.mxu0 0
        %5044 = vmatpush2.bf16.xpose.msra.mxu0 0
        %5045 = vmatprep.subr.bf16.mxu0 0
        %5046 = vmatpush2.bf16.xpose.msra.mxu0 0
        %5047 = vmatprep.subr.bf16.mxu0 0
        %5048 = vmatpush2.bf16.xpose.msra.mxu0 0
        %5049 = vmatprep.subr.bf16.mxu0 0
        %5050 = vmatpush2.bf16.xpose.msra.mxu0 0
        %5051 = vmatprep.mubr.bf16.mxu0 0
        %5052 = vmatmul.mubr.bf16.gmra.mxu0 %v5014
        %v5053 = vpop.f32.mrf.mxu0
        %v5054 = vadd.f32 0.0, %v5053
        %v5055 = vpop.f32.mrf.mxu0
        %v5056 = vpop.f32.mrf.mxu0
        %v5057 = vpop.f32.mrf.mxu0
        %5058 = vdwg.mxu0
        %v5059 = vsel %vm3485, %v5054, -1e+30
        %v5060 = vsel %vm3487, %v5059, -inf
        %5061 = vmax.xlane.f32.xlu0 %v5060
        %v5062 = vpop.xlane.xlu0 %5061
        %v5063 = vsub.f32 %v5059, %v5062
        %v5064 = vmul.f32 %v5063, 1.442695
        %v5065 = vpow.pop %v5064
        %v5066 = vsel %vm3487, %v5065, 0.0
        %5067 = vadd.xlane.f32.xlu0 %v5066
        %v5068 = vpop.xlane.xlu0 %5067
        %v5069 = vrcp.pop %v5068
        %v5070 = vmul.f32 %v5065, %v5069
        %v5071 = vpack.c.bf16 %v5070, %v5070
        %5072 = vrot.lane.b32.xlu0 %v4780, 96
        %v5073 = vpop.permute.xlu0 %5072
        %v5075 = vsel %vm3487, %v5071, 0
        %v5078 = vsel %vm3503, %v5073, 0
        %5080 = vmatprep.subr.bf16.mxu0 0
        %5081 = vmatpush1.bf16.msra.mxu0 0
        %5082 = vmatprep.subr.bf16.mxu0 0
        %5083 = vmatpush1.bf16.msra.mxu0 0
        %5084 = vmatprep.subr.bf16.mxu0 0
        %5085 = vmatpush1.bf16.msra.mxu0 0
        %5086 = vmatprep.subr.bf16.mxu0 0
        %5087 = vmatpush1.bf16.msra.mxu0 0
        %5088 = vmatprep.subr.bf16.mxu0 0
        %5089 = vmatpush1.bf16.msra.mxu0 0
        %5090 = vmatprep.subr.bf16.mxu0 0
        %5091 = vmatpush1.bf16.msra.mxu0 0
        %5092 = vmatprep.subr.bf16.mxu0 0
        %5093 = vmatpush1.bf16.msra.mxu0 0
        %5094 = vmatprep.subr.bf16.mxu0 0
        %5095 = vmatpush1.bf16.msra.mxu0 %v5078
        %5096 = vmatprep.subr.bf16.mxu0 0
        %5097 = vmatpush2.bf16.msra.mxu0 0
        %5098 = vmatprep.subr.bf16.mxu0 0
        %5099 = vmatpush2.bf16.msra.mxu0 0
        %5100 = vmatprep.subr.bf16.mxu0 0
        %5101 = vmatpush2.bf16.msra.mxu0 0
        %5102 = vmatprep.subr.bf16.mxu0 0
        %5103 = vmatpush2.bf16.msra.mxu0 0
        %5104 = vmatprep.subr.bf16.mxu0 0
        %5105 = vmatpush2.bf16.msra.mxu0 0
        %5106 = vmatprep.subr.bf16.mxu0 0
        %5107 = vmatpush2.bf16.msra.mxu0 0
        %5108 = vmatprep.subr.bf16.mxu0 0
        %5109 = vmatpush2.bf16.msra.mxu0 0
        %5110 = vmatprep.subr.bf16.mxu0 0
        %5111 = vmatpush2.bf16.msra.mxu0 0
        %5112 = vmatprep.mubr.bf16.mxu0 0
        %5113 = vmatmul.mubr.bf16.gmra.mxu0 %v5075
        %v5114 = vpop.f32.mrf.mxu0
        %v5115 = vadd.f32 0.0, %v5114
        %v5116 = vpop.f32.mrf.mxu0
        %v5117 = vpop.f32.mrf.mxu0
        %v5118 = vpop.f32.mrf.mxu0
        %5119 = vdwg.mxu0
        %v5120 = vpack.c.bf16 %v5115, %v5004
        %v5125 = vunpack.c.l.b16 %v3406
        %v5126 = vunpack.c.h.b16 %v3406
        %v5127 = vunpack.c.l.b16 %v3407
        %v5128 = vunpack.c.h.b16 %v3407
        %v5129 = vunpack.c.l.b16 %v3408
        %v5130 = vunpack.c.h.b16 %v3408
        %v5131 = vunpack.c.l.b16 %v3409
        %v5132 = vunpack.c.h.b16 %v3409
        %v5133 = vpack.c.b16 %v5127, %v5125
        %v5134 = vpack.c.b16 %v5128, %v5126
        %v5135 = vpack.c.b16 %v5131, %v5129
        %v5136 = vpack.c.b16 %v5132, %v5130
        %v5142 = vsel %vm3437, %v5120, 0
        %5144 = vmatprep.subr.bf16.mxu0 0
        %5145 = vmatpush1.bf16.msra.mxu0 0
        %5146 = vmatprep.subr.bf16.mxu0 0
        %5147 = vmatpush1.bf16.msra.mxu0 0
        %5148 = vmatprep.subr.bf16.mxu0 0
        %5149 = vmatpush1.bf16.msra.mxu0 0
        %5150 = vmatprep.subr.bf16.mxu0 0
        %5151 = vmatpush1.bf16.msra.mxu0 0
        %5152 = vmatprep.subr.bf16.mxu0 0
        %5153 = vmatpush1.bf16.msra.mxu0 0
        %5154 = vmatprep.subr.bf16.mxu0 0
        %5155 = vmatpush1.bf16.msra.mxu0 0
        %5156 = vmatprep.subr.bf16.mxu0 %v5136
        %5157 = vmatpush1.bf16.msra.mxu0 %v5135
        %5158 = vmatprep.subr.bf16.mxu0 %v5134
        %5159 = vmatpush1.bf16.msra.mxu0 %v5133
        %5160 = vmatprep.subr.bf16.mxu0 0
        %5161 = vmatpush2.bf16.msra.mxu0 0
        %5162 = vmatprep.subr.bf16.mxu0 0
        %5163 = vmatpush2.bf16.msra.mxu0 0
        %5164 = vmatprep.subr.bf16.mxu0 0
        %5165 = vmatpush2.bf16.msra.mxu0 0
        %5166 = vmatprep.subr.bf16.mxu0 0
        %5167 = vmatpush2.bf16.msra.mxu0 0
        %5168 = vmatprep.subr.bf16.mxu0 0
        %5169 = vmatpush2.bf16.msra.mxu0 0
        %5170 = vmatprep.subr.bf16.mxu0 0
        %5171 = vmatpush2.bf16.msra.mxu0 0
        %5172 = vmatprep.subr.bf16.mxu0 0
        %5173 = vmatpush2.bf16.msra.mxu0 0
        %5174 = vmatprep.subr.bf16.mxu0 0
        %5175 = vmatpush2.bf16.msra.mxu0 0
        %5176 = vmatprep.mubr.bf16.mxu0 0
        %5177 = vmatmul.mubr.bf16.gmra.mxu0 %v5142
        %v5178 = vpop.f32.mrf.mxu0
        %v5179 = vadd.f32 0.0, %v5178
        %v5180 = vpop.f32.mrf.mxu0
        %v5181 = vadd.f32 0.0, %v5180
        %v5182 = vpop.f32.mrf.mxu0
        %v5183 = vadd.f32 0.0, %v5182
        %v5184 = vpop.f32.mrf.mxu0
        %v5185 = vadd.f32 0.0, %v5184
        %5186 = vdwg.mxu0
        %v5187 = vadd.f32 %v4894, %v5179
        %v5188 = vadd.f32 %v4895, %v5181
        %v5189 = vadd.f32 %v4896, %v5183
        %v5190 = vadd.f32 %v4897, %v5185
        %5191 = vrot.lane.b32.xlu0 %v4608, 64
        %v5192 = vpop.permute.xlu0 %5191
        %5193 = vrot.lane.b32.xlu0 %v4609, 64
        %v5194 = vpop.permute.xlu0 %5193
        %v5196 = vsel %vm3437, %v5192, 0
        %v5199 = vsel %vm3437, %v5194, 0
        %5201 = vmatprep.subr.bf16.mxu0 0
        %5202 = vmatpush1.bf16.xpose.msra.mxu0 0
        %5203 = vmatprep.subr.bf16.mxu0 0
        %5204 = vmatpush1.bf16.xpose.msra.mxu0 0
        %5205 = vmatprep.subr.bf16.mxu0 0
        %5206 = vmatpush1.bf16.xpose.msra.mxu0 0
        %5207 = vmatprep.subr.bf16.mxu0 0
        %5208 = vmatpush1.bf16.xpose.msra.mxu0 0
        %5209 = vmatprep.subr.bf16.mxu0 0
        %5210 = vmatpush1.bf16.xpose.msra.mxu0 0
        %5211 = vmatprep.subr.bf16.mxu0 0
        %5212 = vmatpush1.bf16.xpose.msra.mxu0 0
        %5213 = vmatprep.subr.bf16.mxu0 0
        %5214 = vmatpush1.bf16.xpose.msra.mxu0 0
        %5215 = vmatprep.subr.bf16.mxu0 0
        %5216 = vmatpush1.bf16.xpose.msra.mxu0 %v5199
        %5217 = vmatprep.subr.bf16.mxu0 0
        %5218 = vmatpush2.bf16.xpose.msra.mxu0 0
        %5219 = vmatprep.subr.bf16.mxu0 0
        %5220 = vmatpush2.bf16.xpose.msra.mxu0 0
        %5221 = vmatprep.subr.bf16.mxu0 0
        %5222 = vmatpush2.bf16.xpose.msra.mxu0 0
        %5223 = vmatprep.subr.bf16.mxu0 0
        %5224 = vmatpush2.bf16.xpose.msra.mxu0 0
        %5225 = vmatprep.subr.bf16.mxu0 0
        %5226 = vmatpush2.bf16.xpose.msra.mxu0 0
        %5227 = vmatprep.subr.bf16.mxu0 0
        %5228 = vmatpush2.bf16.xpose.msra.mxu0 0
        %5229 = vmatprep.subr.bf16.mxu0 0
        %5230 = vmatpush2.bf16.xpose.msra.mxu0 0
        %5231 = vmatprep.subr.bf16.mxu0 0
        %5232 = vmatpush2.bf16.xpose.msra.mxu0 0
        %5233 = vmatprep.mubr.bf16.mxu0 0
        %5234 = vmatmul.mubr.bf16.gmra.mxu0 %v5196
        %v5235 = vpop.f32.mrf.mxu0
        %v5236 = vadd.f32 0.0, %v5235
        %v5237 = vpop.f32.mrf.mxu0
        %v5238 = vpop.f32.mrf.mxu0
        %v5239 = vpop.f32.mrf.mxu0
        %5240 = vdwg.mxu0
        %v5241 = vsel %vm3485, %v5236, -1e+30
        %v5242 = vsel %vm3487, %v5241, -inf
        %5243 = vmax.xlane.f32.xlu0 %v5242
        %v5244 = vpop.xlane.xlu0 %5243
        %v5245 = vsub.f32 %v5241, %v5244
        %v5246 = vmul.f32 %v5245, 1.442695
        %v5247 = vpow.pop %v5246
        %v5248 = vsel %vm3487, %v5247, 0.0
        %5249 = vadd.xlane.f32.xlu0 %v5248
        %v5250 = vpop.xlane.xlu0 %5249
        %v5251 = vrcp.pop %v5250
        %v5252 = vmul.f32 %v5247, %v5251
        %v5253 = vpack.c.bf16 %v5252, %v5252
        %5254 = vrot.lane.b32.xlu0 %v4610, 64
        %v5255 = vpop.permute.xlu0 %5254
        %v5257 = vsel %vm3487, %v5253, 0
        %v5260 = vsel %vm3503, %v5255, 0
        %5262 = vmatprep.subr.bf16.mxu0 0
        %5263 = vmatpush1.bf16.msra.mxu0 0
        %5264 = vmatprep.subr.bf16.mxu0 0
        %5265 = vmatpush1.bf16.msra.mxu0 0
        %5266 = vmatprep.subr.bf16.mxu0 0
        %5267 = vmatpush1.bf16.msra.mxu0 0
        %5268 = vmatprep.subr.bf16.mxu0 0
        %5269 = vmatpush1.bf16.msra.mxu0 0
        %5270 = vmatprep.subr.bf16.mxu0 0
        %5271 = vmatpush1.bf16.msra.mxu0 0
        %5272 = vmatprep.subr.bf16.mxu0 0
        %5273 = vmatpush1.bf16.msra.mxu0 0
        %5274 = vmatprep.subr.bf16.mxu0 0
        %5275 = vmatpush1.bf16.msra.mxu0 0
        %5276 = vmatprep.subr.bf16.mxu0 0
        %5277 = vmatpush1.bf16.msra.mxu0 %v5260
        %5278 = vmatprep.subr.bf16.mxu0 0
        %5279 = vmatpush2.bf16.msra.mxu0 0
        %5280 = vmatprep.subr.bf16.mxu0 0
        %5281 = vmatpush2.bf16.msra.mxu0 0
        %5282 = vmatprep.subr.bf16.mxu0 0
        %5283 = vmatpush2.bf16.msra.mxu0 0
        %5284 = vmatprep.subr.bf16.mxu0 0
        %5285 = vmatpush2.bf16.msra.mxu0 0
        %5286 = vmatprep.subr.bf16.mxu0 0
        %5287 = vmatpush2.bf16.msra.mxu0 0
        %5288 = vmatprep.subr.bf16.mxu0 0
        %5289 = vmatpush2.bf16.msra.mxu0 0
        %5290 = vmatprep.subr.bf16.mxu0 0
        %5291 = vmatpush2.bf16.msra.mxu0 0
        %5292 = vmatprep.subr.bf16.mxu0 0
        %5293 = vmatpush2.bf16.msra.mxu0 0
        %5294 = vmatprep.mubr.bf16.mxu0 0
        %5295 = vmatmul.mubr.bf16.gmra.mxu0 %v5257
        %v5296 = vpop.f32.mrf.mxu0
        %v5297 = vadd.f32 0.0, %v5296
        %v5298 = vpop.f32.mrf.mxu0
        %v5299 = vpop.f32.mrf.mxu0
        %v5300 = vpop.f32.mrf.mxu0
        %5301 = vdwg.mxu0
        %5302 = vrot.lane.b32.xlu0 %v4717, 64
        %v5303 = vpop.permute.xlu0 %5302
        %5304 = vrot.lane.b32.xlu0 %v4719, 64
        %v5305 = vpop.permute.xlu0 %5304
        %v5307 = vsel %vm3437, %v5303, 0
        %v5310 = vsel %vm3437, %v5305, 0
        %5312 = vmatprep.subr.bf16.mxu0 0
        %5313 = vmatpush1.bf16.xpose.msra.mxu0 0
        %5314 = vmatprep.subr.bf16.mxu0 0
        %5315 = vmatpush1.bf16.xpose.msra.mxu0 0
        %5316 = vmatprep.subr.bf16.mxu0 0
        %5317 = vmatpush1.bf16.xpose.msra.mxu0 0
        %5318 = vmatprep.subr.bf16.mxu0 0
        %5319 = vmatpush1.bf16.xpose.msra.mxu0 0
        %5320 = vmatprep.subr.bf16.mxu0 0
        %5321 = vmatpush1.bf16.xpose.msra.mxu0 0
        %5322 = vmatprep.subr.bf16.mxu0 0
        %5323 = vmatpush1.bf16.xpose.msra.mxu0 0
        %5324 = vmatprep.subr.bf16.mxu0 0
        %5325 = vmatpush1.bf16.xpose.msra.mxu0 0
        %5326 = vmatprep.subr.bf16.mxu0 0
        %5327 = vmatpush1.bf16.xpose.msra.mxu0 %v5310
        %5328 = vmatprep.subr.bf16.mxu0 0
        %5329 = vmatpush2.bf16.xpose.msra.mxu0 0
        %5330 = vmatprep.subr.bf16.mxu0 0
        %5331 = vmatpush2.bf16.xpose.msra.mxu0 0
        %5332 = vmatprep.subr.bf16.mxu0 0
        %5333 = vmatpush2.bf16.xpose.msra.mxu0 0
        %5334 = vmatprep.subr.bf16.mxu0 0
        %5335 = vmatpush2.bf16.xpose.msra.mxu0 0
        %5336 = vmatprep.subr.bf16.mxu0 0
        %5337 = vmatpush2.bf16.xpose.msra.mxu0 0
        %5338 = vmatprep.subr.bf16.mxu0 0
        %5339 = vmatpush2.bf16.xpose.msra.mxu0 0
        %5340 = vmatprep.subr.bf16.mxu0 0
        %5341 = vmatpush2.bf16.xpose.msra.mxu0 0
        %5342 = vmatprep.subr.bf16.mxu0 0
        %5343 = vmatpush2.bf16.xpose.msra.mxu0 0
        %5344 = vmatprep.mubr.bf16.mxu0 0
        %5345 = vmatmul.mubr.bf16.gmra.mxu0 %v5307
        %v5346 = vpop.f32.mrf.mxu0
        %v5347 = vadd.f32 0.0, %v5346
        %v5348 = vpop.f32.mrf.mxu0
        %v5349 = vpop.f32.mrf.mxu0
        %v5350 = vpop.f32.mrf.mxu0
        %5351 = vdwg.mxu0
        %v5352 = vsel %vm3485, %v5347, -1e+30
        %v5353 = vsel %vm3487, %v5352, -inf
        %5354 = vmax.xlane.f32.xlu0 %v5353
        %v5355 = vpop.xlane.xlu0 %5354
        %v5356 = vsub.f32 %v5352, %v5355
        %v5357 = vmul.f32 %v5356, 1.442695
        %v5358 = vpow.pop %v5357
        %v5359 = vsel %vm3487, %v5358, 0.0
        %5360 = vadd.xlane.f32.xlu0 %v5359
        %v5361 = vpop.xlane.xlu0 %5360
        %v5362 = vrcp.pop %v5361
        %v5363 = vmul.f32 %v5358, %v5362
        %v5364 = vpack.c.bf16 %v5363, %v5363
        %5365 = vrot.lane.b32.xlu0 %v4780, 64
        %v5366 = vpop.permute.xlu0 %5365
        %v5368 = vsel %vm3487, %v5364, 0
        %v5371 = vsel %vm3503, %v5366, 0
        %5373 = vmatprep.subr.bf16.mxu0 0
        %5374 = vmatpush1.bf16.msra.mxu0 0
        %5375 = vmatprep.subr.bf16.mxu0 0
        %5376 = vmatpush1.bf16.msra.mxu0 0
        %5377 = vmatprep.subr.bf16.mxu0 0
        %5378 = vmatpush1.bf16.msra.mxu0 0
        %5379 = vmatprep.subr.bf16.mxu0 0
        %5380 = vmatpush1.bf16.msra.mxu0 0
        %5381 = vmatprep.subr.bf16.mxu0 0
        %5382 = vmatpush1.bf16.msra.mxu0 0
        %5383 = vmatprep.subr.bf16.mxu0 0
        %5384 = vmatpush1.bf16.msra.mxu0 0
        %5385 = vmatprep.subr.bf16.mxu0 0
        %5386 = vmatpush1.bf16.msra.mxu0 0
        %5387 = vmatprep.subr.bf16.mxu0 0
        %5388 = vmatpush1.bf16.msra.mxu0 %v5371
        %5389 = vmatprep.subr.bf16.mxu0 0
        %5390 = vmatpush2.bf16.msra.mxu0 0
        %5391 = vmatprep.subr.bf16.mxu0 0
        %5392 = vmatpush2.bf16.msra.mxu0 0
        %5393 = vmatprep.subr.bf16.mxu0 0
        %5394 = vmatpush2.bf16.msra.mxu0 0
        %5395 = vmatprep.subr.bf16.mxu0 0
        %5396 = vmatpush2.bf16.msra.mxu0 0
        %5397 = vmatprep.subr.bf16.mxu0 0
        %5398 = vmatpush2.bf16.msra.mxu0 0
        %5399 = vmatprep.subr.bf16.mxu0 0
        %5400 = vmatpush2.bf16.msra.mxu0 0
        %5401 = vmatprep.subr.bf16.mxu0 0
        %5402 = vmatpush2.bf16.msra.mxu0 0
        %5403 = vmatprep.subr.bf16.mxu0 0
        %5404 = vmatpush2.bf16.msra.mxu0 0
        %5405 = vmatprep.mubr.bf16.mxu0 0
        %5406 = vmatmul.mubr.bf16.gmra.mxu0 %v5368
        %v5407 = vpop.f32.mrf.mxu0
        %v5408 = vadd.f32 0.0, %v5407
        %v5409 = vpop.f32.mrf.mxu0
        %v5410 = vpop.f32.mrf.mxu0
        %v5411 = vpop.f32.mrf.mxu0
        %5412 = vdwg.mxu0
        %v5413 = vpack.c.bf16 %v5408, %v5297
        %v5418 = vunpack.c.l.b16 %v3410
        %v5419 = vunpack.c.h.b16 %v3410
        %v5420 = vunpack.c.l.b16 %v3411
        %v5421 = vunpack.c.h.b16 %v3411
        %v5422 = vunpack.c.l.b16 %v3412
        %v5423 = vunpack.c.h.b16 %v3412
        %v5424 = vunpack.c.l.b16 %v3413
        %v5425 = vunpack.c.h.b16 %v3413
        %v5426 = vpack.c.b16 %v5420, %v5418
        %v5427 = vpack.c.b16 %v5421, %v5419
        %v5428 = vpack.c.b16 %v5424, %v5422
        %v5429 = vpack.c.b16 %v5425, %v5423
        %v5435 = vsel %vm3437, %v5413, 0
        %5437 = vmatprep.subr.bf16.mxu0 0
        %5438 = vmatpush1.bf16.msra.mxu0 0
        %5439 = vmatprep.subr.bf16.mxu0 0
        %5440 = vmatpush1.bf16.msra.mxu0 0
        %5441 = vmatprep.subr.bf16.mxu0 0
        %5442 = vmatpush1.bf16.msra.mxu0 0
        %5443 = vmatprep.subr.bf16.mxu0 0
        %5444 = vmatpush1.bf16.msra.mxu0 0
        %5445 = vmatprep.subr.bf16.mxu0 0
        %5446 = vmatpush1.bf16.msra.mxu0 0
        %5447 = vmatprep.subr.bf16.mxu0 0
        %5448 = vmatpush1.bf16.msra.mxu0 0
        %5449 = vmatprep.subr.bf16.mxu0 %v5429
        %5450 = vmatpush1.bf16.msra.mxu0 %v5428
        %5451 = vmatprep.subr.bf16.mxu0 %v5427
        %5452 = vmatpush1.bf16.msra.mxu0 %v5426
        %5453 = vmatprep.subr.bf16.mxu0 0
        %5454 = vmatpush2.bf16.msra.mxu0 0
        %5455 = vmatprep.subr.bf16.mxu0 0
        %5456 = vmatpush2.bf16.msra.mxu0 0
        %5457 = vmatprep.subr.bf16.mxu0 0
        %5458 = vmatpush2.bf16.msra.mxu0 0
        %5459 = vmatprep.subr.bf16.mxu0 0
        %5460 = vmatpush2.bf16.msra.mxu0 0
        %5461 = vmatprep.subr.bf16.mxu0 0
        %5462 = vmatpush2.bf16.msra.mxu0 0
        %5463 = vmatprep.subr.bf16.mxu0 0
        %5464 = vmatpush2.bf16.msra.mxu0 0
        %5465 = vmatprep.subr.bf16.mxu0 0
        %5466 = vmatpush2.bf16.msra.mxu0 0
        %5467 = vmatprep.subr.bf16.mxu0 0
        %5468 = vmatpush2.bf16.msra.mxu0 0
        %5469 = vmatprep.mubr.bf16.mxu0 0
        %5470 = vmatmul.mubr.bf16.gmra.mxu0 %v5435
        %v5471 = vpop.f32.mrf.mxu0
        %v5472 = vadd.f32 0.0, %v5471
        %v5473 = vpop.f32.mrf.mxu0
        %v5474 = vadd.f32 0.0, %v5473
        %v5475 = vpop.f32.mrf.mxu0
        %v5476 = vadd.f32 0.0, %v5475
        %v5477 = vpop.f32.mrf.mxu0
        %v5478 = vadd.f32 0.0, %v5477
        %5479 = vdwg.mxu0
        %v5480 = vadd.f32 %v5187, %v5472
        %v5481 = vadd.f32 %v5188, %v5474
        %v5482 = vadd.f32 %v5189, %v5476
        %v5483 = vadd.f32 %v5190, %v5478
        %5484 = vrot.lane.b32.xlu0 %v4608, 32
        %v5485 = vpop.permute.xlu0 %5484
        %5486 = vrot.lane.b32.xlu0 %v4609, 32
        %v5487 = vpop.permute.xlu0 %5486
        %v5489 = vsel %vm3437, %v5485, 0
        %v5492 = vsel %vm3437, %v5487, 0
        %5494 = vmatprep.subr.bf16.mxu0 0
        %5495 = vmatpush1.bf16.xpose.msra.mxu0 0
        %5496 = vmatprep.subr.bf16.mxu0 0
        %5497 = vmatpush1.bf16.xpose.msra.mxu0 0
        %5498 = vmatprep.subr.bf16.mxu0 0
        %5499 = vmatpush1.bf16.xpose.msra.mxu0 0
        %5500 = vmatprep.subr.bf16.mxu0 0
        %5501 = vmatpush1.bf16.xpose.msra.mxu0 0
        %5502 = vmatprep.subr.bf16.mxu0 0
        %5503 = vmatpush1.bf16.xpose.msra.mxu0 0
        %5504 = vmatprep.subr.bf16.mxu0 0
        %5505 = vmatpush1.bf16.xpose.msra.mxu0 0
        %5506 = vmatprep.subr.bf16.mxu0 0
        %5507 = vmatpush1.bf16.xpose.msra.mxu0 0
        %5508 = vmatprep.subr.bf16.mxu0 0
        %5509 = vmatpush1.bf16.xpose.msra.mxu0 %v5492
        %5510 = vmatprep.subr.bf16.mxu0 0
        %5511 = vmatpush2.bf16.xpose.msra.mxu0 0
        %5512 = vmatprep.subr.bf16.mxu0 0
        %5513 = vmatpush2.bf16.xpose.msra.mxu0 0
        %5514 = vmatprep.subr.bf16.mxu0 0
        %5515 = vmatpush2.bf16.xpose.msra.mxu0 0
        %5516 = vmatprep.subr.bf16.mxu0 0
        %5517 = vmatpush2.bf16.xpose.msra.mxu0 0
        %5518 = vmatprep.subr.bf16.mxu0 0
        %5519 = vmatpush2.bf16.xpose.msra.mxu0 0
        %5520 = vmatprep.subr.bf16.mxu0 0
        %5521 = vmatpush2.bf16.xpose.msra.mxu0 0
        %5522 = vmatprep.subr.bf16.mxu0 0
        %5523 = vmatpush2.bf16.xpose.msra.mxu0 0
        %5524 = vmatprep.subr.bf16.mxu0 0
        %5525 = vmatpush2.bf16.xpose.msra.mxu0 0
        %5526 = vmatprep.mubr.bf16.mxu0 0
        %5527 = vmatmul.mubr.bf16.gmra.mxu0 %v5489
        %v5528 = vpop.f32.mrf.mxu0
        %v5529 = vadd.f32 0.0, %v5528
        %v5530 = vpop.f32.mrf.mxu0
        %v5531 = vpop.f32.mrf.mxu0
        %v5532 = vpop.f32.mrf.mxu0
        %5533 = vdwg.mxu0
        %v5534 = vsel %vm3485, %v5529, -1e+30
        %v5535 = vsel %vm3487, %v5534, -inf
        %5536 = vmax.xlane.f32.xlu0 %v5535
        %v5537 = vpop.xlane.xlu0 %5536
        %v5538 = vsub.f32 %v5534, %v5537
        %v5539 = vmul.f32 %v5538, 1.442695
        %v5540 = vpow.pop %v5539
        %v5541 = vsel %vm3487, %v5540, 0.0
        %5542 = vadd.xlane.f32.xlu0 %v5541
        %v5543 = vpop.xlane.xlu0 %5542
        %v5544 = vrcp.pop %v5543
        %v5545 = vmul.f32 %v5540, %v5544
        %v5546 = vpack.c.bf16 %v5545, %v5545
        %5547 = vrot.lane.b32.xlu0 %v4610, 32
        %v5548 = vpop.permute.xlu0 %5547
        %v5550 = vsel %vm3487, %v5546, 0
        %v5553 = vsel %vm3503, %v5548, 0
        %5555 = vmatprep.subr.bf16.mxu0 0
        %5556 = vmatpush1.bf16.msra.mxu0 0
        %5557 = vmatprep.subr.bf16.mxu0 0
        %5558 = vmatpush1.bf16.msra.mxu0 0
        %5559 = vmatprep.subr.bf16.mxu0 0
        %5560 = vmatpush1.bf16.msra.mxu0 0
        %5561 = vmatprep.subr.bf16.mxu0 0
        %5562 = vmatpush1.bf16.msra.mxu0 0
        %5563 = vmatprep.subr.bf16.mxu0 0
        %5564 = vmatpush1.bf16.msra.mxu0 0
        %5565 = vmatprep.subr.bf16.mxu0 0
        %5566 = vmatpush1.bf16.msra.mxu0 0
        %5567 = vmatprep.subr.bf16.mxu0 0
        %5568 = vmatpush1.bf16.msra.mxu0 0
        %5569 = vmatprep.subr.bf16.mxu0 0
        %5570 = vmatpush1.bf16.msra.mxu0 %v5553
        %5571 = vmatprep.subr.bf16.mxu0 0
        %5572 = vmatpush2.bf16.msra.mxu0 0
        %5573 = vmatprep.subr.bf16.mxu0 0
        %5574 = vmatpush2.bf16.msra.mxu0 0
        %5575 = vmatprep.subr.bf16.mxu0 0
        %5576 = vmatpush2.bf16.msra.mxu0 0
        %5577 = vmatprep.subr.bf16.mxu0 0
        %5578 = vmatpush2.bf16.msra.mxu0 0
        %5579 = vmatprep.subr.bf16.mxu0 0
        %5580 = vmatpush2.bf16.msra.mxu0 0
        %5581 = vmatprep.subr.bf16.mxu0 0
        %5582 = vmatpush2.bf16.msra.mxu0 0
        %5583 = vmatprep.subr.bf16.mxu0 0
        %5584 = vmatpush2.bf16.msra.mxu0 0
        %5585 = vmatprep.subr.bf16.mxu0 0
        %5586 = vmatpush2.bf16.msra.mxu0 0
        %5587 = vmatprep.mubr.bf16.mxu0 0
        %5588 = vmatmul.mubr.bf16.gmra.mxu0 %v5550
        %v5589 = vpop.f32.mrf.mxu0
        %v5590 = vadd.f32 0.0, %v5589
        %v5591 = vpop.f32.mrf.mxu0
        %v5592 = vpop.f32.mrf.mxu0
        %v5593 = vpop.f32.mrf.mxu0
        %5594 = vdwg.mxu0
        %5595 = vrot.lane.b32.xlu0 %v4717, 32
        %v5596 = vpop.permute.xlu0 %5595
        %5597 = vrot.lane.b32.xlu0 %v4719, 32
        %v5598 = vpop.permute.xlu0 %5597
        %v5600 = vsel %vm3437, %v5596, 0
        %v5603 = vsel %vm3437, %v5598, 0
        %5605 = vmatprep.subr.bf16.mxu0 0
        %5606 = vmatpush1.bf16.xpose.msra.mxu0 0
        %5607 = vmatprep.subr.bf16.mxu0 0
        %5608 = vmatpush1.bf16.xpose.msra.mxu0 0
        %5609 = vmatprep.subr.bf16.mxu0 0
        %5610 = vmatpush1.bf16.xpose.msra.mxu0 0
        %5611 = vmatprep.subr.bf16.mxu0 0
        %5612 = vmatpush1.bf16.xpose.msra.mxu0 0
        %5613 = vmatprep.subr.bf16.mxu0 0
        %5614 = vmatpush1.bf16.xpose.msra.mxu0 0
        %5615 = vmatprep.subr.bf16.mxu0 0
        %5616 = vmatpush1.bf16.xpose.msra.mxu0 0
        %5617 = vmatprep.subr.bf16.mxu0 0
        %5618 = vmatpush1.bf16.xpose.msra.mxu0 0
        %5619 = vmatprep.subr.bf16.mxu0 0
        %5620 = vmatpush1.bf16.xpose.msra.mxu0 %v5603
        %5621 = vmatprep.subr.bf16.mxu0 0
        %5622 = vmatpush2.bf16.xpose.msra.mxu0 0
        %5623 = vmatprep.subr.bf16.mxu0 0
        %5624 = vmatpush2.bf16.xpose.msra.mxu0 0
        %5625 = vmatprep.subr.bf16.mxu0 0
        %5626 = vmatpush2.bf16.xpose.msra.mxu0 0
        %5627 = vmatprep.subr.bf16.mxu0 0
        %5628 = vmatpush2.bf16.xpose.msra.mxu0 0
        %5629 = vmatprep.subr.bf16.mxu0 0
        %5630 = vmatpush2.bf16.xpose.msra.mxu0 0
        %5631 = vmatprep.subr.bf16.mxu0 0
        %5632 = vmatpush2.bf16.xpose.msra.mxu0 0
        %5633 = vmatprep.subr.bf16.mxu0 0
        %5634 = vmatpush2.bf16.xpose.msra.mxu0 0
        %5635 = vmatprep.subr.bf16.mxu0 0
        %5636 = vmatpush2.bf16.xpose.msra.mxu0 0
        %5637 = vmatprep.mubr.bf16.mxu0 0
        %5638 = vmatmul.mubr.bf16.gmra.mxu0 %v5600
        %v5639 = vpop.f32.mrf.mxu0
        %v5640 = vadd.f32 0.0, %v5639
        %v5641 = vpop.f32.mrf.mxu0
        %v5642 = vpop.f32.mrf.mxu0
        %v5643 = vpop.f32.mrf.mxu0
        %5644 = vdwg.mxu0
        %v5645 = vsel %vm3485, %v5640, -1e+30
        %v5646 = vsel %vm3487, %v5645, -inf
        %5647 = vmax.xlane.f32.xlu0 %v5646
        %v5648 = vpop.xlane.xlu0 %5647
        %v5649 = vsub.f32 %v5645, %v5648
        %v5650 = vmul.f32 %v5649, 1.442695
        %v5651 = vpow.pop %v5650
        %v5652 = vsel %vm3487, %v5651, 0.0
        %5653 = vadd.xlane.f32.xlu0 %v5652
        %v5654 = vpop.xlane.xlu0 %5653
        %v5655 = vrcp.pop %v5654
        %v5656 = vmul.f32 %v5651, %v5655
        %v5657 = vpack.c.bf16 %v5656, %v5656
        %5658 = vrot.lane.b32.xlu0 %v4780, 32
        %v5659 = vpop.permute.xlu0 %5658
        %v5661 = vsel %vm3487, %v5657, 0
        %v5664 = vsel %vm3503, %v5659, 0
        %5666 = vmatprep.subr.bf16.mxu0 0
        %5667 = vmatpush1.bf16.msra.mxu0 0
        %5668 = vmatprep.subr.bf16.mxu0 0
        %5669 = vmatpush1.bf16.msra.mxu0 0
        %5670 = vmatprep.subr.bf16.mxu0 0
        %5671 = vmatpush1.bf16.msra.mxu0 0
        %5672 = vmatprep.subr.bf16.mxu0 0
        %5673 = vmatpush1.bf16.msra.mxu0 0
        %5674 = vmatprep.subr.bf16.mxu0 0
        %5675 = vmatpush1.bf16.msra.mxu0 0
        %5676 = vmatprep.subr.bf16.mxu0 0
        %5677 = vmatpush1.bf16.msra.mxu0 0
        %5678 = vmatprep.subr.bf16.mxu0 0
        %5679 = vmatpush1.bf16.msra.mxu0 0
        %5680 = vmatprep.subr.bf16.mxu0 0
        %5681 = vmatpush1.bf16.msra.mxu0 %v5664
        %5682 = vmatprep.subr.bf16.mxu0 0
        %5683 = vmatpush2.bf16.msra.mxu0 0
        %5684 = vmatprep.subr.bf16.mxu0 0
        %5685 = vmatpush2.bf16.msra.mxu0 0
        %5686 = vmatprep.subr.bf16.mxu0 0
        %5687 = vmatpush2.bf16.msra.mxu0 0
        %5688 = vmatprep.subr.bf16.mxu0 0
        %5689 = vmatpush2.bf16.msra.mxu0 0
        %5690 = vmatprep.subr.bf16.mxu0 0
        %5691 = vmatpush2.bf16.msra.mxu0 0
        %5692 = vmatprep.subr.bf16.mxu0 0
        %5693 = vmatpush2.bf16.msra.mxu0 0
        %5694 = vmatprep.subr.bf16.mxu0 0
        %5695 = vmatpush2.bf16.msra.mxu0 0
        %5696 = vmatprep.subr.bf16.mxu0 0
        %5697 = vmatpush2.bf16.msra.mxu0 0
        %5698 = vmatprep.mubr.bf16.mxu0 0
        %5699 = vmatmul.mubr.bf16.gmra.mxu0 %v5661
        %v5700 = vpop.f32.mrf.mxu0
        %v5701 = vadd.f32 0.0, %v5700
        %v5702 = vpop.f32.mrf.mxu0
        %v5703 = vpop.f32.mrf.mxu0
        %v5704 = vpop.f32.mrf.mxu0
        %5705 = vdwg.mxu0
        %v5706 = vpack.c.bf16 %v5701, %v5590
        %v5711 = vunpack.c.l.b16 %v3414
        %v5712 = vunpack.c.h.b16 %v3414
        %v5713 = vunpack.c.l.b16 %v3415
        %v5714 = vunpack.c.h.b16 %v3415
        %v5715 = vunpack.c.l.b16 %v3416
        %v5716 = vunpack.c.h.b16 %v3416
        %v5717 = vunpack.c.l.b16 %v3417
        %v5718 = vunpack.c.h.b16 %v3417
        %v5719 = vpack.c.b16 %v5713, %v5711
        %v5720 = vpack.c.b16 %v5714, %v5712
        %v5721 = vpack.c.b16 %v5717, %v5715
        %v5722 = vpack.c.b16 %v5718, %v5716
        %v5728 = vsel %vm3437, %v5706, 0
        %5730 = vmatprep.subr.bf16.mxu0 0
        %5731 = vmatpush1.bf16.msra.mxu0 0
        %5732 = vmatprep.subr.bf16.mxu0 0
        %5733 = vmatpush1.bf16.msra.mxu0 0
        %5734 = vmatprep.subr.bf16.mxu0 0
        %5735 = vmatpush1.bf16.msra.mxu0 0
        %5736 = vmatprep.subr.bf16.mxu0 0
        %5737 = vmatpush1.bf16.msra.mxu0 0
        %5738 = vmatprep.subr.bf16.mxu0 0
        %5739 = vmatpush1.bf16.msra.mxu0 0
        %5740 = vmatprep.subr.bf16.mxu0 0
        %5741 = vmatpush1.bf16.msra.mxu0 0
        %5742 = vmatprep.subr.bf16.mxu0 %v5722
        %5743 = vmatpush1.bf16.msra.mxu0 %v5721
        %5744 = vmatprep.subr.bf16.mxu0 %v5720
        %5745 = vmatpush1.bf16.msra.mxu0 %v5719
        %5746 = vmatprep.subr.bf16.mxu0 0
        %5747 = vmatpush2.bf16.msra.mxu0 0
        %5748 = vmatprep.subr.bf16.mxu0 0
        %5749 = vmatpush2.bf16.msra.mxu0 0
        %5750 = vmatprep.subr.bf16.mxu0 0
        %5751 = vmatpush2.bf16.msra.mxu0 0
        %5752 = vmatprep.subr.bf16.mxu0 0
        %5753 = vmatpush2.bf16.msra.mxu0 0
        %5754 = vmatprep.subr.bf16.mxu0 0
        %5755 = vmatpush2.bf16.msra.mxu0 0
        %5756 = vmatprep.subr.bf16.mxu0 0
        %5757 = vmatpush2.bf16.msra.mxu0 0
        %5758 = vmatprep.subr.bf16.mxu0 0
        %5759 = vmatpush2.bf16.msra.mxu0 0
        %5760 = vmatprep.subr.bf16.mxu0 0
        %5761 = vmatpush2.bf16.msra.mxu0 0
        %5762 = vmatprep.mubr.bf16.mxu0 0
        %5763 = vmatmul.mubr.bf16.gmra.mxu0 %v5728
        %v5764 = vpop.f32.mrf.mxu0
        %v5765 = vadd.f32 0.0, %v5764
        %v5766 = vpop.f32.mrf.mxu0
        %v5767 = vadd.f32 0.0, %v5766
        %v5768 = vpop.f32.mrf.mxu0
        %v5769 = vadd.f32 0.0, %v5768
        %v5770 = vpop.f32.mrf.mxu0
        %v5771 = vadd.f32 0.0, %v5770
        %5772 = vdwg.mxu0
        %v5773 = vadd.f32 %v5480, %v5765
        %v5774 = vadd.f32 %v5481, %v5767
        %v5775 = vadd.f32 %v5482, %v5769
        %v5776 = vadd.f32 %v5483, %v5771
        %v5777 = vld [vmem:[%s887] sm:$0x3]
        %v5778 = vld [vmem:[%s896] sm:$0x3]
        %v5779 = vadd.f32 %v5773, %v5774
        %5780 = vadd.xlane.f32.xlu0 %v5779
        %v5781 = vpop.xlane.xlu0 %5780
        %v5782 = vadd.f32 %v5775, %v5776
        %5783 = vadd.xlane.f32.xlu0 %v5782
        %v5784 = vpop.xlane.xlu0 %5783
        %v5785 = vmul.f32 %v5781, %v2587
        %v5786 = vmul.f32 %v5784, %v2587
        %v5787 = vsub.f32 %v5773, %v5785
        %v5788 = vsub.f32 %v5774, %v5785
        %v5789 = vsub.f32 %v5775, %v5786
        %v5790 = vsub.f32 %v5776, %v5786
        %v5791 = vmul.f32 %v5787, %v5787
        %v5792 = vmul.f32 %v5788, %v5788
        %v5793 = vmul.f32 %v5789, %v5789
        %v5794 = vmul.f32 %v5790, %v5790
        %v5795 = vadd.f32 %v5791, %v5792
        %5796 = vadd.xlane.f32.xlu0 %v5795
        %v5797 = vpop.xlane.xlu0 %5796
        %v5798 = vadd.f32 %v5793, %v5794
        %5799 = vadd.xlane.f32.xlu0 %v5798
        %v5800 = vpop.xlane.xlu0 %5799
        %v5801 = vmul.f32 %v5797, %v2587
        %v5802 = vmul.f32 %v5800, %v2587
        %v5803 = vadd.f32 %v5801, 1e-06
        %v5804 = vadd.f32 %v5802, 1e-06
        %v5805 = vrsqrt.pop %v5803
        %v5806 = vrsqrt.pop %v5804
        %v5807 = vmul.f32 %v5787, %v5805
        %v5808 = vmul.f32 %v5788, %v5805
        %v5809 = vmul.f32 %v5789, %v5806
        %v5810 = vmul.f32 %v5790, %v5806
        %v5812 = vlaneseq
        %v5813 = vshrl.u32 %v5812, 7
        %v5814 = vsub.s32 0, %v5813
        %v5815 = vrot.slane %v5777, %v5814
        %v5816 = vlaneseq
        %v5817 = vshrl.u32 %v5816, 7
        %v5818 = vsub.s32 1, %v5817
        %v5819 = vrot.slane %v5777, %v5818
        %v5822 = vmul.f32 %v5807, %v5815
        %v5823 = vmul.f32 %v5808, %v5819
        %v5824 = vmul.f32 %v5809, %v5815
        %v5825 = vmul.f32 %v5810, %v5819
        %v5827 = vlaneseq
        %v5828 = vshrl.u32 %v5827, 7
        %v5829 = vsub.s32 0, %v5828
        %v5830 = vrot.slane %v5778, %v5829
        %v5831 = vlaneseq
        %v5832 = vshrl.u32 %v5831, 7
        %v5833 = vsub.s32 1, %v5832
        %v5834 = vrot.slane %v5778, %v5833
        %v5837 = vadd.f32 %v5822, %v5830
        %v5838 = vadd.f32 %v5823, %v5834
        %v5839 = vadd.f32 %v5824, %v5830
        %v5840 = vadd.f32 %v5825, %v5834
        %v5841 = vpack.c.bf16 %v5839, %v5837
        %v5842 = vpack.c.bf16 %v5840, %v5838
        %v5843 = vld [vmem:[%s905] sm:$0xff]
        %v5844 = vld [vmem:[%s905 + $0x8] sm:$0xff]
        %v5845 = vld [vmem:[%s905 + $0x10] sm:$0xff]
        %v5846 = vld [vmem:[%s905 + $0x18] sm:$0xff]
        %v5847 = vld [vmem:[%s905 + $0x20] sm:$0xff]
        %v5848 = vld [vmem:[%s905 + $0x28] sm:$0xff]
        %v5849 = vld [vmem:[%s905 + $0x30] sm:$0xff]
        %v5850 = vld [vmem:[%s905 + $0x38] sm:$0xff]
        %v5851 = vld [vmem:[%s905 + $0x40] sm:$0xff]
        %v5852 = vld [vmem:[%s905 + $0x48] sm:$0xff]
        %v5853 = vld [vmem:[%s905 + $0x50] sm:$0xff]
        %v5854 = vld [vmem:[%s905 + $0x58] sm:$0xff]
        %v5855 = vld [vmem:[%s905 + $0x60] sm:$0xff]
        %v5856 = vld [vmem:[%s905 + $0x68] sm:$0xff]
        %v5857 = vld [vmem:[%s905 + $0x70] sm:$0xff]
        %v5858 = vld [vmem:[%s905 + $0x78] sm:$0xff]
        %v5859 = vld [vmem:[%s905 + $0x80] sm:$0xff]
        %v5860 = vld [vmem:[%s905 + $0x88] sm:$0xff]
        %v5861 = vld [vmem:[%s905 + $0x90] sm:$0xff]
        %v5862 = vld [vmem:[%s905 + $0x98] sm:$0xff]
        %v5863 = vld [vmem:[%s905 + $0xa0] sm:$0xff]
        %v5864 = vld [vmem:[%s905 + $0xa8] sm:$0xff]
        %v5865 = vld [vmem:[%s905 + $0xb0] sm:$0xff]
        %v5866 = vld [vmem:[%s905 + $0xb8] sm:$0xff]
        %v5867 = vld [vmem:[%s905 + $0xc0] sm:$0xff]
        %v5868 = vld [vmem:[%s905 + $0xc8] sm:$0xff]
        %v5869 = vld [vmem:[%s905 + $0xd0] sm:$0xff]
        %v5870 = vld [vmem:[%s905 + $0xd8] sm:$0xff]
        %v5871 = vld [vmem:[%s905 + $0xe0] sm:$0xff]
        %v5872 = vld [vmem:[%s905 + $0xe8] sm:$0xff]
        %v5873 = vld [vmem:[%s905 + $0xf0] sm:$0xff]
        %v5874 = vld [vmem:[%s905 + $0xf8] sm:$0xff]
        %v5875 = vld [vmem:[%s905 + $0x100] sm:$0xff]
        %v5876 = vld [vmem:[%s905 + $0x108] sm:$0xff]
        %v5877 = vld [vmem:[%s905 + $0x110] sm:$0xff]
        %v5878 = vld [vmem:[%s905 + $0x118] sm:$0xff]
        %v5879 = vld [vmem:[%s905 + $0x120] sm:$0xff]
        %v5880 = vld [vmem:[%s905 + $0x128] sm:$0xff]
        %v5881 = vld [vmem:[%s905 + $0x130] sm:$0xff]
        %v5882 = vld [vmem:[%s905 + $0x138] sm:$0xff]
        %v5883 = vld [vmem:[%s905 + $0x140] sm:$0xff]
        %v5884 = vld [vmem:[%s905 + $0x148] sm:$0xff]
        %v5885 = vld [vmem:[%s905 + $0x150] sm:$0xff]
        %v5886 = vld [vmem:[%s905 + $0x158] sm:$0xff]
        %v5887 = vld [vmem:[%s905 + $0x160] sm:$0xff]
        %v5888 = vld [vmem:[%s905 + $0x168] sm:$0xff]
        %v5889 = vld [vmem:[%s905 + $0x170] sm:$0xff]
        %v5890 = vld [vmem:[%s905 + $0x178] sm:$0xff]
        %v5891 = vld [vmem:[%s905 + $0x180] sm:$0xff]
        %v5892 = vld [vmem:[%s905 + $0x188] sm:$0xff]
        %v5893 = vld [vmem:[%s905 + $0x190] sm:$0xff]
        %v5894 = vld [vmem:[%s905 + $0x198] sm:$0xff]
        %v5895 = vld [vmem:[%s905 + $0x1a0] sm:$0xff]
        %v5896 = vld [vmem:[%s905 + $0x1a8] sm:$0xff]
        %v5897 = vld [vmem:[%s905 + $0x1b0] sm:$0xff]
        %v5898 = vld [vmem:[%s905 + $0x1b8] sm:$0xff]
        %v5899 = vld [vmem:[%s905 + $0x1c0] sm:$0xff]
        %v5900 = vld [vmem:[%s905 + $0x1c8] sm:$0xff]
        %v5901 = vld [vmem:[%s905 + $0x1d0] sm:$0xff]
        %v5902 = vld [vmem:[%s905 + $0x1d8] sm:$0xff]
        %v5903 = vld [vmem:[%s905 + $0x1e0] sm:$0xff]
        %v5904 = vld [vmem:[%s905 + $0x1e8] sm:$0xff]
        %v5905 = vld [vmem:[%s905 + $0x1f0] sm:$0xff]
        %v5906 = vld [vmem:[%s905 + $0x1f8] sm:$0xff]
        %v5907 = vld [vmem:[%s905 + $0x200] sm:$0xff]
        %v5908 = vld [vmem:[%s905 + $0x208] sm:$0xff]
        %v5909 = vld [vmem:[%s905 + $0x210] sm:$0xff]
        %v5910 = vld [vmem:[%s905 + $0x218] sm:$0xff]
        %v5911 = vld [vmem:[%s905 + $0x220] sm:$0xff]
        %v5912 = vld [vmem:[%s905 + $0x228] sm:$0xff]
        %v5913 = vld [vmem:[%s905 + $0x230] sm:$0xff]
        %v5914 = vld [vmem:[%s905 + $0x238] sm:$0xff]
        %v5915 = vld [vmem:[%s905 + $0x240] sm:$0xff]
        %v5916 = vld [vmem:[%s905 + $0x248] sm:$0xff]
        %v5917 = vld [vmem:[%s905 + $0x250] sm:$0xff]
        %v5918 = vld [vmem:[%s905 + $0x258] sm:$0xff]
        %v5919 = vld [vmem:[%s905 + $0x260] sm:$0xff]
        %v5920 = vld [vmem:[%s905 + $0x268] sm:$0xff]
        %v5921 = vld [vmem:[%s905 + $0x270] sm:$0xff]
        %v5922 = vld [vmem:[%s905 + $0x278] sm:$0xff]
        %v5923 = vld [vmem:[%s905 + $0x280] sm:$0xff]
        %v5924 = vld [vmem:[%s905 + $0x288] sm:$0xff]
        %v5925 = vld [vmem:[%s905 + $0x290] sm:$0xff]
        %v5926 = vld [vmem:[%s905 + $0x298] sm:$0xff]
        %v5927 = vld [vmem:[%s905 + $0x2a0] sm:$0xff]
        %v5928 = vld [vmem:[%s905 + $0x2a8] sm:$0xff]
        %v5929 = vld [vmem:[%s905 + $0x2b0] sm:$0xff]
        %v5930 = vld [vmem:[%s905 + $0x2b8] sm:$0xff]
        %v5931 = vld [vmem:[%s905 + $0x2c0] sm:$0xff]
        %v5932 = vld [vmem:[%s905 + $0x2c8] sm:$0xff]
        %v5933 = vld [vmem:[%s905 + $0x2d0] sm:$0xff]
        %v5934 = vld [vmem:[%s905 + $0x2d8] sm:$0xff]
        %v5935 = vld [vmem:[%s905 + $0x2e0] sm:$0xff]
        %v5936 = vld [vmem:[%s905 + $0x2e8] sm:$0xff]
        %v5937 = vld [vmem:[%s905 + $0x2f0] sm:$0xff]
        %v5938 = vld [vmem:[%s905 + $0x2f8] sm:$0xff]
        %v5939 = vld [vmem:[%s905 + $0x300] sm:$0xff]
        %v5940 = vld [vmem:[%s905 + $0x308] sm:$0xff]
        %v5941 = vld [vmem:[%s905 + $0x310] sm:$0xff]
        %v5942 = vld [vmem:[%s905 + $0x318] sm:$0xff]
        %v5943 = vld [vmem:[%s905 + $0x320] sm:$0xff]
        %v5944 = vld [vmem:[%s905 + $0x328] sm:$0xff]
        %v5945 = vld [vmem:[%s905 + $0x330] sm:$0xff]
        %v5946 = vld [vmem:[%s905 + $0x338] sm:$0xff]
        %v5947 = vld [vmem:[%s905 + $0x340] sm:$0xff]
        %v5948 = vld [vmem:[%s905 + $0x348] sm:$0xff]
        %v5949 = vld [vmem:[%s905 + $0x350] sm:$0xff]
        %v5950 = vld [vmem:[%s905 + $0x358] sm:$0xff]
        %v5951 = vld [vmem:[%s905 + $0x360] sm:$0xff]
        %v5952 = vld [vmem:[%s905 + $0x368] sm:$0xff]
        %v5953 = vld [vmem:[%s905 + $0x370] sm:$0xff]
        %v5954 = vld [vmem:[%s905 + $0x378] sm:$0xff]
        %v5955 = vld [vmem:[%s905 + $0x380] sm:$0xff]
        %v5956 = vld [vmem:[%s905 + $0x388] sm:$0xff]
        %v5957 = vld [vmem:[%s905 + $0x390] sm:$0xff]
        %v5958 = vld [vmem:[%s905 + $0x398] sm:$0xff]
        %v5959 = vld [vmem:[%s905 + $0x3a0] sm:$0xff]
        %v5960 = vld [vmem:[%s905 + $0x3a8] sm:$0xff]
        %v5961 = vld [vmem:[%s905 + $0x3b0] sm:$0xff]
        %v5962 = vld [vmem:[%s905 + $0x3b8] sm:$0xff]
        %v5963 = vld [vmem:[%s905 + $0x3c0] sm:$0xff]
        %v5964 = vld [vmem:[%s905 + $0x3c8] sm:$0xff]
        %v5965 = vld [vmem:[%s905 + $0x3d0] sm:$0xff]
        %v5966 = vld [vmem:[%s905 + $0x3d8] sm:$0xff]
        %v5967 = vld [vmem:[%s905 + $0x3e0] sm:$0xff]
        %v5968 = vld [vmem:[%s905 + $0x3e8] sm:$0xff]
        %v5969 = vld [vmem:[%s905 + $0x3f0] sm:$0xff]
        %v5970 = vld [vmem:[%s905 + $0x3f8] sm:$0xff]
        %v5971 = vld [vmem:[%s914] sm:$0xff]
        %v5973 = vlaneseq
        %v5974 = vshrl.u32 %v5973, 7
        %v5975 = vsub.s32 0, %v5974
        %v5976 = vrot.slane %v5971, %v5975
        %v5977 = vlaneseq
        %v5978 = vshrl.u32 %v5977, 7
        %v5979 = vsub.s32 1, %v5978
        %v5980 = vrot.slane %v5971, %v5979
        %v5981 = vlaneseq
        %v5982 = vshrl.u32 %v5981, 7
        %v5983 = vsub.s32 2, %v5982
        %v5984 = vrot.slane %v5971, %v5983
        %v5985 = vlaneseq
        %v5986 = vshrl.u32 %v5985, 7
        %v5987 = vsub.s32 3, %v5986
        %v5988 = vrot.slane %v5971, %v5987
        %v5989 = vlaneseq
        %v5990 = vshrl.u32 %v5989, 7
        %v5991 = vsub.s32 4, %v5990
        %v5992 = vrot.slane %v5971, %v5991
        %v5993 = vlaneseq
        %v5994 = vshrl.u32 %v5993, 7
        %v5995 = vsub.s32 5, %v5994
        %v5996 = vrot.slane %v5971, %v5995
        %v5997 = vlaneseq
        %v5998 = vshrl.u32 %v5997, 7
        %v5999 = vsub.s32 6, %v5998
        %v6000 = vrot.slane %v5971, %v5999
        %v6001 = vlaneseq
        %v6002 = vshrl.u32 %v6001, 7
        %v6003 = vsub.s32 7, %v6002
        %v6004 = vrot.slane %v5971, %v6003
        %v6141 = vunpack.c.l.b16 %v5843
        %v6142 = vunpack.c.h.b16 %v5843
        %v6143 = vunpack.c.l.b16 %v5844
        %v6144 = vunpack.c.h.b16 %v5844
        %v6145 = vunpack.c.l.b16 %v5845
        %v6146 = vunpack.c.h.b16 %v5845
        %v6147 = vunpack.c.l.b16 %v5846
        %v6148 = vunpack.c.h.b16 %v5846
        %v6149 = vunpack.c.l.b16 %v5847
        %v6150 = vunpack.c.h.b16 %v5847
        %v6151 = vunpack.c.l.b16 %v5848
        %v6152 = vunpack.c.h.b16 %v5848
        %v6153 = vunpack.c.l.b16 %v5849
        %v6154 = vunpack.c.h.b16 %v5849
        %v6155 = vunpack.c.l.b16 %v5850
        %v6156 = vunpack.c.h.b16 %v5850
        %v6157 = vunpack.c.l.b16 %v5851
        %v6158 = vunpack.c.h.b16 %v5851
        %v6159 = vunpack.c.l.b16 %v5852
        %v6160 = vunpack.c.h.b16 %v5852
        %v6161 = vunpack.c.l.b16 %v5853
        %v6162 = vunpack.c.h.b16 %v5853
        %v6163 = vunpack.c.l.b16 %v5854
        %v6164 = vunpack.c.h.b16 %v5854
        %v6165 = vunpack.c.l.b16 %v5855
        %v6166 = vunpack.c.h.b16 %v5855
        %v6167 = vunpack.c.l.b16 %v5856
        %v6168 = vunpack.c.h.b16 %v5856
        %v6169 = vunpack.c.l.b16 %v5857
        %v6170 = vunpack.c.h.b16 %v5857
        %v6171 = vunpack.c.l.b16 %v5858
        %v6172 = vunpack.c.h.b16 %v5858
        %v6173 = vunpack.c.l.b16 %v5859
        %v6174 = vunpack.c.h.b16 %v5859
        %v6175 = vunpack.c.l.b16 %v5860
        %v6176 = vunpack.c.h.b16 %v5860
        %v6177 = vunpack.c.l.b16 %v5861
        %v6178 = vunpack.c.h.b16 %v5861
        %v6179 = vunpack.c.l.b16 %v5862
        %v6180 = vunpack.c.h.b16 %v5862
        %v6181 = vunpack.c.l.b16 %v5863
        %v6182 = vunpack.c.h.b16 %v5863
        %v6183 = vunpack.c.l.b16 %v5864
        %v6184 = vunpack.c.h.b16 %v5864
        %v6185 = vunpack.c.l.b16 %v5865
        %v6186 = vunpack.c.h.b16 %v5865
        %v6187 = vunpack.c.l.b16 %v5866
        %v6188 = vunpack.c.h.b16 %v5866
        %v6189 = vunpack.c.l.b16 %v5867
        %v6190 = vunpack.c.h.b16 %v5867
        %v6191 = vunpack.c.l.b16 %v5868
        %v6192 = vunpack.c.h.b16 %v5868
        %v6193 = vunpack.c.l.b16 %v5869
        %v6194 = vunpack.c.h.b16 %v5869
        %v6195 = vunpack.c.l.b16 %v5870
        %v6196 = vunpack.c.h.b16 %v5870
        %v6197 = vunpack.c.l.b16 %v5871
        %v6198 = vunpack.c.h.b16 %v5871
        %v6199 = vunpack.c.l.b16 %v5872
        %v6200 = vunpack.c.h.b16 %v5872
        %v6201 = vunpack.c.l.b16 %v5873
        %v6202 = vunpack.c.h.b16 %v5873
        %v6203 = vunpack.c.l.b16 %v5874
        %v6204 = vunpack.c.h.b16 %v5874
        %v6205 = vunpack.c.l.b16 %v5875
        %v6206 = vunpack.c.h.b16 %v5875
        %v6207 = vunpack.c.l.b16 %v5876
        %v6208 = vunpack.c.h.b16 %v5876
        %v6209 = vunpack.c.l.b16 %v5877
        %v6210 = vunpack.c.h.b16 %v5877
        %v6211 = vunpack.c.l.b16 %v5878
        %v6212 = vunpack.c.h.b16 %v5878
        %v6213 = vunpack.c.l.b16 %v5879
        %v6214 = vunpack.c.h.b16 %v5879
        %v6215 = vunpack.c.l.b16 %v5880
        %v6216 = vunpack.c.h.b16 %v5880
        %v6217 = vunpack.c.l.b16 %v5881
        %v6218 = vunpack.c.h.b16 %v5881
        %v6219 = vunpack.c.l.b16 %v5882
        %v6220 = vunpack.c.h.b16 %v5882
        %v6221 = vunpack.c.l.b16 %v5883
        %v6222 = vunpack.c.h.b16 %v5883
        %v6223 = vunpack.c.l.b16 %v5884
        %v6224 = vunpack.c.h.b16 %v5884
        %v6225 = vunpack.c.l.b16 %v5885
        %v6226 = vunpack.c.h.b16 %v5885
        %v6227 = vunpack.c.l.b16 %v5886
        %v6228 = vunpack.c.h.b16 %v5886
        %v6229 = vunpack.c.l.b16 %v5887
        %v6230 = vunpack.c.h.b16 %v5887
        %v6231 = vunpack.c.l.b16 %v5888
        %v6232 = vunpack.c.h.b16 %v5888
        %v6233 = vunpack.c.l.b16 %v5889
        %v6234 = vunpack.c.h.b16 %v5889
        %v6235 = vunpack.c.l.b16 %v5890
        %v6236 = vunpack.c.h.b16 %v5890
        %v6237 = vunpack.c.l.b16 %v5891
        %v6238 = vunpack.c.h.b16 %v5891
        %v6239 = vunpack.c.l.b16 %v5892
        %v6240 = vunpack.c.h.b16 %v5892
        %v6241 = vunpack.c.l.b16 %v5893
        %v6242 = vunpack.c.h.b16 %v5893
        %v6243 = vunpack.c.l.b16 %v5894
        %v6244 = vunpack.c.h.b16 %v5894
        %v6245 = vunpack.c.l.b16 %v5895
        %v6246 = vunpack.c.h.b16 %v5895
        %v6247 = vunpack.c.l.b16 %v5896
        %v6248 = vunpack.c.h.b16 %v5896
        %v6249 = vunpack.c.l.b16 %v5897
        %v6250 = vunpack.c.h.b16 %v5897
        %v6251 = vunpack.c.l.b16 %v5898
        %v6252 = vunpack.c.h.b16 %v5898
        %v6253 = vunpack.c.l.b16 %v5899
        %v6254 = vunpack.c.h.b16 %v5899
        %v6255 = vunpack.c.l.b16 %v5900
        %v6256 = vunpack.c.h.b16 %v5900
        %v6257 = vunpack.c.l.b16 %v5901
        %v6258 = vunpack.c.h.b16 %v5901
        %v6259 = vunpack.c.l.b16 %v5902
        %v6260 = vunpack.c.h.b16 %v5902
        %v6261 = vunpack.c.l.b16 %v5903
        %v6262 = vunpack.c.h.b16 %v5903
        %v6263 = vunpack.c.l.b16 %v5904
        %v6264 = vunpack.c.h.b16 %v5904
        %v6265 = vunpack.c.l.b16 %v5905
        %v6266 = vunpack.c.h.b16 %v5905
        %v6267 = vunpack.c.l.b16 %v5906
        %v6268 = vunpack.c.h.b16 %v5906
        %v6269 = vunpack.c.l.b16 %v5907
        %v6270 = vunpack.c.h.b16 %v5907
        %v6271 = vunpack.c.l.b16 %v5908
        %v6272 = vunpack.c.h.b16 %v5908
        %v6273 = vunpack.c.l.b16 %v5909
        %v6274 = vunpack.c.h.b16 %v5909
        %v6275 = vunpack.c.l.b16 %v5910
        %v6276 = vunpack.c.h.b16 %v5910
        %v6277 = vunpack.c.l.b16 %v5911
        %v6278 = vunpack.c.h.b16 %v5911
        %v6279 = vunpack.c.l.b16 %v5912
        %v6280 = vunpack.c.h.b16 %v5912
        %v6281 = vunpack.c.l.b16 %v5913
        %v6282 = vunpack.c.h.b16 %v5913
        %v6283 = vunpack.c.l.b16 %v5914
        %v6284 = vunpack.c.h.b16 %v5914
        %v6285 = vunpack.c.l.b16 %v5915
        %v6286 = vunpack.c.h.b16 %v5915
        %v6287 = vunpack.c.l.b16 %v5916
        %v6288 = vunpack.c.h.b16 %v5916
        %v6289 = vunpack.c.l.b16 %v5917
        %v6290 = vunpack.c.h.b16 %v5917
        %v6291 = vunpack.c.l.b16 %v5918
        %v6292 = vunpack.c.h.b16 %v5918
        %v6293 = vunpack.c.l.b16 %v5919
        %v6294 = vunpack.c.h.b16 %v5919
        %v6295 = vunpack.c.l.b16 %v5920
        %v6296 = vunpack.c.h.b16 %v5920
        %v6297 = vunpack.c.l.b16 %v5921
        %v6298 = vunpack.c.h.b16 %v5921
        %v6299 = vunpack.c.l.b16 %v5922
        %v6300 = vunpack.c.h.b16 %v5922
        %v6301 = vunpack.c.l.b16 %v5923
        %v6302 = vunpack.c.h.b16 %v5923
        %v6303 = vunpack.c.l.b16 %v5924
        %v6304 = vunpack.c.h.b16 %v5924
        %v6305 = vunpack.c.l.b16 %v5925
        %v6306 = vunpack.c.h.b16 %v5925
        %v6307 = vunpack.c.l.b16 %v5926
        %v6308 = vunpack.c.h.b16 %v5926
        %v6309 = vunpack.c.l.b16 %v5927
        %v6310 = vunpack.c.h.b16 %v5927
        %v6311 = vunpack.c.l.b16 %v5928
        %v6312 = vunpack.c.h.b16 %v5928
        %v6313 = vunpack.c.l.b16 %v5929
        %v6314 = vunpack.c.h.b16 %v5929
        %v6315 = vunpack.c.l.b16 %v5930
        %v6316 = vunpack.c.h.b16 %v5930
        %v6317 = vunpack.c.l.b16 %v5931
        %v6318 = vunpack.c.h.b16 %v5931
        %v6319 = vunpack.c.l.b16 %v5932
        %v6320 = vunpack.c.h.b16 %v5932
        %v6321 = vunpack.c.l.b16 %v5933
        %v6322 = vunpack.c.h.b16 %v5933
        %v6323 = vunpack.c.l.b16 %v5934
        %v6324 = vunpack.c.h.b16 %v5934
        %v6325 = vunpack.c.l.b16 %v5935
        %v6326 = vunpack.c.h.b16 %v5935
        %v6327 = vunpack.c.l.b16 %v5936
        %v6328 = vunpack.c.h.b16 %v5936
        %v6329 = vunpack.c.l.b16 %v5937
        %v6330 = vunpack.c.h.b16 %v5937
        %v6331 = vunpack.c.l.b16 %v5938
        %v6332 = vunpack.c.h.b16 %v5938
        %v6333 = vunpack.c.l.b16 %v5939
        %v6334 = vunpack.c.h.b16 %v5939
        %v6335 = vunpack.c.l.b16 %v5940
        %v6336 = vunpack.c.h.b16 %v5940
        %v6337 = vunpack.c.l.b16 %v5941
        %v6338 = vunpack.c.h.b16 %v5941
        %v6339 = vunpack.c.l.b16 %v5942
        %v6340 = vunpack.c.h.b16 %v5942
        %v6341 = vunpack.c.l.b16 %v5943
        %v6342 = vunpack.c.h.b16 %v5943
        %v6343 = vunpack.c.l.b16 %v5944
        %v6344 = vunpack.c.h.b16 %v5944
        %v6345 = vunpack.c.l.b16 %v5945
        %v6346 = vunpack.c.h.b16 %v5945
        %v6347 = vunpack.c.l.b16 %v5946
        %v6348 = vunpack.c.h.b16 %v5946
        %v6349 = vunpack.c.l.b16 %v5947
        %v6350 = vunpack.c.h.b16 %v5947
        %v6351 = vunpack.c.l.b16 %v5948
        %v6352 = vunpack.c.h.b16 %v5948
        %v6353 = vunpack.c.l.b16 %v5949
        %v6354 = vunpack.c.h.b16 %v5949
        %v6355 = vunpack.c.l.b16 %v5950
        %v6356 = vunpack.c.h.b16 %v5950
        %v6357 = vunpack.c.l.b16 %v5951
        %v6358 = vunpack.c.h.b16 %v5951
        %v6359 = vunpack.c.l.b16 %v5952
        %v6360 = vunpack.c.h.b16 %v5952
        %v6361 = vunpack.c.l.b16 %v5953
        %v6362 = vunpack.c.h.b16 %v5953
        %v6363 = vunpack.c.l.b16 %v5954
        %v6364 = vunpack.c.h.b16 %v5954
        %v6365 = vunpack.c.l.b16 %v5955
        %v6366 = vunpack.c.h.b16 %v5955
        %v6367 = vunpack.c.l.b16 %v5956
        %v6368 = vunpack.c.h.b16 %v5956
        %v6369 = vunpack.c.l.b16 %v5957
        %v6370 = vunpack.c.h.b16 %v5957
        %v6371 = vunpack.c.l.b16 %v5958
        %v6372 = vunpack.c.h.b16 %v5958
        %v6373 = vunpack.c.l.b16 %v5959
        %v6374 = vunpack.c.h.b16 %v5959
        %v6375 = vunpack.c.l.b16 %v5960
        %v6376 = vunpack.c.h.b16 %v5960
        %v6377 = vunpack.c.l.b16 %v5961
        %v6378 = vunpack.c.h.b16 %v5961
        %v6379 = vunpack.c.l.b16 %v5962
        %v6380 = vunpack.c.h.b16 %v5962
        %v6381 = vunpack.c.l.b16 %v5963
        %v6382 = vunpack.c.h.b16 %v5963
        %v6383 = vunpack.c.l.b16 %v5964
        %v6384 = vunpack.c.h.b16 %v5964
        %v6385 = vunpack.c.l.b16 %v5965
        %v6386 = vunpack.c.h.b16 %v5965
        %v6387 = vunpack.c.l.b16 %v5966
        %v6388 = vunpack.c.h.b16 %v5966
        %v6389 = vunpack.c.l.b16 %v5967
        %v6390 = vunpack.c.h.b16 %v5967
        %v6391 = vunpack.c.l.b16 %v5968
        %v6392 = vunpack.c.h.b16 %v5968
        %v6393 = vunpack.c.l.b16 %v5969
        %v6394 = vunpack.c.h.b16 %v5969
        %v6395 = vunpack.c.l.b16 %v5970
        %v6396 = vunpack.c.h.b16 %v5970
        %v6397 = vpack.c.b16 %v6149, %v6141
        %v6398 = vpack.c.b16 %v6150, %v6142
        %v6399 = vpack.c.b16 %v6151, %v6143
        %v6400 = vpack.c.b16 %v6152, %v6144
        %v6401 = vpack.c.b16 %v6153, %v6145
        %v6402 = vpack.c.b16 %v6154, %v6146
        %v6403 = vpack.c.b16 %v6155, %v6147
        %v6404 = vpack.c.b16 %v6156, %v6148
        %v6405 = vpack.c.b16 %v6165, %v6157
        %v6406 = vpack.c.b16 %v6166, %v6158
        %v6407 = vpack.c.b16 %v6167, %v6159
        %v6408 = vpack.c.b16 %v6168, %v6160
        %v6409 = vpack.c.b16 %v6169, %v6161
        %v6410 = vpack.c.b16 %v6170, %v6162
        %v6411 = vpack.c.b16 %v6171, %v6163
        %v6412 = vpack.c.b16 %v6172, %v6164
        %v6413 = vpack.c.b16 %v6181, %v6173
        %v6414 = vpack.c.b16 %v6182, %v6174
        %v6415 = vpack.c.b16 %v6183, %v6175
        %v6416 = vpack.c.b16 %v6184, %v6176
        %v6417 = vpack.c.b16 %v6185, %v6177
        %v6418 = vpack.c.b16 %v6186, %v6178
        %v6419 = vpack.c.b16 %v6187, %v6179
        %v6420 = vpack.c.b16 %v6188, %v6180
        %v6421 = vpack.c.b16 %v6197, %v6189
        %v6422 = vpack.c.b16 %v6198, %v6190
        %v6423 = vpack.c.b16 %v6199, %v6191
        %v6424 = vpack.c.b16 %v6200, %v6192
        %v6425 = vpack.c.b16 %v6201, %v6193
        %v6426 = vpack.c.b16 %v6202, %v6194
        %v6427 = vpack.c.b16 %v6203, %v6195
        %v6428 = vpack.c.b16 %v6204, %v6196
        %v6429 = vpack.c.b16 %v6213, %v6205
        %v6430 = vpack.c.b16 %v6214, %v6206
        %v6431 = vpack.c.b16 %v6215, %v6207
        %v6432 = vpack.c.b16 %v6216, %v6208
        %v6433 = vpack.c.b16 %v6217, %v6209
        %v6434 = vpack.c.b16 %v6218, %v6210
        %v6435 = vpack.c.b16 %v6219, %v6211
        %v6436 = vpack.c.b16 %v6220, %v6212
        %v6437 = vpack.c.b16 %v6229, %v6221
        %v6438 = vpack.c.b16 %v6230, %v6222
        %v6439 = vpack.c.b16 %v6231, %v6223
        %v6440 = vpack.c.b16 %v6232, %v6224
        %v6441 = vpack.c.b16 %v6233, %v6225
        %v6442 = vpack.c.b16 %v6234, %v6226
        %v6443 = vpack.c.b16 %v6235, %v6227
        %v6444 = vpack.c.b16 %v6236, %v6228
        %v6445 = vpack.c.b16 %v6245, %v6237
        %v6446 = vpack.c.b16 %v6246, %v6238
        %v6447 = vpack.c.b16 %v6247, %v6239
        %v6448 = vpack.c.b16 %v6248, %v6240
        %v6449 = vpack.c.b16 %v6249, %v6241
        %v6450 = vpack.c.b16 %v6250, %v6242
        %v6451 = vpack.c.b16 %v6251, %v6243
        %v6452 = vpack.c.b16 %v6252, %v6244
        %v6453 = vpack.c.b16 %v6261, %v6253
        %v6454 = vpack.c.b16 %v6262, %v6254
        %v6455 = vpack.c.b16 %v6263, %v6255
        %v6456 = vpack.c.b16 %v6264, %v6256
        %v6457 = vpack.c.b16 %v6265, %v6257
        %v6458 = vpack.c.b16 %v6266, %v6258
        %v6459 = vpack.c.b16 %v6267, %v6259
        %v6460 = vpack.c.b16 %v6268, %v6260
        %v6461 = vpack.c.b16 %v6277, %v6269
        %v6462 = vpack.c.b16 %v6278, %v6270
        %v6463 = vpack.c.b16 %v6279, %v6271
        %v6464 = vpack.c.b16 %v6280, %v6272
        %v6465 = vpack.c.b16 %v6281, %v6273
        %v6466 = vpack.c.b16 %v6282, %v6274
        %v6467 = vpack.c.b16 %v6283, %v6275
        %v6468 = vpack.c.b16 %v6284, %v6276
        %v6469 = vpack.c.b16 %v6293, %v6285
        %v6470 = vpack.c.b16 %v6294, %v6286
        %v6471 = vpack.c.b16 %v6295, %v6287
        %v6472 = vpack.c.b16 %v6296, %v6288
        %v6473 = vpack.c.b16 %v6297, %v6289
        %v6474 = vpack.c.b16 %v6298, %v6290
        %v6475 = vpack.c.b16 %v6299, %v6291
        %v6476 = vpack.c.b16 %v6300, %v6292
        %v6477 = vpack.c.b16 %v6309, %v6301
        %v6478 = vpack.c.b16 %v6310, %v6302
        %v6479 = vpack.c.b16 %v6311, %v6303
        %v6480 = vpack.c.b16 %v6312, %v6304
        %v6481 = vpack.c.b16 %v6313, %v6305
        %v6482 = vpack.c.b16 %v6314, %v6306
        %v6483 = vpack.c.b16 %v6315, %v6307
        %v6484 = vpack.c.b16 %v6316, %v6308
        %v6485 = vpack.c.b16 %v6325, %v6317
        %v6486 = vpack.c.b16 %v6326, %v6318
        %v6487 = vpack.c.b16 %v6327, %v6319
        %v6488 = vpack.c.b16 %v6328, %v6320
        %v6489 = vpack.c.b16 %v6329, %v6321
        %v6490 = vpack.c.b16 %v6330, %v6322
        %v6491 = vpack.c.b16 %v6331, %v6323
        %v6492 = vpack.c.b16 %v6332, %v6324
        %v6493 = vpack.c.b16 %v6341, %v6333
        %v6494 = vpack.c.b16 %v6342, %v6334
        %v6495 = vpack.c.b16 %v6343, %v6335
        %v6496 = vpack.c.b16 %v6344, %v6336
        %v6497 = vpack.c.b16 %v6345, %v6337
        %v6498 = vpack.c.b16 %v6346, %v6338
        %v6499 = vpack.c.b16 %v6347, %v6339
        %v6500 = vpack.c.b16 %v6348, %v6340
        %v6501 = vpack.c.b16 %v6357, %v6349
        %v6502 = vpack.c.b16 %v6358, %v6350
        %v6503 = vpack.c.b16 %v6359, %v6351
        %v6504 = vpack.c.b16 %v6360, %v6352
        %v6505 = vpack.c.b16 %v6361, %v6353
        %v6506 = vpack.c.b16 %v6362, %v6354
        %v6507 = vpack.c.b16 %v6363, %v6355
        %v6508 = vpack.c.b16 %v6364, %v6356
        %v6509 = vpack.c.b16 %v6373, %v6365
        %v6510 = vpack.c.b16 %v6374, %v6366
        %v6511 = vpack.c.b16 %v6375, %v6367
        %v6512 = vpack.c.b16 %v6376, %v6368
        %v6513 = vpack.c.b16 %v6377, %v6369
        %v6514 = vpack.c.b16 %v6378, %v6370
        %v6515 = vpack.c.b16 %v6379, %v6371
        %v6516 = vpack.c.b16 %v6380, %v6372
        %v6517 = vpack.c.b16 %v6389, %v6381
        %v6518 = vpack.c.b16 %v6390, %v6382
        %v6519 = vpack.c.b16 %v6391, %v6383
        %v6520 = vpack.c.b16 %v6392, %v6384
        %v6521 = vpack.c.b16 %v6393, %v6385
        %v6522 = vpack.c.b16 %v6394, %v6386
        %v6523 = vpack.c.b16 %v6395, %v6387
        %v6524 = vpack.c.b16 %v6396, %v6388
        %6653 = vmatprep.subr.bf16.mxu0 %v6454
        %6654 = vmatpush1.bf16.msra.mxu0 %v6453
        %6655 = vmatprep.subr.bf16.mxu0 %v6446
        %6656 = vmatpush1.bf16.msra.mxu0 %v6445
        %6657 = vmatprep.subr.bf16.mxu0 %v6438
        %6658 = vmatpush1.bf16.msra.mxu0 %v6437
        %6659 = vmatprep.subr.bf16.mxu0 %v6430
        %6660 = vmatpush1.bf16.msra.mxu0 %v6429
        %6661 = vmatprep.subr.bf16.mxu0 %v6422
        %6662 = vmatpush1.bf16.msra.mxu0 %v6421
        %6663 = vmatprep.subr.bf16.mxu0 %v6414
        %6664 = vmatpush1.bf16.msra.mxu0 %v6413
        %6665 = vmatprep.subr.bf16.mxu0 %v6406
        %6666 = vmatpush1.bf16.msra.mxu0 %v6405
        %6667 = vmatprep.subr.bf16.mxu0 %v6398
        %6668 = vmatpush1.bf16.msra.mxu0 %v6397
        %6669 = vmatprep.subr.bf16.mxu0 %v6518
        %6670 = vmatpush2.bf16.msra.mxu0 %v6517
        %6671 = vmatprep.subr.bf16.mxu0 %v6510
        %6672 = vmatpush2.bf16.msra.mxu0 %v6509
        %6673 = vmatprep.subr.bf16.mxu0 %v6502
        %6674 = vmatpush2.bf16.msra.mxu0 %v6501
        %6675 = vmatprep.subr.bf16.mxu0 %v6494
        %6676 = vmatpush2.bf16.msra.mxu0 %v6493
        %6677 = vmatprep.subr.bf16.mxu0 %v6486
        %6678 = vmatpush2.bf16.msra.mxu0 %v6485
        %6679 = vmatprep.subr.bf16.mxu0 %v6478
        %6680 = vmatpush2.bf16.msra.mxu0 %v6477
        %6681 = vmatprep.subr.bf16.mxu0 %v6470
        %6682 = vmatpush2.bf16.msra.mxu0 %v6469
        %6683 = vmatprep.subr.bf16.mxu0 %v6462
        %6684 = vmatpush2.bf16.msra.mxu0 %v6461
        %6685 = vmatprep.mubr.bf16.mxu0 %v5842
        %6686 = vmatmul.mubr.bf16.gmra.mxu0 %v5841
        %v6687 = vpop.f32.mrf.mxu0
        %v6688 = vadd.f32 %v5976, %v6687
        %v6689 = vpop.f32.mrf.mxu0
        %v6690 = vadd.f32 %v5980, %v6689
        %v6691 = vpop.f32.mrf.mxu0
        %v6692 = vadd.f32 %v5976, %v6691
        %v6693 = vpop.f32.mrf.mxu0
        %v6694 = vadd.f32 %v5980, %v6693
        %6695 = vdwg.mxu0
        %6696 = vmatprep.subr.bf16.mxu0 %v6456
        %6697 = vmatpush1.bf16.msra.mxu0 %v6455
        %6698 = vmatprep.subr.bf16.mxu0 %v6448
        %6699 = vmatpush1.bf16.msra.mxu0 %v6447
        %6700 = vmatprep.subr.bf16.mxu0 %v6440
        %6701 = vmatpush1.bf16.msra.mxu0 %v6439
        %6702 = vmatprep.subr.bf16.mxu0 %v6432
        %6703 = vmatpush1.bf16.msra.mxu0 %v6431
        %6704 = vmatprep.subr.bf16.mxu0 %v6424
        %6705 = vmatpush1.bf16.msra.mxu0 %v6423
        %6706 = vmatprep.subr.bf16.mxu0 %v6416
        %6707 = vmatpush1.bf16.msra.mxu0 %v6415
        %6708 = vmatprep.subr.bf16.mxu0 %v6408
        %6709 = vmatpush1.bf16.msra.mxu0 %v6407
        %6710 = vmatprep.subr.bf16.mxu0 %v6400
        %6711 = vmatpush1.bf16.msra.mxu0 %v6399
        %6712 = vmatprep.subr.bf16.mxu0 %v6520
        %6713 = vmatpush2.bf16.msra.mxu0 %v6519
        %6714 = vmatprep.subr.bf16.mxu0 %v6512
        %6715 = vmatpush2.bf16.msra.mxu0 %v6511
        %6716 = vmatprep.subr.bf16.mxu0 %v6504
        %6717 = vmatpush2.bf16.msra.mxu0 %v6503
        %6718 = vmatprep.subr.bf16.mxu0 %v6496
        %6719 = vmatpush2.bf16.msra.mxu0 %v6495
        %6720 = vmatprep.subr.bf16.mxu0 %v6488
        %6721 = vmatpush2.bf16.msra.mxu0 %v6487
        %6722 = vmatprep.subr.bf16.mxu0 %v6480
        %6723 = vmatpush2.bf16.msra.mxu0 %v6479
        %6724 = vmatprep.subr.bf16.mxu0 %v6472
        %6725 = vmatpush2.bf16.msra.mxu0 %v6471
        %6726 = vmatprep.subr.bf16.mxu0 %v6464
        %6727 = vmatpush2.bf16.msra.mxu0 %v6463
        %6728 = vmatprep.mubr.bf16.mxu0 %v5842
        %6729 = vmatmul.mubr.bf16.gmra.mxu0 %v5841
        %v6730 = vpop.f32.mrf.mxu0
        %v6731 = vadd.f32 %v5984, %v6730
        %v6732 = vpop.f32.mrf.mxu0
        %v6733 = vadd.f32 %v5988, %v6732
        %v6734 = vpop.f32.mrf.mxu0
        %v6735 = vadd.f32 %v5984, %v6734
        %v6736 = vpop.f32.mrf.mxu0
        %v6737 = vadd.f32 %v5988, %v6736
        %6738 = vdwg.mxu0
        %6739 = vmatprep.subr.bf16.mxu0 %v6458
        %6740 = vmatpush1.bf16.msra.mxu0 %v6457
        %6741 = vmatprep.subr.bf16.mxu0 %v6450
        %6742 = vmatpush1.bf16.msra.mxu0 %v6449
        %6743 = vmatprep.subr.bf16.mxu0 %v6442
        %6744 = vmatpush1.bf16.msra.mxu0 %v6441
        %6745 = vmatprep.subr.bf16.mxu0 %v6434
        %6746 = vmatpush1.bf16.msra.mxu0 %v6433
        %6747 = vmatprep.subr.bf16.mxu0 %v6426
        %6748 = vmatpush1.bf16.msra.mxu0 %v6425
        %6749 = vmatprep.subr.bf16.mxu0 %v6418
        %6750 = vmatpush1.bf16.msra.mxu0 %v6417
        %6751 = vmatprep.subr.bf16.mxu0 %v6410
        %6752 = vmatpush1.bf16.msra.mxu0 %v6409
        %6753 = vmatprep.subr.bf16.mxu0 %v6402
        %6754 = vmatpush1.bf16.msra.mxu0 %v6401
        %6755 = vmatprep.subr.bf16.mxu0 %v6522
        %6756 = vmatpush2.bf16.msra.mxu0 %v6521
        %6757 = vmatprep.subr.bf16.mxu0 %v6514
        %6758 = vmatpush2.bf16.msra.mxu0 %v6513
        %6759 = vmatprep.subr.bf16.mxu0 %v6506
        %6760 = vmatpush2.bf16.msra.mxu0 %v6505
        %6761 = vmatprep.subr.bf16.mxu0 %v6498
        %6762 = vmatpush2.bf16.msra.mxu0 %v6497
        %6763 = vmatprep.subr.bf16.mxu0 %v6490
        %6764 = vmatpush2.bf16.msra.mxu0 %v6489
        %6765 = vmatprep.subr.bf16.mxu0 %v6482
        %6766 = vmatpush2.bf16.msra.mxu0 %v6481
        %6767 = vmatprep.subr.bf16.mxu0 %v6474
        %6768 = vmatpush2.bf16.msra.mxu0 %v6473
        %6769 = vmatprep.subr.bf16.mxu0 %v6466
        %6770 = vmatpush2.bf16.msra.mxu0 %v6465
        %6771 = vmatprep.mubr.bf16.mxu0 %v5842
        %6772 = vmatmul.mubr.bf16.gmra.mxu0 %v5841
        %v6773 = vpop.f32.mrf.mxu0
        %v6774 = vadd.f32 %v5992, %v6773
        %v6775 = vpop.f32.mrf.mxu0
        %v6776 = vadd.f32 %v5996, %v6775
        %v6777 = vpop.f32.mrf.mxu0
        %v6778 = vadd.f32 %v5992, %v6777
        %v6779 = vpop.f32.mrf.mxu0
        %v6780 = vadd.f32 %v5996, %v6779
        %6781 = vdwg.mxu0
        %6782 = vmatprep.subr.bf16.mxu0 %v6460
        %6783 = vmatpush1.bf16.msra.mxu0 %v6459
        %6784 = vmatprep.subr.bf16.mxu0 %v6452
        %6785 = vmatpush1.bf16.msra.mxu0 %v6451
        %6786 = vmatprep.subr.bf16.mxu0 %v6444
        %6787 = vmatpush1.bf16.msra.mxu0 %v6443
        %6788 = vmatprep.subr.bf16.mxu0 %v6436
        %6789 = vmatpush1.bf16.msra.mxu0 %v6435
        %6790 = vmatprep.subr.bf16.mxu0 %v6428
        %6791 = vmatpush1.bf16.msra.mxu0 %v6427
        %6792 = vmatprep.subr.bf16.mxu0 %v6420
        %6793 = vmatpush1.bf16.msra.mxu0 %v6419
        %6794 = vmatprep.subr.bf16.mxu0 %v6412
        %6795 = vmatpush1.bf16.msra.mxu0 %v6411
        %6796 = vmatprep.subr.bf16.mxu0 %v6404
        %6797 = vmatpush1.bf16.msra.mxu0 %v6403
        %6798 = vmatprep.subr.bf16.mxu0 %v6524
        %6799 = vmatpush2.bf16.msra.mxu0 %v6523
        %6800 = vmatprep.subr.bf16.mxu0 %v6516
        %6801 = vmatpush2.bf16.msra.mxu0 %v6515
        %6802 = vmatprep.subr.bf16.mxu0 %v6508
        %6803 = vmatpush2.bf16.msra.mxu0 %v6507
        %6804 = vmatprep.subr.bf16.mxu0 %v6500
        %6805 = vmatpush2.bf16.msra.mxu0 %v6499
        %6806 = vmatprep.subr.bf16.mxu0 %v6492
        %6807 = vmatpush2.bf16.msra.mxu0 %v6491
        %6808 = vmatprep.subr.bf16.mxu0 %v6484
        %6809 = vmatpush2.bf16.msra.mxu0 %v6483
        %6810 = vmatprep.subr.bf16.mxu0 %v6476
        %6811 = vmatpush2.bf16.msra.mxu0 %v6475
        %6812 = vmatprep.subr.bf16.mxu0 %v6468
        %6813 = vmatpush2.bf16.msra.mxu0 %v6467
        %6814 = vmatprep.mubr.bf16.mxu0 %v5842
        %6815 = vmatmul.mubr.bf16.gmra.mxu0 %v5841
        %v6816 = vpop.f32.mrf.mxu0
        %v6817 = vadd.f32 %v6000, %v6816
        %v6818 = vpop.f32.mrf.mxu0
        %v6819 = vadd.f32 %v6004, %v6818
        %v6820 = vpop.f32.mrf.mxu0
        %v6821 = vadd.f32 %v6000, %v6820
        %v6822 = vpop.f32.mrf.mxu0
        %v6823 = vadd.f32 %v6004, %v6822
        %6824 = vdwg.mxu0
        %v6825 = vmul.f32 %v6688, %v6688
        %v6826 = vmul.f32 %v6690, %v6690
        %v6827 = vmul.f32 %v6731, %v6731
        %v6828 = vmul.f32 %v6733, %v6733
        %v6829 = vmul.f32 %v6774, %v6774
        %v6830 = vmul.f32 %v6776, %v6776
        %v6831 = vmul.f32 %v6817, %v6817
        %v6832 = vmul.f32 %v6819, %v6819
        %v6833 = vmul.f32 %v6692, %v6692
        %v6834 = vmul.f32 %v6694, %v6694
        %v6835 = vmul.f32 %v6735, %v6735
        %v6836 = vmul.f32 %v6737, %v6737
        %v6837 = vmul.f32 %v6778, %v6778
        %v6838 = vmul.f32 %v6780, %v6780
        %v6839 = vmul.f32 %v6821, %v6821
        %v6840 = vmul.f32 %v6823, %v6823
        %v6841 = vmul.f32 %v6688, %v6825
        %v6842 = vmul.f32 %v6690, %v6826
        %v6843 = vmul.f32 %v6731, %v6827
        %v6844 = vmul.f32 %v6733, %v6828
        %v6845 = vmul.f32 %v6774, %v6829
        %v6846 = vmul.f32 %v6776, %v6830
        %v6847 = vmul.f32 %v6817, %v6831
        %v6848 = vmul.f32 %v6819, %v6832
        %v6849 = vmul.f32 %v6692, %v6833
        %v6850 = vmul.f32 %v6694, %v6834
        %v6851 = vmul.f32 %v6735, %v6835
        %v6852 = vmul.f32 %v6737, %v6836
        %v6853 = vmul.f32 %v6778, %v6837
        %v6854 = vmul.f32 %v6780, %v6838
        %v6855 = vmul.f32 %v6821, %v6839
        %v6856 = vmul.f32 %v6823, %v6840
        %v6857 = vmul.f32 %v6841, 0.044715
        %v6858 = vmul.f32 %v6842, 0.044715
        %v6859 = vmul.f32 %v6843, 0.044715
        %v6860 = vmul.f32 %v6844, 0.044715
        %v6861 = vmul.f32 %v6845, 0.044715
        %v6862 = vmul.f32 %v6846, 0.044715
        %v6863 = vmul.f32 %v6847, 0.044715
        %v6864 = vmul.f32 %v6848, 0.044715
        %v6865 = vmul.f32 %v6849, 0.044715
        %v6866 = vmul.f32 %v6850, 0.044715
        %v6867 = vmul.f32 %v6851, 0.044715
        %v6868 = vmul.f32 %v6852, 0.044715
        %v6869 = vmul.f32 %v6853, 0.044715
        %v6870 = vmul.f32 %v6854, 0.044715
        %v6871 = vmul.f32 %v6855, 0.044715
        %v6872 = vmul.f32 %v6856, 0.044715
        %v6873 = vadd.f32 %v6688, %v6857
        %v6874 = vadd.f32 %v6690, %v6858
        %v6875 = vadd.f32 %v6731, %v6859
        %v6876 = vadd.f32 %v6733, %v6860
        %v6877 = vadd.f32 %v6774, %v6861
        %v6878 = vadd.f32 %v6776, %v6862
        %v6879 = vadd.f32 %v6817, %v6863
        %v6880 = vadd.f32 %v6819, %v6864
        %v6881 = vadd.f32 %v6692, %v6865
        %v6882 = vadd.f32 %v6694, %v6866
        %v6883 = vadd.f32 %v6735, %v6867
        %v6884 = vadd.f32 %v6737, %v6868
        %v6885 = vadd.f32 %v6778, %v6869
        %v6886 = vadd.f32 %v6780, %v6870
        %v6887 = vadd.f32 %v6821, %v6871
        %v6888 = vadd.f32 %v6823, %v6872
        %v6889 = vmul.f32 %v6873, 0.7978846
        %v6890 = vmul.f32 %v6874, 0.7978846
        %v6891 = vmul.f32 %v6875, 0.7978846
        %v6892 = vmul.f32 %v6876, 0.7978846
        %v6893 = vmul.f32 %v6877, 0.7978846
        %v6894 = vmul.f32 %v6878, 0.7978846
        %v6895 = vmul.f32 %v6879, 0.7978846
        %v6896 = vmul.f32 %v6880, 0.7978846
        %v6897 = vmul.f32 %v6881, 0.7978846
        %v6898 = vmul.f32 %v6882, 0.7978846
        %v6899 = vmul.f32 %v6883, 0.7978846
        %v6900 = vmul.f32 %v6884, 0.7978846
        %v6901 = vmul.f32 %v6885, 0.7978846
        %v6902 = vmul.f32 %v6886, 0.7978846
        %v6903 = vmul.f32 %v6887, 0.7978846
        %v6904 = vmul.f32 %v6888, 0.7978846
        %v6905 = vtanh.pop %v6889
        %v6906 = vtanh.pop %v6890
        %v6907 = vtanh.pop %v6891
        %v6908 = vtanh.pop %v6892
        %v6909 = vtanh.pop %v6893
        %v6910 = vtanh.pop %v6894
        %v6911 = vtanh.pop %v6895
        %v6912 = vtanh.pop %v6896
        %v6913 = vtanh.pop %v6897
        %v6914 = vtanh.pop %v6898
        %v6915 = vtanh.pop %v6899
        %v6916 = vtanh.pop %v6900
        %v6917 = vtanh.pop %v6901
        %v6918 = vtanh.pop %v6902
        %v6919 = vtanh.pop %v6903
        %v6920 = vtanh.pop %v6904
        %v6921 = vadd.f32 %v6905, 1.0
        %v6922 = vadd.f32 %v6906, 1.0
        %v6923 = vadd.f32 %v6907, 1.0
        %v6924 = vadd.f32 %v6908, 1.0
        %v6925 = vadd.f32 %v6909, 1.0
        %v6926 = vadd.f32 %v6910, 1.0
        %v6927 = vadd.f32 %v6911, 1.0
        %v6928 = vadd.f32 %v6912, 1.0
        %v6929 = vadd.f32 %v6913, 1.0
        %v6930 = vadd.f32 %v6914, 1.0
        %v6931 = vadd.f32 %v6915, 1.0
        %v6932 = vadd.f32 %v6916, 1.0
        %v6933 = vadd.f32 %v6917, 1.0
        %v6934 = vadd.f32 %v6918, 1.0
        %v6935 = vadd.f32 %v6919, 1.0
        %v6936 = vadd.f32 %v6920, 1.0
        %v6937 = vmul.f32 %v6921, 0.5
        %v6938 = vmul.f32 %v6922, 0.5
        %v6939 = vmul.f32 %v6923, 0.5
        %v6940 = vmul.f32 %v6924, 0.5
        %v6941 = vmul.f32 %v6925, 0.5
        %v6942 = vmul.f32 %v6926, 0.5
        %v6943 = vmul.f32 %v6927, 0.5
        %v6944 = vmul.f32 %v6928, 0.5
        %v6945 = vmul.f32 %v6929, 0.5
        %v6946 = vmul.f32 %v6930, 0.5
        %v6947 = vmul.f32 %v6931, 0.5
        %v6948 = vmul.f32 %v6932, 0.5
        %v6949 = vmul.f32 %v6933, 0.5
        %v6950 = vmul.f32 %v6934, 0.5
        %v6951 = vmul.f32 %v6935, 0.5
        %v6952 = vmul.f32 %v6936, 0.5
        %v6953 = vmul.f32 %v6688, %v6937
        %v6954 = vmul.f32 %v6690, %v6938
        %v6955 = vmul.f32 %v6731, %v6939
        %v6956 = vmul.f32 %v6733, %v6940
        %v6957 = vmul.f32 %v6774, %v6941
        %v6958 = vmul.f32 %v6776, %v6942
        %v6959 = vmul.f32 %v6817, %v6943
        %v6960 = vmul.f32 %v6819, %v6944
        %v6961 = vmul.f32 %v6692, %v6945
        %v6962 = vmul.f32 %v6694, %v6946
        %v6963 = vmul.f32 %v6735, %v6947
        %v6964 = vmul.f32 %v6737, %v6948
        %v6965 = vmul.f32 %v6778, %v6949
        %v6966 = vmul.f32 %v6780, %v6950
        %v6967 = vmul.f32 %v6821, %v6951
        %v6968 = vmul.f32 %v6823, %v6952
        %v6969 = vpack.c.bf16 %v6961, %v6953
        %v6970 = vpack.c.bf16 %v6962, %v6954
        %v6971 = vpack.c.bf16 %v6963, %v6955
        %v6972 = vpack.c.bf16 %v6964, %v6956
        %v6973 = vpack.c.bf16 %v6965, %v6957
        %v6974 = vpack.c.bf16 %v6966, %v6958
        %v6975 = vpack.c.bf16 %v6967, %v6959
        %v6976 = vpack.c.bf16 %v6968, %v6960
        %v6977 = vld [vmem:[%s923] sm:$0xff]
        %v6978 = vld [vmem:[%s923 + $0x8] sm:$0xff]
        %v6979 = vld [vmem:[%s923 + $0x10] sm:$0xff]
        %v6980 = vld [vmem:[%s923 + $0x18] sm:$0xff]
        %v6981 = vld [vmem:[%s923 + $0x20] sm:$0xff]
        %v6982 = vld [vmem:[%s923 + $0x28] sm:$0xff]
        %v6983 = vld [vmem:[%s923 + $0x30] sm:$0xff]
        %v6984 = vld [vmem:[%s923 + $0x38] sm:$0xff]
        %v6985 = vld [vmem:[%s923 + $0x40] sm:$0xff]
        %v6986 = vld [vmem:[%s923 + $0x48] sm:$0xff]
        %v6987 = vld [vmem:[%s923 + $0x50] sm:$0xff]
        %v6988 = vld [vmem:[%s923 + $0x58] sm:$0xff]
        %v6989 = vld [vmem:[%s923 + $0x60] sm:$0xff]
        %v6990 = vld [vmem:[%s923 + $0x68] sm:$0xff]
        %v6991 = vld [vmem:[%s923 + $0x70] sm:$0xff]
        %v6992 = vld [vmem:[%s923 + $0x78] sm:$0xff]
        %v6993 = vld [vmem:[%s923 + $0x80] sm:$0xff]
        %v6994 = vld [vmem:[%s923 + $0x88] sm:$0xff]
        %v6995 = vld [vmem:[%s923 + $0x90] sm:$0xff]
        %v6996 = vld [vmem:[%s923 + $0x98] sm:$0xff]
        %v6997 = vld [vmem:[%s923 + $0xa0] sm:$0xff]
        %v6998 = vld [vmem:[%s923 + $0xa8] sm:$0xff]
        %v6999 = vld [vmem:[%s923 + $0xb0] sm:$0xff]
        %v7000 = vld [vmem:[%s923 + $0xb8] sm:$0xff]
        %v7001 = vld [vmem:[%s923 + $0xc0] sm:$0xff]
        %v7002 = vld [vmem:[%s923 + $0xc8] sm:$0xff]
        %v7003 = vld [vmem:[%s923 + $0xd0] sm:$0xff]
        %v7004 = vld [vmem:[%s923 + $0xd8] sm:$0xff]
        %v7005 = vld [vmem:[%s923 + $0xe0] sm:$0xff]
        %v7006 = vld [vmem:[%s923 + $0xe8] sm:$0xff]
        %v7007 = vld [vmem:[%s923 + $0xf0] sm:$0xff]
        %v7008 = vld [vmem:[%s923 + $0xf8] sm:$0xff]
        %v7009 = vld [vmem:[%s923 + $0x100] sm:$0xff]
        %v7010 = vld [vmem:[%s923 + $0x108] sm:$0xff]
        %v7011 = vld [vmem:[%s923 + $0x110] sm:$0xff]
        %v7012 = vld [vmem:[%s923 + $0x118] sm:$0xff]
        %v7013 = vld [vmem:[%s923 + $0x120] sm:$0xff]
        %v7014 = vld [vmem:[%s923 + $0x128] sm:$0xff]
        %v7015 = vld [vmem:[%s923 + $0x130] sm:$0xff]
        %v7016 = vld [vmem:[%s923 + $0x138] sm:$0xff]
        %v7017 = vld [vmem:[%s923 + $0x140] sm:$0xff]
        %v7018 = vld [vmem:[%s923 + $0x148] sm:$0xff]
        %v7019 = vld [vmem:[%s923 + $0x150] sm:$0xff]
        %v7020 = vld [vmem:[%s923 + $0x158] sm:$0xff]
        %v7021 = vld [vmem:[%s923 + $0x160] sm:$0xff]
        %v7022 = vld [vmem:[%s923 + $0x168] sm:$0xff]
        %v7023 = vld [vmem:[%s923 + $0x170] sm:$0xff]
        %v7024 = vld [vmem:[%s923 + $0x178] sm:$0xff]
        %v7025 = vld [vmem:[%s923 + $0x180] sm:$0xff]
        %v7026 = vld [vmem:[%s923 + $0x188] sm:$0xff]
        %v7027 = vld [vmem:[%s923 + $0x190] sm:$0xff]
        %v7028 = vld [vmem:[%s923 + $0x198] sm:$0xff]
        %v7029 = vld [vmem:[%s923 + $0x1a0] sm:$0xff]
        %v7030 = vld [vmem:[%s923 + $0x1a8] sm:$0xff]
        %v7031 = vld [vmem:[%s923 + $0x1b0] sm:$0xff]
        %v7032 = vld [vmem:[%s923 + $0x1b8] sm:$0xff]
        %v7033 = vld [vmem:[%s923 + $0x1c0] sm:$0xff]
        %v7034 = vld [vmem:[%s923 + $0x1c8] sm:$0xff]
        %v7035 = vld [vmem:[%s923 + $0x1d0] sm:$0xff]
        %v7036 = vld [vmem:[%s923 + $0x1d8] sm:$0xff]
        %v7037 = vld [vmem:[%s923 + $0x1e0] sm:$0xff]
        %v7038 = vld [vmem:[%s923 + $0x1e8] sm:$0xff]
        %v7039 = vld [vmem:[%s923 + $0x1f0] sm:$0xff]
        %v7040 = vld [vmem:[%s923 + $0x1f8] sm:$0xff]
        %v7041 = vld [vmem:[%s923 + $0x200] sm:$0xff]
        %v7042 = vld [vmem:[%s923 + $0x208] sm:$0xff]
        %v7043 = vld [vmem:[%s923 + $0x210] sm:$0xff]
        %v7044 = vld [vmem:[%s923 + $0x218] sm:$0xff]
        %v7045 = vld [vmem:[%s923 + $0x220] sm:$0xff]
        %v7046 = vld [vmem:[%s923 + $0x228] sm:$0xff]
        %v7047 = vld [vmem:[%s923 + $0x230] sm:$0xff]
        %v7048 = vld [vmem:[%s923 + $0x238] sm:$0xff]
        %v7049 = vld [vmem:[%s923 + $0x240] sm:$0xff]
        %v7050 = vld [vmem:[%s923 + $0x248] sm:$0xff]
        %v7051 = vld [vmem:[%s923 + $0x250] sm:$0xff]
        %v7052 = vld [vmem:[%s923 + $0x258] sm:$0xff]
        %v7053 = vld [vmem:[%s923 + $0x260] sm:$0xff]
        %v7054 = vld [vmem:[%s923 + $0x268] sm:$0xff]
        %v7055 = vld [vmem:[%s923 + $0x270] sm:$0xff]
        %v7056 = vld [vmem:[%s923 + $0x278] sm:$0xff]
        %v7057 = vld [vmem:[%s923 + $0x280] sm:$0xff]
        %v7058 = vld [vmem:[%s923 + $0x288] sm:$0xff]
        %v7059 = vld [vmem:[%s923 + $0x290] sm:$0xff]
        %v7060 = vld [vmem:[%s923 + $0x298] sm:$0xff]
        %v7061 = vld [vmem:[%s923 + $0x2a0] sm:$0xff]
        %v7062 = vld [vmem:[%s923 + $0x2a8] sm:$0xff]
        %v7063 = vld [vmem:[%s923 + $0x2b0] sm:$0xff]
        %v7064 = vld [vmem:[%s923 + $0x2b8] sm:$0xff]
        %v7065 = vld [vmem:[%s923 + $0x2c0] sm:$0xff]
        %v7066 = vld [vmem:[%s923 + $0x2c8] sm:$0xff]
        %v7067 = vld [vmem:[%s923 + $0x2d0] sm:$0xff]
        %v7068 = vld [vmem:[%s923 + $0x2d8] sm:$0xff]
        %v7069 = vld [vmem:[%s923 + $0x2e0] sm:$0xff]
        %v7070 = vld [vmem:[%s923 + $0x2e8] sm:$0xff]
        %v7071 = vld [vmem:[%s923 + $0x2f0] sm:$0xff]
        %v7072 = vld [vmem:[%s923 + $0x2f8] sm:$0xff]
        %v7073 = vld [vmem:[%s923 + $0x300] sm:$0xff]
        %v7074 = vld [vmem:[%s923 + $0x308] sm:$0xff]
        %v7075 = vld [vmem:[%s923 + $0x310] sm:$0xff]
        %v7076 = vld [vmem:[%s923 + $0x318] sm:$0xff]
        %v7077 = vld [vmem:[%s923 + $0x320] sm:$0xff]
        %v7078 = vld [vmem:[%s923 + $0x328] sm:$0xff]
        %v7079 = vld [vmem:[%s923 + $0x330] sm:$0xff]
        %v7080 = vld [vmem:[%s923 + $0x338] sm:$0xff]
        %v7081 = vld [vmem:[%s923 + $0x340] sm:$0xff]
        %v7082 = vld [vmem:[%s923 + $0x348] sm:$0xff]
        %v7083 = vld [vmem:[%s923 + $0x350] sm:$0xff]
        %v7084 = vld [vmem:[%s923 + $0x358] sm:$0xff]
        %v7085 = vld [vmem:[%s923 + $0x360] sm:$0xff]
        %v7086 = vld [vmem:[%s923 + $0x368] sm:$0xff]
        %v7087 = vld [vmem:[%s923 + $0x370] sm:$0xff]
        %v7088 = vld [vmem:[%s923 + $0x378] sm:$0xff]
        %v7089 = vld [vmem:[%s923 + $0x380] sm:$0xff]
        %v7090 = vld [vmem:[%s923 + $0x388] sm:$0xff]
        %v7091 = vld [vmem:[%s923 + $0x390] sm:$0xff]
        %v7092 = vld [vmem:[%s923 + $0x398] sm:$0xff]
        %v7093 = vld [vmem:[%s923 + $0x3a0] sm:$0xff]
        %v7094 = vld [vmem:[%s923 + $0x3a8] sm:$0xff]
        %v7095 = vld [vmem:[%s923 + $0x3b0] sm:$0xff]
        %v7096 = vld [vmem:[%s923 + $0x3b8] sm:$0xff]
        %v7097 = vld [vmem:[%s923 + $0x3c0] sm:$0xff]
        %v7098 = vld [vmem:[%s923 + $0x3c8] sm:$0xff]
        %v7099 = vld [vmem:[%s923 + $0x3d0] sm:$0xff]
        %v7100 = vld [vmem:[%s923 + $0x3d8] sm:$0xff]
        %v7101 = vld [vmem:[%s923 + $0x3e0] sm:$0xff]
        %v7102 = vld [vmem:[%s923 + $0x3e8] sm:$0xff]
        %v7103 = vld [vmem:[%s923 + $0x3f0] sm:$0xff]
        %v7104 = vld [vmem:[%s923 + $0x3f8] sm:$0xff]
        %v7233 = vunpack.c.l.b16 %v6977
        %v7234 = vunpack.c.h.b16 %v6977
        %v7235 = vunpack.c.l.b16 %v6978
        %v7236 = vunpack.c.h.b16 %v6978
        %v7237 = vunpack.c.l.b16 %v6979
        %v7238 = vunpack.c.h.b16 %v6979
        %v7239 = vunpack.c.l.b16 %v6980
        %v7240 = vunpack.c.h.b16 %v6980
        %v7241 = vunpack.c.l.b16 %v6981
        %v7242 = vunpack.c.h.b16 %v6981
        %v7243 = vunpack.c.l.b16 %v6982
        %v7244 = vunpack.c.h.b16 %v6982
        %v7245 = vunpack.c.l.b16 %v6983
        %v7246 = vunpack.c.h.b16 %v6983
        %v7247 = vunpack.c.l.b16 %v6984
        %v7248 = vunpack.c.h.b16 %v6984
        %v7249 = vunpack.c.l.b16 %v6985
        %v7250 = vunpack.c.h.b16 %v6985
        %v7251 = vunpack.c.l.b16 %v6986
        %v7252 = vunpack.c.h.b16 %v6986
        %v7253 = vunpack.c.l.b16 %v6987
        %v7254 = vunpack.c.h.b16 %v6987
        %v7255 = vunpack.c.l.b16 %v6988
        %v7256 = vunpack.c.h.b16 %v6988
        %v7257 = vunpack.c.l.b16 %v6989
        %v7258 = vunpack.c.h.b16 %v6989
        %v7259 = vunpack.c.l.b16 %v6990
        %v7260 = vunpack.c.h.b16 %v6990
        %v7261 = vunpack.c.l.b16 %v6991
        %v7262 = vunpack.c.h.b16 %v6991
        %v7263 = vunpack.c.l.b16 %v6992
        %v7264 = vunpack.c.h.b16 %v6992
        %v7265 = vunpack.c.l.b16 %v6993
        %v7266 = vunpack.c.h.b16 %v6993
        %v7267 = vunpack.c.l.b16 %v6994
        %v7268 = vunpack.c.h.b16 %v6994
        %v7269 = vunpack.c.l.b16 %v6995
        %v7270 = vunpack.c.h.b16 %v6995
        %v7271 = vunpack.c.l.b16 %v6996
        %v7272 = vunpack.c.h.b16 %v6996
        %v7273 = vunpack.c.l.b16 %v6997
        %v7274 = vunpack.c.h.b16 %v6997
        %v7275 = vunpack.c.l.b16 %v6998
        %v7276 = vunpack.c.h.b16 %v6998
        %v7277 = vunpack.c.l.b16 %v6999
        %v7278 = vunpack.c.h.b16 %v6999
        %v7279 = vunpack.c.l.b16 %v7000
        %v7280 = vunpack.c.h.b16 %v7000
        %v7281 = vunpack.c.l.b16 %v7001
        %v7282 = vunpack.c.h.b16 %v7001
        %v7283 = vunpack.c.l.b16 %v7002
        %v7284 = vunpack.c.h.b16 %v7002
        %v7285 = vunpack.c.l.b16 %v7003
        %v7286 = vunpack.c.h.b16 %v7003
        %v7287 = vunpack.c.l.b16 %v7004
        %v7288 = vunpack.c.h.b16 %v7004
        %v7289 = vunpack.c.l.b16 %v7005
        %v7290 = vunpack.c.h.b16 %v7005
        %v7291 = vunpack.c.l.b16 %v7006
        %v7292 = vunpack.c.h.b16 %v7006
        %v7293 = vunpack.c.l.b16 %v7007
        %v7294 = vunpack.c.h.b16 %v7007
        %v7295 = vunpack.c.l.b16 %v7008
        %v7296 = vunpack.c.h.b16 %v7008
        %v7297 = vunpack.c.l.b16 %v7009
        %v7298 = vunpack.c.h.b16 %v7009
        %v7299 = vunpack.c.l.b16 %v7010
        %v7300 = vunpack.c.h.b16 %v7010
        %v7301 = vunpack.c.l.b16 %v7011
        %v7302 = vunpack.c.h.b16 %v7011
        %v7303 = vunpack.c.l.b16 %v7012
        %v7304 = vunpack.c.h.b16 %v7012
        %v7305 = vunpack.c.l.b16 %v7013
        %v7306 = vunpack.c.h.b16 %v7013
        %v7307 = vunpack.c.l.b16 %v7014
        %v7308 = vunpack.c.h.b16 %v7014
        %v7309 = vunpack.c.l.b16 %v7015
        %v7310 = vunpack.c.h.b16 %v7015
        %v7311 = vunpack.c.l.b16 %v7016
        %v7312 = vunpack.c.h.b16 %v7016
        %v7313 = vunpack.c.l.b16 %v7017
        %v7314 = vunpack.c.h.b16 %v7017
        %v7315 = vunpack.c.l.b16 %v7018
        %v7316 = vunpack.c.h.b16 %v7018
        %v7317 = vunpack.c.l.b16 %v7019
        %v7318 = vunpack.c.h.b16 %v7019
        %v7319 = vunpack.c.l.b16 %v7020
        %v7320 = vunpack.c.h.b16 %v7020
        %v7321 = vunpack.c.l.b16 %v7021
        %v7322 = vunpack.c.h.b16 %v7021
        %v7323 = vunpack.c.l.b16 %v7022
        %v7324 = vunpack.c.h.b16 %v7022
        %v7325 = vunpack.c.l.b16 %v7023
        %v7326 = vunpack.c.h.b16 %v7023
        %v7327 = vunpack.c.l.b16 %v7024
        %v7328 = vunpack.c.h.b16 %v7024
        %v7329 = vunpack.c.l.b16 %v7025
        %v7330 = vunpack.c.h.b16 %v7025
        %v7331 = vunpack.c.l.b16 %v7026
        %v7332 = vunpack.c.h.b16 %v7026
        %v7333 = vunpack.c.l.b16 %v7027
        %v7334 = vunpack.c.h.b16 %v7027
        %v7335 = vunpack.c.l.b16 %v7028
        %v7336 = vunpack.c.h.b16 %v7028
        %v7337 = vunpack.c.l.b16 %v7029
        %v7338 = vunpack.c.h.b16 %v7029
        %v7339 = vunpack.c.l.b16 %v7030
        %v7340 = vunpack.c.h.b16 %v7030
        %v7341 = vunpack.c.l.b16 %v7031
        %v7342 = vunpack.c.h.b16 %v7031
        %v7343 = vunpack.c.l.b16 %v7032
        %v7344 = vunpack.c.h.b16 %v7032
        %v7345 = vunpack.c.l.b16 %v7033
        %v7346 = vunpack.c.h.b16 %v7033
        %v7347 = vunpack.c.l.b16 %v7034
        %v7348 = vunpack.c.h.b16 %v7034
        %v7349 = vunpack.c.l.b16 %v7035
        %v7350 = vunpack.c.h.b16 %v7035
        %v7351 = vunpack.c.l.b16 %v7036
        %v7352 = vunpack.c.h.b16 %v7036
        %v7353 = vunpack.c.l.b16 %v7037
        %v7354 = vunpack.c.h.b16 %v7037
        %v7355 = vunpack.c.l.b16 %v7038
        %v7356 = vunpack.c.h.b16 %v7038
        %v7357 = vunpack.c.l.b16 %v7039
        %v7358 = vunpack.c.h.b16 %v7039
        %v7359 = vunpack.c.l.b16 %v7040
        %v7360 = vunpack.c.h.b16 %v7040
        %v7361 = vunpack.c.l.b16 %v7041
        %v7362 = vunpack.c.h.b16 %v7041
        %v7363 = vunpack.c.l.b16 %v7042
        %v7364 = vunpack.c.h.b16 %v7042
        %v7365 = vunpack.c.l.b16 %v7043
        %v7366 = vunpack.c.h.b16 %v7043
        %v7367 = vunpack.c.l.b16 %v7044
        %v7368 = vunpack.c.h.b16 %v7044
        %v7369 = vunpack.c.l.b16 %v7045
        %v7370 = vunpack.c.h.b16 %v7045
        %v7371 = vunpack.c.l.b16 %v7046
        %v7372 = vunpack.c.h.b16 %v7046
        %v7373 = vunpack.c.l.b16 %v7047
        %v7374 = vunpack.c.h.b16 %v7047
        %v7375 = vunpack.c.l.b16 %v7048
        %v7376 = vunpack.c.h.b16 %v7048
        %v7377 = vunpack.c.l.b16 %v7049
        %v7378 = vunpack.c.h.b16 %v7049
        %v7379 = vunpack.c.l.b16 %v7050
        %v7380 = vunpack.c.h.b16 %v7050
        %v7381 = vunpack.c.l.b16 %v7051
        %v7382 = vunpack.c.h.b16 %v7051
        %v7383 = vunpack.c.l.b16 %v7052
        %v7384 = vunpack.c.h.b16 %v7052
        %v7385 = vunpack.c.l.b16 %v7053
        %v7386 = vunpack.c.h.b16 %v7053
        %v7387 = vunpack.c.l.b16 %v7054
        %v7388 = vunpack.c.h.b16 %v7054
        %v7389 = vunpack.c.l.b16 %v7055
        %v7390 = vunpack.c.h.b16 %v7055
        %v7391 = vunpack.c.l.b16 %v7056
        %v7392 = vunpack.c.h.b16 %v7056
        %v7393 = vunpack.c.l.b16 %v7057
        %v7394 = vunpack.c.h.b16 %v7057
        %v7395 = vunpack.c.l.b16 %v7058
        %v7396 = vunpack.c.h.b16 %v7058
        %v7397 = vunpack.c.l.b16 %v7059
        %v7398 = vunpack.c.h.b16 %v7059
        %v7399 = vunpack.c.l.b16 %v7060
        %v7400 = vunpack.c.h.b16 %v7060
        %v7401 = vunpack.c.l.b16 %v7061
        %v7402 = vunpack.c.h.b16 %v7061
        %v7403 = vunpack.c.l.b16 %v7062
        %v7404 = vunpack.c.h.b16 %v7062
        %v7405 = vunpack.c.l.b16 %v7063
        %v7406 = vunpack.c.h.b16 %v7063
        %v7407 = vunpack.c.l.b16 %v7064
        %v7408 = vunpack.c.h.b16 %v7064
        %v7409 = vunpack.c.l.b16 %v7065
        %v7410 = vunpack.c.h.b16 %v7065
        %v7411 = vunpack.c.l.b16 %v7066
        %v7412 = vunpack.c.h.b16 %v7066
        %v7413 = vunpack.c.l.b16 %v7067
        %v7414 = vunpack.c.h.b16 %v7067
        %v7415 = vunpack.c.l.b16 %v7068
        %v7416 = vunpack.c.h.b16 %v7068
        %v7417 = vunpack.c.l.b16 %v7069
        %v7418 = vunpack.c.h.b16 %v7069
        %v7419 = vunpack.c.l.b16 %v7070
        %v7420 = vunpack.c.h.b16 %v7070
        %v7421 = vunpack.c.l.b16 %v7071
        %v7422 = vunpack.c.h.b16 %v7071
        %v7423 = vunpack.c.l.b16 %v7072
        %v7424 = vunpack.c.h.b16 %v7072
        %v7425 = vunpack.c.l.b16 %v7073
        %v7426 = vunpack.c.h.b16 %v7073
        %v7427 = vunpack.c.l.b16 %v7074
        %v7428 = vunpack.c.h.b16 %v7074
        %v7429 = vunpack.c.l.b16 %v7075
        %v7430 = vunpack.c.h.b16 %v7075
        %v7431 = vunpack.c.l.b16 %v7076
        %v7432 = vunpack.c.h.b16 %v7076
        %v7433 = vunpack.c.l.b16 %v7077
        %v7434 = vunpack.c.h.b16 %v7077
        %v7435 = vunpack.c.l.b16 %v7078
        %v7436 = vunpack.c.h.b16 %v7078
        %v7437 = vunpack.c.l.b16 %v7079
        %v7438 = vunpack.c.h.b16 %v7079
        %v7439 = vunpack.c.l.b16 %v7080
        %v7440 = vunpack.c.h.b16 %v7080
        %v7441 = vunpack.c.l.b16 %v7081
        %v7442 = vunpack.c.h.b16 %v7081
        %v7443 = vunpack.c.l.b16 %v7082
        %v7444 = vunpack.c.h.b16 %v7082
        %v7445 = vunpack.c.l.b16 %v7083
        %v7446 = vunpack.c.h.b16 %v7083
        %v7447 = vunpack.c.l.b16 %v7084
        %v7448 = vunpack.c.h.b16 %v7084
        %v7449 = vunpack.c.l.b16 %v7085
        %v7450 = vunpack.c.h.b16 %v7085
        %v7451 = vunpack.c.l.b16 %v7086
        %v7452 = vunpack.c.h.b16 %v7086
        %v7453 = vunpack.c.l.b16 %v7087
        %v7454 = vunpack.c.h.b16 %v7087
        %v7455 = vunpack.c.l.b16 %v7088
        %v7456 = vunpack.c.h.b16 %v7088
        %v7457 = vunpack.c.l.b16 %v7089
        %v7458 = vunpack.c.h.b16 %v7089
        %v7459 = vunpack.c.l.b16 %v7090
        %v7460 = vunpack.c.h.b16 %v7090
        %v7461 = vunpack.c.l.b16 %v7091
        %v7462 = vunpack.c.h.b16 %v7091
        %v7463 = vunpack.c.l.b16 %v7092
        %v7464 = vunpack.c.h.b16 %v7092
        %v7465 = vunpack.c.l.b16 %v7093
        %v7466 = vunpack.c.h.b16 %v7093
        %v7467 = vunpack.c.l.b16 %v7094
        %v7468 = vunpack.c.h.b16 %v7094
        %v7469 = vunpack.c.l.b16 %v7095
        %v7470 = vunpack.c.h.b16 %v7095
        %v7471 = vunpack.c.l.b16 %v7096
        %v7472 = vunpack.c.h.b16 %v7096
        %v7473 = vunpack.c.l.b16 %v7097
        %v7474 = vunpack.c.h.b16 %v7097
        %v7475 = vunpack.c.l.b16 %v7098
        %v7476 = vunpack.c.h.b16 %v7098
        %v7477 = vunpack.c.l.b16 %v7099
        %v7478 = vunpack.c.h.b16 %v7099
        %v7479 = vunpack.c.l.b16 %v7100
        %v7480 = vunpack.c.h.b16 %v7100
        %v7481 = vunpack.c.l.b16 %v7101
        %v7482 = vunpack.c.h.b16 %v7101
        %v7483 = vunpack.c.l.b16 %v7102
        %v7484 = vunpack.c.h.b16 %v7102
        %v7485 = vunpack.c.l.b16 %v7103
        %v7486 = vunpack.c.h.b16 %v7103
        %v7487 = vunpack.c.l.b16 %v7104
        %v7488 = vunpack.c.h.b16 %v7104
        %v7489 = vpack.c.b16 %v7235, %v7233
        %v7490 = vpack.c.b16 %v7236, %v7234
        %v7491 = vpack.c.b16 %v7239, %v7237
        %v7492 = vpack.c.b16 %v7240, %v7238
        %v7493 = vpack.c.b16 %v7243, %v7241
        %v7494 = vpack.c.b16 %v7244, %v7242
        %v7495 = vpack.c.b16 %v7247, %v7245
        %v7496 = vpack.c.b16 %v7248, %v7246
        %v7497 = vpack.c.b16 %v7251, %v7249
        %v7498 = vpack.c.b16 %v7252, %v7250
        %v7499 = vpack.c.b16 %v7255, %v7253
        %v7500 = vpack.c.b16 %v7256, %v7254
        %v7501 = vpack.c.b16 %v7259, %v7257
        %v7502 = vpack.c.b16 %v7260, %v7258
        %v7503 = vpack.c.b16 %v7263, %v7261
        %v7504 = vpack.c.b16 %v7264, %v7262
        %v7505 = vpack.c.b16 %v7267, %v7265
        %v7506 = vpack.c.b16 %v7268, %v7266
        %v7507 = vpack.c.b16 %v7271, %v7269
        %v7508 = vpack.c.b16 %v7272, %v7270
        %v7509 = vpack.c.b16 %v7275, %v7273
        %v7510 = vpack.c.b16 %v7276, %v7274
        %v7511 = vpack.c.b16 %v7279, %v7277
        %v7512 = vpack.c.b16 %v7280, %v7278
        %v7513 = vpack.c.b16 %v7283, %v7281
        %v7514 = vpack.c.b16 %v7284, %v7282
        %v7515 = vpack.c.b16 %v7287, %v7285
        %v7516 = vpack.c.b16 %v7288, %v7286
        %v7517 = vpack.c.b16 %v7291, %v7289
        %v7518 = vpack.c.b16 %v7292, %v7290
        %v7519 = vpack.c.b16 %v7295, %v7293
        %v7520 = vpack.c.b16 %v7296, %v7294
        %v7521 = vpack.c.b16 %v7299, %v7297
        %v7522 = vpack.c.b16 %v7300, %v7298
        %v7523 = vpack.c.b16 %v7303, %v7301
        %v7524 = vpack.c.b16 %v7304, %v7302
        %v7525 = vpack.c.b16 %v7307, %v7305
        %v7526 = vpack.c.b16 %v7308, %v7306
        %v7527 = vpack.c.b16 %v7311, %v7309
        %v7528 = vpack.c.b16 %v7312, %v7310
        %v7529 = vpack.c.b16 %v7315, %v7313
        %v7530 = vpack.c.b16 %v7316, %v7314
        %v7531 = vpack.c.b16 %v7319, %v7317
        %v7532 = vpack.c.b16 %v7320, %v7318
        %v7533 = vpack.c.b16 %v7323, %v7321
        %v7534 = vpack.c.b16 %v7324, %v7322
        %v7535 = vpack.c.b16 %v7327, %v7325
        %v7536 = vpack.c.b16 %v7328, %v7326
        %v7537 = vpack.c.b16 %v7331, %v7329
        %v7538 = vpack.c.b16 %v7332, %v7330
        %v7539 = vpack.c.b16 %v7335, %v7333
        %v7540 = vpack.c.b16 %v7336, %v7334
        %v7541 = vpack.c.b16 %v7339, %v7337
        %v7542 = vpack.c.b16 %v7340, %v7338
        %v7543 = vpack.c.b16 %v7343, %v7341
        %v7544 = vpack.c.b16 %v7344, %v7342
        %v7545 = vpack.c.b16 %v7347, %v7345
        %v7546 = vpack.c.b16 %v7348, %v7346
        %v7547 = vpack.c.b16 %v7351, %v7349
        %v7548 = vpack.c.b16 %v7352, %v7350
        %v7549 = vpack.c.b16 %v7355, %v7353
        %v7550 = vpack.c.b16 %v7356, %v7354
        %v7551 = vpack.c.b16 %v7359, %v7357
        %v7552 = vpack.c.b16 %v7360, %v7358
        %v7553 = vpack.c.b16 %v7363, %v7361
        %v7554 = vpack.c.b16 %v7364, %v7362
        %v7555 = vpack.c.b16 %v7367, %v7365
        %v7556 = vpack.c.b16 %v7368, %v7366
        %v7557 = vpack.c.b16 %v7371, %v7369
        %v7558 = vpack.c.b16 %v7372, %v7370
        %v7559 = vpack.c.b16 %v7375, %v7373
        %v7560 = vpack.c.b16 %v7376, %v7374
        %v7561 = vpack.c.b16 %v7379, %v7377
        %v7562 = vpack.c.b16 %v7380, %v7378
        %v7563 = vpack.c.b16 %v7383, %v7381
        %v7564 = vpack.c.b16 %v7384, %v7382
        %v7565 = vpack.c.b16 %v7387, %v7385
        %v7566 = vpack.c.b16 %v7388, %v7386
        %v7567 = vpack.c.b16 %v7391, %v7389
        %v7568 = vpack.c.b16 %v7392, %v7390
        %v7569 = vpack.c.b16 %v7395, %v7393
        %v7570 = vpack.c.b16 %v7396, %v7394
        %v7571 = vpack.c.b16 %v7399, %v7397
        %v7572 = vpack.c.b16 %v7400, %v7398
        %v7573 = vpack.c.b16 %v7403, %v7401
        %v7574 = vpack.c.b16 %v7404, %v7402
        %v7575 = vpack.c.b16 %v7407, %v7405
        %v7576 = vpack.c.b16 %v7408, %v7406
        %v7577 = vpack.c.b16 %v7411, %v7409
        %v7578 = vpack.c.b16 %v7412, %v7410
        %v7579 = vpack.c.b16 %v7415, %v7413
        %v7580 = vpack.c.b16 %v7416, %v7414
        %v7581 = vpack.c.b16 %v7419, %v7417
        %v7582 = vpack.c.b16 %v7420, %v7418
        %v7583 = vpack.c.b16 %v7423, %v7421
        %v7584 = vpack.c.b16 %v7424, %v7422
        %v7585 = vpack.c.b16 %v7427, %v7425
        %v7586 = vpack.c.b16 %v7428, %v7426
        %v7587 = vpack.c.b16 %v7431, %v7429
        %v7588 = vpack.c.b16 %v7432, %v7430
        %v7589 = vpack.c.b16 %v7435, %v7433
        %v7590 = vpack.c.b16 %v7436, %v7434
        %v7591 = vpack.c.b16 %v7439, %v7437
        %v7592 = vpack.c.b16 %v7440, %v7438
        %v7593 = vpack.c.b16 %v7443, %v7441
        %v7594 = vpack.c.b16 %v7444, %v7442
        %v7595 = vpack.c.b16 %v7447, %v7445
        %v7596 = vpack.c.b16 %v7448, %v7446
        %v7597 = vpack.c.b16 %v7451, %v7449
        %v7598 = vpack.c.b16 %v7452, %v7450
        %v7599 = vpack.c.b16 %v7455, %v7453
        %v7600 = vpack.c.b16 %v7456, %v7454
        %v7601 = vpack.c.b16 %v7459, %v7457
        %v7602 = vpack.c.b16 %v7460, %v7458
        %v7603 = vpack.c.b16 %v7463, %v7461
        %v7604 = vpack.c.b16 %v7464, %v7462
        %v7605 = vpack.c.b16 %v7467, %v7465
        %v7606 = vpack.c.b16 %v7468, %v7466
        %v7607 = vpack.c.b16 %v7471, %v7469
        %v7608 = vpack.c.b16 %v7472, %v7470
        %v7609 = vpack.c.b16 %v7475, %v7473
        %v7610 = vpack.c.b16 %v7476, %v7474
        %v7611 = vpack.c.b16 %v7479, %v7477
        %v7612 = vpack.c.b16 %v7480, %v7478
        %v7613 = vpack.c.b16 %v7483, %v7481
        %v7614 = vpack.c.b16 %v7484, %v7482
        %v7615 = vpack.c.b16 %v7487, %v7485
        %v7616 = vpack.c.b16 %v7488, %v7486
        %7745 = vmatprep.subr.bf16.mxu0 %v7504
        %7746 = vmatpush1.bf16.msra.mxu0 %v7503
        %7747 = vmatprep.subr.bf16.mxu0 %v7502
        %7748 = vmatpush1.bf16.msra.mxu0 %v7501
        %7749 = vmatprep.subr.bf16.mxu0 %v7500
        %7750 = vmatpush1.bf16.msra.mxu0 %v7499
        %7751 = vmatprep.subr.bf16.mxu0 %v7498
        %7752 = vmatpush1.bf16.msra.mxu0 %v7497
        %7753 = vmatprep.subr.bf16.mxu0 %v7496
        %7754 = vmatpush1.bf16.msra.mxu0 %v7495
        %7755 = vmatprep.subr.bf16.mxu0 %v7494
        %7756 = vmatpush1.bf16.msra.mxu0 %v7493
        %7757 = vmatprep.subr.bf16.mxu0 %v7492
        %7758 = vmatpush1.bf16.msra.mxu0 %v7491
        %7759 = vmatprep.subr.bf16.mxu0 %v7490
        %7760 = vmatpush1.bf16.msra.mxu0 %v7489
        %7761 = vmatprep.subr.bf16.mxu0 %v7520
        %7762 = vmatpush2.bf16.msra.mxu0 %v7519
        %7763 = vmatprep.subr.bf16.mxu0 %v7518
        %7764 = vmatpush2.bf16.msra.mxu0 %v7517
        %7765 = vmatprep.subr.bf16.mxu0 %v7516
        %7766 = vmatpush2.bf16.msra.mxu0 %v7515
        %7767 = vmatprep.subr.bf16.mxu0 %v7514
        %7768 = vmatpush2.bf16.msra.mxu0 %v7513
        %7769 = vmatprep.subr.bf16.mxu0 %v7512
        %7770 = vmatpush2.bf16.msra.mxu0 %v7511
        %7771 = vmatprep.subr.bf16.mxu0 %v7510
        %7772 = vmatpush2.bf16.msra.mxu0 %v7509
        %7773 = vmatprep.subr.bf16.mxu0 %v7508
        %7774 = vmatpush2.bf16.msra.mxu0 %v7507
        %7775 = vmatprep.subr.bf16.mxu0 %v7506
        %7776 = vmatpush2.bf16.msra.mxu0 %v7505
        %7777 = vmatprep.mubr.bf16.mxu0 %v6970
        %7778 = vmatmul.mubr.bf16.gmra.mxu0 %v6969
        %v7779 = vpop.f32.mrf.mxu0
        %v7780 = vadd.f32 0.0, %v7779
        %v7781 = vpop.f32.mrf.mxu0
        %v7782 = vadd.f32 0.0, %v7781
        %v7783 = vpop.f32.mrf.mxu0
        %v7784 = vadd.f32 0.0, %v7783
        %v7785 = vpop.f32.mrf.mxu0
        %v7786 = vadd.f32 0.0, %v7785
        %7787 = vdwg.mxu0
        %7788 = vmatprep.subr.bf16.mxu0 %v7536
        %7789 = vmatpush1.bf16.msra.mxu0 %v7535
        %7790 = vmatprep.subr.bf16.mxu0 %v7534
        %7791 = vmatpush1.bf16.msra.mxu0 %v7533
        %7792 = vmatprep.subr.bf16.mxu0 %v7532
        %7793 = vmatpush1.bf16.msra.mxu0 %v7531
        %7794 = vmatprep.subr.bf16.mxu0 %v7530
        %7795 = vmatpush1.bf16.msra.mxu0 %v7529
        %7796 = vmatprep.subr.bf16.mxu0 %v7528
        %7797 = vmatpush1.bf16.msra.mxu0 %v7527
        %7798 = vmatprep.subr.bf16.mxu0 %v7526
        %7799 = vmatpush1.bf16.msra.mxu0 %v7525
        %7800 = vmatprep.subr.bf16.mxu0 %v7524
        %7801 = vmatpush1.bf16.msra.mxu0 %v7523
        %7802 = vmatprep.subr.bf16.mxu0 %v7522
        %7803 = vmatpush1.bf16.msra.mxu0 %v7521
        %7804 = vmatprep.subr.bf16.mxu0 %v7552
        %7805 = vmatpush2.bf16.msra.mxu0 %v7551
        %7806 = vmatprep.subr.bf16.mxu0 %v7550
        %7807 = vmatpush2.bf16.msra.mxu0 %v7549
        %7808 = vmatprep.subr.bf16.mxu0 %v7548
        %7809 = vmatpush2.bf16.msra.mxu0 %v7547
        %7810 = vmatprep.subr.bf16.mxu0 %v7546
        %7811 = vmatpush2.bf16.msra.mxu0 %v7545
        %7812 = vmatprep.subr.bf16.mxu0 %v7544
        %7813 = vmatpush2.bf16.msra.mxu0 %v7543
        %7814 = vmatprep.subr.bf16.mxu0 %v7542
        %7815 = vmatpush2.bf16.msra.mxu0 %v7541
        %7816 = vmatprep.subr.bf16.mxu0 %v7540
        %7817 = vmatpush2.bf16.msra.mxu0 %v7539
        %7818 = vmatprep.subr.bf16.mxu0 %v7538
        %7819 = vmatpush2.bf16.msra.mxu0 %v7537
        %7820 = vmatprep.mubr.bf16.mxu0 %v6972
        %7821 = vmatmul.mubr.bf16.gmra.mxu0 %v6971
        %v7822 = vpop.f32.mrf.mxu0
        %v7823 = vadd.f32 %v7780, %v7822
        %v7824 = vpop.f32.mrf.mxu0
        %v7825 = vadd.f32 %v7782, %v7824
        %v7826 = vpop.f32.mrf.mxu0
        %v7827 = vadd.f32 %v7784, %v7826
        %v7828 = vpop.f32.mrf.mxu0
        %v7829 = vadd.f32 %v7786, %v7828
        %7830 = vdwg.mxu0
        %7831 = vmatprep.subr.bf16.mxu0 %v7568
        %7832 = vmatpush1.bf16.msra.mxu0 %v7567
        %7833 = vmatprep.subr.bf16.mxu0 %v7566
        %7834 = vmatpush1.bf16.msra.mxu0 %v7565
        %7835 = vmatprep.subr.bf16.mxu0 %v7564
        %7836 = vmatpush1.bf16.msra.mxu0 %v7563
        %7837 = vmatprep.subr.bf16.mxu0 %v7562
        %7838 = vmatpush1.bf16.msra.mxu0 %v7561
        %7839 = vmatprep.subr.bf16.mxu0 %v7560
        %7840 = vmatpush1.bf16.msra.mxu0 %v7559
        %7841 = vmatprep.subr.bf16.mxu0 %v7558
        %7842 = vmatpush1.bf16.msra.mxu0 %v7557
        %7843 = vmatprep.subr.bf16.mxu0 %v7556
        %7844 = vmatpush1.bf16.msra.mxu0 %v7555
        %7845 = vmatprep.subr.bf16.mxu0 %v7554
        %7846 = vmatpush1.bf16.msra.mxu0 %v7553
        %7847 = vmatprep.subr.bf16.mxu0 %v7584
        %7848 = vmatpush2.bf16.msra.mxu0 %v7583
        %7849 = vmatprep.subr.bf16.mxu0 %v7582
        %7850 = vmatpush2.bf16.msra.mxu0 %v7581
        %7851 = vmatprep.subr.bf16.mxu0 %v7580
        %7852 = vmatpush2.bf16.msra.mxu0 %v7579
        %7853 = vmatprep.subr.bf16.mxu0 %v7578
        %7854 = vmatpush2.bf16.msra.mxu0 %v7577
        %7855 = vmatprep.subr.bf16.mxu0 %v7576
        %7856 = vmatpush2.bf16.msra.mxu0 %v7575
        %7857 = vmatprep.subr.bf16.mxu0 %v7574
        %7858 = vmatpush2.bf16.msra.mxu0 %v7573
        %7859 = vmatprep.subr.bf16.mxu0 %v7572
        %7860 = vmatpush2.bf16.msra.mxu0 %v7571
        %7861 = vmatprep.subr.bf16.mxu0 %v7570
        %7862 = vmatpush2.bf16.msra.mxu0 %v7569
        %7863 = vmatprep.mubr.bf16.mxu0 %v6974
        %7864 = vmatmul.mubr.bf16.gmra.mxu0 %v6973
        %v7865 = vpop.f32.mrf.mxu0
        %v7866 = vadd.f32 %v7823, %v7865
        %v7867 = vpop.f32.mrf.mxu0
        %v7868 = vadd.f32 %v7825, %v7867
        %v7869 = vpop.f32.mrf.mxu0
        %v7870 = vadd.f32 %v7827, %v7869
        %v7871 = vpop.f32.mrf.mxu0
        %v7872 = vadd.f32 %v7829, %v7871
        %7873 = vdwg.mxu0
        %7874 = vmatprep.subr.bf16.mxu0 %v7600
        %7875 = vmatpush1.bf16.msra.mxu0 %v7599
        %7876 = vmatprep.subr.bf16.mxu0 %v7598
        %7877 = vmatpush1.bf16.msra.mxu0 %v7597
        %7878 = vmatprep.subr.bf16.mxu0 %v7596
        %7879 = vmatpush1.bf16.msra.mxu0 %v7595
        %7880 = vmatprep.subr.bf16.mxu0 %v7594
        %7881 = vmatpush1.bf16.msra.mxu0 %v7593
        %7882 = vmatprep.subr.bf16.mxu0 %v7592
        %7883 = vmatpush1.bf16.msra.mxu0 %v7591
        %7884 = vmatprep.subr.bf16.mxu0 %v7590
        %7885 = vmatpush1.bf16.msra.mxu0 %v7589
        %7886 = vmatprep.subr.bf16.mxu0 %v7588
        %7887 = vmatpush1.bf16.msra.mxu0 %v7587
        %7888 = vmatprep.subr.bf16.mxu0 %v7586
        %7889 = vmatpush1.bf16.msra.mxu0 %v7585
        %7890 = vmatprep.subr.bf16.mxu0 %v7616
        %7891 = vmatpush2.bf16.msra.mxu0 %v7615
        %7892 = vmatprep.subr.bf16.mxu0 %v7614
        %7893 = vmatpush2.bf16.msra.mxu0 %v7613
        %7894 = vmatprep.subr.bf16.mxu0 %v7612
        %7895 = vmatpush2.bf16.msra.mxu0 %v7611
        %7896 = vmatprep.subr.bf16.mxu0 %v7610
        %7897 = vmatpush2.bf16.msra.mxu0 %v7609
        %7898 = vmatprep.subr.bf16.mxu0 %v7608
        %7899 = vmatpush2.bf16.msra.mxu0 %v7607
        %7900 = vmatprep.subr.bf16.mxu0 %v7606
        %7901 = vmatpush2.bf16.msra.mxu0 %v7605
        %7902 = vmatprep.subr.bf16.mxu0 %v7604
        %7903 = vmatpush2.bf16.msra.mxu0 %v7603
        %7904 = vmatprep.subr.bf16.mxu0 %v7602
        %7905 = vmatpush2.bf16.msra.mxu0 %v7601
        %7906 = vmatprep.mubr.bf16.mxu0 %v6976
        %7907 = vmatmul.mubr.bf16.gmra.mxu0 %v6975
        %v7908 = vpop.f32.mrf.mxu0
        %v7909 = vadd.f32 %v7866, %v7908
        %v7910 = vpop.f32.mrf.mxu0
        %v7911 = vadd.f32 %v7868, %v7910
        %v7912 = vpop.f32.mrf.mxu0
        %v7913 = vadd.f32 %v7870, %v7912
        %v7914 = vpop.f32.mrf.mxu0
        %v7915 = vadd.f32 %v7872, %v7914
        %7916 = vdwg.mxu0
        %v7917 = vadd.f32 %v5773, %v7909
        %v7918 = vadd.f32 %v5774, %v7911
        %v7919 = vadd.f32 %v5775, %v7913
        %v7920 = vadd.f32 %v5776, %v7915
        %v7921 = vld [vmem:[%s932] sm:$0x3]
        %v7923 = vlaneseq
        %v7924 = vshrl.u32 %v7923, 7
        %v7925 = vsub.s32 0, %v7924
        %v7926 = vrot.slane %v7921, %v7925
        %v7927 = vlaneseq
        %v7928 = vshrl.u32 %v7927, 7
        %v7929 = vsub.s32 1, %v7928
        %v7930 = vrot.slane %v7921, %v7929
        %v7933 = vadd.f32 %v7917, %v7926
        %v7934 = vadd.f32 %v7918, %v7930
        %v7935 = vadd.f32 %v7919, %v7926
        %v7936 = vadd.f32 %v7920, %v7930
        %7937 = vst [vmem:[%s1078] sm:$0xff] %v7933
        %7938 = vst [vmem:[%s1078 + $0x8] sm:$0xff] %v7934
        %7939 = vst [vmem:[%s1078 + $0x10] sm:$0xff] %v7935
        %7940 = vst [vmem:[%s1078 + $0x18] sm:$0xff] %v7936
        %p7941 = scmp.eq.s32.totalorder %s53, 11
        // Predicated region
        $region153: #{global_branch_forward.1} parent=87 // pred_check
          %p7942 = pneg %p7941
        $region154: #{global_branch_forward.1} parent=87 // pred_check_branch
          %7944 = sbr.rel (%p7942) target = $region156
        $region155: #{global_branch_forward.1} parent=87 // pred_region
          %v7945 = vld [vmem:[#allocation22] sm:$0x3]
          %v7946 = vld [vmem:[#allocation24] sm:$0x3]
          %v7947 = vadd.f32 %v7933, %v7934
          %7948 = vadd.xlane.f32.xlu0 %v7947
          %v7949 = vpop.xlane.xlu0 %7948
          %v7950 = vadd.f32 %v7935, %v7936
          %7951 = vadd.xlane.f32.xlu0 %v7950
          %v7952 = vpop.xlane.xlu0 %7951
          %v7953 = vmul.f32 %v7949, %v2587
          %v7954 = vmul.f32 %v7952, %v2587
          %v7955 = vsub.f32 %v7933, %v7953
          %v7956 = vsub.f32 %v7934, %v7953
          %v7957 = vsub.f32 %v7935, %v7954
          %v7958 = vsub.f32 %v7936, %v7954
          %v7959 = vmul.f32 %v7955, %v7955
          %v7960 = vmul.f32 %v7956, %v7956
          %v7961 = vmul.f32 %v7957, %v7957
          %v7962 = vmul.f32 %v7958, %v7958
          %v7963 = vadd.f32 %v7959, %v7960
          %7964 = vadd.xlane.f32.xlu0 %v7963
          %v7965 = vpop.xlane.xlu0 %7964
          %v7966 = vadd.f32 %v7961, %v7962
          %7967 = vadd.xlane.f32.xlu0 %v7966
          %v7968 = vpop.xlane.xlu0 %7967
          %v7969 = vmul.f32 %v7965, %v2587
          %v7970 = vmul.f32 %v7968, %v2587
          %v7971 = vadd.f32 %v7969, 1e-06
          %v7972 = vadd.f32 %v7970, 1e-06
          %v7973 = vrsqrt.pop %v7971
          %v7974 = vrsqrt.pop %v7972
          %v7975 = vmul.f32 %v7955, %v7973
          %v7976 = vmul.f32 %v7956, %v7973
          %v7977 = vmul.f32 %v7957, %v7974
          %v7978 = vmul.f32 %v7958, %v7974
          %v7980 = vlaneseq
          %v7981 = vshrl.u32 %v7980, 7
          %v7982 = vsub.s32 0, %v7981
          %v7983 = vrot.slane %v7945, %v7982
          %v7984 = vlaneseq
          %v7985 = vshrl.u32 %v7984, 7
          %v7986 = vsub.s32 1, %v7985
          %v7987 = vrot.slane %v7945, %v7986
          %v7990 = vmul.f32 %v7975, %v7983
          %v7991 = vmul.f32 %v7976, %v7987
          %v7992 = vmul.f32 %v7977, %v7983
          %v7993 = vmul.f32 %v7978, %v7987
          %v7995 = vlaneseq
          %v7996 = vshrl.u32 %v7995, 7
          %v7997 = vsub.s32 0, %v7996
          %v7998 = vrot.slane %v7946, %v7997
          %v7999 = vlaneseq
          %v8000 = vshrl.u32 %v7999, 7
          %v8001 = vsub.s32 1, %v8000
          %v8002 = vrot.slane %v7946, %v8001
          %v8005 = vadd.f32 %v7990, %v7998
          %v8006 = vadd.f32 %v7991, %v8002
          %v8007 = vadd.f32 %v7992, %v7998
          %v8008 = vadd.f32 %v7993, %v8002
          %8009 = vst [vmem:[%s1078] sm:$0xff] %v8005
          %8010 = vst [vmem:[%s1078 + $0x8] sm:$0xff] %v8006
          %8011 = vst [vmem:[%s1078 + $0x10] sm:$0xff] %v8007
          %8012 = vst [vmem:[%s1078 + $0x18] sm:$0xff] %v8008
        $region156: #{global_branch_forward.1} parent=87 // pred_fallthru
          _
        %s8013 = smul.u32 2, %s52
        %p8014 = scmp.lt.s32.totalorder %s8013, 1
        %s8015 = scalar_select %p8014, %s8013, 1
        %s8016 = smul.addr %s8015, 2
        %s8017 = smul.addr %s8016, 8
        %s8018 = scalar_lea.vmem %s17, %s8017
        // Predicated region
        $region157: #{global_branch_forward.1} parent=87 // pred_check
          %p8019 = pneg %p505
        $region158: #{global_branch_forward.1} parent=87 // pred_check_branch
          %8021 = sbr.rel (%p8019) target = $region160
        $region159: #{global_branch_forward.1} parent=87 // pred_region
          %s8022 = smul.u32 2, %s52
        $region160: #{global_branch_forward.1} parent=87 // pred_fallthru
          _
        // Predicated region
        $region161: #{global_branch_forward.1} parent=87 // pred_check
          %p8023 = pneg %p505
        $region162: #{global_branch_forward.1} parent=87 // pred_check_branch
          %8025 = sbr.rel (%p8023) target = $region164
        $region163: #{global_branch_forward.1} parent=87 // pred_region
          %s8026 = smul.u32 2, %s52
          %p8027 = scmp.lt.s32.totalorder %s8026, 1
          %s8028 = scalar_select %p8027, %s8026, 1
          %s8029 = smul.addr %s8028, 2
          %s8030 = smul.addr %s8029, 8
          %s8031 = scalar_lea.vmem %s17, %s8030
        $region164: #{global_branch_forward.1} parent=87 // pred_fallthru
          _
      $region88: #{global_branch_forward.1} parent=5 // pred_fallthru
        _
      %p8032 = scmp.le.s32.totalorder 2, %s43
      // Predicated region
      $region165: #{global_branch_forward.1} parent=5 // pred_check
        %p8033 = pneg %p8032
      $region166: #{global_branch_forward.1} parent=5 // pred_check_branch
        %8035 = sbr.rel (%p8033) target = $region168
      $region167: #{global_branch_forward.1} parent=5 // pred_region
        %s8036 = ssub.s32 %s43, 2
      $region168: #{global_branch_forward.1} parent=5 // pred_fallthru
        _
    $region6: #{global_branch_forward.1} parent=1 // loop_footer
      %s47 = sadd.s32 1, %s43
    $region7: #{global_branch_forward.1} parent=1 // loop_footer_branch
      %42 = sbr.rel target = $region3
    $region8: #{global_branch_forward.1} parent=1 // loop_exit
      _
    %8037 = vsyncpa [#allocation3], 1
    %s8038 = scalar_lea.sflag [#allocation3], 1
    %8039 = vsyncpa %s8038, 1
    %8040 = vsyncpa [#allocation5], 1
    %s8041 = scalar_lea.sflag [#allocation5], 1
    %8042 = vsyncpa %s8041, 1
    %8043 = vsyncpa [#allocation8], 1
    %s8044 = scalar_lea.sflag [#allocation8], 1
    %8045 = vsyncpa %s8044, 1
    %8046 = vsyncpa [#allocation11], 1
    %s8047 = scalar_lea.sflag [#allocation11], 1
    %8048 = vsyncpa %s8047, 1
    %8049 = vsyncpa [#allocation14], 1
    %s8050 = scalar_lea.sflag [#allocation14], 1
    %8051 = vsyncpa %s8050, 1
    %8052 = vsyncpa [#allocation17], 1
    %s8053 = scalar_lea.sflag [#allocation17], 1
    %8054 = vsyncpa %s8053, 1
    %8055 = vsyncpa [#allocation20], 1
    %s8056 = scalar_lea.sflag [#allocation20], 1
    %8057 = vsyncpa %s8056, 1
    %8058 = vsyncpa [#allocation23], 1

</llo_original>
